<compile_context>
chip_gen: v5e
topology: v5e:2x2
jax: 0.10.0
libtpu: 0.0.40
codegen_flags: <defaults>
</compile_context>

<pallas_src>
import functools
import math

import jax
import jax.numpy as jnp
from jax.experimental import pallas as pl
from jax.experimental.pallas import tpu as pltpu

BN_EPS = 1e-5
LANE = 128
SUBLANE = 8


def _round_up(x, m):
    return ((x + m - 1) // m) * m


def _query_vmem_cap():
    # v5e/v6e: 128 MiB, v7x: 64 MiB per TensorCore.  Conservative default if query fails.
    try:
        cap = int(pltpu.get_tpu_info().vmem_capacity_bytes)
        if 32 * 1024 * 1024 <= cap <= 2 ** 31:
            return cap
    except Exception:
        pass
    return 64 * 1024 * 1024


_VMEM_CAP = _query_vmem_cap()
_VMEM_LIMIT = max(32 * 1024 * 1024, min(int(_VMEM_CAP * 0.75), 100 * 1024 * 1024))
_FUSE_BUDGET = int(_VMEM_CAP * 0.55)


# ----------------------------------------------------------------------------
# Fused path: conv matmul + batch-stat BN + (residual) + ReLU in one kernel.
# grid = (Cout tiles [parallel], K tiles [arbitrary]); the f32 accumulator holds the
# full (M_pad, TC) column in VMEM, so batch statistics and the activation epilogue can
# be applied in the K-epilogue and the output is written once, in bf16.
# ----------------------------------------------------------------------------
def _fused_conv_bn_kernel(*refs, m_true, m_pad, relu, has_res):
    if has_res:
        x_ref, w_ref, gamma_ref, beta_ref, res_ref, out_ref, acc_ref = refs
    else:
        x_ref, w_ref, gamma_ref, beta_ref, out_ref, acc_ref = refs
        res_ref = None

    k = pl.program_id(1)

    @pl.when(k == 0)
    def _():
        acc_ref[...] = jnp.zeros_like(acc_ref)

    acc_ref[...] += jnp.dot(x_ref[...], w_ref[...],
                            preferred_element_type=jnp.float32)

    @pl.when(k == pl.num_programs(1) - 1)
    def _():
        acc = acc_ref[...]                                    # (M_pad, TC) f32
        inv_m = 1.0 / m_true
        mean = jnp.sum(acc, axis=0, keepdims=True) * inv_m    # (1, TC)
        centered = acc - mean
        ssq = jnp.sum(centered * centered, axis=0, keepdims=True)
        # zero-padded rows each contributed mean^2 to ssq; remove them exactly.
        ssq = ssq - (m_pad - m_true) * (mean * mean)
        var = jnp.maximum(ssq * inv_m, 0.0)
        inv_std = jax.lax.rsqrt(var + BN_EPS)
        scale = gamma_ref[...] * inv_std                      # (1, TC)
        bias = beta_ref[...] - mean * scale
        y = acc * scale + bias
        if has_res:
            y = y + res_ref[...].astype(jnp.float32)
        if relu:
            y = jnp.maximum(y, 0.0)
        out_ref[...] = y.astype(out_ref.dtype)


def fused_conv_bn(patches, w2d, gamma, beta, res=None, *, relu, m_true, tk, tc):
    m_pad, k_pad = patches.shape
    _, c_pad = w2d.shape
    grid = (c_pad // tc, k_pad // tk)
    in_specs = [
        pl.BlockSpec((m_pad, tk), lambda j, k: (0, k)),
        pl.BlockSpec((tk, tc), lambda j, k: (k, j)),
        pl.BlockSpec((1, tc), lambda j, k: (0, j)),
        pl.BlockSpec((1, tc), lambda j, k: (0, j)),
    ]
    args = [patches, w2d, gamma, beta]
    if res is not None:
        in_specs.append(pl.BlockSpec((m_pad, tc), lambda j, k: (0, j)))
        args.append(res)

    kernel = functools.partial(_fused_conv_bn_kernel,
                               m_true=float(m_true), m_pad=float(m_pad),
                               relu=relu, has_res=res is not None)
    return pl.pallas_call(
        kernel,
        grid=grid,
        in_specs=in_specs,
        out_specs=pl.BlockSpec((m_pad, tc), lambda j, k: (0, j)),
        out_shape=jax.ShapeDtypeStruct((m_pad, c_pad), jnp.bfloat16),
        scratch_shapes=[pltpu.VMEM((m_pad, tc), jnp.float32)],
        compiler_params=pltpu.CompilerParams(
            dimension_semantics=("parallel", "arbitrary"),
            vmem_limit_bytes=_VMEM_LIMIT),
    )(*args)


def _choose_tk(k_pad, m_pad, budget):
    # Prefer a single K step (tk == k_pad) so the accumulator init/epilogue runs once.
    for t in sorted({k_pad, 2048, 1024, 512, 256, 128}, reverse=True):
        if t <= k_pad and k_pad % t == 0 and 2 * m_pad * t * 2 <= budget // 2:
            return t
    return 128


def _fused_vmem_estimate(m_pad, tk, tc, has_res):
    patches = 2 * m_pad * tk * 2          # double-buffered bf16 LHS column block
    weights = 2 * tk * tc * 2
    resid = (2 * m_pad * tc * 2) if has_res else 0
    out = 2 * m_pad * tc * 2
    acc = m_pad * tc * 4
    return patches + weights + resid + out + acc + (1 << 16)


# ----------------------------------------------------------------------------
# Fallback path (only when a full-M column does not fit VMEM, i.e. very large M):
# phase 1: bf16 conv intermediate + f32 partial BN stats; phase 2: large-tile BN/act.
# ----------------------------------------------------------------------------
def _conv_stats_kernel(x_ref, w_ref, out_ref, stats_ref, acc_ref):
    k = pl.program_id(2)

    @pl.when(k == 0)
    def _():
        acc_ref[...] = jnp.zeros_like(acc_ref)

    acc_ref[...] += jnp.dot(x_ref[...], w_ref[...],
                            preferred_element_type=jnp.float32)

    @pl.when(k == pl.num_programs(2) - 1)
    def _():
        acc = acc_ref[...]
        out_ref[...] = acc.astype(out_ref.dtype)      # bf16 intermediate (halved HBM)
        stats_ref[0, 0:1, :] = jnp.sum(acc, axis=0, keepdims=True)
        stats_ref[0, 1:2, :] = jnp.sum(acc * acc, axis=0, keepdims=True)


def _bn_act_kernel_factory(has_res, relu):
    def kernel(*refs):
        if has_res:
            conv_ref, scale_ref, bias_ref, res_ref, out_ref = refs
        else:
            conv_ref, scale_ref, bias_ref, out_ref = refs
            res_ref = None
        y = conv_ref[...].astype(jnp.float32) * scale_ref[...] + bias_ref[...]
        if has_res:
            y = y + res_ref[...].astype(jnp.float32)
        if relu:
            y = jnp.maximum(y, 0.0)
        out_ref[...] = y.astype(out_ref.dtype)
    return kernel


def bn_act_apply(conv, scale, bias, res, *, relu, tm, tc):
    m_pad, c_pad = conv.shape
    grid = (m_pad // tm, c_pad // tc)
    in_specs = [
        pl.BlockSpec((tm, tc), lambda i, j: (i, j)),
        pl.BlockSpec((1, tc), lambda i, j: (0, j)),
        pl.BlockSpec((1, tc), lambda i, j: (0, j)),
    ]
    args = [conv, scale, bias]
    if res is not None:
        in_specs.append(pl.BlockSpec((tm, tc), lambda i, j: (i, j)))
        args.append(res)
    return pl.pallas_call(
        _bn_act_kernel_factory(res is not None, relu),
        grid=grid,
        in_specs=in_specs,
        out_specs=pl.BlockSpec((tm, tc), lambda i, j: (i, j)),
        out_shape=jax.ShapeDtypeStruct((m_pad, c_pad), jnp.bfloat16),
        compiler_params=pltpu.CompilerParams(
            dimension_semantics=("parallel", "parallel"),
            vmem_limit_bytes=_VMEM_LIMIT),
    )(*args)


def two_phase_conv_bn(patches, unit, m_true, relu, res_flat, m_pad_out):
    m0, k_pad = patches.shape
    c_pad = unit['c_pad']
    tm1 = 512                                  # >= 2 parallel M tiles whenever this path runs
    tm2 = 2048                                 # large lane-dense tiles for the mem-bound pass
    m_pad = _round_up(m0, tm2)
    patches = jnp.pad(patches, ((0, m_pad - m0), (0, 0)))
    tk1 = 512 if k_pad % 512 == 0 else (256 if k_pad % 256 == 0 else 128)
    tc1 = 256 if c_pad % 256 == 0 else 128

    grid = (m_pad // tm1, c_pad // tc1, k_pad // tk1)
    conv, stats = pl.pallas_call(
        _conv_stats_kernel,
        grid=grid,
        in_specs=[
            pl.BlockSpec((tm1, tk1), lambda i, j, k: (i, k),
                         pipeline_mode=pl.Buffered(3)),
            pl.BlockSpec((tk1, tc1), lambda i, j, k: (k, j)),
        ],
        out_specs=[
            pl.BlockSpec((tm1, tc1), lambda i, j, k: (i, j)),
            pl.BlockSpec((1, 2, tc1), lambda i, j, k: (i, 0, j)),
        ],
        out_shape=[
            jax.ShapeDtypeStruct((m_pad, c_pad), jnp.bfloat16),
            jax.ShapeDtypeStruct((grid[0], 2, c_pad), jnp.float32),
        ],
        scratch_shapes=[pltpu.VMEM((tm1, tc1), jnp.float32)],
        compiler_params=pltpu.CompilerParams(
            dimension_semantics=("parallel", "parallel", "arbitrary"),
            vmem_limit_bytes=_VMEM_LIMIT),
    )(patches, unit['w2d'])

    # Tiny per-channel glue: fold global batch statistics into scale/bias.
    tot = jnp.sum(stats, axis=0)                       # (2, C_pad)
    mean = tot[0] / m_true
    var = jnp.maximum(tot[1] / m_true - mean * mean, 0.0)
    inv = jax.lax.rsqrt(var + BN_EPS)
    scale = unit['gamma'] * inv                        # (1, C_pad)
    bias = unit['beta'] - mean[None, :] * scale

    tc2 = next(t for t in (c_pad, 512, 256, 128) if t <= c_pad and c_pad % t == 0)
    res2 = None
    if res_flat is not None:
        res2 = jnp.pad(res_flat, ((0, m_pad - res_flat.shape[0]), (0, 0)))
    out = bn_act_apply(conv, scale, bias, res2, relu=relu, tm=tm2, tc=tc2)
    return out[:m_pad_out]


# ----------------------------------------------------------------------------
# Head: fused global average pool + 1x1-conv fc (tiny; single full block).
# ----------------------------------------------------------------------------
def _head_kernel(x_ref, w_ref, b_ref, o_ref):
    pooled = jnp.mean(x_ref[...].astype(jnp.float32), axis=1)      # (N, Cpad)
    o_ref[...] = jnp.dot(pooled, w_ref[...],
                         preferred_element_type=jnp.float32) + b_ref[...]


def avgpool_fc(x3, w2d, bias):
    n, hw, c_pad = x3.shape
    _, nc_pad = w2d.shape
    return pl.pallas_call(
        _head_kernel,
        grid=(1,),
        in_specs=[
            pl.BlockSpec((n, hw, c_pad), lambda i: (0, 0, 0)),
            pl.BlockSpec((c_pad, nc_pad), lambda i: (0, 0)),
            pl.BlockSpec((1, nc_pad), lambda i: (0, 0)),
        ],
        out_specs=pl.BlockSpec((n, nc_pad), lambda i: (0, 0)),
        out_shape=jax.ShapeDtypeStruct((n, nc_pad), jnp.float32),
    )(x3, w2d, bias)


# ----------------------------------------------------------------------------
# Activation container: lane-dense padded flat buffer (M_pad, C_pad) in bf16.
# ----------------------------------------------------------------------------
def _to_act(x4):
    n, h, w, c = x4.shape
    m = n * h * w
    c_pad = _round_up(c, LANE)
    m_pad = _round_up(m, SUBLANE)
    flat = x4.reshape(m, c).astype(jnp.bfloat16)
    flat = jnp.pad(flat, ((0, m_pad - m), (0, c_pad - c)))
    return {'flat': flat, 'n': n, 'h': h, 'w': w, 'c': c}


def _act_to_nhwc(act):
    n, h, w, c = act['n'], act['h'], act['w'], act['c']
    m = n * h * w
    return act['flat'][:m, :c].reshape(n, h, w, c)


# ----------------------------------------------------------------------------
# JAX glue: im2col patch extraction (pad + shifted strided slices), bf16.
# ----------------------------------------------------------------------------
def extract_patches(x, ksize, stride, padding, dilation):
    # TODO(synk): in-kernel tap-shifted DMA (see header) would remove this blow-up.
    n, h, w, c = x.shape
    xp = jnp.pad(x, ((0, 0), (padding, padding), (padding, padding), (0, 0)))
    hp, wp = h + 2 * padding, w + 2 * padding
    ext = dilation * (ksize - 1) + 1
    oh = (hp - ext) // stride + 1
    ow = (wp - ext) // stride + 1
    cols = []
    for kh in range(ksize):
        for kw in range(ksize):
            r0, c0 = kh * dilation, kw * dilation
            cols.append(xp[:, r0:r0 + stride * (oh - 1) + 1:stride,
                              c0:c0 + stride * (ow - 1) + 1:stride, :])
    patches = jnp.concatenate(cols, axis=-1)          # feature order (kh, kw, cin)
    return patches.reshape(n * oh * ow, ksize * ksize * c), (n, oh, ow)


def conv_bn_act(act, unit, *, relu=True, res_flat=None):
    x4 = _act_to_nhwc(act)
    patches, (n, oh, ow) = extract_patches(
        x4, unit['ksize'], unit['stride'], unit['padding'], unit['dilation'])
    m = n * oh * ow
    k_feat = patches.shape[1]
    k_pad, c_pad = unit['k_pad'], unit['c_pad']
    m_pad = _round_up(m, SUBLANE)
    patches = jnp.pad(patches.astype(jnp.bfloat16),
                      ((0, m_pad - m), (0, k_pad - k_feat)))

    # Pick tiles for the fused (resident output column) path: prefer tc=256 (MXU fill
    # on v6e/v7x, fewer LHS re-reads), single-step K.  Gate on per-chip VMEM budget.
    chosen = None
    for tc in (256, 128):
        if c_pad % tc != 0:
            continue
        tk = _choose_tk(k_pad, m_pad, _FUSE_BUDGET)
        if _fused_vmem_estimate(m_pad, tk, tc, res_flat is not None) <= _FUSE_BUDGET:
            chosen = (tk, tc)
            break

    if chosen is not None:
        tk, tc = chosen
        out_flat = fused_conv_bn(patches, unit['w2d'], unit['gamma'], unit['beta'],
                                 res=res_flat, relu=relu, m_true=m, tk=tk, tc=tc)
    else:
        out_flat = two_phase_conv_bn(patches, unit, m, relu, res_flat, m_pad)

    return {'flat': out_flat, 'n': n, 'h': oh, 'w': ow, 'c': unit['cout']}


def basic_block(act, blk):
    out = conv_bn_act(act, blk['conv1'], relu=True)
    res_flat = None
    if blk['residual']:
        if blk['downsample'] is not None:
            res_flat = conv_bn_act(act, blk['downsample'], relu=False)['flat']
        else:
            res_flat = act['flat']
    return conv_bn_act(out, blk['conv2'], relu=True, res_flat=res_flat)


# ----------------------------------------------------------------------------
# Parameter construction (mirrors DRN.__init__, arch='D', deterministic init).
# ----------------------------------------------------------------------------
def build_drn_params(key, channels, layers, num_classes):
    keys = jax.random.split(key, 128)
    idx = [0]

    def nk():
        k = keys[idx[0]]
        idx[0] += 1
        return k

    def conv_unit(cin, cout, ksize, stride, padding, dilation):
        # DRN init: weight ~ N(0, sqrt(2 / (kh*kw*out_channels)))
        std = math.sqrt(2.0 / (ksize * ksize * cout))
        w = std * jax.random.normal(nk(), (ksize, ksize, cin, cout), jnp.float32)
        k_feat = ksize * ksize * cin
        k_pad = _round_up(k_feat, LANE)
        c_pad = _round_up(cout, LANE)
        w2d = jnp.pad(w.reshape(k_feat, cout),
                      ((0, k_pad - k_feat), (0, c_pad - cout))).astype(jnp.bfloat16)
        gamma = jnp.pad(jnp.ones((1, cout), jnp.float32), ((0, 0), (0, c_pad - cout)))
        beta = jnp.zeros((1, c_pad), jnp.float32)
        return dict(w2d=w2d, gamma=gamma, beta=beta,
                    ksize=ksize, stride=stride, padding=padding, dilation=dilation,
                    cin=cin, cout=cout, c_pad=c_pad, k_pad=k_pad)

    state = dict(inplanes=channels[0])

    def make_conv_layers(chan, convs, stride=1, dilation=1):
        mods = []
        for i in range(convs):
            mods.append(conv_unit(state['inplanes'], chan, 3,
                                  stride if i == 0 else 1, dilation, dilation))
            state['inplanes'] = chan
        return mods

    def make_layer(planes, blocks, stride=1, dilation=1, new_level=True,
                   residual=True):
        assert dilation == 1 or dilation % 2 == 0
        downsample = None
        if stride != 1 or state['inplanes'] != planes:
            downsample = conv_unit(state['inplanes'], planes, 1, stride, 0, 1)
        d = (1, 1) if dilation == 1 else ((dilation // 2 if new_level else dilation),
                                          dilation)
        blks = [dict(conv1=conv_unit(state['inplanes'], planes, 3, stride, d[0], d[0]),
                     conv2=conv_unit(planes, planes, 3, 1, d[1], d[1]),
                     downsample=downsample, residual=residual)]
        state['inplanes'] = planes
        for _ in range(1, blocks):
            blks.append(dict(conv1=conv_unit(planes, planes, 3, 1, dilation, dilation),
                             conv2=conv_unit(planes, planes, 3, 1, dilation, dilation),
                             downsample=None, residual=residual))
        return blks

    params = {}
    # arch == 'D'
    params['layer0'] = [conv_unit(3, channels[0], 7, 1, 3, 1)]
    params['layer1'] = make_conv_layers(channels[0], layers[0], stride=1)
    params['layer2'] = make_conv_layers(channels[1], layers[1], stride=2)
    params['layer3'] = make_layer(channels[2], layers[2], stride=2)
    params['layer4'] = make_layer(channels[3], layers[3], stride=2)
    params['layer5'] = make_layer(channels[4], layers[4], dilation=2, new_level=False)
    params['layer6'] = (None if layers[5] == 0 else
                        make_layer(channels[5], layers[5], dilation=4, new_level=False))
    params['layer7'] = (None if layers[6] == 0 else
                        make_conv_layers(channels[6], layers[6], dilation=2))
    params['layer8'] = (None if layers[7] == 0 else
                        make_conv_layers(channels[7], layers[7], dilation=1))

    # fc is a 1x1 Conv2d with bias; DRN's init loop only sets the weight.
    c_last = channels[-1]
    c_last_pad = _round_up(c_last, LANE)
    nc_pad = _round_up(num_classes, LANE)
    std = math.sqrt(2.0 / (1 * 1 * num_classes))
    fcw = std * jax.random.normal(nk(), (c_last, num_classes), jnp.float32)
    params['fc_w2d'] = jnp.pad(fcw, ((0, c_last_pad - c_last),
                                     (0, nc_pad - num_classes)))
    params['fc_b'] = jnp.zeros((1, nc_pad), jnp.float32)
    return params


# ----------------------------------------------------------------------------
# Forward (out_map=False, out_middle=False  ->  returns (N, num_classes))
# ----------------------------------------------------------------------------
def drn_forward(params, x_nhwc, *, pool_size, num_classes):
    act = _to_act(x_nhwc)
    for u in params['layer0']:
        act = conv_bn_act(act, u)
    for u in params['layer1']:
        act = conv_bn_act(act, u)
    for u in params['layer2']:
        act = conv_bn_act(act, u)
    for name in ('layer3', 'layer4', 'layer5', 'layer6'):
        if params[name] is None:
            continue
        for blk in params[name]:
            act = basic_block(act, blk)
    for name in ('layer7', 'layer8'):
        if params[name] is None:
            continue
        for u in params[name]:
            act = conv_bn_act(act, u)

    n, h, w = act['n'], act['h'], act['w']
    # TODO(synk): only the DRN-intended case (pool_size == final spatial size,
    # i.e. a global average pool yielding a 1x1 map) is implemented.
    assert h == pool_size and w == pool_size
    m = n * h * w
    c_pad = act['flat'].shape[1]
    x3 = act['flat'][:m].reshape(n, h * w, c_pad)   # padded channels are exactly 0
    logits = avgpool_fc(x3, params['fc_w2d'], params['fc_b'])
    return logits[:, :num_classes]                  # == x.view(x.size(0), -1)


# ----------------------------------------------------------------------------
if __name__ == "__main__":
    key = jax.random.PRNGKey(0)
    pkey, xkey = jax.random.split(key)

    # small synthetic DRN-D config
    channels = (8, 8, 16, 16, 32, 32, 32, 32)
    layers = (1, 1, 1, 1, 1, 1, 1, 1)
    num_classes = 10
    pool_size = 2          # input 16x16 -> /8 after the three strided stages -> 2x2

    params = build_drn_params(pkey, channels, layers, num_classes)

    x_nchw = jax.random.normal(xkey, (2, 3, 16, 16), jnp.float32)  # PyTorch layout
    x_nhwc = jnp.transpose(x_nchw, (0, 2, 3, 1))                   # kernel layout

    # weights are closed over so layer hyper-params stay static under jit
    fwd = jax.jit(lambda xin: drn_forward(params, xin, pool_size=pool_size,
                                          num_classes=num_classes))
    logits = fwd(x_nhwc)
    logits = jax.block_until_ready(logits)
    assert logits.shape == (2, num_classes)
    assert bool(jnp.all(jnp.isfinite(logits)))
    print("KERNEL_OK")
</pallas_src>

<mosaic_0001>
module attributes {stable_mosaic.version = 11 : i64} {
  func.func @_fused_conv_bn_kernel(%arg0: i32, %arg1: i32, %arg2: memref<512x256xbf16, #tpu.memory_space<vmem>>, %arg3: memref<256x128xbf16, #tpu.memory_space<vmem>>, %arg4: memref<1x128xf32, #tpu.memory_space<vmem>>, %arg5: memref<1x128xf32, #tpu.memory_space<vmem>>, %arg6: memref<512x128xbf16, #tpu.memory_space<vmem>>, %arg7: memref<512x128xf32, #tpu.memory_space<vmem>>) attributes {dimension_semantics = [#tpu.dimension_semantics<parallel>, #tpu.dimension_semantics<arbitrary>], iteration_bounds = array<i64: 1, 1>, scalar_prefetch = 0 : i64, scratch_operands = 1 : i64, tpu.core_type = #tpu.core_type<tc>, window_params = [{transform_indices = @transform_0, window_bounds = array<i64: 512, 256>}, {transform_indices = @transform_1, window_bounds = array<i64: 256, 128>}, {transform_indices = @transform_2, window_bounds = array<i64: 1, 128>}, {transform_indices = @transform_3, window_bounds = array<i64: 1, 128>}, {transform_indices = @transform_4, window_bounds = array<i64: 512, 128>}]} {
    %c0_i32 = arith.constant 0 : i32
    %0 = arith.cmpi eq, %arg1, %c0_i32 : i32
    %1 = arith.extui %0 : i1 to i32
    %c0_i32_0 = arith.constant 0 : i32
    %2 = arith.cmpi ne, %1, %c0_i32_0 : i32
    scf.if %2 {
      %cst_10 = arith.constant 0.000000e+00 : f32
      %12 = vector.broadcast %cst_10 : f32 to vector<512x128xf32>
      %c0_11 = arith.constant 0 : index
      %c0_12 = arith.constant 0 : index
      %13 = vector.load %arg7[%c0_11, %c0_12] : memref<512x128xf32, #tpu.memory_space<vmem>>, vector<512x128xf32>
      tpu.vector_store %arg7[%c0_11, %c0_12], %12 {strides = array<i32>} : memref<512x128xf32, #tpu.memory_space<vmem>>, vector<512x128xf32>,
    } else {
    }
    %c0 = arith.constant 0 : index
    %c0_1 = arith.constant 0 : index
    %3 = vector.load %arg7[%c0, %c0_1] : memref<512x128xf32, #tpu.memory_space<vmem>>, vector<512x128xf32>
    %c0_2 = arith.constant 0 : index
    %c0_3 = arith.constant 0 : index
    %4 = vector.load %arg2[%c0_2, %c0_3] : memref<512x256xbf16, #tpu.memory_space<vmem>>, vector<512x256xbf16>
    %c0_4 = arith.constant 0 : index
    %c0_5 = arith.constant 0 : index
    %5 = vector.load %arg3[%c0_4, %c0_5] : memref<256x128xbf16, #tpu.memory_space<vmem>>, vector<256x128xbf16>
    %cst = arith.constant dense<0.000000e+00> : vector<512x128xf32>
    %6 = tpu.matmul %4, %5, %cst {dimension_numbers = #tpu.dot_dimension_numbers<[1], [0], [0], [1], [0, 0, 1, 1], [], []>} : vector<512x256xbf16>, vector<256x128xbf16>, vector<512x128xf32> -> vector<512x128xf32>
    %7 = arith.addf %3, %6 : vector<512x128xf32>
    %c0_6 = arith.constant 0 : index
    %c0_7 = arith.constant 0 : index
    %8 = vector.load %arg7[%c0_6, %c0_7] : memref<512x128xf32, #tpu.memory_space<vmem>>, vector<512x128xf32>
    tpu.vector_store %arg7[%c0_6, %c0_7], %7 {strides = array<i32>} : memref<512x128xf32, #tpu.memory_space<vmem>>, vector<512x128xf32>,
    %c0_i32_8 = arith.constant 0 : i32
    %9 = arith.cmpi eq, %arg1, %c0_i32_8 : i32
    %10 = arith.extui %9 : i1 to i32
    %c0_i32_9 = arith.constant 0 : i32
    %11 = arith.cmpi ne, %10, %c0_i32_9 : i32
    scf.if %11 {
      %c0_10 = arith.constant 0 : index
      %c0_11 = arith.constant 0 : index
      %12 = vector.load %arg7[%c0_10, %c0_11] : memref<512x128xf32, #tpu.memory_space<vmem>>, vector<512x128xf32>
      %cst_12 = arith.constant dense<0.000000e+00> : vector<128xf32>
      %13 = vector.multi_reduction <add>, %12, %cst_12 [0] : vector<512x128xf32> to vector<128xf32>
      %14 = vector.shape_cast %13 : vector<128xf32> to vector<1x128xf32>
      %cst_13 = arith.constant 0.001953125 : f32
      %15 = vector.broadcast %cst_13 : f32 to vector<1x128xf32>
      %16 = arith.mulf %14, %15 : vector<1x128xf32>
      %17 = vector.broadcast %16 : vector<1x128xf32> to vector<512x128xf32>
      %18 = arith.subf %12, %17 : vector<512x128xf32>
      %19 = arith.mulf %18, %18 : vector<512x128xf32>
      %cst_14 = arith.constant dense<0.000000e+00> : vector<128xf32>
      %20 = vector.multi_reduction <add>, %19, %cst_14 [0] : vector<512x128xf32> to vector<128xf32>
      %21 = vector.shape_cast %20 : vector<128xf32> to vector<1x128xf32>
      %22 = arith.mulf %16, %16 : vector<1x128xf32>
      %cst_15 = arith.constant 0.000000e+00 : f32
      %23 = vector.broadcast %cst_15 : f32 to vector<1x128xf32>
      %24 = arith.mulf %23, %22 : vector<1x128xf32>
      %25 = arith.subf %21, %24 : vector<1x128xf32>
      %cst_16 = arith.constant 0.001953125 : f32
      %26 = vector.broadcast %cst_16 : f32 to vector<1x128xf32>
      %27 = arith.mulf %25, %26 : vector<1x128xf32>
      %cst_17 = arith.constant 0.000000e+00 : f32
      %28 = vector.broadcast %cst_17 : f32 to vector<1x128xf32>
      %29 = arith.maximumf %27, %28 : vector<1x128xf32>
      %cst_18 = arith.constant 9.99999974E-6 : f32
      %30 = vector.broadcast %cst_18 : f32 to vector<1x128xf32>
      %31 = arith.addf %29, %30 : vector<1x128xf32>
      %32 = math.rsqrt %31 : vector<1x128xf32>
      %c0_19 = arith.constant 0 : index
      %c0_20 = arith.constant 0 : index
      %33 = vector.load %arg4[%c0_19, %c0_20] : memref<1x128xf32, #tpu.memory_space<vmem>>, vector<1x128xf32>
      %34 = arith.mulf %33, %32 : vector<1x128xf32>
      %c0_21 = arith.constant 0 : index
      %c0_22 = arith.constant 0 : index
      %35 = vector.load %arg5[%c0_21, %c0_22] : memref<1x128xf32, #tpu.memory_space<vmem>>, vector<1x128xf32>
      %36 = arith.mulf %16, %34 : vector<1x128xf32>
      %37 = arith.subf %35, %36 : vector<1x128xf32>
      %38 = vector.broadcast %34 : vector<1x128xf32> to vector<512x128xf32>
      %39 = arith.mulf %12, %38 : vector<512x128xf32>
      %40 = vector.broadcast %37 : vector<1x128xf32> to vector<512x128xf32>
      %41 = arith.addf %39, %40 : vector<512x128xf32>
      %cst_23 = arith.constant 0.000000e+00 : f32
      %42 = vector.broadcast %cst_23 : f32 to vector<512x128xf32>
      %43 = arith.maximumf %41, %42 : vector<512x128xf32>
      %44 = arith.truncf %43 : vector<512x128xf32> to vector<512x128xbf16>
      %c0_24 = arith.constant 0 : index
      %c0_25 = arith.constant 0 : index
      %45 = vector.load %arg6[%c0_24, %c0_25] : memref<512x128xbf16, #tpu.memory_space<vmem>>, vector<512x128xbf16>
      tpu.vector_store %arg6[%c0_24, %c0_25], %44 {strides = array<i32>} : memref<512x128xbf16, #tpu.memory_space<vmem>>, vector<512x128xbf16>,
    } else {
    }
    return
  }
  func.func @transform_0(%arg0: i32, %arg1: i32) -> (i32, i32) {
    %c0_i32 = arith.constant 0 : i32
    %c0_i32_0 = arith.constant 0 : i32
    return %c0_i32, %arg1 : i32, i32
  }
  func.func @transform_1(%arg0: i32, %arg1: i32) -> (i32, i32) {
    %c0_i32 = arith.constant 0 : i32
    return %arg1, %arg0 : i32, i32
  }
  func.func @transform_2(%arg0: i32, %arg1: i32) -> (i32, i32) {
    %c0_i32 = arith.constant 0 : i32
    %c0_i32_0 = arith.constant 0 : i32
    return %c0_i32, %arg0 : i32, i32
  }
  func.func @transform_3(%arg0: i32, %arg1: i32) -> (i32, i32) {
    %c0_i32 = arith.constant 0 : i32
    %c0_i32_0 = arith.constant 0 : i32
    return %c0_i32, %arg0 : i32, i32
  }
  func.func @transform_4(%arg0: i32, %arg1: i32) -> (i32, i32) {
    %c0_i32 = arith.constant 0 : i32
    %c0_i32_0 = arith.constant 0 : i32
    return %c0_i32, %arg0 : i32, i32
  }
}

module attributes {stable_mosaic.version = 11 : i64} {
  func.func @_fused_conv_bn_kernel(%arg0: i32, %arg1: i32, %arg2: memref<512x128xbf16, #tpu.memory_space<vmem>>, %arg3: memref<128x128xbf16, #tpu.memory_space<vmem>>, %arg4: memref<1x128xf32, #tpu.memory_space<vmem>>, %arg5: memref<1x128xf32, #tpu.memory_space<vmem>>, %arg6: memref<512x128xbf16, #tpu.memory_space<vmem>>, %arg7: memref<512x128xf32, #tpu.memory_space<vmem>>) attributes {dimension_semantics = [#tpu.dimension_semantics<parallel>, #tpu.dimension_semantics<arbitrary>], iteration_bounds = array<i64: 1, 1>, scalar_prefetch = 0 : i64, scratch_operands = 1 : i64, tpu.core_type = #tpu.core_type<tc>, window_params = [{transform_indices = @transform_0, window_bounds = array<i64: 512, 128>}, {transform_indices = @transform_1, window_bounds = array<i64: 128, 128>}, {transform_indices = @transform_2, window_bounds = array<i64: 1, 128>}, {transform_indices = @transform_3, window_bounds = array<i64: 1, 128>}, {transform_indices = @transform_4, window_bounds = array<i64: 512, 128>}]} {
    %c0_i32 = arith.constant 0 : i32
    %0 = arith.cmpi eq, %arg1, %c0_i32 : i32
    %1 = arith.extui %0 : i1 to i32
    %c0_i32_0 = arith.constant 0 : i32
    %2 = arith.cmpi ne, %1, %c0_i32_0 : i32
    scf.if %2 {
      %cst_10 = arith.constant 0.000000e+00 : f32
      %12 = vector.broadcast %cst_10 : f32 to vector<512x128xf32>
      %c0_11 = arith.constant 0 : index
      %c0_12 = arith.constant 0 : index
      %13 = vector.load %arg7[%c0_11, %c0_12] : memref<512x128xf32, #tpu.memory_space<vmem>>, vector<512x128xf32>
      tpu.vector_store %arg7[%c0_11, %c0_12], %12 {strides = array<i32>} : memref<512x128xf32, #tpu.memory_space<vmem>>, vector<512x128xf32>,
    } else {
    }
    %c0 = arith.constant 0 : index
    %c0_1 = arith.constant 0 : index
    %3 = vector.load %arg7[%c0, %c0_1] : memref<512x128xf32, #tpu.memory_space<vmem>>, vector<512x128xf32>
    %c0_2 = arith.constant 0 : index
    %c0_3 = arith.constant 0 : index
    %4 = vector.load %arg2[%c0_2, %c0_3] : memref<512x128xbf16, #tpu.memory_space<vmem>>, vector<512x128xbf16>
    %c0_4 = arith.constant 0 : index
    %c0_5 = arith.constant 0 : index
    %5 = vector.load %arg3[%c0_4, %c0_5] : memref<128x128xbf16, #tpu.memory_space<vmem>>, vector<128x128xbf16>
    %cst = arith.constant dense<0.000000e+00> : vector<512x128xf32>
    %6 = tpu.matmul %4, %5, %cst {dimension_numbers = #tpu.dot_dimension_numbers<[1], [0], [0], [1], [0, 0, 1, 1], [], []>} : vector<512x128xbf16>, vector<128x128xbf16>, vector<512x128xf32> -> vector<512x128xf32>
    %7 = arith.addf %3, %6 : vector<512x128xf32>
    %c0_6 = arith.constant 0 : index
    %c0_7 = arith.constant 0 : index
    %8 = vector.load %arg7[%c0_6, %c0_7] : memref<512x128xf32, #tpu.memory_space<vmem>>, vector<512x128xf32>
    tpu.vector_store %arg7[%c0_6, %c0_7], %7 {strides = array<i32>} : memref<512x128xf32, #tpu.memory_space<vmem>>, vector<512x128xf32>,
    %c0_i32_8 = arith.constant 0 : i32
    %9 = arith.cmpi eq, %arg1, %c0_i32_8 : i32
    %10 = arith.extui %9 : i1 to i32
    %c0_i32_9 = arith.constant 0 : i32
    %11 = arith.cmpi ne, %10, %c0_i32_9 : i32
    scf.if %11 {
      %c0_10 = arith.constant 0 : index
      %c0_11 = arith.constant 0 : index
      %12 = vector.load %arg7[%c0_10, %c0_11] : memref<512x128xf32, #tpu.memory_space<vmem>>, vector<512x128xf32>
      %cst_12 = arith.constant dense<0.000000e+00> : vector<128xf32>
      %13 = vector.multi_reduction <add>, %12, %cst_12 [0] : vector<512x128xf32> to vector<128xf32>
      %14 = vector.shape_cast %13 : vector<128xf32> to vector<1x128xf32>
      %cst_13 = arith.constant 0.001953125 : f32
      %15 = vector.broadcast %cst_13 : f32 to vector<1x128xf32>
      %16 = arith.mulf %14, %15 : vector<1x128xf32>
      %17 = vector.broadcast %16 : vector<1x128xf32> to vector<512x128xf32>
      %18 = arith.subf %12, %17 : vector<512x128xf32>
      %19 = arith.mulf %18, %18 : vector<512x128xf32>
      %cst_14 = arith.constant dense<0.000000e+00> : vector<128xf32>
      %20 = vector.multi_reduction <add>, %19, %cst_14 [0] : vector<512x128xf32> to vector<128xf32>
      %21 = vector.shape_cast %20 : vector<128xf32> to vector<1x128xf32>
      %22 = arith.mulf %16, %16 : vector<1x128xf32>
      %cst_15 = arith.constant 0.000000e+00 : f32
      %23 = vector.broadcast %cst_15 : f32 to vector<1x128xf32>
      %24 = arith.mulf %23, %22 : vector<1x128xf32>
      %25 = arith.subf %21, %24 : vector<1x128xf32>
      %cst_16 = arith.constant 0.001953125 : f32
      %26 = vector.broadcast %cst_16 : f32 to vector<1x128xf32>
      %27 = arith.mulf %25, %26 : vector<1x128xf32>
      %cst_17 = arith.constant 0.000000e+00 : f32
      %28 = vector.broadcast %cst_17 : f32 to vector<1x128xf32>
      %29 = arith.maximumf %27, %28 : vector<1x128xf32>
      %cst_18 = arith.constant 9.99999974E-6 : f32
      %30 = vector.broadcast %cst_18 : f32 to vector<1x128xf32>
      %31 = arith.addf %29, %30 : vector<1x128xf32>
      %32 = math.rsqrt %31 : vector<1x128xf32>
      %c0_19 = arith.constant 0 : index
      %c0_20 = arith.constant 0 : index
      %33 = vector.load %arg4[%c0_19, %c0_20] : memref<1x128xf32, #tpu.memory_space<vmem>>, vector<1x128xf32>
      %34 = arith.mulf %33, %32 : vector<1x128xf32>
      %c0_21 = arith.constant 0 : index
      %c0_22 = arith.constant 0 : index
      %35 = vector.load %arg5[%c0_21, %c0_22] : memref<1x128xf32, #tpu.memory_space<vmem>>, vector<1x128xf32>
      %36 = arith.mulf %16, %34 : vector<1x128xf32>
      %37 = arith.subf %35, %36 : vector<1x128xf32>
      %38 = vector.broadcast %34 : vector<1x128xf32> to vector<512x128xf32>
      %39 = arith.mulf %12, %38 : vector<512x128xf32>
      %40 = vector.broadcast %37 : vector<1x128xf32> to vector<512x128xf32>
      %41 = arith.addf %39, %40 : vector<512x128xf32>
      %cst_23 = arith.constant 0.000000e+00 : f32
      %42 = vector.broadcast %cst_23 : f32 to vector<512x128xf32>
      %43 = arith.maximumf %41, %42 : vector<512x128xf32>
      %44 = arith.truncf %43 : vector<512x128xf32> to vector<512x128xbf16>
      %c0_24 = arith.constant 0 : index
      %c0_25 = arith.constant 0 : index
      %45 = vector.load %arg6[%c0_24, %c0_25] : memref<512x128xbf16, #tpu.memory_space<vmem>>, vector<512x128xbf16>
      tpu.vector_store %arg6[%c0_24, %c0_25], %44 {strides = array<i32>} : memref<512x128xbf16, #tpu.memory_space<vmem>>, vector<512x128xbf16>,
    } else {
    }
    return
  }
  func.func @transform_0(%arg0: i32, %arg1: i32) -> (i32, i32) {
    %c0_i32 = arith.constant 0 : i32
    %c0_i32_0 = arith.constant 0 : i32
    return %c0_i32, %arg1 : i32, i32
  }
  func.func @transform_1(%arg0: i32, %arg1: i32) -> (i32, i32) {
    %c0_i32 = arith.constant 0 : i32
    return %arg1, %arg0 : i32, i32
  }
  func.func @transform_2(%arg0: i32, %arg1: i32) -> (i32, i32) {
    %c0_i32 = arith.constant 0 : i32
    %c0_i32_0 = arith.constant 0 : i32
    return %c0_i32, %arg0 : i32, i32
  }
  func.func @transform_3(%arg0: i32, %arg1: i32) -> (i32, i32) {
    %c0_i32 = arith.constant 0 : i32
    %c0_i32_0 = arith.constant 0 : i32
    return %c0_i32, %arg0 : i32, i32
  }
  func.func @transform_4(%arg0: i32, %arg1: i32) -> (i32, i32) {
    %c0_i32 = arith.constant 0 : i32
    %c0_i32_0 = arith.constant 0 : i32
    return %c0_i32, %arg0 : i32, i32
  }
}

module attributes {stable_mosaic.version = 11 : i64} {
  func.func @_fused_conv_bn_kernel(%arg0: i32, %arg1: i32, %arg2: memref<128x128xbf16, #tpu.memory_space<vmem>>, %arg3: memref<128x128xbf16, #tpu.memory_space<vmem>>, %arg4: memref<1x128xf32, #tpu.memory_space<vmem>>, %arg5: memref<1x128xf32, #tpu.memory_space<vmem>>, %arg6: memref<128x128xbf16, #tpu.memory_space<vmem>>, %arg7: memref<128x128xf32, #tpu.memory_space<vmem>>) attributes {dimension_semantics = [#tpu.dimension_semantics<parallel>, #tpu.dimension_semantics<arbitrary>], iteration_bounds = array<i64: 1, 1>, scalar_prefetch = 0 : i64, scratch_operands = 1 : i64, tpu.core_type = #tpu.core_type<tc>, window_params = [{transform_indices = @transform_0, window_bounds = array<i64: 128, 128>}, {transform_indices = @transform_1, window_bounds = array<i64: 128, 128>}, {transform_indices = @transform_2, window_bounds = array<i64: 1, 128>}, {transform_indices = @transform_3, window_bounds = array<i64: 1, 128>}, {transform_indices = @transform_4, window_bounds = array<i64: 128, 128>}]} {
    %c0_i32 = arith.constant 0 : i32
    %0 = arith.cmpi eq, %arg1, %c0_i32 : i32
    %1 = arith.extui %0 : i1 to i32
    %c0_i32_0 = arith.constant 0 : i32
    %2 = arith.cmpi ne, %1, %c0_i32_0 : i32
    scf.if %2 {
      %cst_10 = arith.constant 0.000000e+00 : f32
      %12 = vector.broadcast %cst_10 : f32 to vector<128x128xf32>
      %c0_11 = arith.constant 0 : index
      %c0_12 = arith.constant 0 : index
      %13 = vector.load %arg7[%c0_11, %c0_12] : memref<128x128xf32, #tpu.memory_space<vmem>>, vector<128x128xf32>
      tpu.vector_store %arg7[%c0_11, %c0_12], %12 {strides = array<i32>} : memref<128x128xf32, #tpu.memory_space<vmem>>, vector<128x128xf32>,
    } else {
    }
    %c0 = arith.constant 0 : index
    %c0_1 = arith.constant 0 : index
    %3 = vector.load %arg7[%c0, %c0_1] : memref<128x128xf32, #tpu.memory_space<vmem>>, vector<128x128xf32>
    %c0_2 = arith.constant 0 : index
    %c0_3 = arith.constant 0 : index
    %4 = vector.load %arg2[%c0_2, %c0_3] : memref<128x128xbf16, #tpu.memory_space<vmem>>, vector<128x128xbf16>
    %c0_4 = arith.constant 0 : index
    %c0_5 = arith.constant 0 : index
    %5 = vector.load %arg3[%c0_4, %c0_5] : memref<128x128xbf16, #tpu.memory_space<vmem>>, vector<128x128xbf16>
    %cst = arith.constant dense<0.000000e+00> : vector<128x128xf32>
    %6 = tpu.matmul %4, %5, %cst {dimension_numbers = #tpu.dot_dimension_numbers<[1], [0], [0], [1], [0, 0, 1, 1], [], []>} : vector<128x128xbf16>, vector<128x128xbf16>, vector<128x128xf32> -> vector<128x128xf32>
    %7 = arith.addf %3, %6 : vector<128x128xf32>
    %c0_6 = arith.constant 0 : index
    %c0_7 = arith.constant 0 : index
    %8 = vector.load %arg7[%c0_6, %c0_7] : memref<128x128xf32, #tpu.memory_space<vmem>>, vector<128x128xf32>
    tpu.vector_store %arg7[%c0_6, %c0_7], %7 {strides = array<i32>} : memref<128x128xf32, #tpu.memory_space<vmem>>, vector<128x128xf32>,
    %c0_i32_8 = arith.constant 0 : i32
    %9 = arith.cmpi eq, %arg1, %c0_i32_8 : i32
    %10 = arith.extui %9 : i1 to i32
    %c0_i32_9 = arith.constant 0 : i32
    %11 = arith.cmpi ne, %10, %c0_i32_9 : i32
    scf.if %11 {
      %c0_10 = arith.constant 0 : index
      %c0_11 = arith.constant 0 : index
      %12 = vector.load %arg7[%c0_10, %c0_11] : memref<128x128xf32, #tpu.memory_space<vmem>>, vector<128x128xf32>
      %cst_12 = arith.constant dense<0.000000e+00> : vector<128xf32>
      %13 = vector.multi_reduction <add>, %12, %cst_12 [0] : vector<128x128xf32> to vector<128xf32>
      %14 = vector.shape_cast %13 : vector<128xf32> to vector<1x128xf32>
      %cst_13 = arith.constant 7.812500e-03 : f32
      %15 = vector.broadcast %cst_13 : f32 to vector<1x128xf32>
      %16 = arith.mulf %14, %15 : vector<1x128xf32>
      %17 = vector.broadcast %16 : vector<1x128xf32> to vector<128x128xf32>
      %18 = arith.subf %12, %17 : vector<128x128xf32>
      %19 = arith.mulf %18, %18 : vector<128x128xf32>
      %cst_14 = arith.constant dense<0.000000e+00> : vector<128xf32>
      %20 = vector.multi_reduction <add>, %19, %cst_14 [0] : vector<128x128xf32> to vector<128xf32>
      %21 = vector.shape_cast %20 : vector<128xf32> to vector<1x128xf32>
      %22 = arith.mulf %16, %16 : vector<1x128xf32>
      %cst_15 = arith.constant 0.000000e+00 : f32
      %23 = vector.broadcast %cst_15 : f32 to vector<1x128xf32>
      %24 = arith.mulf %23, %22 : vector<1x128xf32>
      %25 = arith.subf %21, %24 : vector<1x128xf32>
      %cst_16 = arith.constant 7.812500e-03 : f32
      %26 = vector.broadcast %cst_16 : f32 to vector<1x128xf32>
      %27 = arith.mulf %25, %26 : vector<1x128xf32>
      %cst_17 = arith.constant 0.000000e+00 : f32
      %28 = vector.broadcast %cst_17 : f32 to vector<1x128xf32>
      %29 = arith.maximumf %27, %28 : vector<1x128xf32>
      %cst_18 = arith.constant 9.99999974E-6 : f32
      %30 = vector.broadcast %cst_18 : f32 to vector<1x128xf32>
      %31 = arith.addf %29, %30 : vector<1x128xf32>
      %32 = math.rsqrt %31 : vector<1x128xf32>
      %c0_19 = arith.constant 0 : index
      %c0_20 = arith.constant 0 : index
      %33 = vector.load %arg4[%c0_19, %c0_20] : memref<1x128xf32, #tpu.memory_space<vmem>>, vector<1x128xf32>
      %34 = arith.mulf %33, %32 : vector<1x128xf32>
      %c0_21 = arith.constant 0 : index
      %c0_22 = arith.constant 0 : index
      %35 = vector.load %arg5[%c0_21, %c0_22] : memref<1x128xf32, #tpu.memory_space<vmem>>, vector<1x128xf32>
      %36 = arith.mulf %16, %34 : vector<1x128xf32>
      %37 = arith.subf %35, %36 : vector<1x128xf32>
      %38 = vector.broadcast %34 : vector<1x128xf32> to vector<128x128xf32>
      %39 = arith.mulf %12, %38 : vector<128x128xf32>
      %40 = vector.broadcast %37 : vector<1x128xf32> to vector<128x128xf32>
      %41 = arith.addf %39, %40 : vector<128x128xf32>
      %cst_23 = arith.constant 0.000000e+00 : f32
      %42 = vector.broadcast %cst_23 : f32 to vector<128x128xf32>
      %43 = arith.maximumf %41, %42 : vector<128x128xf32>
      %44 = arith.truncf %43 : vector<128x128xf32> to vector<128x128xbf16>
      %c0_24 = arith.constant 0 : index
      %c0_25 = arith.constant 0 : index
      %45 = vector.load %arg6[%c0_24, %c0_25] : memref<128x128xbf16, #tpu.memory_space<vmem>>, vector<128x128xbf16>
      tpu.vector_store %arg6[%c0_24, %c0_25], %44 {strides = array<i32>} : memref<128x128xbf16, #tpu.memory_space<vmem>>, vector<128x128xbf16>,
    } else {
    }
    return
  }
  func.func @transform_0(%arg0: i32, %arg1: i32) -> (i32, i32) {
    %c0_i32 = arith.constant 0 : i32
    %c0_i32_0 = arith.constant 0 : i32
    return %c0_i32, %arg1 : i32, i32
  }
  func.func @transform_1(%arg0: i32, %arg1: i32) -> (i32, i32) {
    %c0_i32 = arith.constant 0 : i32
    return %arg1, %arg0 : i32, i32
  }
  func.func @transform_2(%arg0: i32, %arg1: i32) -> (i32, i32) {
    %c0_i32 = arith.constant 0 : i32
    %c0_i32_0 = arith.constant 0 : i32
    return %c0_i32, %arg0 : i32, i32
  }
  func.func @transform_3(%arg0: i32, %arg1: i32) -> (i32, i32) {
    %c0_i32 = arith.constant 0 : i32
    %c0_i32_0 = arith.constant 0 : i32
    return %c0_i32, %arg0 : i32, i32
  }
  func.func @transform_4(%arg0: i32, %arg1: i32) -> (i32, i32) {
    %c0_i32 = arith.constant 0 : i32
    %c0_i32_0 = arith.constant 0 : i32
    return %c0_i32, %arg0 : i32, i32
  }
}

module attributes {stable_mosaic.version = 11 : i64} {
  func.func @_fused_conv_bn_kernel(%arg0: i32, %arg1: i32, %arg2: memref<32x128xbf16, #tpu.memory_space<vmem>>, %arg3: memref<128x128xbf16, #tpu.memory_space<vmem>>, %arg4: memref<1x128xf32, #tpu.memory_space<vmem>>, %arg5: memref<1x128xf32, #tpu.memory_space<vmem>>, %arg6: memref<32x128xbf16, #tpu.memory_space<vmem>>, %arg7: memref<32x128xf32, #tpu.memory_space<vmem>>) attributes {dimension_semantics = [#tpu.dimension_semantics<parallel>, #tpu.dimension_semantics<arbitrary>], iteration_bounds = array<i64: 1, 1>, scalar_prefetch = 0 : i64, scratch_operands = 1 : i64, tpu.core_type = #tpu.core_type<tc>, window_params = [{transform_indices = @transform_0, window_bounds = array<i64: 32, 128>}, {transform_indices = @transform_1, window_bounds = array<i64: 128, 128>}, {transform_indices = @transform_2, window_bounds = array<i64: 1, 128>}, {transform_indices = @transform_3, window_bounds = array<i64: 1, 128>}, {transform_indices = @transform_4, window_bounds = array<i64: 32, 128>}]} {
    %c0_i32 = arith.constant 0 : i32
    %0 = arith.cmpi eq, %arg1, %c0_i32 : i32
    %1 = arith.extui %0 : i1 to i32
    %c0_i32_0 = arith.constant 0 : i32
    %2 = arith.cmpi ne, %1, %c0_i32_0 : i32
    scf.if %2 {
      %cst_10 = arith.constant 0.000000e+00 : f32
      %12 = vector.broadcast %cst_10 : f32 to vector<32x128xf32>
      %c0_11 = arith.constant 0 : index
      %c0_12 = arith.constant 0 : index
      %13 = vector.load %arg7[%c0_11, %c0_12] : memref<32x128xf32, #tpu.memory_space<vmem>>, vector<32x128xf32>
      tpu.vector_store %arg7[%c0_11, %c0_12], %12 {strides = array<i32>} : memref<32x128xf32, #tpu.memory_space<vmem>>, vector<32x128xf32>,
    } else {
    }
    %c0 = arith.constant 0 : index
    %c0_1 = arith.constant 0 : index
    %3 = vector.load %arg7[%c0, %c0_1] : memref<32x128xf32, #tpu.memory_space<vmem>>, vector<32x128xf32>
    %c0_2 = arith.constant 0 : index
    %c0_3 = arith.constant 0 : index
    %4 = vector.load %arg2[%c0_2, %c0_3] : memref<32x128xbf16, #tpu.memory_space<vmem>>, vector<32x128xbf16>
    %c0_4 = arith.constant 0 : index
    %c0_5 = arith.constant 0 : index
    %5 = vector.load %arg3[%c0_4, %c0_5] : memref<128x128xbf16, #tpu.memory_space<vmem>>, vector<128x128xbf16>
    %cst = arith.constant dense<0.000000e+00> : vector<32x128xf32>
    %6 = tpu.matmul %4, %5, %cst {dimension_numbers = #tpu.dot_dimension_numbers<[1], [0], [0], [1], [0, 0, 1, 1], [], []>} : vector<32x128xbf16>, vector<128x128xbf16>, vector<32x128xf32> -> vector<32x128xf32>
    %7 = arith.addf %3, %6 : vector<32x128xf32>
    %c0_6 = arith.constant 0 : index
    %c0_7 = arith.constant 0 : index
    %8 = vector.load %arg7[%c0_6, %c0_7] : memref<32x128xf32, #tpu.memory_space<vmem>>, vector<32x128xf32>
    tpu.vector_store %arg7[%c0_6, %c0_7], %7 {strides = array<i32>} : memref<32x128xf32, #tpu.memory_space<vmem>>, vector<32x128xf32>,
    %c0_i32_8 = arith.constant 0 : i32
    %9 = arith.cmpi eq, %arg1, %c0_i32_8 : i32
    %10 = arith.extui %9 : i1 to i32
    %c0_i32_9 = arith.constant 0 : i32
    %11 = arith.cmpi ne, %10, %c0_i32_9 : i32
    scf.if %11 {
      %c0_10 = arith.constant 0 : index
      %c0_11 = arith.constant 0 : index
      %12 = vector.load %arg7[%c0_10, %c0_11] : memref<32x128xf32, #tpu.memory_space<vmem>>, vector<32x128xf32>
      %cst_12 = arith.constant dense<0.000000e+00> : vector<128xf32>
      %13 = vector.multi_reduction <add>, %12, %cst_12 [0] : vector<32x128xf32> to vector<128xf32>
      %14 = vector.shape_cast %13 : vector<128xf32> to vector<1x128xf32>
      %cst_13 = arith.constant 3.125000e-02 : f32
      %15 = vector.broadcast %cst_13 : f32 to vector<1x128xf32>
      %16 = arith.mulf %14, %15 : vector<1x128xf32>
      %17 = vector.broadcast %16 : vector<1x128xf32> to vector<32x128xf32>
      %18 = arith.subf %12, %17 : vector<32x128xf32>
      %19 = arith.mulf %18, %18 : vector<32x128xf32>
      %cst_14 = arith.constant dense<0.000000e+00> : vector<128xf32>
      %20 = vector.multi_reduction <add>, %19, %cst_14 [0] : vector<32x128xf32> to vector<128xf32>
      %21 = vector.shape_cast %20 : vector<128xf32> to vector<1x128xf32>
      %22 = arith.mulf %16, %16 : vector<1x128xf32>
      %cst_15 = arith.constant 0.000000e+00 : f32
      %23 = vector.broadcast %cst_15 : f32 to vector<1x128xf32>
      %24 = arith.mulf %23, %22 : vector<1x128xf32>
      %25 = arith.subf %21, %24 : vector<1x128xf32>
      %cst_16 = arith.constant 3.125000e-02 : f32
      %26 = vector.broadcast %cst_16 : f32 to vector<1x128xf32>
      %27 = arith.mulf %25, %26 : vector<1x128xf32>
      %cst_17 = arith.constant 0.000000e+00 : f32
      %28 = vector.broadcast %cst_17 : f32 to vector<1x128xf32>
      %29 = arith.maximumf %27, %28 : vector<1x128xf32>
      %cst_18 = arith.constant 9.99999974E-6 : f32
      %30 = vector.broadcast %cst_18 : f32 to vector<1x128xf32>
      %31 = arith.addf %29, %30 : vector<1x128xf32>
      %32 = math.rsqrt %31 : vector<1x128xf32>
      %c0_19 = arith.constant 0 : index
      %c0_20 = arith.constant 0 : index
      %33 = vector.load %arg4[%c0_19, %c0_20] : memref<1x128xf32, #tpu.memory_space<vmem>>, vector<1x128xf32>
      %34 = arith.mulf %33, %32 : vector<1x128xf32>
      %c0_21 = arith.constant 0 : index
      %c0_22 = arith.constant 0 : index
      %35 = vector.load %arg5[%c0_21, %c0_22] : memref<1x128xf32, #tpu.memory_space<vmem>>, vector<1x128xf32>
      %36 = arith.mulf %16, %34 : vector<1x128xf32>
      %37 = arith.subf %35, %36 : vector<1x128xf32>
      %38 = vector.broadcast %34 : vector<1x128xf32> to vector<32x128xf32>
      %39 = arith.mulf %12, %38 : vector<32x128xf32>
      %40 = vector.broadcast %37 : vector<1x128xf32> to vector<32x128xf32>
      %41 = arith.addf %39, %40 : vector<32x128xf32>
      %cst_23 = arith.constant 0.000000e+00 : f32
      %42 = vector.broadcast %cst_23 : f32 to vector<32x128xf32>
      %43 = arith.maximumf %41, %42 : vector<32x128xf32>
      %44 = arith.truncf %43 : vector<32x128xf32> to vector<32x128xbf16>
      %c0_24 = arith.constant 0 : index
      %c0_25 = arith.constant 0 : index
      %45 = vector.load %arg6[%c0_24, %c0_25] : memref<32x128xbf16, #tpu.memory_space<vmem>>, vector<32x128xbf16>
      tpu.vector_store %arg6[%c0_24, %c0_25], %44 {strides = array<i32>} : memref<32x128xbf16, #tpu.memory_space<vmem>>, vector<32x128xbf16>,
    } else {
    }
    return
  }
  func.func @transform_0(%arg0: i32, %arg1: i32) -> (i32, i32) {
    %c0_i32 = arith.constant 0 : i32
    %c0_i32_0 = arith.constant 0 : i32
    return %c0_i32, %arg1 : i32, i32
  }
  func.func @transform_1(%arg0: i32, %arg1: i32) -> (i32, i32) {
    %c0_i32 = arith.constant 0 : i32
    return %arg1, %arg0 : i32, i32
  }
  func.func @transform_2(%arg0: i32, %arg1: i32) -> (i32, i32) {
    %c0_i32 = arith.constant 0 : i32
    %c0_i32_0 = arith.constant 0 : i32
    return %c0_i32, %arg0 : i32, i32
  }
  func.func @transform_3(%arg0: i32, %arg1: i32) -> (i32, i32) {
    %c0_i32 = arith.constant 0 : i32
    %c0_i32_0 = arith.constant 0 : i32
    return %c0_i32, %arg0 : i32, i32
  }
  func.func @transform_4(%arg0: i32, %arg1: i32) -> (i32, i32) {
    %c0_i32 = arith.constant 0 : i32
    %c0_i32_0 = arith.constant 0 : i32
    return %c0_i32, %arg0 : i32, i32
  }
}

module attributes {stable_mosaic.version = 11 : i64} {
  func.func @_fused_conv_bn_kernel(%arg0: i32, %arg1: i32, %arg2: memref<32x128xbf16, #tpu.memory_space<vmem>>, %arg3: memref<128x128xbf16, #tpu.memory_space<vmem>>, %arg4: memref<1x128xf32, #tpu.memory_space<vmem>>, %arg5: memref<1x128xf32, #tpu.memory_space<vmem>>, %arg6: memref<32x128xbf16, #tpu.memory_space<vmem>>, %arg7: memref<32x128xf32, #tpu.memory_space<vmem>>) attributes {dimension_semantics = [#tpu.dimension_semantics<parallel>, #tpu.dimension_semantics<arbitrary>], iteration_bounds = array<i64: 1, 1>, scalar_prefetch = 0 : i64, scratch_operands = 1 : i64, tpu.core_type = #tpu.core_type<tc>, window_params = [{transform_indices = @transform_0, window_bounds = array<i64: 32, 128>}, {transform_indices = @transform_1, window_bounds = array<i64: 128, 128>}, {transform_indices = @transform_2, window_bounds = array<i64: 1, 128>}, {transform_indices = @transform_3, window_bounds = array<i64: 1, 128>}, {transform_indices = @transform_4, window_bounds = array<i64: 32, 128>}]} {
    %c0_i32 = arith.constant 0 : i32
    %0 = arith.cmpi eq, %arg1, %c0_i32 : i32
    %1 = arith.extui %0 : i1 to i32
    %c0_i32_0 = arith.constant 0 : i32
    %2 = arith.cmpi ne, %1, %c0_i32_0 : i32
    scf.if %2 {
      %cst_10 = arith.constant 0.000000e+00 : f32
      %12 = vector.broadcast %cst_10 : f32 to vector<32x128xf32>
      %c0_11 = arith.constant 0 : index
      %c0_12 = arith.constant 0 : index
      %13 = vector.load %arg7[%c0_11, %c0_12] : memref<32x128xf32, #tpu.memory_space<vmem>>, vector<32x128xf32>
      tpu.vector_store %arg7[%c0_11, %c0_12], %12 {strides = array<i32>} : memref<32x128xf32, #tpu.memory_space<vmem>>, vector<32x128xf32>,
    } else {
    }
    %c0 = arith.constant 0 : index
    %c0_1 = arith.constant 0 : index
    %3 = vector.load %arg7[%c0, %c0_1] : memref<32x128xf32, #tpu.memory_space<vmem>>, vector<32x128xf32>
    %c0_2 = arith.constant 0 : index
    %c0_3 = arith.constant 0 : index
    %4 = vector.load %arg2[%c0_2, %c0_3] : memref<32x128xbf16, #tpu.memory_space<vmem>>, vector<32x128xbf16>
    %c0_4 = arith.constant 0 : index
    %c0_5 = arith.constant 0 : index
    %5 = vector.load %arg3[%c0_4, %c0_5] : memref<128x128xbf16, #tpu.memory_space<vmem>>, vector<128x128xbf16>
    %cst = arith.constant dense<0.000000e+00> : vector<32x128xf32>
    %6 = tpu.matmul %4, %5, %cst {dimension_numbers = #tpu.dot_dimension_numbers<[1], [0], [0], [1], [0, 0, 1, 1], [], []>} : vector<32x128xbf16>, vector<128x128xbf16>, vector<32x128xf32> -> vector<32x128xf32>
    %7 = arith.addf %3, %6 : vector<32x128xf32>
    %c0_6 = arith.constant 0 : index
    %c0_7 = arith.constant 0 : index
    %8 = vector.load %arg7[%c0_6, %c0_7] : memref<32x128xf32, #tpu.memory_space<vmem>>, vector<32x128xf32>
    tpu.vector_store %arg7[%c0_6, %c0_7], %7 {strides = array<i32>} : memref<32x128xf32, #tpu.memory_space<vmem>>, vector<32x128xf32>,
    %c0_i32_8 = arith.constant 0 : i32
    %9 = arith.cmpi eq, %arg1, %c0_i32_8 : i32
    %10 = arith.extui %9 : i1 to i32
    %c0_i32_9 = arith.constant 0 : i32
    %11 = arith.cmpi ne, %10, %c0_i32_9 : i32
    scf.if %11 {
      %c0_10 = arith.constant 0 : index
      %c0_11 = arith.constant 0 : index
      %12 = vector.load %arg7[%c0_10, %c0_11] : memref<32x128xf32, #tpu.memory_space<vmem>>, vector<32x128xf32>
      %cst_12 = arith.constant dense<0.000000e+00> : vector<128xf32>
      %13 = vector.multi_reduction <add>, %12, %cst_12 [0] : vector<32x128xf32> to vector<128xf32>
      %14 = vector.shape_cast %13 : vector<128xf32> to vector<1x128xf32>
      %cst_13 = arith.constant 3.125000e-02 : f32
      %15 = vector.broadcast %cst_13 : f32 to vector<1x128xf32>
      %16 = arith.mulf %14, %15 : vector<1x128xf32>
      %17 = vector.broadcast %16 : vector<1x128xf32> to vector<32x128xf32>
      %18 = arith.subf %12, %17 : vector<32x128xf32>
      %19 = arith.mulf %18, %18 : vector<32x128xf32>
      %cst_14 = arith.constant dense<0.000000e+00> : vector<128xf32>
      %20 = vector.multi_reduction <add>, %19, %cst_14 [0] : vector<32x128xf32> to vector<128xf32>
      %21 = vector.shape_cast %20 : vector<128xf32> to vector<1x128xf32>
      %22 = arith.mulf %16, %16 : vector<1x128xf32>
      %cst_15 = arith.constant 0.000000e+00 : f32
      %23 = vector.broadcast %cst_15 : f32 to vector<1x128xf32>
      %24 = arith.mulf %23, %22 : vector<1x128xf32>
      %25 = arith.subf %21, %24 : vector<1x128xf32>
      %cst_16 = arith.constant 3.125000e-02 : f32
      %26 = vector.broadcast %cst_16 : f32 to vector<1x128xf32>
      %27 = arith.mulf %25, %26 : vector<1x128xf32>
      %cst_17 = arith.constant 0.000000e+00 : f32
      %28 = vector.broadcast %cst_17 : f32 to vector<1x128xf32>
      %29 = arith.maximumf %27, %28 : vector<1x128xf32>
      %cst_18 = arith.constant 9.99999974E-6 : f32
      %30 = vector.broadcast %cst_18 : f32 to vector<1x128xf32>
      %31 = arith.addf %29, %30 : vector<1x128xf32>
      %32 = math.rsqrt %31 : vector<1x128xf32>
      %c0_19 = arith.constant 0 : index
      %c0_20 = arith.constant 0 : index
      %33 = vector.load %arg4[%c0_19, %c0_20] : memref<1x128xf32, #tpu.memory_space<vmem>>, vector<1x128xf32>
      %34 = arith.mulf %33, %32 : vector<1x128xf32>
      %c0_21 = arith.constant 0 : index
      %c0_22 = arith.constant 0 : index
      %35 = vector.load %arg5[%c0_21, %c0_22] : memref<1x128xf32, #tpu.memory_space<vmem>>, vector<1x128xf32>
      %36 = arith.mulf %16, %34 : vector<1x128xf32>
      %37 = arith.subf %35, %36 : vector<1x128xf32>
      %38 = vector.broadcast %34 : vector<1x128xf32> to vector<32x128xf32>
      %39 = arith.mulf %12, %38 : vector<32x128xf32>
      %40 = vector.broadcast %37 : vector<1x128xf32> to vector<32x128xf32>
      %41 = arith.addf %39, %40 : vector<32x128xf32>
      %42 = arith.truncf %41 : vector<32x128xf32> to vector<32x128xbf16>
      %c0_23 = arith.constant 0 : index
      %c0_24 = arith.constant 0 : index
      %43 = vector.load %arg6[%c0_23, %c0_24] : memref<32x128xbf16, #tpu.memory_space<vmem>>, vector<32x128xbf16>
      tpu.vector_store %arg6[%c0_23, %c0_24], %42 {strides = array<i32>} : memref<32x128xbf16, #tpu.memory_space<vmem>>, vector<32x128xbf16>,
    } else {
    }
    return
  }
  func.func @transform_0(%arg0: i32, %arg1: i32) -> (i32, i32) {
    %c0_i32 = arith.constant 0 : i32
    %c0_i32_0 = arith.constant 0 : i32
    return %c0_i32, %arg1 : i32, i32
  }
  func.func @transform_1(%arg0: i32, %arg1: i32) -> (i32, i32) {
    %c0_i32 = arith.constant 0 : i32
    return %arg1, %arg0 : i32, i32
  }
  func.func @transform_2(%arg0: i32, %arg1: i32) -> (i32, i32) {
    %c0_i32 = arith.constant 0 : i32
    %c0_i32_0 = arith.constant 0 : i32
    return %c0_i32, %arg0 : i32, i32
  }
  func.func @transform_3(%arg0: i32, %arg1: i32) -> (i32, i32) {
    %c0_i32 = arith.constant 0 : i32
    %c0_i32_0 = arith.constant 0 : i32
    return %c0_i32, %arg0 : i32, i32
  }
  func.func @transform_4(%arg0: i32, %arg1: i32) -> (i32, i32) {
    %c0_i32 = arith.constant 0 : i32
    %c0_i32_0 = arith.constant 0 : i32
    return %c0_i32, %arg0 : i32, i32
  }
}

module attributes {stable_mosaic.version = 11 : i64} {
  func.func @_fused_conv_bn_kernel(%arg0: i32, %arg1: i32, %arg2: memref<32x256xbf16, #tpu.memory_space<vmem>>, %arg3: memref<256x128xbf16, #tpu.memory_space<vmem>>, %arg4: memref<1x128xf32, #tpu.memory_space<vmem>>, %arg5: memref<1x128xf32, #tpu.memory_space<vmem>>, %arg6: memref<32x128xbf16, #tpu.memory_space<vmem>>, %arg7: memref<32x128xbf16, #tpu.memory_space<vmem>>, %arg8: memref<32x128xf32, #tpu.memory_space<vmem>>) attributes {dimension_semantics = [#tpu.dimension_semantics<parallel>, #tpu.dimension_semantics<arbitrary>], iteration_bounds = array<i64: 1, 1>, scalar_prefetch = 0 : i64, scratch_operands = 1 : i64, tpu.core_type = #tpu.core_type<tc>, window_params = [{transform_indices = @transform_0, window_bounds = array<i64: 32, 256>}, {transform_indices = @transform_1, window_bounds = array<i64: 256, 128>}, {transform_indices = @transform_2, window_bounds = array<i64: 1, 128>}, {transform_indices = @transform_3, window_bounds = array<i64: 1, 128>}, {transform_indices = @transform_4, window_bounds = array<i64: 32, 128>}, {transform_indices = @transform_5, window_bounds = array<i64: 32, 128>}]} {
    %c0_i32 = arith.constant 0 : i32
    %0 = arith.cmpi eq, %arg1, %c0_i32 : i32
    %1 = arith.extui %0 : i1 to i32
    %c0_i32_0 = arith.constant 0 : i32
    %2 = arith.cmpi ne, %1, %c0_i32_0 : i32
    scf.if %2 {
      %cst_10 = arith.constant 0.000000e+00 : f32
      %12 = vector.broadcast %cst_10 : f32 to vector<32x128xf32>
      %c0_11 = arith.constant 0 : index
      %c0_12 = arith.constant 0 : index
      %13 = vector.load %arg8[%c0_11, %c0_12] : memref<32x128xf32, #tpu.memory_space<vmem>>, vector<32x128xf32>
      tpu.vector_store %arg8[%c0_11, %c0_12], %12 {strides = array<i32>} : memref<32x128xf32, #tpu.memory_space<vmem>>, vector<32x128xf32>,
    } else {
    }
    %c0 = arith.constant 0 : index
    %c0_1 = arith.constant 0 : index
    %3 = vector.load %arg8[%c0, %c0_1] : memref<32x128xf32, #tpu.memory_space<vmem>>, vector<32x128xf32>
    %c0_2 = arith.constant 0 : index
    %c0_3 = arith.constant 0 : index
    %4 = vector.load %arg2[%c0_2, %c0_3] : memref<32x256xbf16, #tpu.memory_space<vmem>>, vector<32x256xbf16>
    %c0_4 = arith.constant 0 : index
    %c0_5 = arith.constant 0 : index
    %5 = vector.load %arg3[%c0_4, %c0_5] : memref<256x128xbf16, #tpu.memory_space<vmem>>, vector<256x128xbf16>
    %cst = arith.constant dense<0.000000e+00> : vector<32x128xf32>
    %6 = tpu.matmul %4, %5, %cst {dimension_numbers = #tpu.dot_dimension_numbers<[1], [0], [0], [1], [0, 0, 1, 1], [], []>} : vector<32x256xbf16>, vector<256x128xbf16>, vector<32x128xf32> -> vector<32x128xf32>
    %7 = arith.addf %3, %6 : vector<32x128xf32>
    %c0_6 = arith.constant 0 : index
    %c0_7 = arith.constant 0 : index
    %8 = vector.load %arg8[%c0_6, %c0_7] : memref<32x128xf32, #tpu.memory_space<vmem>>, vector<32x128xf32>
    tpu.vector_store %arg8[%c0_6, %c0_7], %7 {strides = array<i32>} : memref<32x128xf32, #tpu.memory_space<vmem>>, vector<32x128xf32>,
    %c0_i32_8 = arith.constant 0 : i32
    %9 = arith.cmpi eq, %arg1, %c0_i32_8 : i32
    %10 = arith.extui %9 : i1 to i32
    %c0_i32_9 = arith.constant 0 : i32
    %11 = arith.cmpi ne, %10, %c0_i32_9 : i32
    scf.if %11 {
      %c0_10 = arith.constant 0 : index
      %c0_11 = arith.constant 0 : index
      %12 = vector.load %arg8[%c0_10, %c0_11] : memref<32x128xf32, #tpu.memory_space<vmem>>, vector<32x128xf32>
      %cst_12 = arith.constant dense<0.000000e+00> : vector<128xf32>
      %13 = vector.multi_reduction <add>, %12, %cst_12 [0] : vector<32x128xf32> to vector<128xf32>
      %14 = vector.shape_cast %13 : vector<128xf32> to vector<1x128xf32>
      %cst_13 = arith.constant 3.125000e-02 : f32
      %15 = vector.broadcast %cst_13 : f32 to vector<1x128xf32>
      %16 = arith.mulf %14, %15 : vector<1x128xf32>
      %17 = vector.broadcast %16 : vector<1x128xf32> to vector<32x128xf32>
      %18 = arith.subf %12, %17 : vector<32x128xf32>
      %19 = arith.mulf %18, %18 : vector<32x128xf32>
      %cst_14 = arith.constant dense<0.000000e+00> : vector<128xf32>
      %20 = vector.multi_reduction <add>, %19, %cst_14 [0] : vector<32x128xf32> to vector<128xf32>
      %21 = vector.shape_cast %20 : vector<128xf32> to vector<1x128xf32>
      %22 = arith.mulf %16, %16 : vector<1x128xf32>
      %cst_15 = arith.constant 0.000000e+00 : f32
      %23 = vector.broadcast %cst_15 : f32 to vector<1x128xf32>
      %24 = arith.mulf %23, %22 : vector<1x128xf32>
      %25 = arith.subf %21, %24 : vector<1x128xf32>
      %cst_16 = arith.constant 3.125000e-02 : f32
      %26 = vector.broadcast %cst_16 : f32 to vector<1x128xf32>
      %27 = arith.mulf %25, %26 : vector<1x128xf32>
      %cst_17 = arith.constant 0.000000e+00 : f32
      %28 = vector.broadcast %cst_17 : f32 to vector<1x128xf32>
      %29 = arith.maximumf %27, %28 : vector<1x128xf32>
      %cst_18 = arith.constant 9.99999974E-6 : f32
      %30 = vector.broadcast %cst_18 : f32 to vector<1x128xf32>
      %31 = arith.addf %29, %30 : vector<1x128xf32>
      %32 = math.rsqrt %31 : vector<1x128xf32>
      %c0_19 = arith.constant 0 : index
      %c0_20 = arith.constant 0 : index
      %33 = vector.load %arg4[%c0_19, %c0_20] : memref<1x128xf32, #tpu.memory_space<vmem>>, vector<1x128xf32>
      %34 = arith.mulf %33, %32 : vector<1x128xf32>
      %c0_21 = arith.constant 0 : index
      %c0_22 = arith.constant 0 : index
      %35 = vector.load %arg5[%c0_21, %c0_22] : memref<1x128xf32, #tpu.memory_space<vmem>>, vector<1x128xf32>
      %36 = arith.mulf %16, %34 : vector<1x128xf32>
      %37 = arith.subf %35, %36 : vector<1x128xf32>
      %38 = vector.broadcast %34 : vector<1x128xf32> to vector<32x128xf32>
      %39 = arith.mulf %12, %38 : vector<32x128xf32>
      %40 = vector.broadcast %37 : vector<1x128xf32> to vector<32x128xf32>
      %41 = arith.addf %39, %40 : vector<32x128xf32>
      %c0_23 = arith.constant 0 : index
      %c0_24 = arith.constant 0 : index
      %42 = vector.load %arg6[%c0_23, %c0_24] : memref<32x128xbf16, #tpu.memory_space<vmem>>, vector<32x128xbf16>
      %43 = arith.extf %42 : vector<32x128xbf16> to vector<32x128xf32>
      %44 = arith.addf %41, %43 : vector<32x128xf32>
      %cst_25 = arith.constant 0.000000e+00 : f32
      %45 = vector.broadcast %cst_25 : f32 to vector<32x128xf32>
      %46 = arith.maximumf %44, %45 : vector<32x128xf32>
      %47 = arith.truncf %46 : vector<32x128xf32> to vector<32x128xbf16>
      %c0_26 = arith.constant 0 : index
      %c0_27 = arith.constant 0 : index
      %48 = vector.load %arg7[%c0_26, %c0_27] : memref<32x128xbf16, #tpu.memory_space<vmem>>, vector<32x128xbf16>
      tpu.vector_store %arg7[%c0_26, %c0_27], %47 {strides = array<i32>} : memref<32x128xbf16, #tpu.memory_space<vmem>>, vector<32x128xbf16>,
    } else {
    }
    return
  }
  func.func @transform_0(%arg0: i32, %arg1: i32) -> (i32, i32) {
    %c0_i32 = arith.constant 0 : i32
    %c0_i32_0 = arith.constant 0 : i32
    return %c0_i32, %arg1 : i32, i32
  }
  func.func @transform_1(%arg0: i32, %arg1: i32) -> (i32, i32) {
    %c0_i32 = arith.constant 0 : i32
    return %arg1, %arg0 : i32, i32
  }
  func.func @transform_2(%arg0: i32, %arg1: i32) -> (i32, i32) {
    %c0_i32 = arith.constant 0 : i32
    %c0_i32_0 = arith.constant 0 : i32
    return %c0_i32, %arg0 : i32, i32
  }
  func.func @transform_3(%arg0: i32, %arg1: i32) -> (i32, i32) {
    %c0_i32 = arith.constant 0 : i32
    %c0_i32_0 = arith.constant 0 : i32
    return %c0_i32, %arg0 : i32, i32
  }
  func.func @transform_4(%arg0: i32, %arg1: i32) -> (i32, i32) {
    %c0_i32 = arith.constant 0 : i32
    %c0_i32_0 = arith.constant 0 : i32
    return %c0_i32, %arg0 : i32, i32
  }
  func.func @transform_5(%arg0: i32, %arg1: i32) -> (i32, i32) {
    %c0_i32 = arith.constant 0 : i32
    %c0_i32_0 = arith.constant 0 : i32
    return %c0_i32, %arg0 : i32, i32
  }
}

module attributes {stable_mosaic.version = 11 : i64} {
  func.func @_fused_conv_bn_kernel(%arg0: i32, %arg1: i32, %arg2: memref<8x256xbf16, #tpu.memory_space<vmem>>, %arg3: memref<256x128xbf16, #tpu.memory_space<vmem>>, %arg4: memref<1x128xf32, #tpu.memory_space<vmem>>, %arg5: memref<1x128xf32, #tpu.memory_space<vmem>>, %arg6: memref<8x128xbf16, #tpu.memory_space<vmem>>, %arg7: memref<8x128xf32, #tpu.memory_space<vmem>>) attributes {dimension_semantics = [#tpu.dimension_semantics<parallel>, #tpu.dimension_semantics<arbitrary>], iteration_bounds = array<i64: 1, 1>, scalar_prefetch = 0 : i64, scratch_operands = 1 : i64, tpu.core_type = #tpu.core_type<tc>, window_params = [{transform_indices = @transform_0, window_bounds = array<i64: 8, 256>}, {transform_indices = @transform_1, window_bounds = array<i64: 256, 128>}, {transform_indices = @transform_2, window_bounds = array<i64: 1, 128>}, {transform_indices = @transform_3, window_bounds = array<i64: 1, 128>}, {transform_indices = @transform_4, window_bounds = array<i64: 8, 128>}]} {
    %c0_i32 = arith.constant 0 : i32
    %0 = arith.cmpi eq, %arg1, %c0_i32 : i32
    %1 = arith.extui %0 : i1 to i32
    %c0_i32_0 = arith.constant 0 : i32
    %2 = arith.cmpi ne, %1, %c0_i32_0 : i32
    scf.if %2 {
      %cst_10 = arith.constant 0.000000e+00 : f32
      %12 = vector.broadcast %cst_10 : f32 to vector<8x128xf32>
      %c0_11 = arith.constant 0 : index
      %c0_12 = arith.constant 0 : index
      %13 = vector.load %arg7[%c0_11, %c0_12] : memref<8x128xf32, #tpu.memory_space<vmem>>, vector<8x128xf32>
      tpu.vector_store %arg7[%c0_11, %c0_12], %12 {strides = array<i32>} : memref<8x128xf32, #tpu.memory_space<vmem>>, vector<8x128xf32>,
    } else {
    }
    %c0 = arith.constant 0 : index
    %c0_1 = arith.constant 0 : index
    %3 = vector.load %arg7[%c0, %c0_1] : memref<8x128xf32, #tpu.memory_space<vmem>>, vector<8x128xf32>
    %c0_2 = arith.constant 0 : index
    %c0_3 = arith.constant 0 : index
    %4 = vector.load %arg2[%c0_2, %c0_3] : memref<8x256xbf16, #tpu.memory_space<vmem>>, vector<8x256xbf16>
    %c0_4 = arith.constant 0 : index
    %c0_5 = arith.constant 0 : index
    %5 = vector.load %arg3[%c0_4, %c0_5] : memref<256x128xbf16, #tpu.memory_space<vmem>>, vector<256x128xbf16>
    %cst = arith.constant dense<0.000000e+00> : vector<8x128xf32>
    %6 = tpu.matmul %4, %5, %cst {dimension_numbers = #tpu.dot_dimension_numbers<[1], [0], [0], [1], [0, 0, 1, 1], [], []>} : vector<8x256xbf16>, vector<256x128xbf16>, vector<8x128xf32> -> vector<8x128xf32>
    %7 = arith.addf %3, %6 : vector<8x128xf32>
    %c0_6 = arith.constant 0 : index
    %c0_7 = arith.constant 0 : index
    %8 = vector.load %arg7[%c0_6, %c0_7] : memref<8x128xf32, #tpu.memory_space<vmem>>, vector<8x128xf32>
    tpu.vector_store %arg7[%c0_6, %c0_7], %7 {strides = array<i32>} : memref<8x128xf32, #tpu.memory_space<vmem>>, vector<8x128xf32>,
    %c0_i32_8 = arith.constant 0 : i32
    %9 = arith.cmpi eq, %arg1, %c0_i32_8 : i32
    %10 = arith.extui %9 : i1 to i32
    %c0_i32_9 = arith.constant 0 : i32
    %11 = arith.cmpi ne, %10, %c0_i32_9 : i32
    scf.if %11 {
      %c0_10 = arith.constant 0 : index
      %c0_11 = arith.constant 0 : index
      %12 = vector.load %arg7[%c0_10, %c0_11] : memref<8x128xf32, #tpu.memory_space<vmem>>, vector<8x128xf32>
      %cst_12 = arith.constant dense<0.000000e+00> : vector<128xf32>
      %13 = vector.multi_reduction <add>, %12, %cst_12 [0] : vector<8x128xf32> to vector<128xf32>
      %14 = vector.shape_cast %13 : vector<128xf32> to vector<1x128xf32>
      %cst_13 = arith.constant 1.250000e-01 : f32
      %15 = vector.broadcast %cst_13 : f32 to vector<1x128xf32>
      %16 = arith.mulf %14, %15 : vector<1x128xf32>
      %17 = vector.broadcast %16 : vector<1x128xf32> to vector<8x128xf32>
      %18 = arith.subf %12, %17 : vector<8x128xf32>
      %19 = arith.mulf %18, %18 : vector<8x128xf32>
      %cst_14 = arith.constant dense<0.000000e+00> : vector<128xf32>
      %20 = vector.multi_reduction <add>, %19, %cst_14 [0] : vector<8x128xf32> to vector<128xf32>
      %21 = vector.shape_cast %20 : vector<128xf32> to vector<1x128xf32>
      %22 = arith.mulf %16, %16 : vector<1x128xf32>
      %cst_15 = arith.constant 0.000000e+00 : f32
      %23 = vector.broadcast %cst_15 : f32 to vector<1x128xf32>
      %24 = arith.mulf %23, %22 : vector<1x128xf32>
      %25 = arith.subf %21, %24 : vector<1x128xf32>
      %cst_16 = arith.constant 1.250000e-01 : f32
      %26 = vector.broadcast %cst_16 : f32 to vector<1x128xf32>
      %27 = arith.mulf %25, %26 : vector<1x128xf32>
      %cst_17 = arith.constant 0.000000e+00 : f32
      %28 = vector.broadcast %cst_17 : f32 to vector<1x128xf32>
      %29 = arith.maximumf %27, %28 : vector<1x128xf32>
      %cst_18 = arith.constant 9.99999974E-6 : f32
      %30 = vector.broadcast %cst_18 : f32 to vector<1x128xf32>
      %31 = arith.addf %29, %30 : vector<1x128xf32>
      %32 = math.rsqrt %31 : vector<1x128xf32>
      %c0_19 = arith.constant 0 : index
      %c0_20 = arith.constant 0 : index
      %33 = vector.load %arg4[%c0_19, %c0_20] : memref<1x128xf32, #tpu.memory_space<vmem>>, vector<1x128xf32>
      %34 = arith.mulf %33, %32 : vector<1x128xf32>
      %c0_21 = arith.constant 0 : index
      %c0_22 = arith.constant 0 : index
      %35 = vector.load %arg5[%c0_21, %c0_22] : memref<1x128xf32, #tpu.memory_space<vmem>>, vector<1x128xf32>
      %36 = arith.mulf %16, %34 : vector<1x128xf32>
      %37 = arith.subf %35, %36 : vector<1x128xf32>
      %38 = vector.broadcast %34 : vector<1x128xf32> to vector<8x128xf32>
      %39 = arith.mulf %12, %38 : vector<8x128xf32>
      %40 = vector.broadcast %37 : vector<1x128xf32> to vector<8x128xf32>
      %41 = arith.addf %39, %40 : vector<8x128xf32>
      %cst_23 = arith.constant 0.000000e+00 : f32
      %42 = vector.broadcast %cst_23 : f32 to vector<8x128xf32>
      %43 = arith.maximumf %41, %42 : vector<8x128xf32>
      %44 = arith.truncf %43 : vector<8x128xf32> to vector<8x128xbf16>
      %c0_24 = arith.constant 0 : index
      %c0_25 = arith.constant 0 : index
      %45 = vector.load %arg6[%c0_24, %c0_25] : memref<8x128xbf16, #tpu.memory_space<vmem>>, vector<8x128xbf16>
      tpu.vector_store %arg6[%c0_24, %c0_25], %44 {strides = array<i32>} : memref<8x128xbf16, #tpu.memory_space<vmem>>, vector<8x128xbf16>,
    } else {
    }
    return
  }
  func.func @transform_0(%arg0: i32, %arg1: i32) -> (i32, i32) {
    %c0_i32 = arith.constant 0 : i32
    %c0_i32_0 = arith.constant 0 : i32
    return %c0_i32, %arg1 : i32, i32
  }
  func.func @transform_1(%arg0: i32, %arg1: i32) -> (i32, i32) {
    %c0_i32 = arith.constant 0 : i32
    return %arg1, %arg0 : i32, i32
  }
  func.func @transform_2(%arg0: i32, %arg1: i32) -> (i32, i32) {
    %c0_i32 = arith.constant 0 : i32
    %c0_i32_0 = arith.constant 0 : i32
    return %c0_i32, %arg0 : i32, i32
  }
  func.func @transform_3(%arg0: i32, %arg1: i32) -> (i32, i32) {
    %c0_i32 = arith.constant 0 : i32
    %c0_i32_0 = arith.constant 0 : i32
    return %c0_i32, %arg0 : i32, i32
  }
  func.func @transform_4(%arg0: i32, %arg1: i32) -> (i32, i32) {
    %c0_i32 = arith.constant 0 : i32
    %c0_i32_0 = arith.constant 0 : i32
    return %c0_i32, %arg0 : i32, i32
  }
}

module attributes {stable_mosaic.version = 11 : i64} {
  func.func @_fused_conv_bn_kernel(%arg0: i32, %arg1: i32, %arg2: memref<8x128xbf16, #tpu.memory_space<vmem>>, %arg3: memref<128x128xbf16, #tpu.memory_space<vmem>>, %arg4: memref<1x128xf32, #tpu.memory_space<vmem>>, %arg5: memref<1x128xf32, #tpu.memory_space<vmem>>, %arg6: memref<8x128xbf16, #tpu.memory_space<vmem>>, %arg7: memref<8x128xf32, #tpu.memory_space<vmem>>) attributes {dimension_semantics = [#tpu.dimension_semantics<parallel>, #tpu.dimension_semantics<arbitrary>], iteration_bounds = array<i64: 1, 1>, scalar_prefetch = 0 : i64, scratch_operands = 1 : i64, tpu.core_type = #tpu.core_type<tc>, window_params = [{transform_indices = @transform_0, window_bounds = array<i64: 8, 128>}, {transform_indices = @transform_1, window_bounds = array<i64: 128, 128>}, {transform_indices = @transform_2, window_bounds = array<i64: 1, 128>}, {transform_indices = @transform_3, window_bounds = array<i64: 1, 128>}, {transform_indices = @transform_4, window_bounds = array<i64: 8, 128>}]} {
    %c0_i32 = arith.constant 0 : i32
    %0 = arith.cmpi eq, %arg1, %c0_i32 : i32
    %1 = arith.extui %0 : i1 to i32
    %c0_i32_0 = arith.constant 0 : i32
    %2 = arith.cmpi ne, %1, %c0_i32_0 : i32
    scf.if %2 {
      %cst_10 = arith.constant 0.000000e+00 : f32
      %12 = vector.broadcast %cst_10 : f32 to vector<8x128xf32>
      %c0_11 = arith.constant 0 : index
      %c0_12 = arith.constant 0 : index
      %13 = vector.load %arg7[%c0_11, %c0_12] : memref<8x128xf32, #tpu.memory_space<vmem>>, vector<8x128xf32>
      tpu.vector_store %arg7[%c0_11, %c0_12], %12 {strides = array<i32>} : memref<8x128xf32, #tpu.memory_space<vmem>>, vector<8x128xf32>,
    } else {
    }
    %c0 = arith.constant 0 : index
    %c0_1 = arith.constant 0 : index
    %3 = vector.load %arg7[%c0, %c0_1] : memref<8x128xf32, #tpu.memory_space<vmem>>, vector<8x128xf32>
    %c0_2 = arith.constant 0 : index
    %c0_3 = arith.constant 0 : index
    %4 = vector.load %arg2[%c0_2, %c0_3] : memref<8x128xbf16, #tpu.memory_space<vmem>>, vector<8x128xbf16>
    %c0_4 = arith.constant 0 : index
    %c0_5 = arith.constant 0 : index
    %5 = vector.load %arg3[%c0_4, %c0_5] : memref<128x128xbf16, #tpu.memory_space<vmem>>, vector<128x128xbf16>
    %cst = arith.constant dense<0.000000e+00> : vector<8x128xf32>
    %6 = tpu.matmul %4, %5, %cst {dimension_numbers = #tpu.dot_dimension_numbers<[1], [0], [0], [1], [0, 0, 1, 1], [], []>} : vector<8x128xbf16>, vector<128x128xbf16>, vector<8x128xf32> -> vector<8x128xf32>
    %7 = arith.addf %3, %6 : vector<8x128xf32>
    %c0_6 = arith.constant 0 : index
    %c0_7 = arith.constant 0 : index
    %8 = vector.load %arg7[%c0_6, %c0_7] : memref<8x128xf32, #tpu.memory_space<vmem>>, vector<8x128xf32>
    tpu.vector_store %arg7[%c0_6, %c0_7], %7 {strides = array<i32>} : memref<8x128xf32, #tpu.memory_space<vmem>>, vector<8x128xf32>,
    %c0_i32_8 = arith.constant 0 : i32
    %9 = arith.cmpi eq, %arg1, %c0_i32_8 : i32
    %10 = arith.extui %9 : i1 to i32
    %c0_i32_9 = arith.constant 0 : i32
    %11 = arith.cmpi ne, %10, %c0_i32_9 : i32
    scf.if %11 {
      %c0_10 = arith.constant 0 : index
      %c0_11 = arith.constant 0 : index
      %12 = vector.load %arg7[%c0_10, %c0_11] : memref<8x128xf32, #tpu.memory_space<vmem>>, vector<8x128xf32>
      %cst_12 = arith.constant dense<0.000000e+00> : vector<128xf32>
      %13 = vector.multi_reduction <add>, %12, %cst_12 [0] : vector<8x128xf32> to vector<128xf32>
      %14 = vector.shape_cast %13 : vector<128xf32> to vector<1x128xf32>
      %cst_13 = arith.constant 1.250000e-01 : f32
      %15 = vector.broadcast %cst_13 : f32 to vector<1x128xf32>
      %16 = arith.mulf %14, %15 : vector<1x128xf32>
      %17 = vector.broadcast %16 : vector<1x128xf32> to vector<8x128xf32>
      %18 = arith.subf %12, %17 : vector<8x128xf32>
      %19 = arith.mulf %18, %18 : vector<8x128xf32>
      %cst_14 = arith.constant dense<0.000000e+00> : vector<128xf32>
      %20 = vector.multi_reduction <add>, %19, %cst_14 [0] : vector<8x128xf32> to vector<128xf32>
      %21 = vector.shape_cast %20 : vector<128xf32> to vector<1x128xf32>
      %22 = arith.mulf %16, %16 : vector<1x128xf32>
      %cst_15 = arith.constant 0.000000e+00 : f32
      %23 = vector.broadcast %cst_15 : f32 to vector<1x128xf32>
      %24 = arith.mulf %23, %22 : vector<1x128xf32>
      %25 = arith.subf %21, %24 : vector<1x128xf32>
      %cst_16 = arith.constant 1.250000e-01 : f32
      %26 = vector.broadcast %cst_16 : f32 to vector<1x128xf32>
      %27 = arith.mulf %25, %26 : vector<1x128xf32>
      %cst_17 = arith.constant 0.000000e+00 : f32
      %28 = vector.broadcast %cst_17 : f32 to vector<1x128xf32>
      %29 = arith.maximumf %27, %28 : vector<1x128xf32>
      %cst_18 = arith.constant 9.99999974E-6 : f32
      %30 = vector.broadcast %cst_18 : f32 to vector<1x128xf32>
      %31 = arith.addf %29, %30 : vector<1x128xf32>
      %32 = math.rsqrt %31 : vector<1x128xf32>
      %c0_19 = arith.constant 0 : index
      %c0_20 = arith.constant 0 : index
      %33 = vector.load %arg4[%c0_19, %c0_20] : memref<1x128xf32, #tpu.memory_space<vmem>>, vector<1x128xf32>
      %34 = arith.mulf %33, %32 : vector<1x128xf32>
      %c0_21 = arith.constant 0 : index
      %c0_22 = arith.constant 0 : index
      %35 = vector.load %arg5[%c0_21, %c0_22] : memref<1x128xf32, #tpu.memory_space<vmem>>, vector<1x128xf32>
      %36 = arith.mulf %16, %34 : vector<1x128xf32>
      %37 = arith.subf %35, %36 : vector<1x128xf32>
      %38 = vector.broadcast %34 : vector<1x128xf32> to vector<8x128xf32>
      %39 = arith.mulf %12, %38 : vector<8x128xf32>
      %40 = vector.broadcast %37 : vector<1x128xf32> to vector<8x128xf32>
      %41 = arith.addf %39, %40 : vector<8x128xf32>
      %42 = arith.truncf %41 : vector<8x128xf32> to vector<8x128xbf16>
      %c0_23 = arith.constant 0 : index
      %c0_24 = arith.constant 0 : index
      %43 = vector.load %arg6[%c0_23, %c0_24] : memref<8x128xbf16, #tpu.memory_space<vmem>>, vector<8x128xbf16>
      tpu.vector_store %arg6[%c0_23, %c0_24], %42 {strides = array<i32>} : memref<8x128xbf16, #tpu.memory_space<vmem>>, vector<8x128xbf16>,
    } else {
    }
    return
  }
  func.func @transform_0(%arg0: i32, %arg1: i32) -> (i32, i32) {
    %c0_i32 = arith.constant 0 : i32
    %c0_i32_0 = arith.constant 0 : i32
    return %c0_i32, %arg1 : i32, i32
  }
  func.func @transform_1(%arg0: i32, %arg1: i32) -> (i32, i32) {
    %c0_i32 = arith.constant 0 : i32
    return %arg1, %arg0 : i32, i32
  }
  func.func @transform_2(%arg0: i32, %arg1: i32) -> (i32, i32) {
    %c0_i32 = arith.constant 0 : i32
    %c0_i32_0 = arith.constant 0 : i32
    return %c0_i32, %arg0 : i32, i32
  }
  func.func @transform_3(%arg0: i32, %arg1: i32) -> (i32, i32) {
    %c0_i32 = arith.constant 0 : i32
    %c0_i32_0 = arith.constant 0 : i32
    return %c0_i32, %arg0 : i32, i32
  }
  func.func @transform_4(%arg0: i32, %arg1: i32) -> (i32, i32) {
    %c0_i32 = arith.constant 0 : i32
    %c0_i32_0 = arith.constant 0 : i32
    return %c0_i32, %arg0 : i32, i32
  }
}

module attributes {stable_mosaic.version = 11 : i64} {
  func.func @_fused_conv_bn_kernel(%arg0: i32, %arg1: i32, %arg2: memref<8x256xbf16, #tpu.memory_space<vmem>>, %arg3: memref<256x128xbf16, #tpu.memory_space<vmem>>, %arg4: memref<1x128xf32, #tpu.memory_space<vmem>>, %arg5: memref<1x128xf32, #tpu.memory_space<vmem>>, %arg6: memref<8x128xbf16, #tpu.memory_space<vmem>>, %arg7: memref<8x128xbf16, #tpu.memory_space<vmem>>, %arg8: memref<8x128xf32, #tpu.memory_space<vmem>>) attributes {dimension_semantics = [#tpu.dimension_semantics<parallel>, #tpu.dimension_semantics<arbitrary>], iteration_bounds = array<i64: 1, 1>, scalar_prefetch = 0 : i64, scratch_operands = 1 : i64, tpu.core_type = #tpu.core_type<tc>, window_params = [{transform_indices = @transform_0, window_bounds = array<i64: 8, 256>}, {transform_indices = @transform_1, window_bounds = array<i64: 256, 128>}, {transform_indices = @transform_2, window_bounds = array<i64: 1, 128>}, {transform_indices = @transform_3, window_bounds = array<i64: 1, 128>}, {transform_indices = @transform_4, window_bounds = array<i64: 8, 128>}, {transform_indices = @transform_5, window_bounds = array<i64: 8, 128>}]} {
    %c0_i32 = arith.constant 0 : i32
    %0 = arith.cmpi eq, %arg1, %c0_i32 : i32
    %1 = arith.extui %0 : i1 to i32
    %c0_i32_0 = arith.constant 0 : i32
    %2 = arith.cmpi ne, %1, %c0_i32_0 : i32
    scf.if %2 {
      %cst_10 = arith.constant 0.000000e+00 : f32
      %12 = vector.broadcast %cst_10 : f32 to vector<8x128xf32>
      %c0_11 = arith.constant 0 : index
      %c0_12 = arith.constant 0 : index
      %13 = vector.load %arg8[%c0_11, %c0_12] : memref<8x128xf32, #tpu.memory_space<vmem>>, vector<8x128xf32>
      tpu.vector_store %arg8[%c0_11, %c0_12], %12 {strides = array<i32>} : memref<8x128xf32, #tpu.memory_space<vmem>>, vector<8x128xf32>,
    } else {
    }
    %c0 = arith.constant 0 : index
    %c0_1 = arith.constant 0 : index
    %3 = vector.load %arg8[%c0, %c0_1] : memref<8x128xf32, #tpu.memory_space<vmem>>, vector<8x128xf32>
    %c0_2 = arith.constant 0 : index
    %c0_3 = arith.constant 0 : index
    %4 = vector.load %arg2[%c0_2, %c0_3] : memref<8x256xbf16, #tpu.memory_space<vmem>>, vector<8x256xbf16>
    %c0_4 = arith.constant 0 : index
    %c0_5 = arith.constant 0 : index
    %5 = vector.load %arg3[%c0_4, %c0_5] : memref<256x128xbf16, #tpu.memory_space<vmem>>, vector<256x128xbf16>
    %cst = arith.constant dense<0.000000e+00> : vector<8x128xf32>
    %6 = tpu.matmul %4, %5, %cst {dimension_numbers = #tpu.dot_dimension_numbers<[1], [0], [0], [1], [0, 0, 1, 1], [], []>} : vector<8x256xbf16>, vector<256x128xbf16>, vector<8x128xf32> -> vector<8x128xf32>
    %7 = arith.addf %3, %6 : vector<8x128xf32>
    %c0_6 = arith.constant 0 : index
    %c0_7 = arith.constant 0 : index
    %8 = vector.load %arg8[%c0_6, %c0_7] : memref<8x128xf32, #tpu.memory_space<vmem>>, vector<8x128xf32>
    tpu.vector_store %arg8[%c0_6, %c0_7], %7 {strides = array<i32>} : memref<8x128xf32, #tpu.memory_space<vmem>>, vector<8x128xf32>,
    %c0_i32_8 = arith.constant 0 : i32
    %9 = arith.cmpi eq, %arg1, %c0_i32_8 : i32
    %10 = arith.extui %9 : i1 to i32
    %c0_i32_9 = arith.constant 0 : i32
    %11 = arith.cmpi ne, %10, %c0_i32_9 : i32
    scf.if %11 {
      %c0_10 = arith.constant 0 : index
      %c0_11 = arith.constant 0 : index
      %12 = vector.load %arg8[%c0_10, %c0_11] : memref<8x128xf32, #tpu.memory_space<vmem>>, vector<8x128xf32>
      %cst_12 = arith.constant dense<0.000000e+00> : vector<128xf32>
      %13 = vector.multi_reduction <add>, %12, %cst_12 [0] : vector<8x128xf32> to vector<128xf32>
      %14 = vector.shape_cast %13 : vector<128xf32> to vector<1x128xf32>
      %cst_13 = arith.constant 1.250000e-01 : f32
      %15 = vector.broadcast %cst_13 : f32 to vector<1x128xf32>
      %16 = arith.mulf %14, %15 : vector<1x128xf32>
      %17 = vector.broadcast %16 : vector<1x128xf32> to vector<8x128xf32>
      %18 = arith.subf %12, %17 : vector<8x128xf32>
      %19 = arith.mulf %18, %18 : vector<8x128xf32>
      %cst_14 = arith.constant dense<0.000000e+00> : vector<128xf32>
      %20 = vector.multi_reduction <add>, %19, %cst_14 [0] : vector<8x128xf32> to vector<128xf32>
      %21 = vector.shape_cast %20 : vector<128xf32> to vector<1x128xf32>
      %22 = arith.mulf %16, %16 : vector<1x128xf32>
      %cst_15 = arith.constant 0.000000e+00 : f32
      %23 = vector.broadcast %cst_15 : f32 to vector<1x128xf32>
      %24 = arith.mulf %23, %22 : vector<1x128xf32>
      %25 = arith.subf %21, %24 : vector<1x128xf32>
      %cst_16 = arith.constant 1.250000e-01 : f32
      %26 = vector.broadcast %cst_16 : f32 to vector<1x128xf32>
      %27 = arith.mulf %25, %26 : vector<1x128xf32>
      %cst_17 = arith.constant 0.000000e+00 : f32
      %28 = vector.broadcast %cst_17 : f32 to vector<1x128xf32>
      %29 = arith.maximumf %27, %28 : vector<1x128xf32>
      %cst_18 = arith.constant 9.99999974E-6 : f32
      %30 = vector.broadcast %cst_18 : f32 to vector<1x128xf32>
      %31 = arith.addf %29, %30 : vector<1x128xf32>
      %32 = math.rsqrt %31 : vector<1x128xf32>
      %c0_19 = arith.constant 0 : index
      %c0_20 = arith.constant 0 : index
      %33 = vector.load %arg4[%c0_19, %c0_20] : memref<1x128xf32, #tpu.memory_space<vmem>>, vector<1x128xf32>
      %34 = arith.mulf %33, %32 : vector<1x128xf32>
      %c0_21 = arith.constant 0 : index
      %c0_22 = arith.constant 0 : index
      %35 = vector.load %arg5[%c0_21, %c0_22] : memref<1x128xf32, #tpu.memory_space<vmem>>, vector<1x128xf32>
      %36 = arith.mulf %16, %34 : vector<1x128xf32>
      %37 = arith.subf %35, %36 : vector<1x128xf32>
      %38 = vector.broadcast %34 : vector<1x128xf32> to vector<8x128xf32>
      %39 = arith.mulf %12, %38 : vector<8x128xf32>
      %40 = vector.broadcast %37 : vector<1x128xf32> to vector<8x128xf32>
      %41 = arith.addf %39, %40 : vector<8x128xf32>
      %c0_23 = arith.constant 0 : index
      %c0_24 = arith.constant 0 : index
      %42 = vector.load %arg6[%c0_23, %c0_24] : memref<8x128xbf16, #tpu.memory_space<vmem>>, vector<8x128xbf16>
      %43 = arith.extf %42 : vector<8x128xbf16> to vector<8x128xf32>
      %44 = arith.addf %41, %43 : vector<8x128xf32>
      %cst_25 = arith.constant 0.000000e+00 : f32
      %45 = vector.broadcast %cst_25 : f32 to vector<8x128xf32>
      %46 = arith.maximumf %44, %45 : vector<8x128xf32>
      %47 = arith.truncf %46 : vector<8x128xf32> to vector<8x128xbf16>
      %c0_26 = arith.constant 0 : index
      %c0_27 = arith.constant 0 : index
      %48 = vector.load %arg7[%c0_26, %c0_27] : memref<8x128xbf16, #tpu.memory_space<vmem>>, vector<8x128xbf16>
      tpu.vector_store %arg7[%c0_26, %c0_27], %47 {strides = array<i32>} : memref<8x128xbf16, #tpu.memory_space<vmem>>, vector<8x128xbf16>,
    } else {
    }
    return
  }
  func.func @transform_0(%arg0: i32, %arg1: i32) -> (i32, i32) {
    %c0_i32 = arith.constant 0 : i32
    %c0_i32_0 = arith.constant 0 : i32
    return %c0_i32, %arg1 : i32, i32
  }
  func.func @transform_1(%arg0: i32, %arg1: i32) -> (i32, i32) {
    %c0_i32 = arith.constant 0 : i32
    return %arg1, %arg0 : i32, i32
  }
  func.func @transform_2(%arg0: i32, %arg1: i32) -> (i32, i32) {
    %c0_i32 = arith.constant 0 : i32
    %c0_i32_0 = arith.constant 0 : i32
    return %c0_i32, %arg0 : i32, i32
  }
  func.func @transform_3(%arg0: i32, %arg1: i32) -> (i32, i32) {
    %c0_i32 = arith.constant 0 : i32
    %c0_i32_0 = arith.constant 0 : i32
    return %c0_i32, %arg0 : i32, i32
  }
  func.func @transform_4(%arg0: i32, %arg1: i32) -> (i32, i32) {
    %c0_i32 = arith.constant 0 : i32
    %c0_i32_0 = arith.constant 0 : i32
    return %c0_i32, %arg0 : i32, i32
  }
  func.func @transform_5(%arg0: i32, %arg1: i32) -> (i32, i32) {
    %c0_i32 = arith.constant 0 : i32
    %c0_i32_0 = arith.constant 0 : i32
    return %c0_i32, %arg0 : i32, i32
  }
}

module attributes {stable_mosaic.version = 11 : i64} {
  func.func @_fused_conv_bn_kernel(%arg0: i32, %arg1: i32, %arg2: memref<8x384xbf16, #tpu.memory_space<vmem>>, %arg3: memref<384x128xbf16, #tpu.memory_space<vmem>>, %arg4: memref<1x128xf32, #tpu.memory_space<vmem>>, %arg5: memref<1x128xf32, #tpu.memory_space<vmem>>, %arg6: memref<8x128xbf16, #tpu.memory_space<vmem>>, %arg7: memref<8x128xbf16, #tpu.memory_space<vmem>>, %arg8: memref<8x128xf32, #tpu.memory_space<vmem>>) attributes {dimension_semantics = [#tpu.dimension_semantics<parallel>, #tpu.dimension_semantics<arbitrary>], iteration_bounds = array<i64: 1, 1>, scalar_prefetch = 0 : i64, scratch_operands = 1 : i64, tpu.core_type = #tpu.core_type<tc>, window_params = [{transform_indices = @transform_0, window_bounds = array<i64: 8, 384>}, {transform_indices = @transform_1, window_bounds = array<i64: 384, 128>}, {transform_indices = @transform_2, window_bounds = array<i64: 1, 128>}, {transform_indices = @transform_3, window_bounds = array<i64: 1, 128>}, {transform_indices = @transform_4, window_bounds = array<i64: 8, 128>}, {transform_indices = @transform_5, window_bounds = array<i64: 8, 128>}]} {
    %c0_i32 = arith.constant 0 : i32
    %0 = arith.cmpi eq, %arg1, %c0_i32 : i32
    %1 = arith.extui %0 : i1 to i32
    %c0_i32_0 = arith.constant 0 : i32
    %2 = arith.cmpi ne, %1, %c0_i32_0 : i32
    scf.if %2 {
      %cst_10 = arith.constant 0.000000e+00 : f32
      %12 = vector.broadcast %cst_10 : f32 to vector<8x128xf32>
      %c0_11 = arith.constant 0 : index
      %c0_12 = arith.constant 0 : index
      %13 = vector.load %arg8[%c0_11, %c0_12] : memref<8x128xf32, #tpu.memory_space<vmem>>, vector<8x128xf32>
      tpu.vector_store %arg8[%c0_11, %c0_12], %12 {strides = array<i32>} : memref<8x128xf32, #tpu.memory_space<vmem>>, vector<8x128xf32>,
    } else {
    }
    %c0 = arith.constant 0 : index
    %c0_1 = arith.constant 0 : index
    %3 = vector.load %arg8[%c0, %c0_1] : memref<8x128xf32, #tpu.memory_space<vmem>>, vector<8x128xf32>
    %c0_2 = arith.constant 0 : index
    %c0_3 = arith.constant 0 : index
    %4 = vector.load %arg2[%c0_2, %c0_3] : memref<8x384xbf16, #tpu.memory_space<vmem>>, vector<8x384xbf16>
    %c0_4 = arith.constant 0 : index
    %c0_5 = arith.constant 0 : index
    %5 = vector.load %arg3[%c0_4, %c0_5] : memref<384x128xbf16, #tpu.memory_space<vmem>>, vector<384x128xbf16>
    %cst = arith.constant dense<0.000000e+00> : vector<8x128xf32>
    %6 = tpu.matmul %4, %5, %cst {dimension_numbers = #tpu.dot_dimension_numbers<[1], [0], [0], [1], [0, 0, 1, 1], [], []>} : vector<8x384xbf16>, vector<384x128xbf16>, vector<8x128xf32> -> vector<8x128xf32>
    %7 = arith.addf %3, %6 : vector<8x128xf32>
    %c0_6 = arith.constant 0 : index
    %c0_7 = arith.constant 0 : index
    %8 = vector.load %arg8[%c0_6, %c0_7] : memref<8x128xf32, #tpu.memory_space<vmem>>, vector<8x128xf32>
    tpu.vector_store %arg8[%c0_6, %c0_7], %7 {strides = array<i32>} : memref<8x128xf32, #tpu.memory_space<vmem>>, vector<8x128xf32>,
    %c0_i32_8 = arith.constant 0 : i32
    %9 = arith.cmpi eq, %arg1, %c0_i32_8 : i32
    %10 = arith.extui %9 : i1 to i32
    %c0_i32_9 = arith.constant 0 : i32
    %11 = arith.cmpi ne, %10, %c0_i32_9 : i32
    scf.if %11 {
      %c0_10 = arith.constant 0 : index
      %c0_11 = arith.constant 0 : index
      %12 = vector.load %arg8[%c0_10, %c0_11] : memref<8x128xf32, #tpu.memory_space<vmem>>, vector<8x128xf32>
      %cst_12 = arith.constant dense<0.000000e+00> : vector<128xf32>
      %13 = vector.multi_reduction <add>, %12, %cst_12 [0] : vector<8x128xf32> to vector<128xf32>
      %14 = vector.shape_cast %13 : vector<128xf32> to vector<1x128xf32>
      %cst_13 = arith.constant 1.250000e-01 : f32
      %15 = vector.broadcast %cst_13 : f32 to vector<1x128xf32>
      %16 = arith.mulf %14, %15 : vector<1x128xf32>
      %17 = vector.broadcast %16 : vector<1x128xf32> to vector<8x128xf32>
      %18 = arith.subf %12, %17 : vector<8x128xf32>
      %19 = arith.mulf %18, %18 : vector<8x128xf32>
      %cst_14 = arith.constant dense<0.000000e+00> : vector<128xf32>
      %20 = vector.multi_reduction <add>, %19, %cst_14 [0] : vector<8x128xf32> to vector<128xf32>
      %21 = vector.shape_cast %20 : vector<128xf32> to vector<1x128xf32>
      %22 = arith.mulf %16, %16 : vector<1x128xf32>
      %cst_15 = arith.constant 0.000000e+00 : f32
      %23 = vector.broadcast %cst_15 : f32 to vector<1x128xf32>
      %24 = arith.mulf %23, %22 : vector<1x128xf32>
      %25 = arith.subf %21, %24 : vector<1x128xf32>
      %cst_16 = arith.constant 1.250000e-01 : f32
      %26 = vector.broadcast %cst_16 : f32 to vector<1x128xf32>
      %27 = arith.mulf %25, %26 : vector<1x128xf32>
      %cst_17 = arith.constant 0.000000e+00 : f32
      %28 = vector.broadcast %cst_17 : f32 to vector<1x128xf32>
      %29 = arith.maximumf %27, %28 : vector<1x128xf32>
      %cst_18 = arith.constant 9.99999974E-6 : f32
      %30 = vector.broadcast %cst_18 : f32 to vector<1x128xf32>
      %31 = arith.addf %29, %30 : vector<1x128xf32>
      %32 = math.rsqrt %31 : vector<1x128xf32>
      %c0_19 = arith.constant 0 : index
      %c0_20 = arith.constant 0 : index
      %33 = vector.load %arg4[%c0_19, %c0_20] : memref<1x128xf32, #tpu.memory_space<vmem>>, vector<1x128xf32>
      %34 = arith.mulf %33, %32 : vector<1x128xf32>
      %c0_21 = arith.constant 0 : index
      %c0_22 = arith.constant 0 : index
      %35 = vector.load %arg5[%c0_21, %c0_22] : memref<1x128xf32, #tpu.memory_space<vmem>>, vector<1x128xf32>
      %36 = arith.mulf %16, %34 : vector<1x128xf32>
      %37 = arith.subf %35, %36 : vector<1x128xf32>
      %38 = vector.broadcast %34 : vector<1x128xf32> to vector<8x128xf32>
      %39 = arith.mulf %12, %38 : vector<8x128xf32>
      %40 = vector.broadcast %37 : vector<1x128xf32> to vector<8x128xf32>
      %41 = arith.addf %39, %40 : vector<8x128xf32>
      %c0_23 = arith.constant 0 : index
      %c0_24 = arith.constant 0 : index
      %42 = vector.load %arg6[%c0_23, %c0_24] : memref<8x128xbf16, #tpu.memory_space<vmem>>, vector<8x128xbf16>
      %43 = arith.extf %42 : vector<8x128xbf16> to vector<8x128xf32>
      %44 = arith.addf %41, %43 : vector<8x128xf32>
      %cst_25 = arith.constant 0.000000e+00 : f32
      %45 = vector.broadcast %cst_25 : f32 to vector<8x128xf32>
      %46 = arith.maximumf %44, %45 : vector<8x128xf32>
      %47 = arith.truncf %46 : vector<8x128xf32> to vector<8x128xbf16>
      %c0_26 = arith.constant 0 : index
      %c0_27 = arith.constant 0 : index
      %48 = vector.load %arg7[%c0_26, %c0_27] : memref<8x128xbf16, #tpu.memory_space<vmem>>, vector<8x128xbf16>
      tpu.vector_store %arg7[%c0_26, %c0_27], %47 {strides = array<i32>} : memref<8x128xbf16, #tpu.memory_space<vmem>>, vector<8x128xbf16>,
    } else {
    }
    return
  }
  func.func @transform_0(%arg0: i32, %arg1: i32) -> (i32, i32) {
    %c0_i32 = arith.constant 0 : i32
    %c0_i32_0 = arith.constant 0 : i32
    return %c0_i32, %arg1 : i32, i32
  }
  func.func @transform_1(%arg0: i32, %arg1: i32) -> (i32, i32) {
    %c0_i32 = arith.constant 0 : i32
    return %arg1, %arg0 : i32, i32
  }
  func.func @transform_2(%arg0: i32, %arg1: i32) -> (i32, i32) {
    %c0_i32 = arith.constant 0 : i32
    %c0_i32_0 = arith.constant 0 : i32
    return %c0_i32, %arg0 : i32, i32
  }
  func.func @transform_3(%arg0: i32, %arg1: i32) -> (i32, i32) {
    %c0_i32 = arith.constant 0 : i32
    %c0_i32_0 = arith.constant 0 : i32
    return %c0_i32, %arg0 : i32, i32
  }
  func.func @transform_4(%arg0: i32, %arg1: i32) -> (i32, i32) {
    %c0_i32 = arith.constant 0 : i32
    %c0_i32_0 = arith.constant 0 : i32
    return %c0_i32, %arg0 : i32, i32
  }
  func.func @transform_5(%arg0: i32, %arg1: i32) -> (i32, i32) {
    %c0_i32 = arith.constant 0 : i32
    %c0_i32_0 = arith.constant 0 : i32
    return %c0_i32, %arg0 : i32, i32
  }
}

module attributes {stable_mosaic.version = 11 : i64} {
  func.func @_fused_conv_bn_kernel(%arg0: i32, %arg1: i32, %arg2: memref<8x384xbf16, #tpu.memory_space<vmem>>, %arg3: memref<384x128xbf16, #tpu.memory_space<vmem>>, %arg4: memref<1x128xf32, #tpu.memory_space<vmem>>, %arg5: memref<1x128xf32, #tpu.memory_space<vmem>>, %arg6: memref<8x128xbf16, #tpu.memory_space<vmem>>, %arg7: memref<8x128xf32, #tpu.memory_space<vmem>>) attributes {dimension_semantics = [#tpu.dimension_semantics<parallel>, #tpu.dimension_semantics<arbitrary>], iteration_bounds = array<i64: 1, 1>, scalar_prefetch = 0 : i64, scratch_operands = 1 : i64, tpu.core_type = #tpu.core_type<tc>, window_params = [{transform_indices = @transform_0, window_bounds = array<i64: 8, 384>}, {transform_indices = @transform_1, window_bounds = array<i64: 384, 128>}, {transform_indices = @transform_2, window_bounds = array<i64: 1, 128>}, {transform_indices = @transform_3, window_bounds = array<i64: 1, 128>}, {transform_indices = @transform_4, window_bounds = array<i64: 8, 128>}]} {
    %c0_i32 = arith.constant 0 : i32
    %0 = arith.cmpi eq, %arg1, %c0_i32 : i32
    %1 = arith.extui %0 : i1 to i32
    %c0_i32_0 = arith.constant 0 : i32
    %2 = arith.cmpi ne, %1, %c0_i32_0 : i32
    scf.if %2 {
      %cst_10 = arith.constant 0.000000e+00 : f32
      %12 = vector.broadcast %cst_10 : f32 to vector<8x128xf32>
      %c0_11 = arith.constant 0 : index
      %c0_12 = arith.constant 0 : index
      %13 = vector.load %arg7[%c0_11, %c0_12] : memref<8x128xf32, #tpu.memory_space<vmem>>, vector<8x128xf32>
      tpu.vector_store %arg7[%c0_11, %c0_12], %12 {strides = array<i32>} : memref<8x128xf32, #tpu.memory_space<vmem>>, vector<8x128xf32>,
    } else {
    }
    %c0 = arith.constant 0 : index
    %c0_1 = arith.constant 0 : index
    %3 = vector.load %arg7[%c0, %c0_1] : memref<8x128xf32, #tpu.memory_space<vmem>>, vector<8x128xf32>
    %c0_2 = arith.constant 0 : index
    %c0_3 = arith.constant 0 : index
    %4 = vector.load %arg2[%c0_2, %c0_3] : memref<8x384xbf16, #tpu.memory_space<vmem>>, vector<8x384xbf16>
    %c0_4 = arith.constant 0 : index
    %c0_5 = arith.constant 0 : index
    %5 = vector.load %arg3[%c0_4, %c0_5] : memref<384x128xbf16, #tpu.memory_space<vmem>>, vector<384x128xbf16>
    %cst = arith.constant dense<0.000000e+00> : vector<8x128xf32>
    %6 = tpu.matmul %4, %5, %cst {dimension_numbers = #tpu.dot_dimension_numbers<[1], [0], [0], [1], [0, 0, 1, 1], [], []>} : vector<8x384xbf16>, vector<384x128xbf16>, vector<8x128xf32> -> vector<8x128xf32>
    %7 = arith.addf %3, %6 : vector<8x128xf32>
    %c0_6 = arith.constant 0 : index
    %c0_7 = arith.constant 0 : index
    %8 = vector.load %arg7[%c0_6, %c0_7] : memref<8x128xf32, #tpu.memory_space<vmem>>, vector<8x128xf32>
    tpu.vector_store %arg7[%c0_6, %c0_7], %7 {strides = array<i32>} : memref<8x128xf32, #tpu.memory_space<vmem>>, vector<8x128xf32>,
    %c0_i32_8 = arith.constant 0 : i32
    %9 = arith.cmpi eq, %arg1, %c0_i32_8 : i32
    %10 = arith.extui %9 : i1 to i32
    %c0_i32_9 = arith.constant 0 : i32
    %11 = arith.cmpi ne, %10, %c0_i32_9 : i32
    scf.if %11 {
      %c0_10 = arith.constant 0 : index
      %c0_11 = arith.constant 0 : index
      %12 = vector.load %arg7[%c0_10, %c0_11] : memref<8x128xf32, #tpu.memory_space<vmem>>, vector<8x128xf32>
      %cst_12 = arith.constant dense<0.000000e+00> : vector<128xf32>
      %13 = vector.multi_reduction <add>, %12, %cst_12 [0] : vector<8x128xf32> to vector<128xf32>
      %14 = vector.shape_cast %13 : vector<128xf32> to vector<1x128xf32>
      %cst_13 = arith.constant 1.250000e-01 : f32
      %15 = vector.broadcast %cst_13 : f32 to vector<1x128xf32>
      %16 = arith.mulf %14, %15 : vector<1x128xf32>
      %17 = vector.broadcast %16 : vector<1x128xf32> to vector<8x128xf32>
      %18 = arith.subf %12, %17 : vector<8x128xf32>
      %19 = arith.mulf %18, %18 : vector<8x128xf32>
      %cst_14 = arith.constant dense<0.000000e+00> : vector<128xf32>
      %20 = vector.multi_reduction <add>, %19, %cst_14 [0] : vector<8x128xf32> to vector<128xf32>
      %21 = vector.shape_cast %20 : vector<128xf32> to vector<1x128xf32>
      %22 = arith.mulf %16, %16 : vector<1x128xf32>
      %cst_15 = arith.constant 0.000000e+00 : f32
      %23 = vector.broadcast %cst_15 : f32 to vector<1x128xf32>
      %24 = arith.mulf %23, %22 : vector<1x128xf32>
      %25 = arith.subf %21, %24 : vector<1x128xf32>
      %cst_16 = arith.constant 1.250000e-01 : f32
      %26 = vector.broadcast %cst_16 : f32 to vector<1x128xf32>
      %27 = arith.mulf %25, %26 : vector<1x128xf32>
      %cst_17 = arith.constant 0.000000e+00 : f32
      %28 = vector.broadcast %cst_17 : f32 to vector<1x128xf32>
      %29 = arith.maximumf %27, %28 : vector<1x128xf32>
      %cst_18 = arith.constant 9.99999974E-6 : f32
      %30 = vector.broadcast %cst_18 : f32 to vector<1x128xf32>
      %31 = arith.addf %29, %30 : vector<1x128xf32>
      %32 = math.rsqrt %31 : vector<1x128xf32>
      %c0_19 = arith.constant 0 : index
      %c0_20 = arith.constant 0 : index
      %33 = vector.load %arg4[%c0_19, %c0_20] : memref<1x128xf32, #tpu.memory_space<vmem>>, vector<1x128xf32>
      %34 = arith.mulf %33, %32 : vector<1x128xf32>
      %c0_21 = arith.constant 0 : index
      %c0_22 = arith.constant 0 : index
      %35 = vector.load %arg5[%c0_21, %c0_22] : memref<1x128xf32, #tpu.memory_space<vmem>>, vector<1x128xf32>
      %36 = arith.mulf %16, %34 : vector<1x128xf32>
      %37 = arith.subf %35, %36 : vector<1x128xf32>
      %38 = vector.broadcast %34 : vector<1x128xf32> to vector<8x128xf32>
      %39 = arith.mulf %12, %38 : vector<8x128xf32>
      %40 = vector.broadcast %37 : vector<1x128xf32> to vector<8x128xf32>
      %41 = arith.addf %39, %40 : vector<8x128xf32>
      %cst_23 = arith.constant 0.000000e+00 : f32
      %42 = vector.broadcast %cst_23 : f32 to vector<8x128xf32>
      %43 = arith.maximumf %41, %42 : vector<8x128xf32>
      %44 = arith.truncf %43 : vector<8x128xf32> to vector<8x128xbf16>
      %c0_24 = arith.constant 0 : index
      %c0_25 = arith.constant 0 : index
      %45 = vector.load %arg6[%c0_24, %c0_25] : memref<8x128xbf16, #tpu.memory_space<vmem>>, vector<8x128xbf16>
      tpu.vector_store %arg6[%c0_24, %c0_25], %44 {strides = array<i32>} : memref<8x128xbf16, #tpu.memory_space<vmem>>, vector<8x128xbf16>,
    } else {
    }
    return
  }
  func.func @transform_0(%arg0: i32, %arg1: i32) -> (i32, i32) {
    %c0_i32 = arith.constant 0 : i32
    %c0_i32_0 = arith.constant 0 : i32
    return %c0_i32, %arg1 : i32, i32
  }
  func.func @transform_1(%arg0: i32, %arg1: i32) -> (i32, i32) {
    %c0_i32 = arith.constant 0 : i32
    return %arg1, %arg0 : i32, i32
  }
  func.func @transform_2(%arg0: i32, %arg1: i32) -> (i32, i32) {
    %c0_i32 = arith.constant 0 : i32
    %c0_i32_0 = arith.constant 0 : i32
    return %c0_i32, %arg0 : i32, i32
  }
  func.func @transform_3(%arg0: i32, %arg1: i32) -> (i32, i32) {
    %c0_i32 = arith.constant 0 : i32
    %c0_i32_0 = arith.constant 0 : i32
    return %c0_i32, %arg0 : i32, i32
  }
  func.func @transform_4(%arg0: i32, %arg1: i32) -> (i32, i32) {
    %c0_i32 = arith.constant 0 : i32
    %c0_i32_0 = arith.constant 0 : i32
    return %c0_i32, %arg0 : i32, i32
  }
}

module attributes {stable_mosaic.version = 11 : i64} {
  func.func @_head_kernel(%arg0: i32, %arg1: memref<2x4x128xbf16, #tpu.memory_space<vmem>>, %arg2: memref<128x128xf32, #tpu.memory_space<vmem>>, %arg3: memref<1x128xf32, #tpu.memory_space<vmem>>, %arg4: memref<2x128xf32, #tpu.memory_space<vmem>>) attributes {dimension_semantics = [#tpu.dimension_semantics<arbitrary>], iteration_bounds = array<i64: 1>, scalar_prefetch = 0 : i64, scratch_operands = 0 : i64, tpu.core_type = #tpu.core_type<tc>, window_params = [{pipeline_mode = #tpu.pipeline_mode<synchronous>, transform_indices = @transform_0, window_bounds = array<i64: 2, 4, 128>}, {pipeline_mode = #tpu.pipeline_mode<synchronous>, transform_indices = @transform_1, window_bounds = array<i64: 128, 128>}, {pipeline_mode = #tpu.pipeline_mode<synchronous>, transform_indices = @transform_2, window_bounds = array<i64: 1, 128>}, {pipeline_mode = #tpu.pipeline_mode<synchronous>, transform_indices = @transform_3, window_bounds = array<i64: 2, 128>}]} {
    %c0 = arith.constant 0 : index
    %c0_0 = arith.constant 0 : index
    %c0_1 = arith.constant 0 : index
    %0 = vector.load %arg1[%c0, %c0_0, %c0_1] : memref<2x4x128xbf16, #tpu.memory_space<vmem>>, vector<2x4x128xbf16>
    %1 = arith.extf %0 : vector<2x4x128xbf16> to vector<2x4x128xf32>
    %cst = arith.constant dense<0.000000e+00> : vector<2x128xf32>
    %2 = vector.multi_reduction <add>, %1, %cst [1] : vector<2x4x128xf32> to vector<2x128xf32>
    %cst_2 = arith.constant 4.000000e+00 : f32
    %3 = vector.broadcast %cst_2 : f32 to vector<2x128xf32>
    %4 = arith.divf %2, %3 : vector<2x128xf32>
    %c0_3 = arith.constant 0 : index
    %c0_4 = arith.constant 0 : index
    %5 = vector.load %arg2[%c0_3, %c0_4] : memref<128x128xf32, #tpu.memory_space<vmem>>, vector<128x128xf32>
    %cst_5 = arith.constant dense<0.000000e+00> : vector<2x128xf32>
    %6 = tpu.matmul %4, %5, %cst_5 {dimension_numbers = #tpu.dot_dimension_numbers<[1], [0], [0], [1], [0, 0, 1, 1], [], []>} : vector<2x128xf32>, vector<128x128xf32>, vector<2x128xf32> -> vector<2x128xf32>
    %c0_6 = arith.constant 0 : index
    %c0_7 = arith.constant 0 : index
    %7 = vector.load %arg3[%c0_6, %c0_7] : memref<1x128xf32, #tpu.memory_space<vmem>>, vector<1x128xf32>
    %8 = vector.broadcast %7 : vector<1x128xf32> to vector<2x128xf32>
    %9 = arith.addf %6, %8 : vector<2x128xf32>
    %c0_8 = arith.constant 0 : index
    %c0_9 = arith.constant 0 : index
    %10 = vector.load %arg4[%c0_8, %c0_9] : memref<2x128xf32, #tpu.memory_space<vmem>>, vector<2x128xf32>
    tpu.vector_store %arg4[%c0_8, %c0_9], %9 {strides = array<i32>} : memref<2x128xf32, #tpu.memory_space<vmem>>, vector<2x128xf32>,
    return
  }
  func.func @transform_0(%arg0: i32) -> (i32, i32, i32) {
    %c0_i32 = arith.constant 0 : i32
    %c0_i32_0 = arith.constant 0 : i32
    %c0_i32_1 = arith.constant 0 : i32
    %c0_i32_2 = arith.constant 0 : i32
    return %c0_i32, %c0_i32_0, %c0_i32_1 : i32, i32, i32
  }
  func.func @transform_1(%arg0: i32) -> (i32, i32) {
    %c0_i32 = arith.constant 0 : i32
    %c0_i32_0 = arith.constant 0 : i32
    %c0_i32_1 = arith.constant 0 : i32
    return %c0_i32, %c0_i32_0 : i32, i32
  }
  func.func @transform_2(%arg0: i32) -> (i32, i32) {
    %c0_i32 = arith.constant 0 : i32
    %c0_i32_0 = arith.constant 0 : i32
    %c0_i32_1 = arith.constant 0 : i32
    return %c0_i32, %c0_i32_0 : i32, i32
  }
  func.func @transform_3(%arg0: i32) -> (i32, i32) {
    %c0_i32 = arith.constant 0 : i32
    %c0_i32_0 = arith.constant 0 : i32
    %c0_i32_1 = arith.constant 0 : i32
    return %c0_i32, %c0_i32_0 : i32, i32
  }
}

</mosaic_0001>

<llo_original>
// kernel: _lambda_.17
$region0: #{_lambda_.17}
  #allocation0 [shape = 'u32[]', space=smem, size = 0x4, offset = 0x4, fixed_abs, tag = 'smem constant byte address 0x4 - core index']
  #allocation1 [shape = 'u32[72,128]{1,0:T(1,128)}', space=vmem, size = 0x9000, scoped, tag = 'internal scratch']
  #allocation2 [shape = 'f32[512,128]{1,0:T(8,128)}', space=vmem, size = 0x40000, scoped, tag = 'scratch operand']
  %s0 = inlined_call_operand.vmem [shape: bf16[512,256], index: 0, kind: input, shape index: {}]
  %s1 = inlined_call_operand.vmem [shape: bf16[256,128], index: 1, kind: input, shape index: {}]
  %s2 = inlined_call_operand.vmem [shape: f32[1,128], index: 2, kind: input, shape index: {}]
  %s3 = inlined_call_operand.vmem [shape: f32[1,128], index: 3, kind: input, shape index: {}]
  %s4 = inlined_call_operand.vmem [shape: bf16[512,128], index: 4, kind: output, shape index: {}]
  %s5 = sld [smem:[#allocation0]]
  $region34: #{_lambda_.17} parent=0
    _
  %s7 = ssub.s32 1, %s5
  %s8 = scalar_select 0, %s7, %s5
  // Predicated region
  $region2: #{_lambda_.17} parent=0 // pred_check
    _
  $region3: #{_lambda_.17} parent=0 // pred_check_branch
    %10 = sbr.rel (0) target = $region5
  $region4: #{_lambda_.17} parent=0 // pred_region
    _
  $region5: #{_lambda_.17} parent=0 // pred_fallthru
    _
  // Predicated region
  $region6: #{_lambda_.17} parent=0 // pred_check
    _
  $region7: #{_lambda_.17} parent=0 // pred_check_branch
    %12 = sbr.rel (0) target = $region9
  $region8: #{_lambda_.17} parent=0 // pred_region
    _
  $region9: #{_lambda_.17} parent=0 // pred_fallthru
    _
  // Predicated region
  $region10: #{_lambda_.17} parent=0 // pred_check
    _
  $region11: #{_lambda_.17} parent=0 // pred_check_branch
    %14 = sbr.rel (0) target = $region13
  $region12: #{_lambda_.17} parent=0 // pred_region
    _
  $region13: #{_lambda_.17} parent=0 // pred_fallthru
    _
  // Predicated region
  $region14: #{_lambda_.17} parent=0 // pred_check
    _
  $region15: #{_lambda_.17} parent=0 // pred_check_branch
    %16 = sbr.rel (0) target = $region17
  $region16: #{_lambda_.17} parent=0 // pred_region
    _
  $region17: #{_lambda_.17} parent=0 // pred_fallthru
    _
  %p17 = scmp.eq.s32.totalorder 0, 0
  // Predicated region
  $region18: #{_lambda_.17} parent=0 // pred_check
    %p18 = pneg %p17
  $region19: #{_lambda_.17} parent=0 // pred_check_branch
    %20 = sbr.rel (%p18) target = $region21
  $region20: #{_lambda_.17} parent=0 // pred_region
    %21 = vst [vmem:[#allocation2] sm:$0xff] 0.0
    %22 = vst [vmem:[#allocation2 + $0x8] sm:$0xff] 0.0
    %23 = vst [vmem:[#allocation2 + $0x10] sm:$0xff] 0.0
    %24 = vst [vmem:[#allocation2 + $0x18] sm:$0xff] 0.0
    %25 = vst [vmem:[#allocation2 + $0x20] sm:$0xff] 0.0
    %26 = vst [vmem:[#allocation2 + $0x28] sm:$0xff] 0.0
    %27 = vst [vmem:[#allocation2 + $0x30] sm:$0xff] 0.0
    %28 = vst [vmem:[#allocation2 + $0x38] sm:$0xff] 0.0
    %29 = vst [vmem:[#allocation2 + $0x40] sm:$0xff] 0.0
    %30 = vst [vmem:[#allocation2 + $0x48] sm:$0xff] 0.0
    %31 = vst [vmem:[#allocation2 + $0x50] sm:$0xff] 0.0
    %32 = vst [vmem:[#allocation2 + $0x58] sm:$0xff] 0.0
    %33 = vst [vmem:[#allocation2 + $0x60] sm:$0xff] 0.0
    %34 = vst [vmem:[#allocation2 + $0x68] sm:$0xff] 0.0
    %35 = vst [vmem:[#allocation2 + $0x70] sm:$0xff] 0.0
    %36 = vst [vmem:[#allocation2 + $0x78] sm:$0xff] 0.0
    %37 = vst [vmem:[#allocation2 + $0x80] sm:$0xff] 0.0
    %38 = vst [vmem:[#allocation2 + $0x88] sm:$0xff] 0.0
    %39 = vst [vmem:[#allocation2 + $0x90] sm:$0xff] 0.0
    %40 = vst [vmem:[#allocation2 + $0x98] sm:$0xff] 0.0
    %41 = vst [vmem:[#allocation2 + $0xa0] sm:$0xff] 0.0
    %42 = vst [vmem:[#allocation2 + $0xa8] sm:$0xff] 0.0
    %43 = vst [vmem:[#allocation2 + $0xb0] sm:$0xff] 0.0
    %44 = vst [vmem:[#allocation2 + $0xb8] sm:$0xff] 0.0
    %45 = vst [vmem:[#allocation2 + $0xc0] sm:$0xff] 0.0
    %46 = vst [vmem:[#allocation2 + $0xc8] sm:$0xff] 0.0
    %47 = vst [vmem:[#allocation2 + $0xd0] sm:$0xff] 0.0
    %48 = vst [vmem:[#allocation2 + $0xd8] sm:$0xff] 0.0
    %49 = vst [vmem:[#allocation2 + $0xe0] sm:$0xff] 0.0
    %50 = vst [vmem:[#allocation2 + $0xe8] sm:$0xff] 0.0
    %51 = vst [vmem:[#allocation2 + $0xf0] sm:$0xff] 0.0
    %52 = vst [vmem:[#allocation2 + $0xf8] sm:$0xff] 0.0
    %53 = vst [vmem:[#allocation2 + $0x100] sm:$0xff] 0.0
    %54 = vst [vmem:[#allocation2 + $0x108] sm:$0xff] 0.0
    %55 = vst [vmem:[#allocation2 + $0x110] sm:$0xff] 0.0
    %56 = vst [vmem:[#allocation2 + $0x118] sm:$0xff] 0.0
    %57 = vst [vmem:[#allocation2 + $0x120] sm:$0xff] 0.0
    %58 = vst [vmem:[#allocation2 + $0x128] sm:$0xff] 0.0
    %59 = vst [vmem:[#allocation2 + $0x130] sm:$0xff] 0.0
    %60 = vst [vmem:[#allocation2 + $0x138] sm:$0xff] 0.0
    %61 = vst [vmem:[#allocation2 + $0x140] sm:$0xff] 0.0
    %62 = vst [vmem:[#allocation2 + $0x148] sm:$0xff] 0.0
    %63 = vst [vmem:[#allocation2 + $0x150] sm:$0xff] 0.0
    %64 = vst [vmem:[#allocation2 + $0x158] sm:$0xff] 0.0
    %65 = vst [vmem:[#allocation2 + $0x160] sm:$0xff] 0.0
    %66 = vst [vmem:[#allocation2 + $0x168] sm:$0xff] 0.0
    %67 = vst [vmem:[#allocation2 + $0x170] sm:$0xff] 0.0
    %68 = vst [vmem:[#allocation2 + $0x178] sm:$0xff] 0.0
    %69 = vst [vmem:[#allocation2 + $0x180] sm:$0xff] 0.0
    %70 = vst [vmem:[#allocation2 + $0x188] sm:$0xff] 0.0
    %71 = vst [vmem:[#allocation2 + $0x190] sm:$0xff] 0.0
    %72 = vst [vmem:[#allocation2 + $0x198] sm:$0xff] 0.0
    %73 = vst [vmem:[#allocation2 + $0x1a0] sm:$0xff] 0.0
    %74 = vst [vmem:[#allocation2 + $0x1a8] sm:$0xff] 0.0
    %75 = vst [vmem:[#allocation2 + $0x1b0] sm:$0xff] 0.0
    %76 = vst [vmem:[#allocation2 + $0x1b8] sm:$0xff] 0.0
    %77 = vst [vmem:[#allocation2 + $0x1c0] sm:$0xff] 0.0
    %78 = vst [vmem:[#allocation2 + $0x1c8] sm:$0xff] 0.0
    %79 = vst [vmem:[#allocation2 + $0x1d0] sm:$0xff] 0.0
    %80 = vst [vmem:[#allocation2 + $0x1d8] sm:$0xff] 0.0
    %81 = vst [vmem:[#allocation2 + $0x1e0] sm:$0xff] 0.0
    %82 = vst [vmem:[#allocation2 + $0x1e8] sm:$0xff] 0.0
    %83 = vst [vmem:[#allocation2 + $0x1f0] sm:$0xff] 0.0
    %84 = vst [vmem:[#allocation2 + $0x1f8] sm:$0xff] 0.0
  $region21: #{_lambda_.17} parent=0 // pred_fallthru
    _
  %v85 = vld [vmem:[#allocation2] sm:$0xff]
  %v86 = vld [vmem:[#allocation2 + $0x8] sm:$0xff]
  %v87 = vld [vmem:[#allocation2 + $0x10] sm:$0xff]
  %v88 = vld [vmem:[#allocation2 + $0x18] sm:$0xff]
  %v89 = vld [vmem:[#allocation2 + $0x20] sm:$0xff]
  %v90 = vld [vmem:[#allocation2 + $0x28] sm:$0xff]
  %v91 = vld [vmem:[#allocation2 + $0x30] sm:$0xff]
  %v92 = vld [vmem:[#allocation2 + $0x38] sm:$0xff]
  %v93 = vld [vmem:[#allocation2 + $0x40] sm:$0xff]
  %v94 = vld [vmem:[#allocation2 + $0x48] sm:$0xff]
  %v95 = vld [vmem:[#allocation2 + $0x50] sm:$0xff]
  %v96 = vld [vmem:[#allocation2 + $0x58] sm:$0xff]
  %v97 = vld [vmem:[#allocation2 + $0x60] sm:$0xff]
  %v98 = vld [vmem:[#allocation2 + $0x68] sm:$0xff]
  %v99 = vld [vmem:[#allocation2 + $0x70] sm:$0xff]
  %v100 = vld [vmem:[#allocation2 + $0x78] sm:$0xff]
  %v101 = vld [vmem:[#allocation2 + $0x80] sm:$0xff]
  %v102 = vld [vmem:[#allocation2 + $0x88] sm:$0xff]
  %v103 = vld [vmem:[#allocation2 + $0x90] sm:$0xff]
  %v104 = vld [vmem:[#allocation2 + $0x98] sm:$0xff]
  %v105 = vld [vmem:[#allocation2 + $0xa0] sm:$0xff]
  %v106 = vld [vmem:[#allocation2 + $0xa8] sm:$0xff]
  %v107 = vld [vmem:[#allocation2 + $0xb0] sm:$0xff]
  %v108 = vld [vmem:[#allocation2 + $0xb8] sm:$0xff]
  %v109 = vld [vmem:[#allocation2 + $0xc0] sm:$0xff]
  %v110 = vld [vmem:[#allocation2 + $0xc8] sm:$0xff]
  %v111 = vld [vmem:[#allocation2 + $0xd0] sm:$0xff]
  %v112 = vld [vmem:[#allocation2 + $0xd8] sm:$0xff]
  %v113 = vld [vmem:[#allocation2 + $0xe0] sm:$0xff]
  %v114 = vld [vmem:[#allocation2 + $0xe8] sm:$0xff]
  %v115 = vld [vmem:[#allocation2 + $0xf0] sm:$0xff]
  %v116 = vld [vmem:[#allocation2 + $0xf8] sm:$0xff]
  %v117 = vld [vmem:[#allocation2 + $0x100] sm:$0xff]
  %v118 = vld [vmem:[#allocation2 + $0x108] sm:$0xff]
  %v119 = vld [vmem:[#allocation2 + $0x110] sm:$0xff]
  %v120 = vld [vmem:[#allocation2 + $0x118] sm:$0xff]
  %v121 = vld [vmem:[#allocation2 + $0x120] sm:$0xff]
  %v122 = vld [vmem:[#allocation2 + $0x128] sm:$0xff]
  %v123 = vld [vmem:[#allocation2 + $0x130] sm:$0xff]
  %v124 = vld [vmem:[#allocation2 + $0x138] sm:$0xff]
  %v125 = vld [vmem:[#allocation2 + $0x140] sm:$0xff]
  %v126 = vld [vmem:[#allocation2 + $0x148] sm:$0xff]
  %v127 = vld [vmem:[#allocation2 + $0x150] sm:$0xff]
  %v128 = vld [vmem:[#allocation2 + $0x158] sm:$0xff]
  %v129 = vld [vmem:[#allocation2 + $0x160] sm:$0xff]
  %v130 = vld [vmem:[#allocation2 + $0x168] sm:$0xff]
  %v131 = vld [vmem:[#allocation2 + $0x170] sm:$0xff]
  %v132 = vld [vmem:[#allocation2 + $0x178] sm:$0xff]
  %v133 = vld [vmem:[#allocation2 + $0x180] sm:$0xff]
  %v134 = vld [vmem:[#allocation2 + $0x188] sm:$0xff]
  %v135 = vld [vmem:[#allocation2 + $0x190] sm:$0xff]
  %v136 = vld [vmem:[#allocation2 + $0x198] sm:$0xff]
  %v137 = vld [vmem:[#allocation2 + $0x1a0] sm:$0xff]
  %v138 = vld [vmem:[#allocation2 + $0x1a8] sm:$0xff]
  %v139 = vld [vmem:[#allocation2 + $0x1b0] sm:$0xff]
  %v140 = vld [vmem:[#allocation2 + $0x1b8] sm:$0xff]
  %v141 = vld [vmem:[#allocation2 + $0x1c0] sm:$0xff]
  %v142 = vld [vmem:[#allocation2 + $0x1c8] sm:$0xff]
  %v143 = vld [vmem:[#allocation2 + $0x1d0] sm:$0xff]
  %v144 = vld [vmem:[#allocation2 + $0x1d8] sm:$0xff]
  %v145 = vld [vmem:[#allocation2 + $0x1e0] sm:$0xff]
  %v146 = vld [vmem:[#allocation2 + $0x1e8] sm:$0xff]
  %v147 = vld [vmem:[#allocation2 + $0x1f0] sm:$0xff]
  %v148 = vld [vmem:[#allocation2 + $0x1f8] sm:$0xff]
  %v149 = vld [vmem:[%s0] sm:$0xff]
  %v150 = vld [vmem:[%s0 + $0x8] sm:$0xff]
  %v151 = vld [vmem:[%s0 + $0x10] sm:$0xff]
  %v152 = vld [vmem:[%s0 + $0x18] sm:$0xff]
  %v153 = vld [vmem:[%s0 + $0x20] sm:$0xff]
  %v154 = vld [vmem:[%s0 + $0x28] sm:$0xff]
  %v155 = vld [vmem:[%s0 + $0x30] sm:$0xff]
  %v156 = vld [vmem:[%s0 + $0x38] sm:$0xff]
  %v157 = vld [vmem:[%s0 + $0x40] sm:$0xff]
  %v158 = vld [vmem:[%s0 + $0x48] sm:$0xff]
  %v159 = vld [vmem:[%s0 + $0x50] sm:$0xff]
  %v160 = vld [vmem:[%s0 + $0x58] sm:$0xff]
  %v161 = vld [vmem:[%s0 + $0x60] sm:$0xff]
  %v162 = vld [vmem:[%s0 + $0x68] sm:$0xff]
  %v163 = vld [vmem:[%s0 + $0x70] sm:$0xff]
  %v164 = vld [vmem:[%s0 + $0x78] sm:$0xff]
  %v165 = vld [vmem:[%s0 + $0x80] sm:$0xff]
  %v166 = vld [vmem:[%s0 + $0x88] sm:$0xff]
  %v167 = vld [vmem:[%s0 + $0x90] sm:$0xff]
  %v168 = vld [vmem:[%s0 + $0x98] sm:$0xff]
  %v169 = vld [vmem:[%s0 + $0xa0] sm:$0xff]
  %v170 = vld [vmem:[%s0 + $0xa8] sm:$0xff]
  %v171 = vld [vmem:[%s0 + $0xb0] sm:$0xff]
  %v172 = vld [vmem:[%s0 + $0xb8] sm:$0xff]
  %v173 = vld [vmem:[%s0 + $0xc0] sm:$0xff]
  %v174 = vld [vmem:[%s0 + $0xc8] sm:$0xff]
  %v175 = vld [vmem:[%s0 + $0xd0] sm:$0xff]
  %v176 = vld [vmem:[%s0 + $0xd8] sm:$0xff]
  %v177 = vld [vmem:[%s0 + $0xe0] sm:$0xff]
  %v178 = vld [vmem:[%s0 + $0xe8] sm:$0xff]
  %v179 = vld [vmem:[%s0 + $0xf0] sm:$0xff]
  %v180 = vld [vmem:[%s0 + $0xf8] sm:$0xff]
  %v181 = vld [vmem:[%s0 + $0x100] sm:$0xff]
  %v182 = vld [vmem:[%s0 + $0x108] sm:$0xff]
  %v183 = vld [vmem:[%s0 + $0x110] sm:$0xff]
  %v184 = vld [vmem:[%s0 + $0x118] sm:$0xff]
  %v185 = vld [vmem:[%s0 + $0x120] sm:$0xff]
  %v186 = vld [vmem:[%s0 + $0x128] sm:$0xff]
  %v187 = vld [vmem:[%s0 + $0x130] sm:$0xff]
  %v188 = vld [vmem:[%s0 + $0x138] sm:$0xff]
  %v189 = vld [vmem:[%s0 + $0x140] sm:$0xff]
  %v190 = vld [vmem:[%s0 + $0x148] sm:$0xff]
  %v191 = vld [vmem:[%s0 + $0x150] sm:$0xff]
  %v192 = vld [vmem:[%s0 + $0x158] sm:$0xff]
  %v193 = vld [vmem:[%s0 + $0x160] sm:$0xff]
  %v194 = vld [vmem:[%s0 + $0x168] sm:$0xff]
  %v195 = vld [vmem:[%s0 + $0x170] sm:$0xff]
  %v196 = vld [vmem:[%s0 + $0x178] sm:$0xff]
  %v197 = vld [vmem:[%s0 + $0x180] sm:$0xff]
  %v198 = vld [vmem:[%s0 + $0x188] sm:$0xff]
  %v199 = vld [vmem:[%s0 + $0x190] sm:$0xff]
  %v200 = vld [vmem:[%s0 + $0x198] sm:$0xff]
  %v201 = vld [vmem:[%s0 + $0x1a0] sm:$0xff]
  %v202 = vld [vmem:[%s0 + $0x1a8] sm:$0xff]
  %v203 = vld [vmem:[%s0 + $0x1b0] sm:$0xff]
  %v204 = vld [vmem:[%s0 + $0x1b8] sm:$0xff]
  %v205 = vld [vmem:[%s0 + $0x1c0] sm:$0xff]
  %v206 = vld [vmem:[%s0 + $0x1c8] sm:$0xff]
  %v207 = vld [vmem:[%s0 + $0x1d0] sm:$0xff]
  %v208 = vld [vmem:[%s0 + $0x1d8] sm:$0xff]
  %v209 = vld [vmem:[%s0 + $0x1e0] sm:$0xff]
  %v210 = vld [vmem:[%s0 + $0x1e8] sm:$0xff]
  %v211 = vld [vmem:[%s0 + $0x1f0] sm:$0xff]
  %v212 = vld [vmem:[%s0 + $0x1f8] sm:$0xff]
  %v213 = vld [vmem:[%s1] sm:$0xf]
  %v214 = vld [vmem:[%s1 + $0x4] sm:$0xf]
  %v215 = vld [vmem:[%s1 + $0x8] sm:$0xf]
  %v216 = vld [vmem:[%s1 + $0xc] sm:$0xf]
  %v217 = vld [vmem:[%s1 + $0x10] sm:$0xf]
  %v218 = vld [vmem:[%s1 + $0x14] sm:$0xf]
  %v219 = vld [vmem:[%s1 + $0x18] sm:$0xf]
  %v220 = vld [vmem:[%s1 + $0x1c] sm:$0xf]
  %v221 = vld [vmem:[%s1 + $0x20] sm:$0xf]
  %v222 = vld [vmem:[%s1 + $0x24] sm:$0xf]
  %v223 = vld [vmem:[%s1 + $0x28] sm:$0xf]
  %v224 = vld [vmem:[%s1 + $0x2c] sm:$0xf]
  %v225 = vld [vmem:[%s1 + $0x30] sm:$0xf]
  %v226 = vld [vmem:[%s1 + $0x34] sm:$0xf]
  %v227 = vld [vmem:[%s1 + $0x38] sm:$0xf]
  %v228 = vld [vmem:[%s1 + $0x3c] sm:$0xf]
  %v229 = vld [vmem:[%s1 + $0x40] sm:$0xf]
  %v230 = vld [vmem:[%s1 + $0x44] sm:$0xf]
  %v231 = vld [vmem:[%s1 + $0x48] sm:$0xf]
  %v232 = vld [vmem:[%s1 + $0x4c] sm:$0xf]
  %v233 = vld [vmem:[%s1 + $0x50] sm:$0xf]
  %v234 = vld [vmem:[%s1 + $0x54] sm:$0xf]
  %v235 = vld [vmem:[%s1 + $0x58] sm:$0xf]
  %v236 = vld [vmem:[%s1 + $0x5c] sm:$0xf]
  %v237 = vld [vmem:[%s1 + $0x60] sm:$0xf]
  %v238 = vld [vmem:[%s1 + $0x64] sm:$0xf]
  %v239 = vld [vmem:[%s1 + $0x68] sm:$0xf]
  %v240 = vld [vmem:[%s1 + $0x6c] sm:$0xf]
  %v241 = vld [vmem:[%s1 + $0x70] sm:$0xf]
  %v242 = vld [vmem:[%s1 + $0x74] sm:$0xf]
  %v243 = vld [vmem:[%s1 + $0x78] sm:$0xf]
  %v244 = vld [vmem:[%s1 + $0x7c] sm:$0xf]
  %v309 = vunpack.c.l.b16 %v149
  %v310 = vunpack.c.h.b16 %v149
  %v311 = vunpack.c.l.b16 %v150
  %v312 = vunpack.c.h.b16 %v150
  %v313 = vunpack.c.l.b16 %v151
  %v314 = vunpack.c.h.b16 %v151
  %v315 = vunpack.c.l.b16 %v152
  %v316 = vunpack.c.h.b16 %v152
  %v317 = vunpack.c.l.b16 %v153
  %v318 = vunpack.c.h.b16 %v153
  %v319 = vunpack.c.l.b16 %v154
  %v320 = vunpack.c.h.b16 %v154
  %v321 = vunpack.c.l.b16 %v155
  %v322 = vunpack.c.h.b16 %v155
  %v323 = vunpack.c.l.b16 %v156
  %v324 = vunpack.c.h.b16 %v156
  %v325 = vunpack.c.l.b16 %v157
  %v326 = vunpack.c.h.b16 %v157
  %v327 = vunpack.c.l.b16 %v158
  %v328 = vunpack.c.h.b16 %v158
  %v329 = vunpack.c.l.b16 %v159
  %v330 = vunpack.c.h.b16 %v159
  %v331 = vunpack.c.l.b16 %v160
  %v332 = vunpack.c.h.b16 %v160
  %v333 = vunpack.c.l.b16 %v161
  %v334 = vunpack.c.h.b16 %v161
  %v335 = vunpack.c.l.b16 %v162
  %v336 = vunpack.c.h.b16 %v162
  %v337 = vunpack.c.l.b16 %v163
  %v338 = vunpack.c.h.b16 %v163
  %v339 = vunpack.c.l.b16 %v164
  %v340 = vunpack.c.h.b16 %v164
  %v341 = vunpack.c.l.b16 %v165
  %v342 = vunpack.c.h.b16 %v165
  %v343 = vunpack.c.l.b16 %v166
  %v344 = vunpack.c.h.b16 %v166
  %v345 = vunpack.c.l.b16 %v167
  %v346 = vunpack.c.h.b16 %v167
  %v347 = vunpack.c.l.b16 %v168
  %v348 = vunpack.c.h.b16 %v168
  %v349 = vunpack.c.l.b16 %v169
  %v350 = vunpack.c.h.b16 %v169
  %v351 = vunpack.c.l.b16 %v170
  %v352 = vunpack.c.h.b16 %v170
  %v353 = vunpack.c.l.b16 %v171
  %v354 = vunpack.c.h.b16 %v171
  %v355 = vunpack.c.l.b16 %v172
  %v356 = vunpack.c.h.b16 %v172
  %v357 = vunpack.c.l.b16 %v173
  %v358 = vunpack.c.h.b16 %v173
  %v359 = vunpack.c.l.b16 %v174
  %v360 = vunpack.c.h.b16 %v174
  %v361 = vunpack.c.l.b16 %v175
  %v362 = vunpack.c.h.b16 %v175
  %v363 = vunpack.c.l.b16 %v176
  %v364 = vunpack.c.h.b16 %v176
  %v365 = vunpack.c.l.b16 %v177
  %v366 = vunpack.c.h.b16 %v177
  %v367 = vunpack.c.l.b16 %v178
  %v368 = vunpack.c.h.b16 %v178
  %v369 = vunpack.c.l.b16 %v179
  %v370 = vunpack.c.h.b16 %v179
  %v371 = vunpack.c.l.b16 %v180
  %v372 = vunpack.c.h.b16 %v180
  %v373 = vunpack.c.l.b16 %v181
  %v374 = vunpack.c.h.b16 %v181
  %v375 = vunpack.c.l.b16 %v182
  %v376 = vunpack.c.h.b16 %v182
  %v377 = vunpack.c.l.b16 %v183
  %v378 = vunpack.c.h.b16 %v183
  %v379 = vunpack.c.l.b16 %v184
  %v380 = vunpack.c.h.b16 %v184
  %v381 = vunpack.c.l.b16 %v185
  %v382 = vunpack.c.h.b16 %v185
  %v383 = vunpack.c.l.b16 %v186
  %v384 = vunpack.c.h.b16 %v186
  %v385 = vunpack.c.l.b16 %v187
  %v386 = vunpack.c.h.b16 %v187
  %v387 = vunpack.c.l.b16 %v188
  %v388 = vunpack.c.h.b16 %v188
  %v389 = vunpack.c.l.b16 %v189
  %v390 = vunpack.c.h.b16 %v189
  %v391 = vunpack.c.l.b16 %v190
  %v392 = vunpack.c.h.b16 %v190
  %v393 = vunpack.c.l.b16 %v191
  %v394 = vunpack.c.h.b16 %v191
  %v395 = vunpack.c.l.b16 %v192
  %v396 = vunpack.c.h.b16 %v192
  %v397 = vunpack.c.l.b16 %v193
  %v398 = vunpack.c.h.b16 %v193
  %v399 = vunpack.c.l.b16 %v194
  %v400 = vunpack.c.h.b16 %v194
  %v401 = vunpack.c.l.b16 %v195
  %v402 = vunpack.c.h.b16 %v195
  %v403 = vunpack.c.l.b16 %v196
  %v404 = vunpack.c.h.b16 %v196
  %v405 = vunpack.c.l.b16 %v197
  %v406 = vunpack.c.h.b16 %v197
  %v407 = vunpack.c.l.b16 %v198
  %v408 = vunpack.c.h.b16 %v198
  %v409 = vunpack.c.l.b16 %v199
  %v410 = vunpack.c.h.b16 %v199
  %v411 = vunpack.c.l.b16 %v200
  %v412 = vunpack.c.h.b16 %v200
  %v413 = vunpack.c.l.b16 %v201
  %v414 = vunpack.c.h.b16 %v201
  %v415 = vunpack.c.l.b16 %v202
  %v416 = vunpack.c.h.b16 %v202
  %v417 = vunpack.c.l.b16 %v203
  %v418 = vunpack.c.h.b16 %v203
  %v419 = vunpack.c.l.b16 %v204
  %v420 = vunpack.c.h.b16 %v204
  %v421 = vunpack.c.l.b16 %v205
  %v422 = vunpack.c.h.b16 %v205
  %v423 = vunpack.c.l.b16 %v206
  %v424 = vunpack.c.h.b16 %v206
  %v425 = vunpack.c.l.b16 %v207
  %v426 = vunpack.c.h.b16 %v207
  %v427 = vunpack.c.l.b16 %v208
  %v428 = vunpack.c.h.b16 %v208
  %v429 = vunpack.c.l.b16 %v209
  %v430 = vunpack.c.h.b16 %v209
  %v431 = vunpack.c.l.b16 %v210
  %v432 = vunpack.c.h.b16 %v210
  %v433 = vunpack.c.l.b16 %v211
  %v434 = vunpack.c.h.b16 %v211
  %v435 = vunpack.c.l.b16 %v212
  %v436 = vunpack.c.h.b16 %v212
  %v437 = vpack.c.b16 %v311, %v309
  %v438 = vpack.c.b16 %v312, %v310
  %v439 = vpack.c.b16 %v315, %v313
  %v440 = vpack.c.b16 %v316, %v314
  %v441 = vpack.c.b16 %v319, %v317
  %v442 = vpack.c.b16 %v320, %v318
  %v443 = vpack.c.b16 %v323, %v321
  %v444 = vpack.c.b16 %v324, %v322
  %v445 = vpack.c.b16 %v327, %v325
  %v446 = vpack.c.b16 %v328, %v326
  %v447 = vpack.c.b16 %v331, %v329
  %v448 = vpack.c.b16 %v332, %v330
  %v449 = vpack.c.b16 %v335, %v333
  %v450 = vpack.c.b16 %v336, %v334
  %v451 = vpack.c.b16 %v339, %v337
  %v452 = vpack.c.b16 %v340, %v338
  %v453 = vpack.c.b16 %v343, %v341
  %v454 = vpack.c.b16 %v344, %v342
  %v455 = vpack.c.b16 %v347, %v345
  %v456 = vpack.c.b16 %v348, %v346
  %v457 = vpack.c.b16 %v351, %v349
  %v458 = vpack.c.b16 %v352, %v350
  %v459 = vpack.c.b16 %v355, %v353
  %v460 = vpack.c.b16 %v356, %v354
  %v461 = vpack.c.b16 %v359, %v357
  %v462 = vpack.c.b16 %v360, %v358
  %v463 = vpack.c.b16 %v363, %v361
  %v464 = vpack.c.b16 %v364, %v362
  %v465 = vpack.c.b16 %v367, %v365
  %v466 = vpack.c.b16 %v368, %v366
  %v467 = vpack.c.b16 %v371, %v369
  %v468 = vpack.c.b16 %v372, %v370
  %v469 = vpack.c.b16 %v375, %v373
  %v470 = vpack.c.b16 %v376, %v374
  %v471 = vpack.c.b16 %v379, %v377
  %v472 = vpack.c.b16 %v380, %v378
  %v473 = vpack.c.b16 %v383, %v381
  %v474 = vpack.c.b16 %v384, %v382
  %v475 = vpack.c.b16 %v387, %v385
  %v476 = vpack.c.b16 %v388, %v386
  %v477 = vpack.c.b16 %v391, %v389
  %v478 = vpack.c.b16 %v392, %v390
  %v479 = vpack.c.b16 %v395, %v393
  %v480 = vpack.c.b16 %v396, %v394
  %v481 = vpack.c.b16 %v399, %v397
  %v482 = vpack.c.b16 %v400, %v398
  %v483 = vpack.c.b16 %v403, %v401
  %v484 = vpack.c.b16 %v404, %v402
  %v485 = vpack.c.b16 %v407, %v405
  %v486 = vpack.c.b16 %v408, %v406
  %v487 = vpack.c.b16 %v411, %v409
  %v488 = vpack.c.b16 %v412, %v410
  %v489 = vpack.c.b16 %v415, %v413
  %v490 = vpack.c.b16 %v416, %v414
  %v491 = vpack.c.b16 %v419, %v417
  %v492 = vpack.c.b16 %v420, %v418
  %v493 = vpack.c.b16 %v423, %v421
  %v494 = vpack.c.b16 %v424, %v422
  %v495 = vpack.c.b16 %v427, %v425
  %v496 = vpack.c.b16 %v428, %v426
  %v497 = vpack.c.b16 %v431, %v429
  %v498 = vpack.c.b16 %v432, %v430
  %v499 = vpack.c.b16 %v435, %v433
  %v500 = vpack.c.b16 %v436, %v434
  %v597 = vunpack.c.l.b16 %v213
  %v598 = vunpack.c.l.b16 %v214
  %v599 = vunpack.c.l.b16 %v215
  %v600 = vunpack.c.l.b16 %v216
  %v601 = vunpack.c.l.b16 %v217
  %v602 = vunpack.c.l.b16 %v218
  %v603 = vunpack.c.l.b16 %v219
  %v604 = vunpack.c.l.b16 %v220
  %v605 = vunpack.c.l.b16 %v221
  %v606 = vunpack.c.l.b16 %v222
  %v607 = vunpack.c.l.b16 %v223
  %v608 = vunpack.c.l.b16 %v224
  %v609 = vunpack.c.l.b16 %v225
  %v610 = vunpack.c.l.b16 %v226
  %v611 = vunpack.c.l.b16 %v227
  %v612 = vunpack.c.l.b16 %v228
  %v613 = vunpack.c.l.b16 %v229
  %v614 = vunpack.c.l.b16 %v230
  %v615 = vunpack.c.l.b16 %v231
  %v616 = vunpack.c.l.b16 %v232
  %v617 = vunpack.c.l.b16 %v233
  %v618 = vunpack.c.l.b16 %v234
  %v619 = vunpack.c.l.b16 %v235
  %v620 = vunpack.c.l.b16 %v236
  %v621 = vunpack.c.l.b16 %v237
  %v622 = vunpack.c.l.b16 %v238
  %v623 = vunpack.c.l.b16 %v239
  %v624 = vunpack.c.l.b16 %v240
  %v625 = vunpack.c.l.b16 %v241
  %v626 = vunpack.c.l.b16 %v242
  %v627 = vunpack.c.l.b16 %v243
  %v628 = vunpack.c.l.b16 %v244
  %v629 = vpack.c.b16 %v598, %v597
  %v630 = vpack.c.b16 %v600, %v599
  %v631 = vpack.c.b16 %v602, %v601
  %v632 = vpack.c.b16 %v604, %v603
  %v633 = vpack.c.b16 %v606, %v605
  %v634 = vpack.c.b16 %v608, %v607
  %v635 = vpack.c.b16 %v610, %v609
  %v636 = vpack.c.b16 %v612, %v611
  %v637 = vpack.c.b16 %v614, %v613
  %v638 = vpack.c.b16 %v616, %v615
  %v639 = vpack.c.b16 %v618, %v617
  %v640 = vpack.c.b16 %v620, %v619
  %v641 = vpack.c.b16 %v622, %v621
  %v642 = vpack.c.b16 %v624, %v623
  %v643 = vpack.c.b16 %v626, %v625
  %v644 = vpack.c.b16 %v628, %v627
  %661 = vmatpush.bf16.msra.mxu0 %v636
  %662 = vmatpush.bf16.msra.mxu0 %v635
  %663 = vmatpush.bf16.msra.mxu0 %v634
  %664 = vmatpush.bf16.msra.mxu0 %v633
  %665 = vmatpush.bf16.msra.mxu0 %v632
  %666 = vmatpush.bf16.msra.mxu0 %v631
  %667 = vmatpush.bf16.msra.mxu0 %v630
  %668 = vmatpush.bf16.msra.mxu0 %v629
  %669 = vmatmul.bf16.gmra.mxu0 %v437
  %v670 = vpop.f32.mrf.mxu0
  %v671 = vadd.f32 0.0, %v670
  %v672 = vpop.f32.mrf.mxu0
  %v673 = vadd.f32 0.0, %v672
  %674 = vmatmul.bf16.gmra.mxu0 %v439
  %v675 = vpop.f32.mrf.mxu0
  %v676 = vadd.f32 0.0, %v675
  %v677 = vpop.f32.mrf.mxu0
  %v678 = vadd.f32 0.0, %v677
  %679 = vmatmul.bf16.gmra.mxu0 %v441
  %v680 = vpop.f32.mrf.mxu0
  %v681 = vadd.f32 0.0, %v680
  %v682 = vpop.f32.mrf.mxu0
  %v683 = vadd.f32 0.0, %v682
  %684 = vmatmul.bf16.gmra.mxu0 %v443
  %v685 = vpop.f32.mrf.mxu0
  %v686 = vadd.f32 0.0, %v685
  %v687 = vpop.f32.mrf.mxu0
  %v688 = vadd.f32 0.0, %v687
  %689 = vmatmul.bf16.gmra.mxu0 %v445
  %v690 = vpop.f32.mrf.mxu0
  %v691 = vadd.f32 0.0, %v690
  %v692 = vpop.f32.mrf.mxu0
  %v693 = vadd.f32 0.0, %v692
  %694 = vmatmul.bf16.gmra.mxu0 %v447
  %v695 = vpop.f32.mrf.mxu0
  %v696 = vadd.f32 0.0, %v695
  %v697 = vpop.f32.mrf.mxu0
  %v698 = vadd.f32 0.0, %v697
  %699 = vmatmul.bf16.gmra.mxu0 %v449
  %v700 = vpop.f32.mrf.mxu0
  %v701 = vadd.f32 0.0, %v700
  %v702 = vpop.f32.mrf.mxu0
  %v703 = vadd.f32 0.0, %v702
  %704 = vmatmul.bf16.gmra.mxu0 %v451
  %v705 = vpop.f32.mrf.mxu0
  %v706 = vadd.f32 0.0, %v705
  %v707 = vpop.f32.mrf.mxu0
  %v708 = vadd.f32 0.0, %v707
  %709 = vmatmul.bf16.gmra.mxu0 %v453
  %v710 = vpop.f32.mrf.mxu0
  %v711 = vadd.f32 0.0, %v710
  %v712 = vpop.f32.mrf.mxu0
  %v713 = vadd.f32 0.0, %v712
  %714 = vmatmul.bf16.gmra.mxu0 %v455
  %v715 = vpop.f32.mrf.mxu0
  %v716 = vadd.f32 0.0, %v715
  %v717 = vpop.f32.mrf.mxu0
  %v718 = vadd.f32 0.0, %v717
  %719 = vmatmul.bf16.gmra.mxu0 %v457
  %v720 = vpop.f32.mrf.mxu0
  %v721 = vadd.f32 0.0, %v720
  %v722 = vpop.f32.mrf.mxu0
  %v723 = vadd.f32 0.0, %v722
  %724 = vmatmul.bf16.gmra.mxu0 %v459
  %v725 = vpop.f32.mrf.mxu0
  %v726 = vadd.f32 0.0, %v725
  %v727 = vpop.f32.mrf.mxu0
  %v728 = vadd.f32 0.0, %v727
  %729 = vmatmul.bf16.gmra.mxu0 %v461
  %v730 = vpop.f32.mrf.mxu0
  %v731 = vadd.f32 0.0, %v730
  %v732 = vpop.f32.mrf.mxu0
  %v733 = vadd.f32 0.0, %v732
  %734 = vmatmul.bf16.gmra.mxu0 %v463
  %v735 = vpop.f32.mrf.mxu0
  %v736 = vadd.f32 0.0, %v735
  %v737 = vpop.f32.mrf.mxu0
  %v738 = vadd.f32 0.0, %v737
  %739 = vmatmul.bf16.gmra.mxu0 %v465
  %v740 = vpop.f32.mrf.mxu0
  %v741 = vadd.f32 0.0, %v740
  %v742 = vpop.f32.mrf.mxu0
  %v743 = vadd.f32 0.0, %v742
  %744 = vmatmul.bf16.gmra.mxu0 %v467
  %v745 = vpop.f32.mrf.mxu0
  %v746 = vadd.f32 0.0, %v745
  %v747 = vpop.f32.mrf.mxu0
  %v748 = vadd.f32 0.0, %v747
  %749 = vmatmul.bf16.gmra.mxu0 %v469
  %v750 = vpop.f32.mrf.mxu0
  %v751 = vadd.f32 0.0, %v750
  %v752 = vpop.f32.mrf.mxu0
  %v753 = vadd.f32 0.0, %v752
  %754 = vmatmul.bf16.gmra.mxu0 %v471
  %v755 = vpop.f32.mrf.mxu0
  %v756 = vadd.f32 0.0, %v755
  %v757 = vpop.f32.mrf.mxu0
  %v758 = vadd.f32 0.0, %v757
  %759 = vmatmul.bf16.gmra.mxu0 %v473
  %v760 = vpop.f32.mrf.mxu0
  %v761 = vadd.f32 0.0, %v760
  %v762 = vpop.f32.mrf.mxu0
  %v763 = vadd.f32 0.0, %v762
  %764 = vmatmul.bf16.gmra.mxu0 %v475
  %v765 = vpop.f32.mrf.mxu0
  %v766 = vadd.f32 0.0, %v765
  %v767 = vpop.f32.mrf.mxu0
  %v768 = vadd.f32 0.0, %v767
  %769 = vmatmul.bf16.gmra.mxu0 %v477
  %v770 = vpop.f32.mrf.mxu0
  %v771 = vadd.f32 0.0, %v770
  %v772 = vpop.f32.mrf.mxu0
  %v773 = vadd.f32 0.0, %v772
  %774 = vmatmul.bf16.gmra.mxu0 %v479
  %v775 = vpop.f32.mrf.mxu0
  %v776 = vadd.f32 0.0, %v775
  %v777 = vpop.f32.mrf.mxu0
  %v778 = vadd.f32 0.0, %v777
  %779 = vmatmul.bf16.gmra.mxu0 %v481
  %v780 = vpop.f32.mrf.mxu0
  %v781 = vadd.f32 0.0, %v780
  %v782 = vpop.f32.mrf.mxu0
  %v783 = vadd.f32 0.0, %v782
  %784 = vmatmul.bf16.gmra.mxu0 %v483
  %v785 = vpop.f32.mrf.mxu0
  %v786 = vadd.f32 0.0, %v785
  %v787 = vpop.f32.mrf.mxu0
  %v788 = vadd.f32 0.0, %v787
  %789 = vmatmul.bf16.gmra.mxu0 %v485
  %v790 = vpop.f32.mrf.mxu0
  %v791 = vadd.f32 0.0, %v790
  %v792 = vpop.f32.mrf.mxu0
  %v793 = vadd.f32 0.0, %v792
  %794 = vmatmul.bf16.gmra.mxu0 %v487
  %v795 = vpop.f32.mrf.mxu0
  %v796 = vadd.f32 0.0, %v795
  %v797 = vpop.f32.mrf.mxu0
  %v798 = vadd.f32 0.0, %v797
  %799 = vmatmul.bf16.gmra.mxu0 %v489
  %v800 = vpop.f32.mrf.mxu0
  %v801 = vadd.f32 0.0, %v800
  %v802 = vpop.f32.mrf.mxu0
  %v803 = vadd.f32 0.0, %v802
  %804 = vmatmul.bf16.gmra.mxu0 %v491
  %v805 = vpop.f32.mrf.mxu0
  %v806 = vadd.f32 0.0, %v805
  %v807 = vpop.f32.mrf.mxu0
  %v808 = vadd.f32 0.0, %v807
  %809 = vmatmul.bf16.gmra.mxu0 %v493
  %v810 = vpop.f32.mrf.mxu0
  %v811 = vadd.f32 0.0, %v810
  %v812 = vpop.f32.mrf.mxu0
  %v813 = vadd.f32 0.0, %v812
  %814 = vmatmul.bf16.gmra.mxu0 %v495
  %v815 = vpop.f32.mrf.mxu0
  %v816 = vadd.f32 0.0, %v815
  %v817 = vpop.f32.mrf.mxu0
  %v818 = vadd.f32 0.0, %v817
  %819 = vmatmul.bf16.gmra.mxu0 %v497
  %v820 = vpop.f32.mrf.mxu0
  %v821 = vadd.f32 0.0, %v820
  %v822 = vpop.f32.mrf.mxu0
  %v823 = vadd.f32 0.0, %v822
  %824 = vmatmul.bf16.gmra.mxu0 %v499
  %v825 = vpop.f32.mrf.mxu0
  %v826 = vadd.f32 0.0, %v825
  %v827 = vpop.f32.mrf.mxu0
  %v828 = vadd.f32 0.0, %v827
  %829 = vdwg.mxu0
  %830 = vmatpush.bf16.msra.mxu0 %v644
  %831 = vmatpush.bf16.msra.mxu0 %v643
  %832 = vmatpush.bf16.msra.mxu0 %v642
  %833 = vmatpush.bf16.msra.mxu0 %v641
  %834 = vmatpush.bf16.msra.mxu0 %v640
  %835 = vmatpush.bf16.msra.mxu0 %v639
  %836 = vmatpush.bf16.msra.mxu0 %v638
  %837 = vmatpush.bf16.msra.mxu0 %v637
  %838 = vmatmul.bf16.gmra.mxu0 %v438
  %v839 = vpop.f32.mrf.mxu0
  %v840 = vadd.f32 %v671, %v839
  %v841 = vpop.f32.mrf.mxu0
  %v842 = vadd.f32 %v673, %v841
  %843 = vmatmul.bf16.gmra.mxu0 %v440
  %v844 = vpop.f32.mrf.mxu0
  %v845 = vadd.f32 %v676, %v844
  %v846 = vpop.f32.mrf.mxu0
  %v847 = vadd.f32 %v678, %v846
  %848 = vmatmul.bf16.gmra.mxu0 %v442
  %v849 = vpop.f32.mrf.mxu0
  %v850 = vadd.f32 %v681, %v849
  %v851 = vpop.f32.mrf.mxu0
  %v852 = vadd.f32 %v683, %v851
  %853 = vmatmul.bf16.gmra.mxu0 %v444
  %v854 = vpop.f32.mrf.mxu0
  %v855 = vadd.f32 %v686, %v854
  %v856 = vpop.f32.mrf.mxu0
  %v857 = vadd.f32 %v688, %v856
  %858 = vmatmul.bf16.gmra.mxu0 %v446
  %v859 = vpop.f32.mrf.mxu0
  %v860 = vadd.f32 %v691, %v859
  %v861 = vpop.f32.mrf.mxu0
  %v862 = vadd.f32 %v693, %v861
  %863 = vmatmul.bf16.gmra.mxu0 %v448
  %v864 = vpop.f32.mrf.mxu0
  %v865 = vadd.f32 %v696, %v864
  %v866 = vpop.f32.mrf.mxu0
  %v867 = vadd.f32 %v698, %v866
  %868 = vmatmul.bf16.gmra.mxu0 %v450
  %v869 = vpop.f32.mrf.mxu0
  %v870 = vadd.f32 %v701, %v869
  %v871 = vpop.f32.mrf.mxu0
  %v872 = vadd.f32 %v703, %v871
  %873 = vmatmul.bf16.gmra.mxu0 %v452
  %v874 = vpop.f32.mrf.mxu0
  %v875 = vadd.f32 %v706, %v874
  %v876 = vpop.f32.mrf.mxu0
  %v877 = vadd.f32 %v708, %v876
  %878 = vmatmul.bf16.gmra.mxu0 %v454
  %v879 = vpop.f32.mrf.mxu0
  %v880 = vadd.f32 %v711, %v879
  %v881 = vpop.f32.mrf.mxu0
  %v882 = vadd.f32 %v713, %v881
  %883 = vmatmul.bf16.gmra.mxu0 %v456
  %v884 = vpop.f32.mrf.mxu0
  %v885 = vadd.f32 %v716, %v884
  %v886 = vpop.f32.mrf.mxu0
  %v887 = vadd.f32 %v718, %v886
  %888 = vmatmul.bf16.gmra.mxu0 %v458
  %v889 = vpop.f32.mrf.mxu0
  %v890 = vadd.f32 %v721, %v889
  %v891 = vpop.f32.mrf.mxu0
  %v892 = vadd.f32 %v723, %v891
  %893 = vmatmul.bf16.gmra.mxu0 %v460
  %v894 = vpop.f32.mrf.mxu0
  %v895 = vadd.f32 %v726, %v894
  %v896 = vpop.f32.mrf.mxu0
  %v897 = vadd.f32 %v728, %v896
  %898 = vmatmul.bf16.gmra.mxu0 %v462
  %v899 = vpop.f32.mrf.mxu0
  %v900 = vadd.f32 %v731, %v899
  %v901 = vpop.f32.mrf.mxu0
  %v902 = vadd.f32 %v733, %v901
  %903 = vmatmul.bf16.gmra.mxu0 %v464
  %v904 = vpop.f32.mrf.mxu0
  %v905 = vadd.f32 %v736, %v904
  %v906 = vpop.f32.mrf.mxu0
  %v907 = vadd.f32 %v738, %v906
  %908 = vmatmul.bf16.gmra.mxu0 %v466
  %v909 = vpop.f32.mrf.mxu0
  %v910 = vadd.f32 %v741, %v909
  %v911 = vpop.f32.mrf.mxu0
  %v912 = vadd.f32 %v743, %v911
  %913 = vmatmul.bf16.gmra.mxu0 %v468
  %v914 = vpop.f32.mrf.mxu0
  %v915 = vadd.f32 %v746, %v914
  %v916 = vpop.f32.mrf.mxu0
  %v917 = vadd.f32 %v748, %v916
  %918 = vmatmul.bf16.gmra.mxu0 %v470
  %v919 = vpop.f32.mrf.mxu0
  %v920 = vadd.f32 %v751, %v919
  %v921 = vpop.f32.mrf.mxu0
  %v922 = vadd.f32 %v753, %v921
  %923 = vmatmul.bf16.gmra.mxu0 %v472
  %v924 = vpop.f32.mrf.mxu0
  %v925 = vadd.f32 %v756, %v924
  %v926 = vpop.f32.mrf.mxu0
  %v927 = vadd.f32 %v758, %v926
  %928 = vmatmul.bf16.gmra.mxu0 %v474
  %v929 = vpop.f32.mrf.mxu0
  %v930 = vadd.f32 %v761, %v929
  %v931 = vpop.f32.mrf.mxu0
  %v932 = vadd.f32 %v763, %v931
  %933 = vmatmul.bf16.gmra.mxu0 %v476
  %v934 = vpop.f32.mrf.mxu0
  %v935 = vadd.f32 %v766, %v934
  %v936 = vpop.f32.mrf.mxu0
  %v937 = vadd.f32 %v768, %v936
  %938 = vmatmul.bf16.gmra.mxu0 %v478
  %v939 = vpop.f32.mrf.mxu0
  %v940 = vadd.f32 %v771, %v939
  %v941 = vpop.f32.mrf.mxu0
  %v942 = vadd.f32 %v773, %v941
  %943 = vmatmul.bf16.gmra.mxu0 %v480
  %v944 = vpop.f32.mrf.mxu0
  %v945 = vadd.f32 %v776, %v944
  %v946 = vpop.f32.mrf.mxu0
  %v947 = vadd.f32 %v778, %v946
  %948 = vmatmul.bf16.gmra.mxu0 %v482
  %v949 = vpop.f32.mrf.mxu0
  %v950 = vadd.f32 %v781, %v949
  %v951 = vpop.f32.mrf.mxu0
  %v952 = vadd.f32 %v783, %v951
  %953 = vmatmul.bf16.gmra.mxu0 %v484
  %v954 = vpop.f32.mrf.mxu0
  %v955 = vadd.f32 %v786, %v954
  %v956 = vpop.f32.mrf.mxu0
  %v957 = vadd.f32 %v788, %v956
  %958 = vmatmul.bf16.gmra.mxu0 %v486
  %v959 = vpop.f32.mrf.mxu0
  %v960 = vadd.f32 %v791, %v959
  %v961 = vpop.f32.mrf.mxu0
  %v962 = vadd.f32 %v793, %v961
  %963 = vmatmul.bf16.gmra.mxu0 %v488
  %v964 = vpop.f32.mrf.mxu0
  %v965 = vadd.f32 %v796, %v964
  %v966 = vpop.f32.mrf.mxu0
  %v967 = vadd.f32 %v798, %v966
  %968 = vmatmul.bf16.gmra.mxu0 %v490
  %v969 = vpop.f32.mrf.mxu0
  %v970 = vadd.f32 %v801, %v969
  %v971 = vpop.f32.mrf.mxu0
  %v972 = vadd.f32 %v803, %v971
  %973 = vmatmul.bf16.gmra.mxu0 %v492
  %v974 = vpop.f32.mrf.mxu0
  %v975 = vadd.f32 %v806, %v974
  %v976 = vpop.f32.mrf.mxu0
  %v977 = vadd.f32 %v808, %v976
  %978 = vmatmul.bf16.gmra.mxu0 %v494
  %v979 = vpop.f32.mrf.mxu0
  %v980 = vadd.f32 %v811, %v979
  %v981 = vpop.f32.mrf.mxu0
  %v982 = vadd.f32 %v813, %v981
  %983 = vmatmul.bf16.gmra.mxu0 %v496
  %v984 = vpop.f32.mrf.mxu0
  %v985 = vadd.f32 %v816, %v984
  %v986 = vpop.f32.mrf.mxu0
  %v987 = vadd.f32 %v818, %v986
  %988 = vmatmul.bf16.gmra.mxu0 %v498
  %v989 = vpop.f32.mrf.mxu0
  %v990 = vadd.f32 %v821, %v989
  %v991 = vpop.f32.mrf.mxu0
  %v992 = vadd.f32 %v823, %v991
  %993 = vmatmul.bf16.gmra.mxu0 %v500
  %v994 = vpop.f32.mrf.mxu0
  %v995 = vadd.f32 %v826, %v994
  %v996 = vpop.f32.mrf.mxu0
  %v997 = vadd.f32 %v828, %v996
  %998 = vdwg.mxu0
  %v999 = vadd.f32 %v85, %v840
  %v1000 = vadd.f32 %v86, %v842
  %v1001 = vadd.f32 %v87, %v845
  %v1002 = vadd.f32 %v88, %v847
  %v1003 = vadd.f32 %v89, %v850
  %v1004 = vadd.f32 %v90, %v852
  %v1005 = vadd.f32 %v91, %v855
  %v1006 = vadd.f32 %v92, %v857
  %v1007 = vadd.f32 %v93, %v860
  %v1008 = vadd.f32 %v94, %v862
  %v1009 = vadd.f32 %v95, %v865
  %v1010 = vadd.f32 %v96, %v867
  %v1011 = vadd.f32 %v97, %v870
  %v1012 = vadd.f32 %v98, %v872
  %v1013 = vadd.f32 %v99, %v875
  %v1014 = vadd.f32 %v100, %v877
  %v1015 = vadd.f32 %v101, %v880
  %v1016 = vadd.f32 %v102, %v882
  %v1017 = vadd.f32 %v103, %v885
  %v1018 = vadd.f32 %v104, %v887
  %v1019 = vadd.f32 %v105, %v890
  %v1020 = vadd.f32 %v106, %v892
  %v1021 = vadd.f32 %v107, %v895
  %v1022 = vadd.f32 %v108, %v897
  %v1023 = vadd.f32 %v109, %v900
  %v1024 = vadd.f32 %v110, %v902
  %v1025 = vadd.f32 %v111, %v905
  %v1026 = vadd.f32 %v112, %v907
  %v1027 = vadd.f32 %v113, %v910
  %v1028 = vadd.f32 %v114, %v912
  %v1029 = vadd.f32 %v115, %v915
  %v1030 = vadd.f32 %v116, %v917
  %v1031 = vadd.f32 %v117, %v920
  %v1032 = vadd.f32 %v118, %v922
  %v1033 = vadd.f32 %v119, %v925
  %v1034 = vadd.f32 %v120, %v927
  %v1035 = vadd.f32 %v121, %v930
  %v1036 = vadd.f32 %v122, %v932
  %v1037 = vadd.f32 %v123, %v935
  %v1038 = vadd.f32 %v124, %v937
  %v1039 = vadd.f32 %v125, %v940
  %v1040 = vadd.f32 %v126, %v942
  %v1041 = vadd.f32 %v127, %v945
  %v1042 = vadd.f32 %v128, %v947
  %v1043 = vadd.f32 %v129, %v950
  %v1044 = vadd.f32 %v130, %v952
  %v1045 = vadd.f32 %v131, %v955
  %v1046 = vadd.f32 %v132, %v957
  %v1047 = vadd.f32 %v133, %v960
  %v1048 = vadd.f32 %v134, %v962
  %v1049 = vadd.f32 %v135, %v965
  %v1050 = vadd.f32 %v136, %v967
  %v1051 = vadd.f32 %v137, %v970
  %v1052 = vadd.f32 %v138, %v972
  %v1053 = vadd.f32 %v139, %v975
  %v1054 = vadd.f32 %v140, %v977
  %v1055 = vadd.f32 %v141, %v980
  %v1056 = vadd.f32 %v142, %v982
  %v1057 = vadd.f32 %v143, %v985
  %v1058 = vadd.f32 %v144, %v987
  %v1059 = vadd.f32 %v145, %v990
  %v1060 = vadd.f32 %v146, %v992
  %v1061 = vadd.f32 %v147, %v995
  %v1062 = vadd.f32 %v148, %v997
  %1063 = vst [vmem:[#allocation2] sm:$0xff] %v999
  %1064 = vst [vmem:[#allocation2 + $0x8] sm:$0xff] %v1000
  %1065 = vst [vmem:[#allocation2 + $0x10] sm:$0xff] %v1001
  %1066 = vst [vmem:[#allocation2 + $0x18] sm:$0xff] %v1002
  %1067 = vst [vmem:[#allocation2 + $0x20] sm:$0xff] %v1003
  %1068 = vst [vmem:[#allocation2 + $0x28] sm:$0xff] %v1004
  %1069 = vst [vmem:[#allocation2 + $0x30] sm:$0xff] %v1005
  %1070 = vst [vmem:[#allocation2 + $0x38] sm:$0xff] %v1006
  %1071 = vst [vmem:[#allocation2 + $0x40] sm:$0xff] %v1007
  %1072 = vst [vmem:[#allocation2 + $0x48] sm:$0xff] %v1008
  %1073 = vst [vmem:[#allocation2 + $0x50] sm:$0xff] %v1009
  %1074 = vst [vmem:[#allocation2 + $0x58] sm:$0xff] %v1010
  %1075 = vst [vmem:[#allocation2 + $0x60] sm:$0xff] %v1011
  %1076 = vst [vmem:[#allocation2 + $0x68] sm:$0xff] %v1012
  %1077 = vst [vmem:[#allocation2 + $0x70] sm:$0xff] %v1013
  %1078 = vst [vmem:[#allocation2 + $0x78] sm:$0xff] %v1014
  %1079 = vst [vmem:[#allocation2 + $0x80] sm:$0xff] %v1015
  %1080 = vst [vmem:[#allocation2 + $0x88] sm:$0xff] %v1016
  %1081 = vst [vmem:[#allocation2 + $0x90] sm:$0xff] %v1017
  %1082 = vst [vmem:[#allocation2 + $0x98] sm:$0xff] %v1018
  %1083 = vst [vmem:[#allocation2 + $0xa0] sm:$0xff] %v1019
  %1084 = vst [vmem:[#allocation2 + $0xa8] sm:$0xff] %v1020
  %1085 = vst [vmem:[#allocation2 + $0xb0] sm:$0xff] %v1021
  %1086 = vst [vmem:[#allocation2 + $0xb8] sm:$0xff] %v1022
  %1087 = vst [vmem:[#allocation2 + $0xc0] sm:$0xff] %v1023
  %1088 = vst [vmem:[#allocation2 + $0xc8] sm:$0xff] %v1024
  %1089 = vst [vmem:[#allocation2 + $0xd0] sm:$0xff] %v1025
  %1090 = vst [vmem:[#allocation2 + $0xd8] sm:$0xff] %v1026
  %1091 = vst [vmem:[#allocation2 + $0xe0] sm:$0xff] %v1027
  %1092 = vst [vmem:[#allocation2 + $0xe8] sm:$0xff] %v1028
  %1093 = vst [vmem:[#allocation2 + $0xf0] sm:$0xff] %v1029
  %1094 = vst [vmem:[#allocation2 + $0xf8] sm:$0xff] %v1030
  %1095 = vst [vmem:[#allocation2 + $0x100] sm:$0xff] %v1031
  %1096 = vst [vmem:[#allocation2 + $0x108] sm:$0xff] %v1032
  %1097 = vst [vmem:[#allocation2 + $0x110] sm:$0xff] %v1033
  %1098 = vst [vmem:[#allocation2 + $0x118] sm:$0xff] %v1034
  %1099 = vst [vmem:[#allocation2 + $0x120] sm:$0xff] %v1035
  %1100 = vst [vmem:[#allocation2 + $0x128] sm:$0xff] %v1036
  %1101 = vst [vmem:[#allocation2 + $0x130] sm:$0xff] %v1037
  %1102 = vst [vmem:[#allocation2 + $0x138] sm:$0xff] %v1038
  %1103 = vst [vmem:[#allocation2 + $0x140] sm:$0xff] %v1039
  %1104 = vst [vmem:[#allocation2 + $0x148] sm:$0xff] %v1040
  %1105 = vst [vmem:[#allocation2 + $0x150] sm:$0xff] %v1041
  %1106 = vst [vmem:[#allocation2 + $0x158] sm:$0xff] %v1042
  %1107 = vst [vmem:[#allocation2 + $0x160] sm:$0xff] %v1043
  %1108 = vst [vmem:[#allocation2 + $0x168] sm:$0xff] %v1044
  %1109 = vst [vmem:[#allocation2 + $0x170] sm:$0xff] %v1045
  %1110 = vst [vmem:[#allocation2 + $0x178] sm:$0xff] %v1046
  %1111 = vst [vmem:[#allocation2 + $0x180] sm:$0xff] %v1047
  %1112 = vst [vmem:[#allocation2 + $0x188] sm:$0xff] %v1048
  %1113 = vst [vmem:[#allocation2 + $0x190] sm:$0xff] %v1049
  %1114 = vst [vmem:[#allocation2 + $0x198] sm:$0xff] %v1050
  %1115 = vst [vmem:[#allocation2 + $0x1a0] sm:$0xff] %v1051
  %1116 = vst [vmem:[#allocation2 + $0x1a8] sm:$0xff] %v1052
  %1117 = vst [vmem:[#allocation2 + $0x1b0] sm:$0xff] %v1053
  %1118 = vst [vmem:[#allocation2 + $0x1b8] sm:$0xff] %v1054
  %1119 = vst [vmem:[#allocation2 + $0x1c0] sm:$0xff] %v1055
  %1120 = vst [vmem:[#allocation2 + $0x1c8] sm:$0xff] %v1056
  %1121 = vst [vmem:[#allocation2 + $0x1d0] sm:$0xff] %v1057
  %1122 = vst [vmem:[#allocation2 + $0x1d8] sm:$0xff] %v1058
  %1123 = vst [vmem:[#allocation2 + $0x1e0] sm:$0xff] %v1059
  %1124 = vst [vmem:[#allocation2 + $0x1e8] sm:$0xff] %v1060
  %1125 = vst [vmem:[#allocation2 + $0x1f0] sm:$0xff] %v1061
  %1126 = vst [vmem:[#allocation2 + $0x1f8] sm:$0xff] %v1062
  // Predicated region
  $region22: #{_lambda_.17} parent=0 // pred_check
    %p1127 = pneg %p17
  $region23: #{_lambda_.17} parent=0 // pred_check_branch
    %1129 = sbr.rel (%p1127) target = $region25
  $region24: #{_lambda_.17} parent=0 // pred_region
    %v1130 = vld [vmem:[#allocation2] sm:$0xff]
    %v1131 = vld [vmem:[#allocation2 + $0x8] sm:$0xff]
    %v1132 = vld [vmem:[#allocation2 + $0x10] sm:$0xff]
    %v1133 = vld [vmem:[#allocation2 + $0x18] sm:$0xff]
    %v1134 = vld [vmem:[#allocation2 + $0x20] sm:$0xff]
    %v1135 = vld [vmem:[#allocation2 + $0x28] sm:$0xff]
    %v1136 = vld [vmem:[#allocation2 + $0x30] sm:$0xff]
    %v1137 = vld [vmem:[#allocation2 + $0x38] sm:$0xff]
    %v1138 = vld [vmem:[#allocation2 + $0x40] sm:$0xff]
    %v1139 = vld [vmem:[#allocation2 + $0x48] sm:$0xff]
    %v1140 = vld [vmem:[#allocation2 + $0x50] sm:$0xff]
    %v1141 = vld [vmem:[#allocation2 + $0x58] sm:$0xff]
    %v1142 = vld [vmem:[#allocation2 + $0x60] sm:$0xff]
    %v1143 = vld [vmem:[#allocation2 + $0x68] sm:$0xff]
    %v1144 = vld [vmem:[#allocation2 + $0x70] sm:$0xff]
    %v1145 = vld [vmem:[#allocation2 + $0x78] sm:$0xff]
    %v1146 = vld [vmem:[#allocation2 + $0x80] sm:$0xff]
    %v1147 = vld [vmem:[#allocation2 + $0x88] sm:$0xff]
    %v1148 = vld [vmem:[#allocation2 + $0x90] sm:$0xff]
    %v1149 = vld [vmem:[#allocation2 + $0x98] sm:$0xff]
    %v1150 = vld [vmem:[#allocation2 + $0xa0] sm:$0xff]
    %v1151 = vld [vmem:[#allocation2 + $0xa8] sm:$0xff]
    %v1152 = vld [vmem:[#allocation2 + $0xb0] sm:$0xff]
    %v1153 = vld [vmem:[#allocation2 + $0xb8] sm:$0xff]
    %v1154 = vld [vmem:[#allocation2 + $0xc0] sm:$0xff]
    %v1155 = vld [vmem:[#allocation2 + $0xc8] sm:$0xff]
    %v1156 = vld [vmem:[#allocation2 + $0xd0] sm:$0xff]
    %v1157 = vld [vmem:[#allocation2 + $0xd8] sm:$0xff]
    %v1158 = vld [vmem:[#allocation2 + $0xe0] sm:$0xff]
    %v1159 = vld [vmem:[#allocation2 + $0xe8] sm:$0xff]
    %v1160 = vld [vmem:[#allocation2 + $0xf0] sm:$0xff]
    %v1161 = vld [vmem:[#allocation2 + $0xf8] sm:$0xff]
    %v1162 = vld [vmem:[#allocation2 + $0x100] sm:$0xff]
    %v1163 = vld [vmem:[#allocation2 + $0x108] sm:$0xff]
    %v1164 = vld [vmem:[#allocation2 + $0x110] sm:$0xff]
    %v1165 = vld [vmem:[#allocation2 + $0x118] sm:$0xff]
    %v1166 = vld [vmem:[#allocation2 + $0x120] sm:$0xff]
    %v1167 = vld [vmem:[#allocation2 + $0x128] sm:$0xff]
    %v1168 = vld [vmem:[#allocation2 + $0x130] sm:$0xff]
    %v1169 = vld [vmem:[#allocation2 + $0x138] sm:$0xff]
    %v1170 = vld [vmem:[#allocation2 + $0x140] sm:$0xff]
    %v1171 = vld [vmem:[#allocation2 + $0x148] sm:$0xff]
    %v1172 = vld [vmem:[#allocation2 + $0x150] sm:$0xff]
    %v1173 = vld [vmem:[#allocation2 + $0x158] sm:$0xff]
    %v1174 = vld [vmem:[#allocation2 + $0x160] sm:$0xff]
    %v1175 = vld [vmem:[#allocation2 + $0x168] sm:$0xff]
    %v1176 = vld [vmem:[#allocation2 + $0x170] sm:$0xff]
    %v1177 = vld [vmem:[#allocation2 + $0x178] sm:$0xff]
    %v1178 = vld [vmem:[#allocation2 + $0x180] sm:$0xff]
    %v1179 = vld [vmem:[#allocation2 + $0x188] sm:$0xff]
    %v1180 = vld [vmem:[#allocation2 + $0x190] sm:$0xff]
    %v1181 = vld [vmem:[#allocation2 + $0x198] sm:$0xff]
    %v1182 = vld [vmem:[#allocation2 + $0x1a0] sm:$0xff]
    %v1183 = vld [vmem:[#allocation2 + $0x1a8] sm:$0xff]
    %v1184 = vld [vmem:[#allocation2 + $0x1b0] sm:$0xff]
    %v1185 = vld [vmem:[#allocation2 + $0x1b8] sm:$0xff]
    %v1186 = vld [vmem:[#allocation2 + $0x1c0] sm:$0xff]
    %v1187 = vld [vmem:[#allocation2 + $0x1c8] sm:$0xff]
    %v1188 = vld [vmem:[#allocation2 + $0x1d0] sm:$0xff]
    %v1189 = vld [vmem:[#allocation2 + $0x1d8] sm:$0xff]
    %v1190 = vld [vmem:[#allocation2 + $0x1e0] sm:$0xff]
    %v1191 = vld [vmem:[#allocation2 + $0x1e8] sm:$0xff]
    %v1192 = vld [vmem:[#allocation2 + $0x1f0] sm:$0xff]
    %v1193 = vld [vmem:[#allocation2 + $0x1f8] sm:$0xff]
    %v1194 = vadd.f32 %v1130, %v1131
    %v1195 = vadd.f32 %v1194, %v1132
    %v1196 = vadd.f32 %v1195, %v1133
    %v1197 = vadd.f32 %v1196, %v1134
    %v1198 = vadd.f32 %v1197, %v1135
    %v1199 = vadd.f32 %v1198, %v1136
    %v1200 = vadd.f32 %v1199, %v1137
    %v1201 = vadd.f32 %v1200, %v1138
    %v1202 = vadd.f32 %v1201, %v1139
    %v1203 = vadd.f32 %v1202, %v1140
    %v1204 = vadd.f32 %v1203, %v1141
    %v1205 = vadd.f32 %v1204, %v1142
    %v1206 = vadd.f32 %v1205, %v1143
    %v1207 = vadd.f32 %v1206, %v1144
    %v1208 = vadd.f32 %v1207, %v1145
    %v1209 = vadd.f32 %v1208, %v1146
    %v1210 = vadd.f32 %v1209, %v1147
    %v1211 = vadd.f32 %v1210, %v1148
    %v1212 = vadd.f32 %v1211, %v1149
    %v1213 = vadd.f32 %v1212, %v1150
    %v1214 = vadd.f32 %v1213, %v1151
    %v1215 = vadd.f32 %v1214, %v1152
    %v1216 = vadd.f32 %v1215, %v1153
    %v1217 = vadd.f32 %v1216, %v1154
    %v1218 = vadd.f32 %v1217, %v1155
    %v1219 = vadd.f32 %v1218, %v1156
    %v1220 = vadd.f32 %v1219, %v1157
    %v1221 = vadd.f32 %v1220, %v1158
    %v1222 = vadd.f32 %v1221, %v1159
    %v1223 = vadd.f32 %v1222, %v1160
    %v1224 = vadd.f32 %v1223, %v1161
    %v1225 = vadd.f32 %v1224, %v1162
    %v1226 = vadd.f32 %v1225, %v1163
    %v1227 = vadd.f32 %v1226, %v1164
    %v1228 = vadd.f32 %v1227, %v1165
    %v1229 = vadd.f32 %v1228, %v1166
    %v1230 = vadd.f32 %v1229, %v1167
    %v1231 = vadd.f32 %v1230, %v1168
    %v1232 = vadd.f32 %v1231, %v1169
    %v1233 = vadd.f32 %v1232, %v1170
    %v1234 = vadd.f32 %v1233, %v1171
    %v1235 = vadd.f32 %v1234, %v1172
    %v1236 = vadd.f32 %v1235, %v1173
    %v1237 = vadd.f32 %v1236, %v1174
    %v1238 = vadd.f32 %v1237, %v1175
    %v1239 = vadd.f32 %v1238, %v1176
    %v1240 = vadd.f32 %v1239, %v1177
    %v1241 = vadd.f32 %v1240, %v1178
    %v1242 = vadd.f32 %v1241, %v1179
    %v1243 = vadd.f32 %v1242, %v1180
    %v1244 = vadd.f32 %v1243, %v1181
    %v1245 = vadd.f32 %v1244, %v1182
    %v1246 = vadd.f32 %v1245, %v1183
    %v1247 = vadd.f32 %v1246, %v1184
    %v1248 = vadd.f32 %v1247, %v1185
    %v1249 = vadd.f32 %v1248, %v1186
    %v1250 = vadd.f32 %v1249, %v1187
    %v1251 = vadd.f32 %v1250, %v1188
    %v1252 = vadd.f32 %v1251, %v1189
    %v1253 = vadd.f32 %v1252, %v1190
    %v1254 = vadd.f32 %v1253, %v1191
    %v1255 = vadd.f32 %v1254, %v1192
    %v1256 = vadd.f32 %v1255, %v1193
    %v1257 = vrot.slane %v1256, 4
    %v1258 = vadd.f32 %v1256, %v1257
    %v1259 = vrot.slane %v1258, 2
    %v1260 = vadd.f32 %v1258, %v1259
    %v1261 = vrot.slane %v1260, 1
    %v1262 = vadd.f32 %v1260, %v1261
    %v1263 = vmul.f32 %v1262, 0.001953125
    %v1264 = vsub.f32 %v1130, %v1263
    %v1265 = vsub.f32 %v1131, %v1263
    %v1266 = vsub.f32 %v1132, %v1263
    %v1267 = vsub.f32 %v1133, %v1263
    %v1268 = vsub.f32 %v1134, %v1263
    %v1269 = vsub.f32 %v1135, %v1263
    %v1270 = vsub.f32 %v1136, %v1263
    %v1271 = vsub.f32 %v1137, %v1263
    %v1272 = vsub.f32 %v1138, %v1263
    %v1273 = vsub.f32 %v1139, %v1263
    %v1274 = vsub.f32 %v1140, %v1263
    %v1275 = vsub.f32 %v1141, %v1263
    %v1276 = vsub.f32 %v1142, %v1263
    %v1277 = vsub.f32 %v1143, %v1263
    %v1278 = vsub.f32 %v1144, %v1263
    %v1279 = vsub.f32 %v1145, %v1263
    %v1280 = vsub.f32 %v1146, %v1263
    %v1281 = vsub.f32 %v1147, %v1263
    %v1282 = vsub.f32 %v1148, %v1263
    %v1283 = vsub.f32 %v1149, %v1263
    %v1284 = vsub.f32 %v1150, %v1263
    %v1285 = vsub.f32 %v1151, %v1263
    %v1286 = vsub.f32 %v1152, %v1263
    %v1287 = vsub.f32 %v1153, %v1263
    %v1288 = vsub.f32 %v1154, %v1263
    %v1289 = vsub.f32 %v1155, %v1263
    %v1290 = vsub.f32 %v1156, %v1263
    %v1291 = vsub.f32 %v1157, %v1263
    %v1292 = vsub.f32 %v1158, %v1263
    %v1293 = vsub.f32 %v1159, %v1263
    %v1294 = vsub.f32 %v1160, %v1263
    %v1295 = vsub.f32 %v1161, %v1263
    %v1296 = vsub.f32 %v1162, %v1263
    %v1297 = vsub.f32 %v1163, %v1263
    %v1298 = vsub.f32 %v1164, %v1263
    %v1299 = vsub.f32 %v1165, %v1263
    %v1300 = vsub.f32 %v1166, %v1263
    %v1301 = vsub.f32 %v1167, %v1263
    %v1302 = vsub.f32 %v1168, %v1263
    %v1303 = vsub.f32 %v1169, %v1263
    %v1304 = vsub.f32 %v1170, %v1263
    %v1305 = vsub.f32 %v1171, %v1263
    %v1306 = vsub.f32 %v1172, %v1263
    %v1307 = vsub.f32 %v1173, %v1263
    %v1308 = vsub.f32 %v1174, %v1263
    %v1309 = vsub.f32 %v1175, %v1263
    %v1310 = vsub.f32 %v1176, %v1263
    %v1311 = vsub.f32 %v1177, %v1263
    %v1312 = vsub.f32 %v1178, %v1263
    %v1313 = vsub.f32 %v1179, %v1263
    %v1314 = vsub.f32 %v1180, %v1263
    %v1315 = vsub.f32 %v1181, %v1263
    %v1316 = vsub.f32 %v1182, %v1263
    %v1317 = vsub.f32 %v1183, %v1263
    %v1318 = vsub.f32 %v1184, %v1263
    %v1319 = vsub.f32 %v1185, %v1263
    %v1320 = vsub.f32 %v1186, %v1263
    %v1321 = vsub.f32 %v1187, %v1263
    %v1322 = vsub.f32 %v1188, %v1263
    %v1323 = vsub.f32 %v1189, %v1263
    %v1324 = vsub.f32 %v1190, %v1263
    %v1325 = vsub.f32 %v1191, %v1263
    %v1326 = vsub.f32 %v1192, %v1263
    %v1327 = vsub.f32 %v1193, %v1263
    %v1328 = vmul.f32 %v1264, %v1264
    %v1329 = vmul.f32 %v1265, %v1265
    %v1330 = vmul.f32 %v1266, %v1266
    %v1331 = vmul.f32 %v1267, %v1267
    %v1332 = vmul.f32 %v1268, %v1268
    %v1333 = vmul.f32 %v1269, %v1269
    %v1334 = vmul.f32 %v1270, %v1270
    %v1335 = vmul.f32 %v1271, %v1271
    %v1336 = vmul.f32 %v1272, %v1272
    %v1337 = vmul.f32 %v1273, %v1273
    %v1338 = vmul.f32 %v1274, %v1274
    %v1339 = vmul.f32 %v1275, %v1275
    %v1340 = vmul.f32 %v1276, %v1276
    %v1341 = vmul.f32 %v1277, %v1277
    %v1342 = vmul.f32 %v1278, %v1278
    %v1343 = vmul.f32 %v1279, %v1279
    %v1344 = vmul.f32 %v1280, %v1280
    %v1345 = vmul.f32 %v1281, %v1281
    %v1346 = vmul.f32 %v1282, %v1282
    %v1347 = vmul.f32 %v1283, %v1283
    %v1348 = vmul.f32 %v1284, %v1284
    %v1349 = vmul.f32 %v1285, %v1285
    %v1350 = vmul.f32 %v1286, %v1286
    %v1351 = vmul.f32 %v1287, %v1287
    %v1352 = vmul.f32 %v1288, %v1288
    %v1353 = vmul.f32 %v1289, %v1289
    %v1354 = vmul.f32 %v1290, %v1290
    %v1355 = vmul.f32 %v1291, %v1291
    %v1356 = vmul.f32 %v1292, %v1292
    %v1357 = vmul.f32 %v1293, %v1293
    %v1358 = vmul.f32 %v1294, %v1294
    %v1359 = vmul.f32 %v1295, %v1295
    %v1360 = vmul.f32 %v1296, %v1296
    %v1361 = vmul.f32 %v1297, %v1297
    %v1362 = vmul.f32 %v1298, %v1298
    %v1363 = vmul.f32 %v1299, %v1299
    %v1364 = vmul.f32 %v1300, %v1300
    %v1365 = vmul.f32 %v1301, %v1301
    %v1366 = vmul.f32 %v1302, %v1302
    %v1367 = vmul.f32 %v1303, %v1303
    %v1368 = vmul.f32 %v1304, %v1304
    %v1369 = vmul.f32 %v1305, %v1305
    %v1370 = vmul.f32 %v1306, %v1306
    %v1371 = vmul.f32 %v1307, %v1307
    %v1372 = vmul.f32 %v1308, %v1308
    %v1373 = vmul.f32 %v1309, %v1309
    %v1374 = vmul.f32 %v1310, %v1310
    %v1375 = vmul.f32 %v1311, %v1311
    %v1376 = vmul.f32 %v1312, %v1312
    %v1377 = vmul.f32 %v1313, %v1313
    %v1378 = vmul.f32 %v1314, %v1314
    %v1379 = vmul.f32 %v1315, %v1315
    %v1380 = vmul.f32 %v1316, %v1316
    %v1381 = vmul.f32 %v1317, %v1317
    %v1382 = vmul.f32 %v1318, %v1318
    %v1383 = vmul.f32 %v1319, %v1319
    %v1384 = vmul.f32 %v1320, %v1320
    %v1385 = vmul.f32 %v1321, %v1321
    %v1386 = vmul.f32 %v1322, %v1322
    %v1387 = vmul.f32 %v1323, %v1323
    %v1388 = vmul.f32 %v1324, %v1324
    %v1389 = vmul.f32 %v1325, %v1325
    %v1390 = vmul.f32 %v1326, %v1326
    %v1391 = vmul.f32 %v1327, %v1327
    %v1392 = vadd.f32 %v1328, %v1329
    %v1393 = vadd.f32 %v1392, %v1330
    %v1394 = vadd.f32 %v1393, %v1331
    %v1395 = vadd.f32 %v1394, %v1332
    %v1396 = vadd.f32 %v1395, %v1333
    %v1397 = vadd.f32 %v1396, %v1334
    %v1398 = vadd.f32 %v1397, %v1335
    %v1399 = vadd.f32 %v1398, %v1336
    %v1400 = vadd.f32 %v1399, %v1337
    %v1401 = vadd.f32 %v1400, %v1338
    %v1402 = vadd.f32 %v1401, %v1339
    %v1403 = vadd.f32 %v1402, %v1340
    %v1404 = vadd.f32 %v1403, %v1341
    %v1405 = vadd.f32 %v1404, %v1342
    %v1406 = vadd.f32 %v1405, %v1343
    %v1407 = vadd.f32 %v1406, %v1344
    %v1408 = vadd.f32 %v1407, %v1345
    %v1409 = vadd.f32 %v1408, %v1346
    %v1410 = vadd.f32 %v1409, %v1347
    %v1411 = vadd.f32 %v1410, %v1348
    %v1412 = vadd.f32 %v1411, %v1349
    %v1413 = vadd.f32 %v1412, %v1350
    %v1414 = vadd.f32 %v1413, %v1351
    %v1415 = vadd.f32 %v1414, %v1352
    %v1416 = vadd.f32 %v1415, %v1353
    %v1417 = vadd.f32 %v1416, %v1354
    %v1418 = vadd.f32 %v1417, %v1355
    %v1419 = vadd.f32 %v1418, %v1356
    %v1420 = vadd.f32 %v1419, %v1357
    %v1421 = vadd.f32 %v1420, %v1358
    %v1422 = vadd.f32 %v1421, %v1359
    %v1423 = vadd.f32 %v1422, %v1360
    %v1424 = vadd.f32 %v1423, %v1361
    %v1425 = vadd.f32 %v1424, %v1362
    %v1426 = vadd.f32 %v1425, %v1363
    %v1427 = vadd.f32 %v1426, %v1364
    %v1428 = vadd.f32 %v1427, %v1365
    %v1429 = vadd.f32 %v1428, %v1366
    %v1430 = vadd.f32 %v1429, %v1367
    %v1431 = vadd.f32 %v1430, %v1368
    %v1432 = vadd.f32 %v1431, %v1369
    %v1433 = vadd.f32 %v1432, %v1370
    %v1434 = vadd.f32 %v1433, %v1371
    %v1435 = vadd.f32 %v1434, %v1372
    %v1436 = vadd.f32 %v1435, %v1373
    %v1437 = vadd.f32 %v1436, %v1374
    %v1438 = vadd.f32 %v1437, %v1375
    %v1439 = vadd.f32 %v1438, %v1376
    %v1440 = vadd.f32 %v1439, %v1377
    %v1441 = vadd.f32 %v1440, %v1378
    %v1442 = vadd.f32 %v1441, %v1379
    %v1443 = vadd.f32 %v1442, %v1380
    %v1444 = vadd.f32 %v1443, %v1381
    %v1445 = vadd.f32 %v1444, %v1382
    %v1446 = vadd.f32 %v1445, %v1383
    %v1447 = vadd.f32 %v1446, %v1384
    %v1448 = vadd.f32 %v1447, %v1385
    %v1449 = vadd.f32 %v1448, %v1386
    %v1450 = vadd.f32 %v1449, %v1387
    %v1451 = vadd.f32 %v1450, %v1388
    %v1452 = vadd.f32 %v1451, %v1389
    %v1453 = vadd.f32 %v1452, %v1390
    %v1454 = vadd.f32 %v1453, %v1391
    %v1455 = vrot.slane %v1454, 4
    %v1456 = vadd.f32 %v1454, %v1455
    %v1457 = vrot.slane %v1456, 2
    %v1458 = vadd.f32 %v1456, %v1457
    %v1459 = vrot.slane %v1458, 1
    %v1460 = vadd.f32 %v1458, %v1459
    %v1461 = vmul.f32 %v1263, %v1263
    %v1462 = vmul.f32 %v1461, 0.0
    %v1463 = vsub.f32 %v1460, %v1462
    %v1464 = vmul.f32 %v1463, 0.001953125
    %v1465 = vmax.f32 %v1464, 0.0
    %v1466 = vadd.f32 %v1465, 1e-05
    %v1467 = vrsqrt.pop %v1466
    %v1468 = vmul.f32 %v1467, %v1466
    %v1469 = vmul.f32 %v1468, %v1467
    %v1470 = vmul.f32 0.5, %v1469
    %v1471 = vsub.f32 1.5, %v1470
    %v1472 = vmul.f32 %v1467, %v1471
    %vm1473 = vweird.f32 %v1466
    %vm1474 = vweird.f32 %v1467
    %vm1475 = vmor %vm1473, %vm1474
    %v1476 = vsel %vm1475, %v1467, %v1472
    %v1477 = vld [vmem:[%s2] sm:$0x1]
    %v1478 = vmul.f32 %v1477, %v1476
    %v1479 = vld [vmem:[%s3] sm:$0x1]
    %v1480 = vmul.f32 %v1263, %v1478
    %v1481 = vsub.f32 %v1479, %v1480
    %v1483 = vperm.slane %v1478, 0
    %v1485 = vmul.f32 %v1130, %v1483
    %v1486 = vmul.f32 %v1131, %v1483
    %v1487 = vmul.f32 %v1132, %v1483
    %v1488 = vmul.f32 %v1133, %v1483
    %v1489 = vmul.f32 %v1134, %v1483
    %v1490 = vmul.f32 %v1135, %v1483
    %v1491 = vmul.f32 %v1136, %v1483
    %v1492 = vmul.f32 %v1137, %v1483
    %v1493 = vmul.f32 %v1138, %v1483
    %v1494 = vmul.f32 %v1139, %v1483
    %v1495 = vmul.f32 %v1140, %v1483
    %v1496 = vmul.f32 %v1141, %v1483
    %v1497 = vmul.f32 %v1142, %v1483
    %v1498 = vmul.f32 %v1143, %v1483
    %v1499 = vmul.f32 %v1144, %v1483
    %v1500 = vmul.f32 %v1145, %v1483
    %v1501 = vmul.f32 %v1146, %v1483
    %v1502 = vmul.f32 %v1147, %v1483
    %v1503 = vmul.f32 %v1148, %v1483
    %v1504 = vmul.f32 %v1149, %v1483
    %v1505 = vmul.f32 %v1150, %v1483
    %v1506 = vmul.f32 %v1151, %v1483
    %v1507 = vmul.f32 %v1152, %v1483
    %v1508 = vmul.f32 %v1153, %v1483
    %v1509 = vmul.f32 %v1154, %v1483
    %v1510 = vmul.f32 %v1155, %v1483
    %v1511 = vmul.f32 %v1156, %v1483
    %v1512 = vmul.f32 %v1157, %v1483
    %v1513 = vmul.f32 %v1158, %v1483
    %v1514 = vmul.f32 %v1159, %v1483
    %v1515 = vmul.f32 %v1160, %v1483
    %v1516 = vmul.f32 %v1161, %v1483
    %v1517 = vmul.f32 %v1162, %v1483
    %v1518 = vmul.f32 %v1163, %v1483
    %v1519 = vmul.f32 %v1164, %v1483
    %v1520 = vmul.f32 %v1165, %v1483
    %v1521 = vmul.f32 %v1166, %v1483
    %v1522 = vmul.f32 %v1167, %v1483
    %v1523 = vmul.f32 %v1168, %v1483
    %v1524 = vmul.f32 %v1169, %v1483
    %v1525 = vmul.f32 %v1170, %v1483
    %v1526 = vmul.f32 %v1171, %v1483
    %v1527 = vmul.f32 %v1172, %v1483
    %v1528 = vmul.f32 %v1173, %v1483
    %v1529 = vmul.f32 %v1174, %v1483
    %v1530 = vmul.f32 %v1175, %v1483
    %v1531 = vmul.f32 %v1176, %v1483
    %v1532 = vmul.f32 %v1177, %v1483
    %v1533 = vmul.f32 %v1178, %v1483
    %v1534 = vmul.f32 %v1179, %v1483
    %v1535 = vmul.f32 %v1180, %v1483
    %v1536 = vmul.f32 %v1181, %v1483
    %v1537 = vmul.f32 %v1182, %v1483
    %v1538 = vmul.f32 %v1183, %v1483
    %v1539 = vmul.f32 %v1184, %v1483
    %v1540 = vmul.f32 %v1185, %v1483
    %v1541 = vmul.f32 %v1186, %v1483
    %v1542 = vmul.f32 %v1187, %v1483
    %v1543 = vmul.f32 %v1188, %v1483
    %v1544 = vmul.f32 %v1189, %v1483
    %v1545 = vmul.f32 %v1190, %v1483
    %v1546 = vmul.f32 %v1191, %v1483
    %v1547 = vmul.f32 %v1192, %v1483
    %v1548 = vmul.f32 %v1193, %v1483
    %v1550 = vperm.slane %v1481, 0
    %v1552 = vadd.f32 %v1485, %v1550
    %v1553 = vadd.f32 %v1486, %v1550
    %v1554 = vadd.f32 %v1487, %v1550
    %v1555 = vadd.f32 %v1488, %v1550
    %v1556 = vadd.f32 %v1489, %v1550
    %v1557 = vadd.f32 %v1490, %v1550
    %v1558 = vadd.f32 %v1491, %v1550
    %v1559 = vadd.f32 %v1492, %v1550
    %v1560 = vadd.f32 %v1493, %v1550
    %v1561 = vadd.f32 %v1494, %v1550
    %v1562 = vadd.f32 %v1495, %v1550
    %v1563 = vadd.f32 %v1496, %v1550
    %v1564 = vadd.f32 %v1497, %v1550
    %v1565 = vadd.f32 %v1498, %v1550
    %v1566 = vadd.f32 %v1499, %v1550
    %v1567 = vadd.f32 %v1500, %v1550
    %v1568 = vadd.f32 %v1501, %v1550
    %v1569 = vadd.f32 %v1502, %v1550
    %v1570 = vadd.f32 %v1503, %v1550
    %v1571 = vadd.f32 %v1504, %v1550
    %v1572 = vadd.f32 %v1505, %v1550
    %v1573 = vadd.f32 %v1506, %v1550
    %v1574 = vadd.f32 %v1507, %v1550
    %v1575 = vadd.f32 %v1508, %v1550
    %v1576 = vadd.f32 %v1509, %v1550
    %v1577 = vadd.f32 %v1510, %v1550
    %v1578 = vadd.f32 %v1511, %v1550
    %v1579 = vadd.f32 %v1512, %v1550
    %v1580 = vadd.f32 %v1513, %v1550
    %v1581 = vadd.f32 %v1514, %v1550
    %v1582 = vadd.f32 %v1515, %v1550
    %v1583 = vadd.f32 %v1516, %v1550
    %v1584 = vadd.f32 %v1517, %v1550
    %v1585 = vadd.f32 %v1518, %v1550
    %v1586 = vadd.f32 %v1519, %v1550
    %v1587 = vadd.f32 %v1520, %v1550
    %v1588 = vadd.f32 %v1521, %v1550
    %v1589 = vadd.f32 %v1522, %v1550
    %v1590 = vadd.f32 %v1523, %v1550
    %v1591 = vadd.f32 %v1524, %v1550
    %v1592 = vadd.f32 %v1525, %v1550
    %v1593 = vadd.f32 %v1526, %v1550
    %v1594 = vadd.f32 %v1527, %v1550
    %v1595 = vadd.f32 %v1528, %v1550
    %v1596 = vadd.f32 %v1529, %v1550
    %v1597 = vadd.f32 %v1530, %v1550
    %v1598 = vadd.f32 %v1531, %v1550
    %v1599 = vadd.f32 %v1532, %v1550
    %v1600 = vadd.f32 %v1533, %v1550
    %v1601 = vadd.f32 %v1534, %v1550
    %v1602 = vadd.f32 %v1535, %v1550
    %v1603 = vadd.f32 %v1536, %v1550
    %v1604 = vadd.f32 %v1537, %v1550
    %v1605 = vadd.f32 %v1538, %v1550
    %v1606 = vadd.f32 %v1539, %v1550
    %v1607 = vadd.f32 %v1540, %v1550
    %v1608 = vadd.f32 %v1541, %v1550
    %v1609 = vadd.f32 %v1542, %v1550
    %v1610 = vadd.f32 %v1543, %v1550
    %v1611 = vadd.f32 %v1544, %v1550
    %v1612 = vadd.f32 %v1545, %v1550
    %v1613 = vadd.f32 %v1546, %v1550
    %v1614 = vadd.f32 %v1547, %v1550
    %v1615 = vadd.f32 %v1548, %v1550
    %v1616 = vmax.f32 %v1552, 0.0
    %v1617 = vmax.f32 %v1553, 0.0
    %v1618 = vmax.f32 %v1554, 0.0
    %v1619 = vmax.f32 %v1555, 0.0
    %v1620 = vmax.f32 %v1556, 0.0
    %v1621 = vmax.f32 %v1557, 0.0
    %v1622 = vmax.f32 %v1558, 0.0
    %v1623 = vmax.f32 %v1559, 0.0
    %v1624 = vmax.f32 %v1560, 0.0
    %v1625 = vmax.f32 %v1561, 0.0
    %v1626 = vmax.f32 %v1562, 0.0
    %v1627 = vmax.f32 %v1563, 0.0
    %v1628 = vmax.f32 %v1564, 0.0
    %v1629 = vmax.f32 %v1565, 0.0
    %v1630 = vmax.f32 %v1566, 0.0
    %v1631 = vmax.f32 %v1567, 0.0
    %v1632 = vmax.f32 %v1568, 0.0
    %v1633 = vmax.f32 %v1569, 0.0
    %v1634 = vmax.f32 %v1570, 0.0
    %v1635 = vmax.f32 %v1571, 0.0
    %v1636 = vmax.f32 %v1572, 0.0
    %v1637 = vmax.f32 %v1573, 0.0
    %v1638 = vmax.f32 %v1574, 0.0
    %v1639 = vmax.f32 %v1575, 0.0
    %v1640 = vmax.f32 %v1576, 0.0
    %v1641 = vmax.f32 %v1577, 0.0
    %v1642 = vmax.f32 %v1578, 0.0
    %v1643 = vmax.f32 %v1579, 0.0
    %v1644 = vmax.f32 %v1580, 0.0
    %v1645 = vmax.f32 %v1581, 0.0
    %v1646 = vmax.f32 %v1582, 0.0
    %v1647 = vmax.f32 %v1583, 0.0
    %v1648 = vmax.f32 %v1584, 0.0
    %v1649 = vmax.f32 %v1585, 0.0
    %v1650 = vmax.f32 %v1586, 0.0
    %v1651 = vmax.f32 %v1587, 0.0
    %v1652 = vmax.f32 %v1588, 0.0
    %v1653 = vmax.f32 %v1589, 0.0
    %v1654 = vmax.f32 %v1590, 0.0
    %v1655 = vmax.f32 %v1591, 0.0
    %v1656 = vmax.f32 %v1592, 0.0
    %v1657 = vmax.f32 %v1593, 0.0
    %v1658 = vmax.f32 %v1594, 0.0
    %v1659 = vmax.f32 %v1595, 0.0
    %v1660 = vmax.f32 %v1596, 0.0
    %v1661 = vmax.f32 %v1597, 0.0
    %v1662 = vmax.f32 %v1598, 0.0
    %v1663 = vmax.f32 %v1599, 0.0
    %v1664 = vmax.f32 %v1600, 0.0
    %v1665 = vmax.f32 %v1601, 0.0
    %v1666 = vmax.f32 %v1602, 0.0
    %v1667 = vmax.f32 %v1603, 0.0
    %v1668 = vmax.f32 %v1604, 0.0
    %v1669 = vmax.f32 %v1605, 0.0
    %v1670 = vmax.f32 %v1606, 0.0
    %v1671 = vmax.f32 %v1607, 0.0
    %v1672 = vmax.f32 %v1608, 0.0
    %v1673 = vmax.f32 %v1609, 0.0
    %v1674 = vmax.f32 %v1610, 0.0
    %v1675 = vmax.f32 %v1611, 0.0
    %v1676 = vmax.f32 %v1612, 0.0
    %v1677 = vmax.f32 %v1613, 0.0
    %v1678 = vmax.f32 %v1614, 0.0
    %v1679 = vmax.f32 %v1615, 0.0
    %v1680 = vpack.c.bf16 %v1616, %v1616
    %v1681 = vpack.c.bf16 %v1617, %v1617
    %v1682 = vpack.c.bf16 %v1618, %v1618
    %v1683 = vpack.c.bf16 %v1619, %v1619
    %v1684 = vpack.c.bf16 %v1620, %v1620
    %v1685 = vpack.c.bf16 %v1621, %v1621
    %v1686 = vpack.c.bf16 %v1622, %v1622
    %v1687 = vpack.c.bf16 %v1623, %v1623
    %v1688 = vpack.c.bf16 %v1624, %v1624
    %v1689 = vpack.c.bf16 %v1625, %v1625
    %v1690 = vpack.c.bf16 %v1626, %v1626
    %v1691 = vpack.c.bf16 %v1627, %v1627
    %v1692 = vpack.c.bf16 %v1628, %v1628
    %v1693 = vpack.c.bf16 %v1629, %v1629
    %v1694 = vpack.c.bf16 %v1630, %v1630
    %v1695 = vpack.c.bf16 %v1631, %v1631
    %v1696 = vpack.c.bf16 %v1632, %v1632
    %v1697 = vpack.c.bf16 %v1633, %v1633
    %v1698 = vpack.c.bf16 %v1634, %v1634
    %v1699 = vpack.c.bf16 %v1635, %v1635
    %v1700 = vpack.c.bf16 %v1636, %v1636
    %v1701 = vpack.c.bf16 %v1637, %v1637
    %v1702 = vpack.c.bf16 %v1638, %v1638
    %v1703 = vpack.c.bf16 %v1639, %v1639
    %v1704 = vpack.c.bf16 %v1640, %v1640
    %v1705 = vpack.c.bf16 %v1641, %v1641
    %v1706 = vpack.c.bf16 %v1642, %v1642
    %v1707 = vpack.c.bf16 %v1643, %v1643
    %v1708 = vpack.c.bf16 %v1644, %v1644
    %v1709 = vpack.c.bf16 %v1645, %v1645
    %v1710 = vpack.c.bf16 %v1646, %v1646
    %v1711 = vpack.c.bf16 %v1647, %v1647
    %v1712 = vpack.c.bf16 %v1648, %v1648
    %v1713 = vpack.c.bf16 %v1649, %v1649
    %v1714 = vpack.c.bf16 %v1650, %v1650
    %v1715 = vpack.c.bf16 %v1651, %v1651
    %v1716 = vpack.c.bf16 %v1652, %v1652
    %v1717 = vpack.c.bf16 %v1653, %v1653
    %v1718 = vpack.c.bf16 %v1654, %v1654
    %v1719 = vpack.c.bf16 %v1655, %v1655
    %v1720 = vpack.c.bf16 %v1656, %v1656
    %v1721 = vpack.c.bf16 %v1657, %v1657
    %v1722 = vpack.c.bf16 %v1658, %v1658
    %v1723 = vpack.c.bf16 %v1659, %v1659
    %v1724 = vpack.c.bf16 %v1660, %v1660
    %v1725 = vpack.c.bf16 %v1661, %v1661
    %v1726 = vpack.c.bf16 %v1662, %v1662
    %v1727 = vpack.c.bf16 %v1663, %v1663
    %v1728 = vpack.c.bf16 %v1664, %v1664
    %v1729 = vpack.c.bf16 %v1665, %v1665
    %v1730 = vpack.c.bf16 %v1666, %v1666
    %v1731 = vpack.c.bf16 %v1667, %v1667
    %v1732 = vpack.c.bf16 %v1668, %v1668
    %v1733 = vpack.c.bf16 %v1669, %v1669
    %v1734 = vpack.c.bf16 %v1670, %v1670
    %v1735 = vpack.c.bf16 %v1671, %v1671
    %v1736 = vpack.c.bf16 %v1672, %v1672
    %v1737 = vpack.c.bf16 %v1673, %v1673
    %v1738 = vpack.c.bf16 %v1674, %v1674
    %v1739 = vpack.c.bf16 %v1675, %v1675
    %v1740 = vpack.c.bf16 %v1676, %v1676
    %v1741 = vpack.c.bf16 %v1677, %v1677
    %v1742 = vpack.c.bf16 %v1678, %v1678
    %v1743 = vpack.c.bf16 %v1679, %v1679
    %1744 = vst [vmem:[%s4] sm:$0xf] %v1680
    %1745 = vst [vmem:[%s4 + $0x4] sm:$0xf] %v1681
    %1746 = vst [vmem:[%s4 + $0x8] sm:$0xf] %v1682
    %1747 = vst [vmem:[%s4 + $0xc] sm:$0xf] %v1683
    %1748 = vst [vmem:[%s4 + $0x10] sm:$0xf] %v1684
    %1749 = vst [vmem:[%s4 + $0x14] sm:$0xf] %v1685
    %1750 = vst [vmem:[%s4 + $0x18] sm:$0xf] %v1686
    %1751 = vst [vmem:[%s4 + $0x1c] sm:$0xf] %v1687
    %1752 = vst [vmem:[%s4 + $0x20] sm:$0xf] %v1688
    %1753 = vst [vmem:[%s4 + $0x24] sm:$0xf] %v1689
    %1754 = vst [vmem:[%s4 + $0x28] sm:$0xf] %v1690
    %1755 = vst [vmem:[%s4 + $0x2c] sm:$0xf] %v1691
    %1756 = vst [vmem:[%s4 + $0x30] sm:$0xf] %v1692
    %1757 = vst [vmem:[%s4 + $0x34] sm:$0xf] %v1693
    %1758 = vst [vmem:[%s4 + $0x38] sm:$0xf] %v1694
    %1759 = vst [vmem:[%s4 + $0x3c] sm:$0xf] %v1695
    %1760 = vst [vmem:[%s4 + $0x40] sm:$0xf] %v1696
    %1761 = vst [vmem:[%s4 + $0x44] sm:$0xf] %v1697
    %1762 = vst [vmem:[%s4 + $0x48] sm:$0xf] %v1698
    %1763 = vst [vmem:[%s4 + $0x4c] sm:$0xf] %v1699
    %1764 = vst [vmem:[%s4 + $0x50] sm:$0xf] %v1700
    %1765 = vst [vmem:[%s4 + $0x54] sm:$0xf] %v1701
    %1766 = vst [vmem:[%s4 + $0x58] sm:$0xf] %v1702
    %1767 = vst [vmem:[%s4 + $0x5c] sm:$0xf] %v1703
    %1768 = vst [vmem:[%s4 + $0x60] sm:$0xf] %v1704
    %1769 = vst [vmem:[%s4 + $0x64] sm:$0xf] %v1705
    %1770 = vst [vmem:[%s4 + $0x68] sm:$0xf] %v1706
    %1771 = vst [vmem:[%s4 + $0x6c] sm:$0xf] %v1707
    %1772 = vst [vmem:[%s4 + $0x70] sm:$0xf] %v1708
    %1773 = vst [vmem:[%s4 + $0x74] sm:$0xf] %v1709
    %1774 = vst [vmem:[%s4 + $0x78] sm:$0xf] %v1710
    %1775 = vst [vmem:[%s4 + $0x7c] sm:$0xf] %v1711
    %1776 = vst [vmem:[%s4 + $0x80] sm:$0xf] %v1712
    %1777 = vst [vmem:[%s4 + $0x84] sm:$0xf] %v1713
    %1778 = vst [vmem:[%s4 + $0x88] sm:$0xf] %v1714
    %1779 = vst [vmem:[%s4 + $0x8c] sm:$0xf] %v1715
    %1780 = vst [vmem:[%s4 + $0x90] sm:$0xf] %v1716
    %1781 = vst [vmem:[%s4 + $0x94] sm:$0xf] %v1717
    %1782 = vst [vmem:[%s4 + $0x98] sm:$0xf] %v1718
    %1783 = vst [vmem:[%s4 + $0x9c] sm:$0xf] %v1719
    %1784 = vst [vmem:[%s4 + $0xa0] sm:$0xf] %v1720
    %1785 = vst [vmem:[%s4 + $0xa4] sm:$0xf] %v1721
    %1786 = vst [vmem:[%s4 + $0xa8] sm:$0xf] %v1722
    %1787 = vst [vmem:[%s4 + $0xac] sm:$0xf] %v1723
    %1788 = vst [vmem:[%s4 + $0xb0] sm:$0xf] %v1724
    %1789 = vst [vmem:[%s4 + $0xb4] sm:$0xf] %v1725
    %1790 = vst [vmem:[%s4 + $0xb8] sm:$0xf] %v1726
    %1791 = vst [vmem:[%s4 + $0xbc] sm:$0xf] %v1727
    %1792 = vst [vmem:[%s4 + $0xc0] sm:$0xf] %v1728
    %1793 = vst [vmem:[%s4 + $0xc4] sm:$0xf] %v1729
    %1794 = vst [vmem:[%s4 + $0xc8] sm:$0xf] %v1730
    %1795 = vst [vmem:[%s4 + $0xcc] sm:$0xf] %v1731
    %1796 = vst [vmem:[%s4 + $0xd0] sm:$0xf] %v1732
    %1797 = vst [vmem:[%s4 + $0xd4] sm:$0xf] %v1733
    %1798 = vst [vmem:[%s4 + $0xd8] sm:$0xf] %v1734
    %1799 = vst [vmem:[%s4 + $0xdc] sm:$0xf] %v1735
    %1800 = vst [vmem:[%s4 + $0xe0] sm:$0xf] %v1736
    %1801 = vst [vmem:[%s4 + $0xe4] sm:$0xf] %v1737
    %1802 = vst [vmem:[%s4 + $0xe8] sm:$0xf] %v1738
    %1803 = vst [vmem:[%s4 + $0xec] sm:$0xf] %v1739
    %1804 = vst [vmem:[%s4 + $0xf0] sm:$0xf] %v1740
    %1805 = vst [vmem:[%s4 + $0xf4] sm:$0xf] %v1741
    %1806 = vst [vmem:[%s4 + $0xf8] sm:$0xf] %v1742
    %1807 = vst [vmem:[%s4 + $0xfc] sm:$0xf] %v1743
  $region25: #{_lambda_.17} parent=0 // pred_fallthru
    _
  // Predicated region
  $region26: #{_lambda_.17} parent=0 // pred_check
    _
  $region27: #{_lambda_.17} parent=0 // pred_check_branch
    %1809 = sbr.rel (0) target = $region29
  $region28: #{_lambda_.17} parent=0 // pred_region
    _
  $region29: #{_lambda_.17} parent=0 // pred_fallthru
    _
  // Predicated region
  $region30: #{_lambda_.17} parent=0 // pred_check
    _
  $region31: #{_lambda_.17} parent=0 // pred_check_branch
    %1811 = sbr.rel (0) target = $region33
  $region32: #{_lambda_.17} parent=0 // pred_region
    _
  $region33: #{_lambda_.17} parent=0 // pred_fallthru
    _

// kernel: _lambda_.18
$region0: #{_lambda_.18}
  #allocation0 [shape = 'u32[]', space=smem, size = 0x4, offset = 0x4, fixed_abs, tag = 'smem constant byte address 0x4 - core index']
  #allocation1 [shape = 'u32[72,128]{1,0:T(1,128)}', space=vmem, size = 0x9000, scoped, tag = 'internal scratch']
  #allocation2 [shape = 'f32[512,128]{1,0:T(8,128)}', space=vmem, size = 0x40000, scoped, tag = 'scratch operand']
  %s0 = inlined_call_operand.vmem [shape: bf16[512,128], index: 0, kind: input, shape index: {}]
  %s1 = inlined_call_operand.vmem [shape: bf16[128,128], index: 1, kind: input, shape index: {}]
  %s2 = inlined_call_operand.vmem [shape: f32[1,128], index: 2, kind: input, shape index: {}]
  %s3 = inlined_call_operand.vmem [shape: f32[1,128], index: 3, kind: input, shape index: {}]
  %s4 = inlined_call_operand.vmem [shape: bf16[512,128], index: 4, kind: output, shape index: {}]
  %s5 = sld [smem:[#allocation0]]
  $region34: #{_lambda_.18} parent=0
    _
  %s7 = ssub.s32 1, %s5
  %s8 = scalar_select 0, %s7, %s5
  // Predicated region
  $region2: #{_lambda_.18} parent=0 // pred_check
    _
  $region3: #{_lambda_.18} parent=0 // pred_check_branch
    %10 = sbr.rel (0) target = $region5
  $region4: #{_lambda_.18} parent=0 // pred_region
    _
  $region5: #{_lambda_.18} parent=0 // pred_fallthru
    _
  // Predicated region
  $region6: #{_lambda_.18} parent=0 // pred_check
    _
  $region7: #{_lambda_.18} parent=0 // pred_check_branch
    %12 = sbr.rel (0) target = $region9
  $region8: #{_lambda_.18} parent=0 // pred_region
    _
  $region9: #{_lambda_.18} parent=0 // pred_fallthru
    _
  // Predicated region
  $region10: #{_lambda_.18} parent=0 // pred_check
    _
  $region11: #{_lambda_.18} parent=0 // pred_check_branch
    %14 = sbr.rel (0) target = $region13
  $region12: #{_lambda_.18} parent=0 // pred_region
    _
  $region13: #{_lambda_.18} parent=0 // pred_fallthru
    _
  // Predicated region
  $region14: #{_lambda_.18} parent=0 // pred_check
    _
  $region15: #{_lambda_.18} parent=0 // pred_check_branch
    %16 = sbr.rel (0) target = $region17
  $region16: #{_lambda_.18} parent=0 // pred_region
    _
  $region17: #{_lambda_.18} parent=0 // pred_fallthru
    _
  %p17 = scmp.eq.s32.totalorder 0, 0
  // Predicated region
  $region18: #{_lambda_.18} parent=0 // pred_check
    %p18 = pneg %p17
  $region19: #{_lambda_.18} parent=0 // pred_check_branch
    %20 = sbr.rel (%p18) target = $region21
  $region20: #{_lambda_.18} parent=0 // pred_region
    %21 = vst [vmem:[#allocation2] sm:$0xff] 0.0
    %22 = vst [vmem:[#allocation2 + $0x8] sm:$0xff] 0.0
    %23 = vst [vmem:[#allocation2 + $0x10] sm:$0xff] 0.0
    %24 = vst [vmem:[#allocation2 + $0x18] sm:$0xff] 0.0
    %25 = vst [vmem:[#allocation2 + $0x20] sm:$0xff] 0.0
    %26 = vst [vmem:[#allocation2 + $0x28] sm:$0xff] 0.0
    %27 = vst [vmem:[#allocation2 + $0x30] sm:$0xff] 0.0
    %28 = vst [vmem:[#allocation2 + $0x38] sm:$0xff] 0.0
    %29 = vst [vmem:[#allocation2 + $0x40] sm:$0xff] 0.0
    %30 = vst [vmem:[#allocation2 + $0x48] sm:$0xff] 0.0
    %31 = vst [vmem:[#allocation2 + $0x50] sm:$0xff] 0.0
    %32 = vst [vmem:[#allocation2 + $0x58] sm:$0xff] 0.0
    %33 = vst [vmem:[#allocation2 + $0x60] sm:$0xff] 0.0
    %34 = vst [vmem:[#allocation2 + $0x68] sm:$0xff] 0.0
    %35 = vst [vmem:[#allocation2 + $0x70] sm:$0xff] 0.0
    %36 = vst [vmem:[#allocation2 + $0x78] sm:$0xff] 0.0
    %37 = vst [vmem:[#allocation2 + $0x80] sm:$0xff] 0.0
    %38 = vst [vmem:[#allocation2 + $0x88] sm:$0xff] 0.0
    %39 = vst [vmem:[#allocation2 + $0x90] sm:$0xff] 0.0
    %40 = vst [vmem:[#allocation2 + $0x98] sm:$0xff] 0.0
    %41 = vst [vmem:[#allocation2 + $0xa0] sm:$0xff] 0.0
    %42 = vst [vmem:[#allocation2 + $0xa8] sm:$0xff] 0.0
    %43 = vst [vmem:[#allocation2 + $0xb0] sm:$0xff] 0.0
    %44 = vst [vmem:[#allocation2 + $0xb8] sm:$0xff] 0.0
    %45 = vst [vmem:[#allocation2 + $0xc0] sm:$0xff] 0.0
    %46 = vst [vmem:[#allocation2 + $0xc8] sm:$0xff] 0.0
    %47 = vst [vmem:[#allocation2 + $0xd0] sm:$0xff] 0.0
    %48 = vst [vmem:[#allocation2 + $0xd8] sm:$0xff] 0.0
    %49 = vst [vmem:[#allocation2 + $0xe0] sm:$0xff] 0.0
    %50 = vst [vmem:[#allocation2 + $0xe8] sm:$0xff] 0.0
    %51 = vst [vmem:[#allocation2 + $0xf0] sm:$0xff] 0.0
    %52 = vst [vmem:[#allocation2 + $0xf8] sm:$0xff] 0.0
    %53 = vst [vmem:[#allocation2 + $0x100] sm:$0xff] 0.0
    %54 = vst [vmem:[#allocation2 + $0x108] sm:$0xff] 0.0
    %55 = vst [vmem:[#allocation2 + $0x110] sm:$0xff] 0.0
    %56 = vst [vmem:[#allocation2 + $0x118] sm:$0xff] 0.0
    %57 = vst [vmem:[#allocation2 + $0x120] sm:$0xff] 0.0
    %58 = vst [vmem:[#allocation2 + $0x128] sm:$0xff] 0.0
    %59 = vst [vmem:[#allocation2 + $0x130] sm:$0xff] 0.0
    %60 = vst [vmem:[#allocation2 + $0x138] sm:$0xff] 0.0
    %61 = vst [vmem:[#allocation2 + $0x140] sm:$0xff] 0.0
    %62 = vst [vmem:[#allocation2 + $0x148] sm:$0xff] 0.0
    %63 = vst [vmem:[#allocation2 + $0x150] sm:$0xff] 0.0
    %64 = vst [vmem:[#allocation2 + $0x158] sm:$0xff] 0.0
    %65 = vst [vmem:[#allocation2 + $0x160] sm:$0xff] 0.0
    %66 = vst [vmem:[#allocation2 + $0x168] sm:$0xff] 0.0
    %67 = vst [vmem:[#allocation2 + $0x170] sm:$0xff] 0.0
    %68 = vst [vmem:[#allocation2 + $0x178] sm:$0xff] 0.0
    %69 = vst [vmem:[#allocation2 + $0x180] sm:$0xff] 0.0
    %70 = vst [vmem:[#allocation2 + $0x188] sm:$0xff] 0.0
    %71 = vst [vmem:[#allocation2 + $0x190] sm:$0xff] 0.0
    %72 = vst [vmem:[#allocation2 + $0x198] sm:$0xff] 0.0
    %73 = vst [vmem:[#allocation2 + $0x1a0] sm:$0xff] 0.0
    %74 = vst [vmem:[#allocation2 + $0x1a8] sm:$0xff] 0.0
    %75 = vst [vmem:[#allocation2 + $0x1b0] sm:$0xff] 0.0
    %76 = vst [vmem:[#allocation2 + $0x1b8] sm:$0xff] 0.0
    %77 = vst [vmem:[#allocation2 + $0x1c0] sm:$0xff] 0.0
    %78 = vst [vmem:[#allocation2 + $0x1c8] sm:$0xff] 0.0
    %79 = vst [vmem:[#allocation2 + $0x1d0] sm:$0xff] 0.0
    %80 = vst [vmem:[#allocation2 + $0x1d8] sm:$0xff] 0.0
    %81 = vst [vmem:[#allocation2 + $0x1e0] sm:$0xff] 0.0
    %82 = vst [vmem:[#allocation2 + $0x1e8] sm:$0xff] 0.0
    %83 = vst [vmem:[#allocation2 + $0x1f0] sm:$0xff] 0.0
    %84 = vst [vmem:[#allocation2 + $0x1f8] sm:$0xff] 0.0
  $region21: #{_lambda_.18} parent=0 // pred_fallthru
    _
  %v85 = vld [vmem:[#allocation2] sm:$0xff]
  %v86 = vld [vmem:[#allocation2 + $0x8] sm:$0xff]
  %v87 = vld [vmem:[#allocation2 + $0x10] sm:$0xff]
  %v88 = vld [vmem:[#allocation2 + $0x18] sm:$0xff]
  %v89 = vld [vmem:[#allocation2 + $0x20] sm:$0xff]
  %v90 = vld [vmem:[#allocation2 + $0x28] sm:$0xff]
  %v91 = vld [vmem:[#allocation2 + $0x30] sm:$0xff]
  %v92 = vld [vmem:[#allocation2 + $0x38] sm:$0xff]
  %v93 = vld [vmem:[#allocation2 + $0x40] sm:$0xff]
  %v94 = vld [vmem:[#allocation2 + $0x48] sm:$0xff]
  %v95 = vld [vmem:[#allocation2 + $0x50] sm:$0xff]
  %v96 = vld [vmem:[#allocation2 + $0x58] sm:$0xff]
  %v97 = vld [vmem:[#allocation2 + $0x60] sm:$0xff]
  %v98 = vld [vmem:[#allocation2 + $0x68] sm:$0xff]
  %v99 = vld [vmem:[#allocation2 + $0x70] sm:$0xff]
  %v100 = vld [vmem:[#allocation2 + $0x78] sm:$0xff]
  %v101 = vld [vmem:[#allocation2 + $0x80] sm:$0xff]
  %v102 = vld [vmem:[#allocation2 + $0x88] sm:$0xff]
  %v103 = vld [vmem:[#allocation2 + $0x90] sm:$0xff]
  %v104 = vld [vmem:[#allocation2 + $0x98] sm:$0xff]
  %v105 = vld [vmem:[#allocation2 + $0xa0] sm:$0xff]
  %v106 = vld [vmem:[#allocation2 + $0xa8] sm:$0xff]
  %v107 = vld [vmem:[#allocation2 + $0xb0] sm:$0xff]
  %v108 = vld [vmem:[#allocation2 + $0xb8] sm:$0xff]
  %v109 = vld [vmem:[#allocation2 + $0xc0] sm:$0xff]
  %v110 = vld [vmem:[#allocation2 + $0xc8] sm:$0xff]
  %v111 = vld [vmem:[#allocation2 + $0xd0] sm:$0xff]
  %v112 = vld [vmem:[#allocation2 + $0xd8] sm:$0xff]
  %v113 = vld [vmem:[#allocation2 + $0xe0] sm:$0xff]
  %v114 = vld [vmem:[#allocation2 + $0xe8] sm:$0xff]
  %v115 = vld [vmem:[#allocation2 + $0xf0] sm:$0xff]
  %v116 = vld [vmem:[#allocation2 + $0xf8] sm:$0xff]
  %v117 = vld [vmem:[#allocation2 + $0x100] sm:$0xff]
  %v118 = vld [vmem:[#allocation2 + $0x108] sm:$0xff]
  %v119 = vld [vmem:[#allocation2 + $0x110] sm:$0xff]
  %v120 = vld [vmem:[#allocation2 + $0x118] sm:$0xff]
  %v121 = vld [vmem:[#allocation2 + $0x120] sm:$0xff]
  %v122 = vld [vmem:[#allocation2 + $0x128] sm:$0xff]
  %v123 = vld [vmem:[#allocation2 + $0x130] sm:$0xff]
  %v124 = vld [vmem:[#allocation2 + $0x138] sm:$0xff]
  %v125 = vld [vmem:[#allocation2 + $0x140] sm:$0xff]
  %v126 = vld [vmem:[#allocation2 + $0x148] sm:$0xff]
  %v127 = vld [vmem:[#allocation2 + $0x150] sm:$0xff]
  %v128 = vld [vmem:[#allocation2 + $0x158] sm:$0xff]
  %v129 = vld [vmem:[#allocation2 + $0x160] sm:$0xff]
  %v130 = vld [vmem:[#allocation2 + $0x168] sm:$0xff]
  %v131 = vld [vmem:[#allocation2 + $0x170] sm:$0xff]
  %v132 = vld [vmem:[#allocation2 + $0x178] sm:$0xff]
  %v133 = vld [vmem:[#allocation2 + $0x180] sm:$0xff]
  %v134 = vld [vmem:[#allocation2 + $0x188] sm:$0xff]
  %v135 = vld [vmem:[#allocation2 + $0x190] sm:$0xff]
  %v136 = vld [vmem:[#allocation2 + $0x198] sm:$0xff]
  %v137 = vld [vmem:[#allocation2 + $0x1a0] sm:$0xff]
  %v138 = vld [vmem:[#allocation2 + $0x1a8] sm:$0xff]
  %v139 = vld [vmem:[#allocation2 + $0x1b0] sm:$0xff]
  %v140 = vld [vmem:[#allocation2 + $0x1b8] sm:$0xff]
  %v141 = vld [vmem:[#allocation2 + $0x1c0] sm:$0xff]
  %v142 = vld [vmem:[#allocation2 + $0x1c8] sm:$0xff]
  %v143 = vld [vmem:[#allocation2 + $0x1d0] sm:$0xff]
  %v144 = vld [vmem:[#allocation2 + $0x1d8] sm:$0xff]
  %v145 = vld [vmem:[#allocation2 + $0x1e0] sm:$0xff]
  %v146 = vld [vmem:[#allocation2 + $0x1e8] sm:$0xff]
  %v147 = vld [vmem:[#allocation2 + $0x1f0] sm:$0xff]
  %v148 = vld [vmem:[#allocation2 + $0x1f8] sm:$0xff]
  %v149 = vld [vmem:[%s0] sm:$0xf]
  %v150 = vld [vmem:[%s0 + $0x4] sm:$0xf]
  %v151 = vld [vmem:[%s0 + $0x8] sm:$0xf]
  %v152 = vld [vmem:[%s0 + $0xc] sm:$0xf]
  %v153 = vld [vmem:[%s0 + $0x10] sm:$0xf]
  %v154 = vld [vmem:[%s0 + $0x14] sm:$0xf]
  %v155 = vld [vmem:[%s0 + $0x18] sm:$0xf]
  %v156 = vld [vmem:[%s0 + $0x1c] sm:$0xf]
  %v157 = vld [vmem:[%s0 + $0x20] sm:$0xf]
  %v158 = vld [vmem:[%s0 + $0x24] sm:$0xf]
  %v159 = vld [vmem:[%s0 + $0x28] sm:$0xf]
  %v160 = vld [vmem:[%s0 + $0x2c] sm:$0xf]
  %v161 = vld [vmem:[%s0 + $0x30] sm:$0xf]
  %v162 = vld [vmem:[%s0 + $0x34] sm:$0xf]
  %v163 = vld [vmem:[%s0 + $0x38] sm:$0xf]
  %v164 = vld [vmem:[%s0 + $0x3c] sm:$0xf]
  %v165 = vld [vmem:[%s0 + $0x40] sm:$0xf]
  %v166 = vld [vmem:[%s0 + $0x44] sm:$0xf]
  %v167 = vld [vmem:[%s0 + $0x48] sm:$0xf]
  %v168 = vld [vmem:[%s0 + $0x4c] sm:$0xf]
  %v169 = vld [vmem:[%s0 + $0x50] sm:$0xf]
  %v170 = vld [vmem:[%s0 + $0x54] sm:$0xf]
  %v171 = vld [vmem:[%s0 + $0x58] sm:$0xf]
  %v172 = vld [vmem:[%s0 + $0x5c] sm:$0xf]
  %v173 = vld [vmem:[%s0 + $0x60] sm:$0xf]
  %v174 = vld [vmem:[%s0 + $0x64] sm:$0xf]
  %v175 = vld [vmem:[%s0 + $0x68] sm:$0xf]
  %v176 = vld [vmem:[%s0 + $0x6c] sm:$0xf]
  %v177 = vld [vmem:[%s0 + $0x70] sm:$0xf]
  %v178 = vld [vmem:[%s0 + $0x74] sm:$0xf]
  %v179 = vld [vmem:[%s0 + $0x78] sm:$0xf]
  %v180 = vld [vmem:[%s0 + $0x7c] sm:$0xf]
  %v181 = vld [vmem:[%s0 + $0x80] sm:$0xf]
  %v182 = vld [vmem:[%s0 + $0x84] sm:$0xf]
  %v183 = vld [vmem:[%s0 + $0x88] sm:$0xf]
  %v184 = vld [vmem:[%s0 + $0x8c] sm:$0xf]
  %v185 = vld [vmem:[%s0 + $0x90] sm:$0xf]
  %v186 = vld [vmem:[%s0 + $0x94] sm:$0xf]
  %v187 = vld [vmem:[%s0 + $0x98] sm:$0xf]
  %v188 = vld [vmem:[%s0 + $0x9c] sm:$0xf]
  %v189 = vld [vmem:[%s0 + $0xa0] sm:$0xf]
  %v190 = vld [vmem:[%s0 + $0xa4] sm:$0xf]
  %v191 = vld [vmem:[%s0 + $0xa8] sm:$0xf]
  %v192 = vld [vmem:[%s0 + $0xac] sm:$0xf]
  %v193 = vld [vmem:[%s0 + $0xb0] sm:$0xf]
  %v194 = vld [vmem:[%s0 + $0xb4] sm:$0xf]
  %v195 = vld [vmem:[%s0 + $0xb8] sm:$0xf]
  %v196 = vld [vmem:[%s0 + $0xbc] sm:$0xf]
  %v197 = vld [vmem:[%s0 + $0xc0] sm:$0xf]
  %v198 = vld [vmem:[%s0 + $0xc4] sm:$0xf]
  %v199 = vld [vmem:[%s0 + $0xc8] sm:$0xf]
  %v200 = vld [vmem:[%s0 + $0xcc] sm:$0xf]
  %v201 = vld [vmem:[%s0 + $0xd0] sm:$0xf]
  %v202 = vld [vmem:[%s0 + $0xd4] sm:$0xf]
  %v203 = vld [vmem:[%s0 + $0xd8] sm:$0xf]
  %v204 = vld [vmem:[%s0 + $0xdc] sm:$0xf]
  %v205 = vld [vmem:[%s0 + $0xe0] sm:$0xf]
  %v206 = vld [vmem:[%s0 + $0xe4] sm:$0xf]
  %v207 = vld [vmem:[%s0 + $0xe8] sm:$0xf]
  %v208 = vld [vmem:[%s0 + $0xec] sm:$0xf]
  %v209 = vld [vmem:[%s0 + $0xf0] sm:$0xf]
  %v210 = vld [vmem:[%s0 + $0xf4] sm:$0xf]
  %v211 = vld [vmem:[%s0 + $0xf8] sm:$0xf]
  %v212 = vld [vmem:[%s0 + $0xfc] sm:$0xf]
  %v213 = vld [vmem:[%s1] sm:$0xf]
  %v214 = vld [vmem:[%s1 + $0x4] sm:$0xf]
  %v215 = vld [vmem:[%s1 + $0x8] sm:$0xf]
  %v216 = vld [vmem:[%s1 + $0xc] sm:$0xf]
  %v217 = vld [vmem:[%s1 + $0x10] sm:$0xf]
  %v218 = vld [vmem:[%s1 + $0x14] sm:$0xf]
  %v219 = vld [vmem:[%s1 + $0x18] sm:$0xf]
  %v220 = vld [vmem:[%s1 + $0x1c] sm:$0xf]
  %v221 = vld [vmem:[%s1 + $0x20] sm:$0xf]
  %v222 = vld [vmem:[%s1 + $0x24] sm:$0xf]
  %v223 = vld [vmem:[%s1 + $0x28] sm:$0xf]
  %v224 = vld [vmem:[%s1 + $0x2c] sm:$0xf]
  %v225 = vld [vmem:[%s1 + $0x30] sm:$0xf]
  %v226 = vld [vmem:[%s1 + $0x34] sm:$0xf]
  %v227 = vld [vmem:[%s1 + $0x38] sm:$0xf]
  %v228 = vld [vmem:[%s1 + $0x3c] sm:$0xf]
  %v293 = vunpack.c.l.b16 %v149
  %v294 = vunpack.c.l.b16 %v150
  %v295 = vunpack.c.l.b16 %v151
  %v296 = vunpack.c.l.b16 %v152
  %v297 = vunpack.c.l.b16 %v153
  %v298 = vunpack.c.l.b16 %v154
  %v299 = vunpack.c.l.b16 %v155
  %v300 = vunpack.c.l.b16 %v156
  %v301 = vunpack.c.l.b16 %v157
  %v302 = vunpack.c.l.b16 %v158
  %v303 = vunpack.c.l.b16 %v159
  %v304 = vunpack.c.l.b16 %v160
  %v305 = vunpack.c.l.b16 %v161
  %v306 = vunpack.c.l.b16 %v162
  %v307 = vunpack.c.l.b16 %v163
  %v308 = vunpack.c.l.b16 %v164
  %v309 = vunpack.c.l.b16 %v165
  %v310 = vunpack.c.l.b16 %v166
  %v311 = vunpack.c.l.b16 %v167
  %v312 = vunpack.c.l.b16 %v168
  %v313 = vunpack.c.l.b16 %v169
  %v314 = vunpack.c.l.b16 %v170
  %v315 = vunpack.c.l.b16 %v171
  %v316 = vunpack.c.l.b16 %v172
  %v317 = vunpack.c.l.b16 %v173
  %v318 = vunpack.c.l.b16 %v174
  %v319 = vunpack.c.l.b16 %v175
  %v320 = vunpack.c.l.b16 %v176
  %v321 = vunpack.c.l.b16 %v177
  %v322 = vunpack.c.l.b16 %v178
  %v323 = vunpack.c.l.b16 %v179
  %v324 = vunpack.c.l.b16 %v180
  %v325 = vunpack.c.l.b16 %v181
  %v326 = vunpack.c.l.b16 %v182
  %v327 = vunpack.c.l.b16 %v183
  %v328 = vunpack.c.l.b16 %v184
  %v329 = vunpack.c.l.b16 %v185
  %v330 = vunpack.c.l.b16 %v186
  %v331 = vunpack.c.l.b16 %v187
  %v332 = vunpack.c.l.b16 %v188
  %v333 = vunpack.c.l.b16 %v189
  %v334 = vunpack.c.l.b16 %v190
  %v335 = vunpack.c.l.b16 %v191
  %v336 = vunpack.c.l.b16 %v192
  %v337 = vunpack.c.l.b16 %v193
  %v338 = vunpack.c.l.b16 %v194
  %v339 = vunpack.c.l.b16 %v195
  %v340 = vunpack.c.l.b16 %v196
  %v341 = vunpack.c.l.b16 %v197
  %v342 = vunpack.c.l.b16 %v198
  %v343 = vunpack.c.l.b16 %v199
  %v344 = vunpack.c.l.b16 %v200
  %v345 = vunpack.c.l.b16 %v201
  %v346 = vunpack.c.l.b16 %v202
  %v347 = vunpack.c.l.b16 %v203
  %v348 = vunpack.c.l.b16 %v204
  %v349 = vunpack.c.l.b16 %v205
  %v350 = vunpack.c.l.b16 %v206
  %v351 = vunpack.c.l.b16 %v207
  %v352 = vunpack.c.l.b16 %v208
  %v353 = vunpack.c.l.b16 %v209
  %v354 = vunpack.c.l.b16 %v210
  %v355 = vunpack.c.l.b16 %v211
  %v356 = vunpack.c.l.b16 %v212
  %v357 = vpack.c.b16 %v294, %v293
  %v358 = vpack.c.b16 %v296, %v295
  %v359 = vpack.c.b16 %v298, %v297
  %v360 = vpack.c.b16 %v300, %v299
  %v361 = vpack.c.b16 %v302, %v301
  %v362 = vpack.c.b16 %v304, %v303
  %v363 = vpack.c.b16 %v306, %v305
  %v364 = vpack.c.b16 %v308, %v307
  %v365 = vpack.c.b16 %v310, %v309
  %v366 = vpack.c.b16 %v312, %v311
  %v367 = vpack.c.b16 %v314, %v313
  %v368 = vpack.c.b16 %v316, %v315
  %v369 = vpack.c.b16 %v318, %v317
  %v370 = vpack.c.b16 %v320, %v319
  %v371 = vpack.c.b16 %v322, %v321
  %v372 = vpack.c.b16 %v324, %v323
  %v373 = vpack.c.b16 %v326, %v325
  %v374 = vpack.c.b16 %v328, %v327
  %v375 = vpack.c.b16 %v330, %v329
  %v376 = vpack.c.b16 %v332, %v331
  %v377 = vpack.c.b16 %v334, %v333
  %v378 = vpack.c.b16 %v336, %v335
  %v379 = vpack.c.b16 %v338, %v337
  %v380 = vpack.c.b16 %v340, %v339
  %v381 = vpack.c.b16 %v342, %v341
  %v382 = vpack.c.b16 %v344, %v343
  %v383 = vpack.c.b16 %v346, %v345
  %v384 = vpack.c.b16 %v348, %v347
  %v385 = vpack.c.b16 %v350, %v349
  %v386 = vpack.c.b16 %v352, %v351
  %v387 = vpack.c.b16 %v354, %v353
  %v388 = vpack.c.b16 %v356, %v355
  %v437 = vunpack.c.l.b16 %v213
  %v438 = vunpack.c.l.b16 %v214
  %v439 = vunpack.c.l.b16 %v215
  %v440 = vunpack.c.l.b16 %v216
  %v441 = vunpack.c.l.b16 %v217
  %v442 = vunpack.c.l.b16 %v218
  %v443 = vunpack.c.l.b16 %v219
  %v444 = vunpack.c.l.b16 %v220
  %v445 = vunpack.c.l.b16 %v221
  %v446 = vunpack.c.l.b16 %v222
  %v447 = vunpack.c.l.b16 %v223
  %v448 = vunpack.c.l.b16 %v224
  %v449 = vunpack.c.l.b16 %v225
  %v450 = vunpack.c.l.b16 %v226
  %v451 = vunpack.c.l.b16 %v227
  %v452 = vunpack.c.l.b16 %v228
  %v453 = vpack.c.b16 %v438, %v437
  %v454 = vpack.c.b16 %v440, %v439
  %v455 = vpack.c.b16 %v442, %v441
  %v456 = vpack.c.b16 %v444, %v443
  %v457 = vpack.c.b16 %v446, %v445
  %v458 = vpack.c.b16 %v448, %v447
  %v459 = vpack.c.b16 %v450, %v449
  %v460 = vpack.c.b16 %v452, %v451
  %469 = vmatpush.bf16.msra.mxu0 %v460
  %470 = vmatpush.bf16.msra.mxu0 %v459
  %471 = vmatpush.bf16.msra.mxu0 %v458
  %472 = vmatpush.bf16.msra.mxu0 %v457
  %473 = vmatpush.bf16.msra.mxu0 %v456
  %474 = vmatpush.bf16.msra.mxu0 %v455
  %475 = vmatpush.bf16.msra.mxu0 %v454
  %476 = vmatpush.bf16.msra.mxu0 %v453
  %477 = vmatmul.bf16.gmra.mxu0 %v357
  %v478 = vpop.f32.mrf.mxu0
  %v479 = vadd.f32 0.0, %v478
  %v480 = vpop.f32.mrf.mxu0
  %v481 = vadd.f32 0.0, %v480
  %482 = vmatmul.bf16.gmra.mxu0 %v358
  %v483 = vpop.f32.mrf.mxu0
  %v484 = vadd.f32 0.0, %v483
  %v485 = vpop.f32.mrf.mxu0
  %v486 = vadd.f32 0.0, %v485
  %487 = vmatmul.bf16.gmra.mxu0 %v359
  %v488 = vpop.f32.mrf.mxu0
  %v489 = vadd.f32 0.0, %v488
  %v490 = vpop.f32.mrf.mxu0
  %v491 = vadd.f32 0.0, %v490
  %492 = vmatmul.bf16.gmra.mxu0 %v360
  %v493 = vpop.f32.mrf.mxu0
  %v494 = vadd.f32 0.0, %v493
  %v495 = vpop.f32.mrf.mxu0
  %v496 = vadd.f32 0.0, %v495
  %497 = vmatmul.bf16.gmra.mxu0 %v361
  %v498 = vpop.f32.mrf.mxu0
  %v499 = vadd.f32 0.0, %v498
  %v500 = vpop.f32.mrf.mxu0
  %v501 = vadd.f32 0.0, %v500
  %502 = vmatmul.bf16.gmra.mxu0 %v362
  %v503 = vpop.f32.mrf.mxu0
  %v504 = vadd.f32 0.0, %v503
  %v505 = vpop.f32.mrf.mxu0
  %v506 = vadd.f32 0.0, %v505
  %507 = vmatmul.bf16.gmra.mxu0 %v363
  %v508 = vpop.f32.mrf.mxu0
  %v509 = vadd.f32 0.0, %v508
  %v510 = vpop.f32.mrf.mxu0
  %v511 = vadd.f32 0.0, %v510
  %512 = vmatmul.bf16.gmra.mxu0 %v364
  %v513 = vpop.f32.mrf.mxu0
  %v514 = vadd.f32 0.0, %v513
  %v515 = vpop.f32.mrf.mxu0
  %v516 = vadd.f32 0.0, %v515
  %517 = vmatmul.bf16.gmra.mxu0 %v365
  %v518 = vpop.f32.mrf.mxu0
  %v519 = vadd.f32 0.0, %v518
  %v520 = vpop.f32.mrf.mxu0
  %v521 = vadd.f32 0.0, %v520
  %522 = vmatmul.bf16.gmra.mxu0 %v366
  %v523 = vpop.f32.mrf.mxu0
  %v524 = vadd.f32 0.0, %v523
  %v525 = vpop.f32.mrf.mxu0
  %v526 = vadd.f32 0.0, %v525
  %527 = vmatmul.bf16.gmra.mxu0 %v367
  %v528 = vpop.f32.mrf.mxu0
  %v529 = vadd.f32 0.0, %v528
  %v530 = vpop.f32.mrf.mxu0
  %v531 = vadd.f32 0.0, %v530
  %532 = vmatmul.bf16.gmra.mxu0 %v368
  %v533 = vpop.f32.mrf.mxu0
  %v534 = vadd.f32 0.0, %v533
  %v535 = vpop.f32.mrf.mxu0
  %v536 = vadd.f32 0.0, %v535
  %537 = vmatmul.bf16.gmra.mxu0 %v369
  %v538 = vpop.f32.mrf.mxu0
  %v539 = vadd.f32 0.0, %v538
  %v540 = vpop.f32.mrf.mxu0
  %v541 = vadd.f32 0.0, %v540
  %542 = vmatmul.bf16.gmra.mxu0 %v370
  %v543 = vpop.f32.mrf.mxu0
  %v544 = vadd.f32 0.0, %v543
  %v545 = vpop.f32.mrf.mxu0
  %v546 = vadd.f32 0.0, %v545
  %547 = vmatmul.bf16.gmra.mxu0 %v371
  %v548 = vpop.f32.mrf.mxu0
  %v549 = vadd.f32 0.0, %v548
  %v550 = vpop.f32.mrf.mxu0
  %v551 = vadd.f32 0.0, %v550
  %552 = vmatmul.bf16.gmra.mxu0 %v372
  %v553 = vpop.f32.mrf.mxu0
  %v554 = vadd.f32 0.0, %v553
  %v555 = vpop.f32.mrf.mxu0
  %v556 = vadd.f32 0.0, %v555
  %557 = vmatmul.bf16.gmra.mxu0 %v373
  %v558 = vpop.f32.mrf.mxu0
  %v559 = vadd.f32 0.0, %v558
  %v560 = vpop.f32.mrf.mxu0
  %v561 = vadd.f32 0.0, %v560
  %562 = vmatmul.bf16.gmra.mxu0 %v374
  %v563 = vpop.f32.mrf.mxu0
  %v564 = vadd.f32 0.0, %v563
  %v565 = vpop.f32.mrf.mxu0
  %v566 = vadd.f32 0.0, %v565
  %567 = vmatmul.bf16.gmra.mxu0 %v375
  %v568 = vpop.f32.mrf.mxu0
  %v569 = vadd.f32 0.0, %v568
  %v570 = vpop.f32.mrf.mxu0
  %v571 = vadd.f32 0.0, %v570
  %572 = vmatmul.bf16.gmra.mxu0 %v376
  %v573 = vpop.f32.mrf.mxu0
  %v574 = vadd.f32 0.0, %v573
  %v575 = vpop.f32.mrf.mxu0
  %v576 = vadd.f32 0.0, %v575
  %577 = vmatmul.bf16.gmra.mxu0 %v377
  %v578 = vpop.f32.mrf.mxu0
  %v579 = vadd.f32 0.0, %v578
  %v580 = vpop.f32.mrf.mxu0
  %v581 = vadd.f32 0.0, %v580
  %582 = vmatmul.bf16.gmra.mxu0 %v378
  %v583 = vpop.f32.mrf.mxu0
  %v584 = vadd.f32 0.0, %v583
  %v585 = vpop.f32.mrf.mxu0
  %v586 = vadd.f32 0.0, %v585
  %587 = vmatmul.bf16.gmra.mxu0 %v379
  %v588 = vpop.f32.mrf.mxu0
  %v589 = vadd.f32 0.0, %v588
  %v590 = vpop.f32.mrf.mxu0
  %v591 = vadd.f32 0.0, %v590
  %592 = vmatmul.bf16.gmra.mxu0 %v380
  %v593 = vpop.f32.mrf.mxu0
  %v594 = vadd.f32 0.0, %v593
  %v595 = vpop.f32.mrf.mxu0
  %v596 = vadd.f32 0.0, %v595
  %597 = vmatmul.bf16.gmra.mxu0 %v381
  %v598 = vpop.f32.mrf.mxu0
  %v599 = vadd.f32 0.0, %v598
  %v600 = vpop.f32.mrf.mxu0
  %v601 = vadd.f32 0.0, %v600
  %602 = vmatmul.bf16.gmra.mxu0 %v382
  %v603 = vpop.f32.mrf.mxu0
  %v604 = vadd.f32 0.0, %v603
  %v605 = vpop.f32.mrf.mxu0
  %v606 = vadd.f32 0.0, %v605
  %607 = vmatmul.bf16.gmra.mxu0 %v383
  %v608 = vpop.f32.mrf.mxu0
  %v609 = vadd.f32 0.0, %v608
  %v610 = vpop.f32.mrf.mxu0
  %v611 = vadd.f32 0.0, %v610
  %612 = vmatmul.bf16.gmra.mxu0 %v384
  %v613 = vpop.f32.mrf.mxu0
  %v614 = vadd.f32 0.0, %v613
  %v615 = vpop.f32.mrf.mxu0
  %v616 = vadd.f32 0.0, %v615
  %617 = vmatmul.bf16.gmra.mxu0 %v385
  %v618 = vpop.f32.mrf.mxu0
  %v619 = vadd.f32 0.0, %v618
  %v620 = vpop.f32.mrf.mxu0
  %v621 = vadd.f32 0.0, %v620
  %622 = vmatmul.bf16.gmra.mxu0 %v386
  %v623 = vpop.f32.mrf.mxu0
  %v624 = vadd.f32 0.0, %v623
  %v625 = vpop.f32.mrf.mxu0
  %v626 = vadd.f32 0.0, %v625
  %627 = vmatmul.bf16.gmra.mxu0 %v387
  %v628 = vpop.f32.mrf.mxu0
  %v629 = vadd.f32 0.0, %v628
  %v630 = vpop.f32.mrf.mxu0
  %v631 = vadd.f32 0.0, %v630
  %632 = vmatmul.bf16.gmra.mxu0 %v388
  %v633 = vpop.f32.mrf.mxu0
  %v634 = vadd.f32 0.0, %v633
  %v635 = vpop.f32.mrf.mxu0
  %v636 = vadd.f32 0.0, %v635
  %637 = vdwg.mxu0
  %v638 = vadd.f32 %v85, %v479
  %v639 = vadd.f32 %v86, %v481
  %v640 = vadd.f32 %v87, %v484
  %v641 = vadd.f32 %v88, %v486
  %v642 = vadd.f32 %v89, %v489
  %v643 = vadd.f32 %v90, %v491
  %v644 = vadd.f32 %v91, %v494
  %v645 = vadd.f32 %v92, %v496
  %v646 = vadd.f32 %v93, %v499
  %v647 = vadd.f32 %v94, %v501
  %v648 = vadd.f32 %v95, %v504
  %v649 = vadd.f32 %v96, %v506
  %v650 = vadd.f32 %v97, %v509
  %v651 = vadd.f32 %v98, %v511
  %v652 = vadd.f32 %v99, %v514
  %v653 = vadd.f32 %v100, %v516
  %v654 = vadd.f32 %v101, %v519
  %v655 = vadd.f32 %v102, %v521
  %v656 = vadd.f32 %v103, %v524
  %v657 = vadd.f32 %v104, %v526
  %v658 = vadd.f32 %v105, %v529
  %v659 = vadd.f32 %v106, %v531
  %v660 = vadd.f32 %v107, %v534
  %v661 = vadd.f32 %v108, %v536
  %v662 = vadd.f32 %v109, %v539
  %v663 = vadd.f32 %v110, %v541
  %v664 = vadd.f32 %v111, %v544
  %v665 = vadd.f32 %v112, %v546
  %v666 = vadd.f32 %v113, %v549
  %v667 = vadd.f32 %v114, %v551
  %v668 = vadd.f32 %v115, %v554
  %v669 = vadd.f32 %v116, %v556
  %v670 = vadd.f32 %v117, %v559
  %v671 = vadd.f32 %v118, %v561
  %v672 = vadd.f32 %v119, %v564
  %v673 = vadd.f32 %v120, %v566
  %v674 = vadd.f32 %v121, %v569
  %v675 = vadd.f32 %v122, %v571
  %v676 = vadd.f32 %v123, %v574
  %v677 = vadd.f32 %v124, %v576
  %v678 = vadd.f32 %v125, %v579
  %v679 = vadd.f32 %v126, %v581
  %v680 = vadd.f32 %v127, %v584
  %v681 = vadd.f32 %v128, %v586
  %v682 = vadd.f32 %v129, %v589
  %v683 = vadd.f32 %v130, %v591
  %v684 = vadd.f32 %v131, %v594
  %v685 = vadd.f32 %v132, %v596
  %v686 = vadd.f32 %v133, %v599
  %v687 = vadd.f32 %v134, %v601
  %v688 = vadd.f32 %v135, %v604
  %v689 = vadd.f32 %v136, %v606
  %v690 = vadd.f32 %v137, %v609
  %v691 = vadd.f32 %v138, %v611
  %v692 = vadd.f32 %v139, %v614
  %v693 = vadd.f32 %v140, %v616
  %v694 = vadd.f32 %v141, %v619
  %v695 = vadd.f32 %v142, %v621
  %v696 = vadd.f32 %v143, %v624
  %v697 = vadd.f32 %v144, %v626
  %v698 = vadd.f32 %v145, %v629
  %v699 = vadd.f32 %v146, %v631
  %v700 = vadd.f32 %v147, %v634
  %v701 = vadd.f32 %v148, %v636
  %702 = vst [vmem:[#allocation2] sm:$0xff] %v638
  %703 = vst [vmem:[#allocation2 + $0x8] sm:$0xff] %v639
  %704 = vst [vmem:[#allocation2 + $0x10] sm:$0xff] %v640
  %705 = vst [vmem:[#allocation2 + $0x18] sm:$0xff] %v641
  %706 = vst [vmem:[#allocation2 + $0x20] sm:$0xff] %v642
  %707 = vst [vmem:[#allocation2 + $0x28] sm:$0xff] %v643
  %708 = vst [vmem:[#allocation2 + $0x30] sm:$0xff] %v644
  %709 = vst [vmem:[#allocation2 + $0x38] sm:$0xff] %v645
  %710 = vst [vmem:[#allocation2 + $0x40] sm:$0xff] %v646
  %711 = vst [vmem:[#allocation2 + $0x48] sm:$0xff] %v647
  %712 = vst [vmem:[#allocation2 + $0x50] sm:$0xff] %v648
  %713 = vst [vmem:[#allocation2 + $0x58] sm:$0xff] %v649
  %714 = vst [vmem:[#allocation2 + $0x60] sm:$0xff] %v650
  %715 = vst [vmem:[#allocation2 + $0x68] sm:$0xff] %v651
  %716 = vst [vmem:[#allocation2 + $0x70] sm:$0xff] %v652
  %717 = vst [vmem:[#allocation2 + $0x78] sm:$0xff] %v653
  %718 = vst [vmem:[#allocation2 + $0x80] sm:$0xff] %v654
  %719 = vst [vmem:[#allocation2 + $0x88] sm:$0xff] %v655
  %720 = vst [vmem:[#allocation2 + $0x90] sm:$0xff] %v656
  %721 = vst [vmem:[#allocation2 + $0x98] sm:$0xff] %v657
  %722 = vst [vmem:[#allocation2 + $0xa0] sm:$0xff] %v658
  %723 = vst [vmem:[#allocation2 + $0xa8] sm:$0xff] %v659
  %724 = vst [vmem:[#allocation2 + $0xb0] sm:$0xff] %v660
  %725 = vst [vmem:[#allocation2 + $0xb8] sm:$0xff] %v661
  %726 = vst [vmem:[#allocation2 + $0xc0] sm:$0xff] %v662
  %727 = vst [vmem:[#allocation2 + $0xc8] sm:$0xff] %v663
  %728 = vst [vmem:[#allocation2 + $0xd0] sm:$0xff] %v664
  %729 = vst [vmem:[#allocation2 + $0xd8] sm:$0xff] %v665
  %730 = vst [vmem:[#allocation2 + $0xe0] sm:$0xff] %v666
  %731 = vst [vmem:[#allocation2 + $0xe8] sm:$0xff] %v667
  %732 = vst [vmem:[#allocation2 + $0xf0] sm:$0xff] %v668
  %733 = vst [vmem:[#allocation2 + $0xf8] sm:$0xff] %v669
  %734 = vst [vmem:[#allocation2 + $0x100] sm:$0xff] %v670
  %735 = vst [vmem:[#allocation2 + $0x108] sm:$0xff] %v671
  %736 = vst [vmem:[#allocation2 + $0x110] sm:$0xff] %v672
  %737 = vst [vmem:[#allocation2 + $0x118] sm:$0xff] %v673
  %738 = vst [vmem:[#allocation2 + $0x120] sm:$0xff] %v674
  %739 = vst [vmem:[#allocation2 + $0x128] sm:$0xff] %v675
  %740 = vst [vmem:[#allocation2 + $0x130] sm:$0xff] %v676
  %741 = vst [vmem:[#allocation2 + $0x138] sm:$0xff] %v677
  %742 = vst [vmem:[#allocation2 + $0x140] sm:$0xff] %v678
  %743 = vst [vmem:[#allocation2 + $0x148] sm:$0xff] %v679
  %744 = vst [vmem:[#allocation2 + $0x150] sm:$0xff] %v680
  %745 = vst [vmem:[#allocation2 + $0x158] sm:$0xff] %v681
  %746 = vst [vmem:[#allocation2 + $0x160] sm:$0xff] %v682
  %747 = vst [vmem:[#allocation2 + $0x168] sm:$0xff] %v683
  %748 = vst [vmem:[#allocation2 + $0x170] sm:$0xff] %v684
  %749 = vst [vmem:[#allocation2 + $0x178] sm:$0xff] %v685
  %750 = vst [vmem:[#allocation2 + $0x180] sm:$0xff] %v686
  %751 = vst [vmem:[#allocation2 + $0x188] sm:$0xff] %v687
  %752 = vst [vmem:[#allocation2 + $0x190] sm:$0xff] %v688
  %753 = vst [vmem:[#allocation2 + $0x198] sm:$0xff] %v689
  %754 = vst [vmem:[#allocation2 + $0x1a0] sm:$0xff] %v690
  %755 = vst [vmem:[#allocation2 + $0x1a8] sm:$0xff] %v691
  %756 = vst [vmem:[#allocation2 + $0x1b0] sm:$0xff] %v692
  %757 = vst [vmem:[#allocation2 + $0x1b8] sm:$0xff] %v693
  %758 = vst [vmem:[#allocation2 + $0x1c0] sm:$0xff] %v694
  %759 = vst [vmem:[#allocation2 + $0x1c8] sm:$0xff] %v695
  %760 = vst [vmem:[#allocation2 + $0x1d0] sm:$0xff] %v696
  %761 = vst [vmem:[#allocation2 + $0x1d8] sm:$0xff] %v697
  %762 = vst [vmem:[#allocation2 + $0x1e0] sm:$0xff] %v698
  %763 = vst [vmem:[#allocation2 + $0x1e8] sm:$0xff] %v699
  %764 = vst [vmem:[#allocation2 + $0x1f0] sm:$0xff] %v700
  %765 = vst [vmem:[#allocation2 + $0x1f8] sm:$0xff] %v701
  // Predicated region
  $region22: #{_lambda_.18} parent=0 // pred_check
    %p766 = pneg %p17
  $region23: #{_lambda_.18} parent=0 // pred_check_branch
    %768 = sbr.rel (%p766) target = $region25
  $region24: #{_lambda_.18} parent=0 // pred_region
    %v769 = vld [vmem:[#allocation2] sm:$0xff]
    %v770 = vld [vmem:[#allocation2 + $0x8] sm:$0xff]
    %v771 = vld [vmem:[#allocation2 + $0x10] sm:$0xff]
    %v772 = vld [vmem:[#allocation2 + $0x18] sm:$0xff]
    %v773 = vld [vmem:[#allocation2 + $0x20] sm:$0xff]
    %v774 = vld [vmem:[#allocation2 + $0x28] sm:$0xff]
    %v775 = vld [vmem:[#allocation2 + $0x30] sm:$0xff]
    %v776 = vld [vmem:[#allocation2 + $0x38] sm:$0xff]
    %v777 = vld [vmem:[#allocation2 + $0x40] sm:$0xff]
    %v778 = vld [vmem:[#allocation2 + $0x48] sm:$0xff]
    %v779 = vld [vmem:[#allocation2 + $0x50] sm:$0xff]
    %v780 = vld [vmem:[#allocation2 + $0x58] sm:$0xff]
    %v781 = vld [vmem:[#allocation2 + $0x60] sm:$0xff]
    %v782 = vld [vmem:[#allocation2 + $0x68] sm:$0xff]
    %v783 = vld [vmem:[#allocation2 + $0x70] sm:$0xff]
    %v784 = vld [vmem:[#allocation2 + $0x78] sm:$0xff]
    %v785 = vld [vmem:[#allocation2 + $0x80] sm:$0xff]
    %v786 = vld [vmem:[#allocation2 + $0x88] sm:$0xff]
    %v787 = vld [vmem:[#allocation2 + $0x90] sm:$0xff]
    %v788 = vld [vmem:[#allocation2 + $0x98] sm:$0xff]
    %v789 = vld [vmem:[#allocation2 + $0xa0] sm:$0xff]
    %v790 = vld [vmem:[#allocation2 + $0xa8] sm:$0xff]
    %v791 = vld [vmem:[#allocation2 + $0xb0] sm:$0xff]
    %v792 = vld [vmem:[#allocation2 + $0xb8] sm:$0xff]
    %v793 = vld [vmem:[#allocation2 + $0xc0] sm:$0xff]
    %v794 = vld [vmem:[#allocation2 + $0xc8] sm:$0xff]
    %v795 = vld [vmem:[#allocation2 + $0xd0] sm:$0xff]
    %v796 = vld [vmem:[#allocation2 + $0xd8] sm:$0xff]
    %v797 = vld [vmem:[#allocation2 + $0xe0] sm:$0xff]
    %v798 = vld [vmem:[#allocation2 + $0xe8] sm:$0xff]
    %v799 = vld [vmem:[#allocation2 + $0xf0] sm:$0xff]
    %v800 = vld [vmem:[#allocation2 + $0xf8] sm:$0xff]
    %v801 = vld [vmem:[#allocation2 + $0x100] sm:$0xff]
    %v802 = vld [vmem:[#allocation2 + $0x108] sm:$0xff]
    %v803 = vld [vmem:[#allocation2 + $0x110] sm:$0xff]
    %v804 = vld [vmem:[#allocation2 + $0x118] sm:$0xff]
    %v805 = vld [vmem:[#allocation2 + $0x120] sm:$0xff]
    %v806 = vld [vmem:[#allocation2 + $0x128] sm:$0xff]
    %v807 = vld [vmem:[#allocation2 + $0x130] sm:$0xff]
    %v808 = vld [vmem:[#allocation2 + $0x138] sm:$0xff]
    %v809 = vld [vmem:[#allocation2 + $0x140] sm:$0xff]
    %v810 = vld [vmem:[#allocation2 + $0x148] sm:$0xff]
    %v811 = vld [vmem:[#allocation2 + $0x150] sm:$0xff]
    %v812 = vld [vmem:[#allocation2 + $0x158] sm:$0xff]
    %v813 = vld [vmem:[#allocation2 + $0x160] sm:$0xff]
    %v814 = vld [vmem:[#allocation2 + $0x168] sm:$0xff]
    %v815 = vld [vmem:[#allocation2 + $0x170] sm:$0xff]
    %v816 = vld [vmem:[#allocation2 + $0x178] sm:$0xff]
    %v817 = vld [vmem:[#allocation2 + $0x180] sm:$0xff]
    %v818 = vld [vmem:[#allocation2 + $0x188] sm:$0xff]
    %v819 = vld [vmem:[#allocation2 + $0x190] sm:$0xff]
    %v820 = vld [vmem:[#allocation2 + $0x198] sm:$0xff]
    %v821 = vld [vmem:[#allocation2 + $0x1a0] sm:$0xff]
    %v822 = vld [vmem:[#allocation2 + $0x1a8] sm:$0xff]
    %v823 = vld [vmem:[#allocation2 + $0x1b0] sm:$0xff]
    %v824 = vld [vmem:[#allocation2 + $0x1b8] sm:$0xff]
    %v825 = vld [vmem:[#allocation2 + $0x1c0] sm:$0xff]
    %v826 = vld [vmem:[#allocation2 + $0x1c8] sm:$0xff]
    %v827 = vld [vmem:[#allocation2 + $0x1d0] sm:$0xff]
    %v828 = vld [vmem:[#allocation2 + $0x1d8] sm:$0xff]
    %v829 = vld [vmem:[#allocation2 + $0x1e0] sm:$0xff]
    %v830 = vld [vmem:[#allocation2 + $0x1e8] sm:$0xff]
    %v831 = vld [vmem:[#allocation2 + $0x1f0] sm:$0xff]
    %v832 = vld [vmem:[#allocation2 + $0x1f8] sm:$0xff]
    %v833 = vadd.f32 %v769, %v770
    %v834 = vadd.f32 %v833, %v771
    %v835 = vadd.f32 %v834, %v772
    %v836 = vadd.f32 %v835, %v773
    %v837 = vadd.f32 %v836, %v774
    %v838 = vadd.f32 %v837, %v775
    %v839 = vadd.f32 %v838, %v776
    %v840 = vadd.f32 %v839, %v777
    %v841 = vadd.f32 %v840, %v778
    %v842 = vadd.f32 %v841, %v779
    %v843 = vadd.f32 %v842, %v780
    %v844 = vadd.f32 %v843, %v781
    %v845 = vadd.f32 %v844, %v782
    %v846 = vadd.f32 %v845, %v783
    %v847 = vadd.f32 %v846, %v784
    %v848 = vadd.f32 %v847, %v785
    %v849 = vadd.f32 %v848, %v786
    %v850 = vadd.f32 %v849, %v787
    %v851 = vadd.f32 %v850, %v788
    %v852 = vadd.f32 %v851, %v789
    %v853 = vadd.f32 %v852, %v790
    %v854 = vadd.f32 %v853, %v791
    %v855 = vadd.f32 %v854, %v792
    %v856 = vadd.f32 %v855, %v793
    %v857 = vadd.f32 %v856, %v794
    %v858 = vadd.f32 %v857, %v795
    %v859 = vadd.f32 %v858, %v796
    %v860 = vadd.f32 %v859, %v797
    %v861 = vadd.f32 %v860, %v798
    %v862 = vadd.f32 %v861, %v799
    %v863 = vadd.f32 %v862, %v800
    %v864 = vadd.f32 %v863, %v801
    %v865 = vadd.f32 %v864, %v802
    %v866 = vadd.f32 %v865, %v803
    %v867 = vadd.f32 %v866, %v804
    %v868 = vadd.f32 %v867, %v805
    %v869 = vadd.f32 %v868, %v806
    %v870 = vadd.f32 %v869, %v807
    %v871 = vadd.f32 %v870, %v808
    %v872 = vadd.f32 %v871, %v809
    %v873 = vadd.f32 %v872, %v810
    %v874 = vadd.f32 %v873, %v811
    %v875 = vadd.f32 %v874, %v812
    %v876 = vadd.f32 %v875, %v813
    %v877 = vadd.f32 %v876, %v814
    %v878 = vadd.f32 %v877, %v815
    %v879 = vadd.f32 %v878, %v816
    %v880 = vadd.f32 %v879, %v817
    %v881 = vadd.f32 %v880, %v818
    %v882 = vadd.f32 %v881, %v819
    %v883 = vadd.f32 %v882, %v820
    %v884 = vadd.f32 %v883, %v821
    %v885 = vadd.f32 %v884, %v822
    %v886 = vadd.f32 %v885, %v823
    %v887 = vadd.f32 %v886, %v824
    %v888 = vadd.f32 %v887, %v825
    %v889 = vadd.f32 %v888, %v826
    %v890 = vadd.f32 %v889, %v827
    %v891 = vadd.f32 %v890, %v828
    %v892 = vadd.f32 %v891, %v829
    %v893 = vadd.f32 %v892, %v830
    %v894 = vadd.f32 %v893, %v831
    %v895 = vadd.f32 %v894, %v832
    %v896 = vrot.slane %v895, 4
    %v897 = vadd.f32 %v895, %v896
    %v898 = vrot.slane %v897, 2
    %v899 = vadd.f32 %v897, %v898
    %v900 = vrot.slane %v899, 1
    %v901 = vadd.f32 %v899, %v900
    %v902 = vmul.f32 %v901, 0.001953125
    %v903 = vsub.f32 %v769, %v902
    %v904 = vsub.f32 %v770, %v902
    %v905 = vsub.f32 %v771, %v902
    %v906 = vsub.f32 %v772, %v902
    %v907 = vsub.f32 %v773, %v902
    %v908 = vsub.f32 %v774, %v902
    %v909 = vsub.f32 %v775, %v902
    %v910 = vsub.f32 %v776, %v902
    %v911 = vsub.f32 %v777, %v902
    %v912 = vsub.f32 %v778, %v902
    %v913 = vsub.f32 %v779, %v902
    %v914 = vsub.f32 %v780, %v902
    %v915 = vsub.f32 %v781, %v902
    %v916 = vsub.f32 %v782, %v902
    %v917 = vsub.f32 %v783, %v902
    %v918 = vsub.f32 %v784, %v902
    %v919 = vsub.f32 %v785, %v902
    %v920 = vsub.f32 %v786, %v902
    %v921 = vsub.f32 %v787, %v902
    %v922 = vsub.f32 %v788, %v902
    %v923 = vsub.f32 %v789, %v902
    %v924 = vsub.f32 %v790, %v902
    %v925 = vsub.f32 %v791, %v902
    %v926 = vsub.f32 %v792, %v902
    %v927 = vsub.f32 %v793, %v902
    %v928 = vsub.f32 %v794, %v902
    %v929 = vsub.f32 %v795, %v902
    %v930 = vsub.f32 %v796, %v902
    %v931 = vsub.f32 %v797, %v902
    %v932 = vsub.f32 %v798, %v902
    %v933 = vsub.f32 %v799, %v902
    %v934 = vsub.f32 %v800, %v902
    %v935 = vsub.f32 %v801, %v902
    %v936 = vsub.f32 %v802, %v902
    %v937 = vsub.f32 %v803, %v902
    %v938 = vsub.f32 %v804, %v902
    %v939 = vsub.f32 %v805, %v902
    %v940 = vsub.f32 %v806, %v902
    %v941 = vsub.f32 %v807, %v902
    %v942 = vsub.f32 %v808, %v902
    %v943 = vsub.f32 %v809, %v902
    %v944 = vsub.f32 %v810, %v902
    %v945 = vsub.f32 %v811, %v902
    %v946 = vsub.f32 %v812, %v902
    %v947 = vsub.f32 %v813, %v902
    %v948 = vsub.f32 %v814, %v902
    %v949 = vsub.f32 %v815, %v902
    %v950 = vsub.f32 %v816, %v902
    %v951 = vsub.f32 %v817, %v902
    %v952 = vsub.f32 %v818, %v902
    %v953 = vsub.f32 %v819, %v902
    %v954 = vsub.f32 %v820, %v902
    %v955 = vsub.f32 %v821, %v902
    %v956 = vsub.f32 %v822, %v902
    %v957 = vsub.f32 %v823, %v902
    %v958 = vsub.f32 %v824, %v902
    %v959 = vsub.f32 %v825, %v902
    %v960 = vsub.f32 %v826, %v902
    %v961 = vsub.f32 %v827, %v902
    %v962 = vsub.f32 %v828, %v902
    %v963 = vsub.f32 %v829, %v902
    %v964 = vsub.f32 %v830, %v902
    %v965 = vsub.f32 %v831, %v902
    %v966 = vsub.f32 %v832, %v902
    %v967 = vmul.f32 %v903, %v903
    %v968 = vmul.f32 %v904, %v904
    %v969 = vmul.f32 %v905, %v905
    %v970 = vmul.f32 %v906, %v906
    %v971 = vmul.f32 %v907, %v907
    %v972 = vmul.f32 %v908, %v908
    %v973 = vmul.f32 %v909, %v909
    %v974 = vmul.f32 %v910, %v910
    %v975 = vmul.f32 %v911, %v911
    %v976 = vmul.f32 %v912, %v912
    %v977 = vmul.f32 %v913, %v913
    %v978 = vmul.f32 %v914, %v914
    %v979 = vmul.f32 %v915, %v915
    %v980 = vmul.f32 %v916, %v916
    %v981 = vmul.f32 %v917, %v917
    %v982 = vmul.f32 %v918, %v918
    %v983 = vmul.f32 %v919, %v919
    %v984 = vmul.f32 %v920, %v920
    %v985 = vmul.f32 %v921, %v921
    %v986 = vmul.f32 %v922, %v922
    %v987 = vmul.f32 %v923, %v923
    %v988 = vmul.f32 %v924, %v924
    %v989 = vmul.f32 %v925, %v925
    %v990 = vmul.f32 %v926, %v926
    %v991 = vmul.f32 %v927, %v927
    %v992 = vmul.f32 %v928, %v928
    %v993 = vmul.f32 %v929, %v929
    %v994 = vmul.f32 %v930, %v930
    %v995 = vmul.f32 %v931, %v931
    %v996 = vmul.f32 %v932, %v932
    %v997 = vmul.f32 %v933, %v933
    %v998 = vmul.f32 %v934, %v934
    %v999 = vmul.f32 %v935, %v935
    %v1000 = vmul.f32 %v936, %v936
    %v1001 = vmul.f32 %v937, %v937
    %v1002 = vmul.f32 %v938, %v938
    %v1003 = vmul.f32 %v939, %v939
    %v1004 = vmul.f32 %v940, %v940
    %v1005 = vmul.f32 %v941, %v941
    %v1006 = vmul.f32 %v942, %v942
    %v1007 = vmul.f32 %v943, %v943
    %v1008 = vmul.f32 %v944, %v944
    %v1009 = vmul.f32 %v945, %v945
    %v1010 = vmul.f32 %v946, %v946
    %v1011 = vmul.f32 %v947, %v947
    %v1012 = vmul.f32 %v948, %v948
    %v1013 = vmul.f32 %v949, %v949
    %v1014 = vmul.f32 %v950, %v950
    %v1015 = vmul.f32 %v951, %v951
    %v1016 = vmul.f32 %v952, %v952
    %v1017 = vmul.f32 %v953, %v953
    %v1018 = vmul.f32 %v954, %v954
    %v1019 = vmul.f32 %v955, %v955
    %v1020 = vmul.f32 %v956, %v956
    %v1021 = vmul.f32 %v957, %v957
    %v1022 = vmul.f32 %v958, %v958
    %v1023 = vmul.f32 %v959, %v959
    %v1024 = vmul.f32 %v960, %v960
    %v1025 = vmul.f32 %v961, %v961
    %v1026 = vmul.f32 %v962, %v962
    %v1027 = vmul.f32 %v963, %v963
    %v1028 = vmul.f32 %v964, %v964
    %v1029 = vmul.f32 %v965, %v965
    %v1030 = vmul.f32 %v966, %v966
    %v1031 = vadd.f32 %v967, %v968
    %v1032 = vadd.f32 %v1031, %v969
    %v1033 = vadd.f32 %v1032, %v970
    %v1034 = vadd.f32 %v1033, %v971
    %v1035 = vadd.f32 %v1034, %v972
    %v1036 = vadd.f32 %v1035, %v973
    %v1037 = vadd.f32 %v1036, %v974
    %v1038 = vadd.f32 %v1037, %v975
    %v1039 = vadd.f32 %v1038, %v976
    %v1040 = vadd.f32 %v1039, %v977
    %v1041 = vadd.f32 %v1040, %v978
    %v1042 = vadd.f32 %v1041, %v979
    %v1043 = vadd.f32 %v1042, %v980
    %v1044 = vadd.f32 %v1043, %v981
    %v1045 = vadd.f32 %v1044, %v982
    %v1046 = vadd.f32 %v1045, %v983
    %v1047 = vadd.f32 %v1046, %v984
    %v1048 = vadd.f32 %v1047, %v985
    %v1049 = vadd.f32 %v1048, %v986
    %v1050 = vadd.f32 %v1049, %v987
    %v1051 = vadd.f32 %v1050, %v988
    %v1052 = vadd.f32 %v1051, %v989
    %v1053 = vadd.f32 %v1052, %v990
    %v1054 = vadd.f32 %v1053, %v991
    %v1055 = vadd.f32 %v1054, %v992
    %v1056 = vadd.f32 %v1055, %v993
    %v1057 = vadd.f32 %v1056, %v994
    %v1058 = vadd.f32 %v1057, %v995
    %v1059 = vadd.f32 %v1058, %v996
    %v1060 = vadd.f32 %v1059, %v997
    %v1061 = vadd.f32 %v1060, %v998
    %v1062 = vadd.f32 %v1061, %v999
    %v1063 = vadd.f32 %v1062, %v1000
    %v1064 = vadd.f32 %v1063, %v1001
    %v1065 = vadd.f32 %v1064, %v1002
    %v1066 = vadd.f32 %v1065, %v1003
    %v1067 = vadd.f32 %v1066, %v1004
    %v1068 = vadd.f32 %v1067, %v1005
    %v1069 = vadd.f32 %v1068, %v1006
    %v1070 = vadd.f32 %v1069, %v1007
    %v1071 = vadd.f32 %v1070, %v1008
    %v1072 = vadd.f32 %v1071, %v1009
    %v1073 = vadd.f32 %v1072, %v1010
    %v1074 = vadd.f32 %v1073, %v1011
    %v1075 = vadd.f32 %v1074, %v1012
    %v1076 = vadd.f32 %v1075, %v1013
    %v1077 = vadd.f32 %v1076, %v1014
    %v1078 = vadd.f32 %v1077, %v1015
    %v1079 = vadd.f32 %v1078, %v1016
    %v1080 = vadd.f32 %v1079, %v1017
    %v1081 = vadd.f32 %v1080, %v1018
    %v1082 = vadd.f32 %v1081, %v1019
    %v1083 = vadd.f32 %v1082, %v1020
    %v1084 = vadd.f32 %v1083, %v1021
    %v1085 = vadd.f32 %v1084, %v1022
    %v1086 = vadd.f32 %v1085, %v1023
    %v1087 = vadd.f32 %v1086, %v1024
    %v1088 = vadd.f32 %v1087, %v1025
    %v1089 = vadd.f32 %v1088, %v1026
    %v1090 = vadd.f32 %v1089, %v1027
    %v1091 = vadd.f32 %v1090, %v1028
    %v1092 = vadd.f32 %v1091, %v1029
    %v1093 = vadd.f32 %v1092, %v1030
    %v1094 = vrot.slane %v1093, 4
    %v1095 = vadd.f32 %v1093, %v1094
    %v1096 = vrot.slane %v1095, 2
    %v1097 = vadd.f32 %v1095, %v1096
    %v1098 = vrot.slane %v1097, 1
    %v1099 = vadd.f32 %v1097, %v1098
    %v1100 = vmul.f32 %v902, %v902
    %v1101 = vmul.f32 %v1100, 0.0
    %v1102 = vsub.f32 %v1099, %v1101
    %v1103 = vmul.f32 %v1102, 0.001953125
    %v1104 = vmax.f32 %v1103, 0.0
    %v1105 = vadd.f32 %v1104, 1e-05
    %v1106 = vrsqrt.pop %v1105
    %v1107 = vmul.f32 %v1106, %v1105
    %v1108 = vmul.f32 %v1107, %v1106
    %v1109 = vmul.f32 0.5, %v1108
    %v1110 = vsub.f32 1.5, %v1109
    %v1111 = vmul.f32 %v1106, %v1110
    %vm1112 = vweird.f32 %v1105
    %vm1113 = vweird.f32 %v1106
    %vm1114 = vmor %vm1112, %vm1113
    %v1115 = vsel %vm1114, %v1106, %v1111
    %v1116 = vld [vmem:[%s2] sm:$0x1]
    %v1117 = vmul.f32 %v1116, %v1115
    %v1118 = vld [vmem:[%s3] sm:$0x1]
    %v1119 = vmul.f32 %v902, %v1117
    %v1120 = vsub.f32 %v1118, %v1119
    %v1122 = vperm.slane %v1117, 0
    %v1124 = vmul.f32 %v769, %v1122
    %v1125 = vmul.f32 %v770, %v1122
    %v1126 = vmul.f32 %v771, %v1122
    %v1127 = vmul.f32 %v772, %v1122
    %v1128 = vmul.f32 %v773, %v1122
    %v1129 = vmul.f32 %v774, %v1122
    %v1130 = vmul.f32 %v775, %v1122
    %v1131 = vmul.f32 %v776, %v1122
    %v1132 = vmul.f32 %v777, %v1122
    %v1133 = vmul.f32 %v778, %v1122
    %v1134 = vmul.f32 %v779, %v1122
    %v1135 = vmul.f32 %v780, %v1122
    %v1136 = vmul.f32 %v781, %v1122
    %v1137 = vmul.f32 %v782, %v1122
    %v1138 = vmul.f32 %v783, %v1122
    %v1139 = vmul.f32 %v784, %v1122
    %v1140 = vmul.f32 %v785, %v1122
    %v1141 = vmul.f32 %v786, %v1122
    %v1142 = vmul.f32 %v787, %v1122
    %v1143 = vmul.f32 %v788, %v1122
    %v1144 = vmul.f32 %v789, %v1122
    %v1145 = vmul.f32 %v790, %v1122
    %v1146 = vmul.f32 %v791, %v1122
    %v1147 = vmul.f32 %v792, %v1122
    %v1148 = vmul.f32 %v793, %v1122
    %v1149 = vmul.f32 %v794, %v1122
    %v1150 = vmul.f32 %v795, %v1122
    %v1151 = vmul.f32 %v796, %v1122
    %v1152 = vmul.f32 %v797, %v1122
    %v1153 = vmul.f32 %v798, %v1122
    %v1154 = vmul.f32 %v799, %v1122
    %v1155 = vmul.f32 %v800, %v1122
    %v1156 = vmul.f32 %v801, %v1122
    %v1157 = vmul.f32 %v802, %v1122
    %v1158 = vmul.f32 %v803, %v1122
    %v1159 = vmul.f32 %v804, %v1122
    %v1160 = vmul.f32 %v805, %v1122
    %v1161 = vmul.f32 %v806, %v1122
    %v1162 = vmul.f32 %v807, %v1122
    %v1163 = vmul.f32 %v808, %v1122
    %v1164 = vmul.f32 %v809, %v1122
    %v1165 = vmul.f32 %v810, %v1122
    %v1166 = vmul.f32 %v811, %v1122
    %v1167 = vmul.f32 %v812, %v1122
    %v1168 = vmul.f32 %v813, %v1122
    %v1169 = vmul.f32 %v814, %v1122
    %v1170 = vmul.f32 %v815, %v1122
    %v1171 = vmul.f32 %v816, %v1122
    %v1172 = vmul.f32 %v817, %v1122
    %v1173 = vmul.f32 %v818, %v1122
    %v1174 = vmul.f32 %v819, %v1122
    %v1175 = vmul.f32 %v820, %v1122
    %v1176 = vmul.f32 %v821, %v1122
    %v1177 = vmul.f32 %v822, %v1122
    %v1178 = vmul.f32 %v823, %v1122
    %v1179 = vmul.f32 %v824, %v1122
    %v1180 = vmul.f32 %v825, %v1122
    %v1181 = vmul.f32 %v826, %v1122
    %v1182 = vmul.f32 %v827, %v1122
    %v1183 = vmul.f32 %v828, %v1122
    %v1184 = vmul.f32 %v829, %v1122
    %v1185 = vmul.f32 %v830, %v1122
    %v1186 = vmul.f32 %v831, %v1122
    %v1187 = vmul.f32 %v832, %v1122
    %v1189 = vperm.slane %v1120, 0
    %v1191 = vadd.f32 %v1124, %v1189
    %v1192 = vadd.f32 %v1125, %v1189
    %v1193 = vadd.f32 %v1126, %v1189
    %v1194 = vadd.f32 %v1127, %v1189
    %v1195 = vadd.f32 %v1128, %v1189
    %v1196 = vadd.f32 %v1129, %v1189
    %v1197 = vadd.f32 %v1130, %v1189
    %v1198 = vadd.f32 %v1131, %v1189
    %v1199 = vadd.f32 %v1132, %v1189
    %v1200 = vadd.f32 %v1133, %v1189
    %v1201 = vadd.f32 %v1134, %v1189
    %v1202 = vadd.f32 %v1135, %v1189
    %v1203 = vadd.f32 %v1136, %v1189
    %v1204 = vadd.f32 %v1137, %v1189
    %v1205 = vadd.f32 %v1138, %v1189
    %v1206 = vadd.f32 %v1139, %v1189
    %v1207 = vadd.f32 %v1140, %v1189
    %v1208 = vadd.f32 %v1141, %v1189
    %v1209 = vadd.f32 %v1142, %v1189
    %v1210 = vadd.f32 %v1143, %v1189
    %v1211 = vadd.f32 %v1144, %v1189
    %v1212 = vadd.f32 %v1145, %v1189
    %v1213 = vadd.f32 %v1146, %v1189
    %v1214 = vadd.f32 %v1147, %v1189
    %v1215 = vadd.f32 %v1148, %v1189
    %v1216 = vadd.f32 %v1149, %v1189
    %v1217 = vadd.f32 %v1150, %v1189
    %v1218 = vadd.f32 %v1151, %v1189
    %v1219 = vadd.f32 %v1152, %v1189
    %v1220 = vadd.f32 %v1153, %v1189
    %v1221 = vadd.f32 %v1154, %v1189
    %v1222 = vadd.f32 %v1155, %v1189
    %v1223 = vadd.f32 %v1156, %v1189
    %v1224 = vadd.f32 %v1157, %v1189
    %v1225 = vadd.f32 %v1158, %v1189
    %v1226 = vadd.f32 %v1159, %v1189
    %v1227 = vadd.f32 %v1160, %v1189
    %v1228 = vadd.f32 %v1161, %v1189
    %v1229 = vadd.f32 %v1162, %v1189
    %v1230 = vadd.f32 %v1163, %v1189
    %v1231 = vadd.f32 %v1164, %v1189
    %v1232 = vadd.f32 %v1165, %v1189
    %v1233 = vadd.f32 %v1166, %v1189
    %v1234 = vadd.f32 %v1167, %v1189
    %v1235 = vadd.f32 %v1168, %v1189
    %v1236 = vadd.f32 %v1169, %v1189
    %v1237 = vadd.f32 %v1170, %v1189
    %v1238 = vadd.f32 %v1171, %v1189
    %v1239 = vadd.f32 %v1172, %v1189
    %v1240 = vadd.f32 %v1173, %v1189
    %v1241 = vadd.f32 %v1174, %v1189
    %v1242 = vadd.f32 %v1175, %v1189
    %v1243 = vadd.f32 %v1176, %v1189
    %v1244 = vadd.f32 %v1177, %v1189
    %v1245 = vadd.f32 %v1178, %v1189
    %v1246 = vadd.f32 %v1179, %v1189
    %v1247 = vadd.f32 %v1180, %v1189
    %v1248 = vadd.f32 %v1181, %v1189
    %v1249 = vadd.f32 %v1182, %v1189
    %v1250 = vadd.f32 %v1183, %v1189
    %v1251 = vadd.f32 %v1184, %v1189
    %v1252 = vadd.f32 %v1185, %v1189
    %v1253 = vadd.f32 %v1186, %v1189
    %v1254 = vadd.f32 %v1187, %v1189
    %v1255 = vmax.f32 %v1191, 0.0
    %v1256 = vmax.f32 %v1192, 0.0
    %v1257 = vmax.f32 %v1193, 0.0
    %v1258 = vmax.f32 %v1194, 0.0
    %v1259 = vmax.f32 %v1195, 0.0
    %v1260 = vmax.f32 %v1196, 0.0
    %v1261 = vmax.f32 %v1197, 0.0
    %v1262 = vmax.f32 %v1198, 0.0
    %v1263 = vmax.f32 %v1199, 0.0
    %v1264 = vmax.f32 %v1200, 0.0
    %v1265 = vmax.f32 %v1201, 0.0
    %v1266 = vmax.f32 %v1202, 0.0
    %v1267 = vmax.f32 %v1203, 0.0
    %v1268 = vmax.f32 %v1204, 0.0
    %v1269 = vmax.f32 %v1205, 0.0
    %v1270 = vmax.f32 %v1206, 0.0
    %v1271 = vmax.f32 %v1207, 0.0
    %v1272 = vmax.f32 %v1208, 0.0
    %v1273 = vmax.f32 %v1209, 0.0
    %v1274 = vmax.f32 %v1210, 0.0
    %v1275 = vmax.f32 %v1211, 0.0
    %v1276 = vmax.f32 %v1212, 0.0
    %v1277 = vmax.f32 %v1213, 0.0
    %v1278 = vmax.f32 %v1214, 0.0
    %v1279 = vmax.f32 %v1215, 0.0
    %v1280 = vmax.f32 %v1216, 0.0
    %v1281 = vmax.f32 %v1217, 0.0
    %v1282 = vmax.f32 %v1218, 0.0
    %v1283 = vmax.f32 %v1219, 0.0
    %v1284 = vmax.f32 %v1220, 0.0
    %v1285 = vmax.f32 %v1221, 0.0
    %v1286 = vmax.f32 %v1222, 0.0
    %v1287 = vmax.f32 %v1223, 0.0
    %v1288 = vmax.f32 %v1224, 0.0
    %v1289 = vmax.f32 %v1225, 0.0
    %v1290 = vmax.f32 %v1226, 0.0
    %v1291 = vmax.f32 %v1227, 0.0
    %v1292 = vmax.f32 %v1228, 0.0
    %v1293 = vmax.f32 %v1229, 0.0
    %v1294 = vmax.f32 %v1230, 0.0
    %v1295 = vmax.f32 %v1231, 0.0
    %v1296 = vmax.f32 %v1232, 0.0
    %v1297 = vmax.f32 %v1233, 0.0
    %v1298 = vmax.f32 %v1234, 0.0
    %v1299 = vmax.f32 %v1235, 0.0
    %v1300 = vmax.f32 %v1236, 0.0
    %v1301 = vmax.f32 %v1237, 0.0
    %v1302 = vmax.f32 %v1238, 0.0
    %v1303 = vmax.f32 %v1239, 0.0
    %v1304 = vmax.f32 %v1240, 0.0
    %v1305 = vmax.f32 %v1241, 0.0
    %v1306 = vmax.f32 %v1242, 0.0
    %v1307 = vmax.f32 %v1243, 0.0
    %v1308 = vmax.f32 %v1244, 0.0
    %v1309 = vmax.f32 %v1245, 0.0
    %v1310 = vmax.f32 %v1246, 0.0
    %v1311 = vmax.f32 %v1247, 0.0
    %v1312 = vmax.f32 %v1248, 0.0
    %v1313 = vmax.f32 %v1249, 0.0
    %v1314 = vmax.f32 %v1250, 0.0
    %v1315 = vmax.f32 %v1251, 0.0
    %v1316 = vmax.f32 %v1252, 0.0
    %v1317 = vmax.f32 %v1253, 0.0
    %v1318 = vmax.f32 %v1254, 0.0
    %v1319 = vpack.c.bf16 %v1255, %v1255
    %v1320 = vpack.c.bf16 %v1256, %v1256
    %v1321 = vpack.c.bf16 %v1257, %v1257
    %v1322 = vpack.c.bf16 %v1258, %v1258
    %v1323 = vpack.c.bf16 %v1259, %v1259
    %v1324 = vpack.c.bf16 %v1260, %v1260
    %v1325 = vpack.c.bf16 %v1261, %v1261
    %v1326 = vpack.c.bf16 %v1262, %v1262
    %v1327 = vpack.c.bf16 %v1263, %v1263
    %v1328 = vpack.c.bf16 %v1264, %v1264
    %v1329 = vpack.c.bf16 %v1265, %v1265
    %v1330 = vpack.c.bf16 %v1266, %v1266
    %v1331 = vpack.c.bf16 %v1267, %v1267
    %v1332 = vpack.c.bf16 %v1268, %v1268
    %v1333 = vpack.c.bf16 %v1269, %v1269
    %v1334 = vpack.c.bf16 %v1270, %v1270
    %v1335 = vpack.c.bf16 %v1271, %v1271
    %v1336 = vpack.c.bf16 %v1272, %v1272
    %v1337 = vpack.c.bf16 %v1273, %v1273
    %v1338 = vpack.c.bf16 %v1274, %v1274
    %v1339 = vpack.c.bf16 %v1275, %v1275
    %v1340 = vpack.c.bf16 %v1276, %v1276
    %v1341 = vpack.c.bf16 %v1277, %v1277
    %v1342 = vpack.c.bf16 %v1278, %v1278
    %v1343 = vpack.c.bf16 %v1279, %v1279
    %v1344 = vpack.c.bf16 %v1280, %v1280
    %v1345 = vpack.c.bf16 %v1281, %v1281
    %v1346 = vpack.c.bf16 %v1282, %v1282
    %v1347 = vpack.c.bf16 %v1283, %v1283
    %v1348 = vpack.c.bf16 %v1284, %v1284
    %v1349 = vpack.c.bf16 %v1285, %v1285
    %v1350 = vpack.c.bf16 %v1286, %v1286
    %v1351 = vpack.c.bf16 %v1287, %v1287
    %v1352 = vpack.c.bf16 %v1288, %v1288
    %v1353 = vpack.c.bf16 %v1289, %v1289
    %v1354 = vpack.c.bf16 %v1290, %v1290
    %v1355 = vpack.c.bf16 %v1291, %v1291
    %v1356 = vpack.c.bf16 %v1292, %v1292
    %v1357 = vpack.c.bf16 %v1293, %v1293
    %v1358 = vpack.c.bf16 %v1294, %v1294
    %v1359 = vpack.c.bf16 %v1295, %v1295
    %v1360 = vpack.c.bf16 %v1296, %v1296
    %v1361 = vpack.c.bf16 %v1297, %v1297
    %v1362 = vpack.c.bf16 %v1298, %v1298
    %v1363 = vpack.c.bf16 %v1299, %v1299
    %v1364 = vpack.c.bf16 %v1300, %v1300
    %v1365 = vpack.c.bf16 %v1301, %v1301
    %v1366 = vpack.c.bf16 %v1302, %v1302
    %v1367 = vpack.c.bf16 %v1303, %v1303
    %v1368 = vpack.c.bf16 %v1304, %v1304
    %v1369 = vpack.c.bf16 %v1305, %v1305
    %v1370 = vpack.c.bf16 %v1306, %v1306
    %v1371 = vpack.c.bf16 %v1307, %v1307
    %v1372 = vpack.c.bf16 %v1308, %v1308
    %v1373 = vpack.c.bf16 %v1309, %v1309
    %v1374 = vpack.c.bf16 %v1310, %v1310
    %v1375 = vpack.c.bf16 %v1311, %v1311
    %v1376 = vpack.c.bf16 %v1312, %v1312
    %v1377 = vpack.c.bf16 %v1313, %v1313
    %v1378 = vpack.c.bf16 %v1314, %v1314
    %v1379 = vpack.c.bf16 %v1315, %v1315
    %v1380 = vpack.c.bf16 %v1316, %v1316
    %v1381 = vpack.c.bf16 %v1317, %v1317
    %v1382 = vpack.c.bf16 %v1318, %v1318
    %1383 = vst [vmem:[%s4] sm:$0xf] %v1319
    %1384 = vst [vmem:[%s4 + $0x4] sm:$0xf] %v1320
    %1385 = vst [vmem:[%s4 + $0x8] sm:$0xf] %v1321
    %1386 = vst [vmem:[%s4 + $0xc] sm:$0xf] %v1322
    %1387 = vst [vmem:[%s4 + $0x10] sm:$0xf] %v1323
    %1388 = vst [vmem:[%s4 + $0x14] sm:$0xf] %v1324
    %1389 = vst [vmem:[%s4 + $0x18] sm:$0xf] %v1325
    %1390 = vst [vmem:[%s4 + $0x1c] sm:$0xf] %v1326
    %1391 = vst [vmem:[%s4 + $0x20] sm:$0xf] %v1327
    %1392 = vst [vmem:[%s4 + $0x24] sm:$0xf] %v1328
    %1393 = vst [vmem:[%s4 + $0x28] sm:$0xf] %v1329
    %1394 = vst [vmem:[%s4 + $0x2c] sm:$0xf] %v1330
    %1395 = vst [vmem:[%s4 + $0x30] sm:$0xf] %v1331
    %1396 = vst [vmem:[%s4 + $0x34] sm:$0xf] %v1332
    %1397 = vst [vmem:[%s4 + $0x38] sm:$0xf] %v1333
    %1398 = vst [vmem:[%s4 + $0x3c] sm:$0xf] %v1334
    %1399 = vst [vmem:[%s4 + $0x40] sm:$0xf] %v1335
    %1400 = vst [vmem:[%s4 + $0x44] sm:$0xf] %v1336
    %1401 = vst [vmem:[%s4 + $0x48] sm:$0xf] %v1337
    %1402 = vst [vmem:[%s4 + $0x4c] sm:$0xf] %v1338
    %1403 = vst [vmem:[%s4 + $0x50] sm:$0xf] %v1339
    %1404 = vst [vmem:[%s4 + $0x54] sm:$0xf] %v1340
    %1405 = vst [vmem:[%s4 + $0x58] sm:$0xf] %v1341
    %1406 = vst [vmem:[%s4 + $0x5c] sm:$0xf] %v1342
    %1407 = vst [vmem:[%s4 + $0x60] sm:$0xf] %v1343
    %1408 = vst [vmem:[%s4 + $0x64] sm:$0xf] %v1344
    %1409 = vst [vmem:[%s4 + $0x68] sm:$0xf] %v1345
    %1410 = vst [vmem:[%s4 + $0x6c] sm:$0xf] %v1346
    %1411 = vst [vmem:[%s4 + $0x70] sm:$0xf] %v1347
    %1412 = vst [vmem:[%s4 + $0x74] sm:$0xf] %v1348
    %1413 = vst [vmem:[%s4 + $0x78] sm:$0xf] %v1349
    %1414 = vst [vmem:[%s4 + $0x7c] sm:$0xf] %v1350
    %1415 = vst [vmem:[%s4 + $0x80] sm:$0xf] %v1351
    %1416 = vst [vmem:[%s4 + $0x84] sm:$0xf] %v1352
    %1417 = vst [vmem:[%s4 + $0x88] sm:$0xf] %v1353
    %1418 = vst [vmem:[%s4 + $0x8c] sm:$0xf] %v1354
    %1419 = vst [vmem:[%s4 + $0x90] sm:$0xf] %v1355
    %1420 = vst [vmem:[%s4 + $0x94] sm:$0xf] %v1356
    %1421 = vst [vmem:[%s4 + $0x98] sm:$0xf] %v1357
    %1422 = vst [vmem:[%s4 + $0x9c] sm:$0xf] %v1358
    %1423 = vst [vmem:[%s4 + $0xa0] sm:$0xf] %v1359
    %1424 = vst [vmem:[%s4 + $0xa4] sm:$0xf] %v1360
    %1425 = vst [vmem:[%s4 + $0xa8] sm:$0xf] %v1361
    %1426 = vst [vmem:[%s4 + $0xac] sm:$0xf] %v1362
    %1427 = vst [vmem:[%s4 + $0xb0] sm:$0xf] %v1363
    %1428 = vst [vmem:[%s4 + $0xb4] sm:$0xf] %v1364
    %1429 = vst [vmem:[%s4 + $0xb8] sm:$0xf] %v1365
    %1430 = vst [vmem:[%s4 + $0xbc] sm:$0xf] %v1366
    %1431 = vst [vmem:[%s4 + $0xc0] sm:$0xf] %v1367
    %1432 = vst [vmem:[%s4 + $0xc4] sm:$0xf] %v1368
    %1433 = vst [vmem:[%s4 + $0xc8] sm:$0xf] %v1369
    %1434 = vst [vmem:[%s4 + $0xcc] sm:$0xf] %v1370
    %1435 = vst [vmem:[%s4 + $0xd0] sm:$0xf] %v1371
    %1436 = vst [vmem:[%s4 + $0xd4] sm:$0xf] %v1372
    %1437 = vst [vmem:[%s4 + $0xd8] sm:$0xf] %v1373
    %1438 = vst [vmem:[%s4 + $0xdc] sm:$0xf] %v1374
    %1439 = vst [vmem:[%s4 + $0xe0] sm:$0xf] %v1375
    %1440 = vst [vmem:[%s4 + $0xe4] sm:$0xf] %v1376
    %1441 = vst [vmem:[%s4 + $0xe8] sm:$0xf] %v1377
    %1442 = vst [vmem:[%s4 + $0xec] sm:$0xf] %v1378
    %1443 = vst [vmem:[%s4 + $0xf0] sm:$0xf] %v1379
    %1444 = vst [vmem:[%s4 + $0xf4] sm:$0xf] %v1380
    %1445 = vst [vmem:[%s4 + $0xf8] sm:$0xf] %v1381
    %1446 = vst [vmem:[%s4 + $0xfc] sm:$0xf] %v1382
  $region25: #{_lambda_.18} parent=0 // pred_fallthru
    _
  // Predicated region
  $region26: #{_lambda_.18} parent=0 // pred_check
    _
  $region27: #{_lambda_.18} parent=0 // pred_check_branch
    %1448 = sbr.rel (0) target = $region29
  $region28: #{_lambda_.18} parent=0 // pred_region
    _
  $region29: #{_lambda_.18} parent=0 // pred_fallthru
    _
  // Predicated region
  $region30: #{_lambda_.18} parent=0 // pred_check
    _
  $region31: #{_lambda_.18} parent=0 // pred_check_branch
    %1450 = sbr.rel (0) target = $region33
  $region32: #{_lambda_.18} parent=0 // pred_region
    _
  $region33: #{_lambda_.18} parent=0 // pred_fallthru
    _

// kernel: _lambda_.19
$region0: #{_lambda_.19}
  #allocation0 [shape = 'u32[]', space=smem, size = 0x4, offset = 0x4, fixed_abs, tag = 'smem constant byte address 0x4 - core index']
  #allocation1 [shape = 'u32[72,128]{1,0:T(1,128)}', space=vmem, size = 0x9000, scoped, tag = 'internal scratch']
  #allocation2 [shape = 'f32[128,128]{1,0:T(8,128)}', space=vmem, size = 0x10000, scoped, tag = 'scratch operand']
  %s0 = inlined_call_operand.vmem [shape: bf16[128,128], index: 0, kind: input, shape index: {}]
  %s1 = inlined_call_operand.vmem [shape: bf16[128,128], index: 1, kind: input, shape index: {}]
  %s2 = inlined_call_operand.vmem [shape: f32[1,128], index: 2, kind: input, shape index: {}]
  %s3 = inlined_call_operand.vmem [shape: f32[1,128], index: 3, kind: input, shape index: {}]
  %s4 = inlined_call_operand.vmem [shape: bf16[128,128], index: 4, kind: output, shape index: {}]
  %s5 = sld [smem:[#allocation0]]
  $region34: #{_lambda_.19} parent=0
    _
  %s7 = ssub.s32 1, %s5
  %s8 = scalar_select 0, %s7, %s5
  // Predicated region
  $region2: #{_lambda_.19} parent=0 // pred_check
    _
  $region3: #{_lambda_.19} parent=0 // pred_check_branch
    %10 = sbr.rel (0) target = $region5
  $region4: #{_lambda_.19} parent=0 // pred_region
    _
  $region5: #{_lambda_.19} parent=0 // pred_fallthru
    _
  // Predicated region
  $region6: #{_lambda_.19} parent=0 // pred_check
    _
  $region7: #{_lambda_.19} parent=0 // pred_check_branch
    %12 = sbr.rel (0) target = $region9
  $region8: #{_lambda_.19} parent=0 // pred_region
    _
  $region9: #{_lambda_.19} parent=0 // pred_fallthru
    _
  // Predicated region
  $region10: #{_lambda_.19} parent=0 // pred_check
    _
  $region11: #{_lambda_.19} parent=0 // pred_check_branch
    %14 = sbr.rel (0) target = $region13
  $region12: #{_lambda_.19} parent=0 // pred_region
    _
  $region13: #{_lambda_.19} parent=0 // pred_fallthru
    _
  // Predicated region
  $region14: #{_lambda_.19} parent=0 // pred_check
    _
  $region15: #{_lambda_.19} parent=0 // pred_check_branch
    %16 = sbr.rel (0) target = $region17
  $region16: #{_lambda_.19} parent=0 // pred_region
    _
  $region17: #{_lambda_.19} parent=0 // pred_fallthru
    _
  %p17 = scmp.eq.s32.totalorder 0, 0
  // Predicated region
  $region18: #{_lambda_.19} parent=0 // pred_check
    %p18 = pneg %p17
  $region19: #{_lambda_.19} parent=0 // pred_check_branch
    %20 = sbr.rel (%p18) target = $region21
  $region20: #{_lambda_.19} parent=0 // pred_region
    %21 = vst [vmem:[#allocation2] sm:$0xff] 0.0
    %22 = vst [vmem:[#allocation2 + $0x8] sm:$0xff] 0.0
    %23 = vst [vmem:[#allocation2 + $0x10] sm:$0xff] 0.0
    %24 = vst [vmem:[#allocation2 + $0x18] sm:$0xff] 0.0
    %25 = vst [vmem:[#allocation2 + $0x20] sm:$0xff] 0.0
    %26 = vst [vmem:[#allocation2 + $0x28] sm:$0xff] 0.0
    %27 = vst [vmem:[#allocation2 + $0x30] sm:$0xff] 0.0
    %28 = vst [vmem:[#allocation2 + $0x38] sm:$0xff] 0.0
    %29 = vst [vmem:[#allocation2 + $0x40] sm:$0xff] 0.0
    %30 = vst [vmem:[#allocation2 + $0x48] sm:$0xff] 0.0
    %31 = vst [vmem:[#allocation2 + $0x50] sm:$0xff] 0.0
    %32 = vst [vmem:[#allocation2 + $0x58] sm:$0xff] 0.0
    %33 = vst [vmem:[#allocation2 + $0x60] sm:$0xff] 0.0
    %34 = vst [vmem:[#allocation2 + $0x68] sm:$0xff] 0.0
    %35 = vst [vmem:[#allocation2 + $0x70] sm:$0xff] 0.0
    %36 = vst [vmem:[#allocation2 + $0x78] sm:$0xff] 0.0
  $region21: #{_lambda_.19} parent=0 // pred_fallthru
    _
  %v37 = vld [vmem:[#allocation2] sm:$0xff]
  %v38 = vld [vmem:[#allocation2 + $0x8] sm:$0xff]
  %v39 = vld [vmem:[#allocation2 + $0x10] sm:$0xff]
  %v40 = vld [vmem:[#allocation2 + $0x18] sm:$0xff]
  %v41 = vld [vmem:[#allocation2 + $0x20] sm:$0xff]
  %v42 = vld [vmem:[#allocation2 + $0x28] sm:$0xff]
  %v43 = vld [vmem:[#allocation2 + $0x30] sm:$0xff]
  %v44 = vld [vmem:[#allocation2 + $0x38] sm:$0xff]
  %v45 = vld [vmem:[#allocation2 + $0x40] sm:$0xff]
  %v46 = vld [vmem:[#allocation2 + $0x48] sm:$0xff]
  %v47 = vld [vmem:[#allocation2 + $0x50] sm:$0xff]
  %v48 = vld [vmem:[#allocation2 + $0x58] sm:$0xff]
  %v49 = vld [vmem:[#allocation2 + $0x60] sm:$0xff]
  %v50 = vld [vmem:[#allocation2 + $0x68] sm:$0xff]
  %v51 = vld [vmem:[#allocation2 + $0x70] sm:$0xff]
  %v52 = vld [vmem:[#allocation2 + $0x78] sm:$0xff]
  %v53 = vld [vmem:[%s0] sm:$0xf]
  %v54 = vld [vmem:[%s0 + $0x4] sm:$0xf]
  %v55 = vld [vmem:[%s0 + $0x8] sm:$0xf]
  %v56 = vld [vmem:[%s0 + $0xc] sm:$0xf]
  %v57 = vld [vmem:[%s0 + $0x10] sm:$0xf]
  %v58 = vld [vmem:[%s0 + $0x14] sm:$0xf]
  %v59 = vld [vmem:[%s0 + $0x18] sm:$0xf]
  %v60 = vld [vmem:[%s0 + $0x1c] sm:$0xf]
  %v61 = vld [vmem:[%s0 + $0x20] sm:$0xf]
  %v62 = vld [vmem:[%s0 + $0x24] sm:$0xf]
  %v63 = vld [vmem:[%s0 + $0x28] sm:$0xf]
  %v64 = vld [vmem:[%s0 + $0x2c] sm:$0xf]
  %v65 = vld [vmem:[%s0 + $0x30] sm:$0xf]
  %v66 = vld [vmem:[%s0 + $0x34] sm:$0xf]
  %v67 = vld [vmem:[%s0 + $0x38] sm:$0xf]
  %v68 = vld [vmem:[%s0 + $0x3c] sm:$0xf]
  %v69 = vld [vmem:[%s1] sm:$0xf]
  %v70 = vld [vmem:[%s1 + $0x4] sm:$0xf]
  %v71 = vld [vmem:[%s1 + $0x8] sm:$0xf]
  %v72 = vld [vmem:[%s1 + $0xc] sm:$0xf]
  %v73 = vld [vmem:[%s1 + $0x10] sm:$0xf]
  %v74 = vld [vmem:[%s1 + $0x14] sm:$0xf]
  %v75 = vld [vmem:[%s1 + $0x18] sm:$0xf]
  %v76 = vld [vmem:[%s1 + $0x1c] sm:$0xf]
  %v77 = vld [vmem:[%s1 + $0x20] sm:$0xf]
  %v78 = vld [vmem:[%s1 + $0x24] sm:$0xf]
  %v79 = vld [vmem:[%s1 + $0x28] sm:$0xf]
  %v80 = vld [vmem:[%s1 + $0x2c] sm:$0xf]
  %v81 = vld [vmem:[%s1 + $0x30] sm:$0xf]
  %v82 = vld [vmem:[%s1 + $0x34] sm:$0xf]
  %v83 = vld [vmem:[%s1 + $0x38] sm:$0xf]
  %v84 = vld [vmem:[%s1 + $0x3c] sm:$0xf]
  %v101 = vunpack.c.l.b16 %v53
  %v102 = vunpack.c.l.b16 %v54
  %v103 = vunpack.c.l.b16 %v55
  %v104 = vunpack.c.l.b16 %v56
  %v105 = vunpack.c.l.b16 %v57
  %v106 = vunpack.c.l.b16 %v58
  %v107 = vunpack.c.l.b16 %v59
  %v108 = vunpack.c.l.b16 %v60
  %v109 = vunpack.c.l.b16 %v61
  %v110 = vunpack.c.l.b16 %v62
  %v111 = vunpack.c.l.b16 %v63
  %v112 = vunpack.c.l.b16 %v64
  %v113 = vunpack.c.l.b16 %v65
  %v114 = vunpack.c.l.b16 %v66
  %v115 = vunpack.c.l.b16 %v67
  %v116 = vunpack.c.l.b16 %v68
  %v117 = vpack.c.b16 %v102, %v101
  %v118 = vpack.c.b16 %v104, %v103
  %v119 = vpack.c.b16 %v106, %v105
  %v120 = vpack.c.b16 %v108, %v107
  %v121 = vpack.c.b16 %v110, %v109
  %v122 = vpack.c.b16 %v112, %v111
  %v123 = vpack.c.b16 %v114, %v113
  %v124 = vpack.c.b16 %v116, %v115
  %v149 = vunpack.c.l.b16 %v69
  %v150 = vunpack.c.l.b16 %v70
  %v151 = vunpack.c.l.b16 %v71
  %v152 = vunpack.c.l.b16 %v72
  %v153 = vunpack.c.l.b16 %v73
  %v154 = vunpack.c.l.b16 %v74
  %v155 = vunpack.c.l.b16 %v75
  %v156 = vunpack.c.l.b16 %v76
  %v157 = vunpack.c.l.b16 %v77
  %v158 = vunpack.c.l.b16 %v78
  %v159 = vunpack.c.l.b16 %v79
  %v160 = vunpack.c.l.b16 %v80
  %v161 = vunpack.c.l.b16 %v81
  %v162 = vunpack.c.l.b16 %v82
  %v163 = vunpack.c.l.b16 %v83
  %v164 = vunpack.c.l.b16 %v84
  %v165 = vpack.c.b16 %v150, %v149
  %v166 = vpack.c.b16 %v152, %v151
  %v167 = vpack.c.b16 %v154, %v153
  %v168 = vpack.c.b16 %v156, %v155
  %v169 = vpack.c.b16 %v158, %v157
  %v170 = vpack.c.b16 %v160, %v159
  %v171 = vpack.c.b16 %v162, %v161
  %v172 = vpack.c.b16 %v164, %v163
  %181 = vmatpush.bf16.msra.mxu0 %v172
  %182 = vmatpush.bf16.msra.mxu0 %v171
  %183 = vmatpush.bf16.msra.mxu0 %v170
  %184 = vmatpush.bf16.msra.mxu0 %v169
  %185 = vmatpush.bf16.msra.mxu0 %v168
  %186 = vmatpush.bf16.msra.mxu0 %v167
  %187 = vmatpush.bf16.msra.mxu0 %v166
  %188 = vmatpush.bf16.msra.mxu0 %v165
  %189 = vmatmul.bf16.gmra.mxu0 %v117
  %v190 = vpop.f32.mrf.mxu0
  %v191 = vadd.f32 0.0, %v190
  %v192 = vpop.f32.mrf.mxu0
  %v193 = vadd.f32 0.0, %v192
  %194 = vmatmul.bf16.gmra.mxu0 %v118
  %v195 = vpop.f32.mrf.mxu0
  %v196 = vadd.f32 0.0, %v195
  %v197 = vpop.f32.mrf.mxu0
  %v198 = vadd.f32 0.0, %v197
  %199 = vmatmul.bf16.gmra.mxu0 %v119
  %v200 = vpop.f32.mrf.mxu0
  %v201 = vadd.f32 0.0, %v200
  %v202 = vpop.f32.mrf.mxu0
  %v203 = vadd.f32 0.0, %v202
  %204 = vmatmul.bf16.gmra.mxu0 %v120
  %v205 = vpop.f32.mrf.mxu0
  %v206 = vadd.f32 0.0, %v205
  %v207 = vpop.f32.mrf.mxu0
  %v208 = vadd.f32 0.0, %v207
  %209 = vmatmul.bf16.gmra.mxu0 %v121
  %v210 = vpop.f32.mrf.mxu0
  %v211 = vadd.f32 0.0, %v210
  %v212 = vpop.f32.mrf.mxu0
  %v213 = vadd.f32 0.0, %v212
  %214 = vmatmul.bf16.gmra.mxu0 %v122
  %v215 = vpop.f32.mrf.mxu0
  %v216 = vadd.f32 0.0, %v215
  %v217 = vpop.f32.mrf.mxu0
  %v218 = vadd.f32 0.0, %v217
  %219 = vmatmul.bf16.gmra.mxu0 %v123
  %v220 = vpop.f32.mrf.mxu0
  %v221 = vadd.f32 0.0, %v220
  %v222 = vpop.f32.mrf.mxu0
  %v223 = vadd.f32 0.0, %v222
  %224 = vmatmul.bf16.gmra.mxu0 %v124
  %v225 = vpop.f32.mrf.mxu0
  %v226 = vadd.f32 0.0, %v225
  %v227 = vpop.f32.mrf.mxu0
  %v228 = vadd.f32 0.0, %v227
  %229 = vdwg.mxu0
  %v230 = vadd.f32 %v37, %v191
  %v231 = vadd.f32 %v38, %v193
  %v232 = vadd.f32 %v39, %v196
  %v233 = vadd.f32 %v40, %v198
  %v234 = vadd.f32 %v41, %v201
  %v235 = vadd.f32 %v42, %v203
  %v236 = vadd.f32 %v43, %v206
  %v237 = vadd.f32 %v44, %v208
  %v238 = vadd.f32 %v45, %v211
  %v239 = vadd.f32 %v46, %v213
  %v240 = vadd.f32 %v47, %v216
  %v241 = vadd.f32 %v48, %v218
  %v242 = vadd.f32 %v49, %v221
  %v243 = vadd.f32 %v50, %v223
  %v244 = vadd.f32 %v51, %v226
  %v245 = vadd.f32 %v52, %v228
  %246 = vst [vmem:[#allocation2] sm:$0xff] %v230
  %247 = vst [vmem:[#allocation2 + $0x8] sm:$0xff] %v231
  %248 = vst [vmem:[#allocation2 + $0x10] sm:$0xff] %v232
  %249 = vst [vmem:[#allocation2 + $0x18] sm:$0xff] %v233
  %250 = vst [vmem:[#allocation2 + $0x20] sm:$0xff] %v234
  %251 = vst [vmem:[#allocation2 + $0x28] sm:$0xff] %v235
  %252 = vst [vmem:[#allocation2 + $0x30] sm:$0xff] %v236
  %253 = vst [vmem:[#allocation2 + $0x38] sm:$0xff] %v237
  %254 = vst [vmem:[#allocation2 + $0x40] sm:$0xff] %v238
  %255 = vst [vmem:[#allocation2 + $0x48] sm:$0xff] %v239
  %256 = vst [vmem:[#allocation2 + $0x50] sm:$0xff] %v240
  %257 = vst [vmem:[#allocation2 + $0x58] sm:$0xff] %v241
  %258 = vst [vmem:[#allocation2 + $0x60] sm:$0xff] %v242
  %259 = vst [vmem:[#allocation2 + $0x68] sm:$0xff] %v243
  %260 = vst [vmem:[#allocation2 + $0x70] sm:$0xff] %v244
  %261 = vst [vmem:[#allocation2 + $0x78] sm:$0xff] %v245
  // Predicated region
  $region22: #{_lambda_.19} parent=0 // pred_check
    %p262 = pneg %p17
  $region23: #{_lambda_.19} parent=0 // pred_check_branch
    %264 = sbr.rel (%p262) target = $region25
  $region24: #{_lambda_.19} parent=0 // pred_region
    %v265 = vld [vmem:[#allocation2] sm:$0xff]
    %v266 = vld [vmem:[#allocation2 + $0x8] sm:$0xff]
    %v267 = vld [vmem:[#allocation2 + $0x10] sm:$0xff]
    %v268 = vld [vmem:[#allocation2 + $0x18] sm:$0xff]
    %v269 = vld [vmem:[#allocation2 + $0x20] sm:$0xff]
    %v270 = vld [vmem:[#allocation2 + $0x28] sm:$0xff]
    %v271 = vld [vmem:[#allocation2 + $0x30] sm:$0xff]
    %v272 = vld [vmem:[#allocation2 + $0x38] sm:$0xff]
    %v273 = vld [vmem:[#allocation2 + $0x40] sm:$0xff]
    %v274 = vld [vmem:[#allocation2 + $0x48] sm:$0xff]
    %v275 = vld [vmem:[#allocation2 + $0x50] sm:$0xff]
    %v276 = vld [vmem:[#allocation2 + $0x58] sm:$0xff]
    %v277 = vld [vmem:[#allocation2 + $0x60] sm:$0xff]
    %v278 = vld [vmem:[#allocation2 + $0x68] sm:$0xff]
    %v279 = vld [vmem:[#allocation2 + $0x70] sm:$0xff]
    %v280 = vld [vmem:[#allocation2 + $0x78] sm:$0xff]
    %v281 = vadd.f32 %v265, %v266
    %v282 = vadd.f32 %v281, %v267
    %v283 = vadd.f32 %v282, %v268
    %v284 = vadd.f32 %v283, %v269
    %v285 = vadd.f32 %v284, %v270
    %v286 = vadd.f32 %v285, %v271
    %v287 = vadd.f32 %v286, %v272
    %v288 = vadd.f32 %v287, %v273
    %v289 = vadd.f32 %v288, %v274
    %v290 = vadd.f32 %v289, %v275
    %v291 = vadd.f32 %v290, %v276
    %v292 = vadd.f32 %v291, %v277
    %v293 = vadd.f32 %v292, %v278
    %v294 = vadd.f32 %v293, %v279
    %v295 = vadd.f32 %v294, %v280
    %v296 = vrot.slane %v295, 4
    %v297 = vadd.f32 %v295, %v296
    %v298 = vrot.slane %v297, 2
    %v299 = vadd.f32 %v297, %v298
    %v300 = vrot.slane %v299, 1
    %v301 = vadd.f32 %v299, %v300
    %v302 = vmul.f32 %v301, 0.0078125
    %v303 = vsub.f32 %v265, %v302
    %v304 = vsub.f32 %v266, %v302
    %v305 = vsub.f32 %v267, %v302
    %v306 = vsub.f32 %v268, %v302
    %v307 = vsub.f32 %v269, %v302
    %v308 = vsub.f32 %v270, %v302
    %v309 = vsub.f32 %v271, %v302
    %v310 = vsub.f32 %v272, %v302
    %v311 = vsub.f32 %v273, %v302
    %v312 = vsub.f32 %v274, %v302
    %v313 = vsub.f32 %v275, %v302
    %v314 = vsub.f32 %v276, %v302
    %v315 = vsub.f32 %v277, %v302
    %v316 = vsub.f32 %v278, %v302
    %v317 = vsub.f32 %v279, %v302
    %v318 = vsub.f32 %v280, %v302
    %v319 = vmul.f32 %v303, %v303
    %v320 = vmul.f32 %v304, %v304
    %v321 = vmul.f32 %v305, %v305
    %v322 = vmul.f32 %v306, %v306
    %v323 = vmul.f32 %v307, %v307
    %v324 = vmul.f32 %v308, %v308
    %v325 = vmul.f32 %v309, %v309
    %v326 = vmul.f32 %v310, %v310
    %v327 = vmul.f32 %v311, %v311
    %v328 = vmul.f32 %v312, %v312
    %v329 = vmul.f32 %v313, %v313
    %v330 = vmul.f32 %v314, %v314
    %v331 = vmul.f32 %v315, %v315
    %v332 = vmul.f32 %v316, %v316
    %v333 = vmul.f32 %v317, %v317
    %v334 = vmul.f32 %v318, %v318
    %v335 = vadd.f32 %v319, %v320
    %v336 = vadd.f32 %v335, %v321
    %v337 = vadd.f32 %v336, %v322
    %v338 = vadd.f32 %v337, %v323
    %v339 = vadd.f32 %v338, %v324
    %v340 = vadd.f32 %v339, %v325
    %v341 = vadd.f32 %v340, %v326
    %v342 = vadd.f32 %v341, %v327
    %v343 = vadd.f32 %v342, %v328
    %v344 = vadd.f32 %v343, %v329
    %v345 = vadd.f32 %v344, %v330
    %v346 = vadd.f32 %v345, %v331
    %v347 = vadd.f32 %v346, %v332
    %v348 = vadd.f32 %v347, %v333
    %v349 = vadd.f32 %v348, %v334
    %v350 = vrot.slane %v349, 4
    %v351 = vadd.f32 %v349, %v350
    %v352 = vrot.slane %v351, 2
    %v353 = vadd.f32 %v351, %v352
    %v354 = vrot.slane %v353, 1
    %v355 = vadd.f32 %v353, %v354
    %v356 = vmul.f32 %v302, %v302
    %v357 = vmul.f32 %v356, 0.0
    %v358 = vsub.f32 %v355, %v357
    %v359 = vmul.f32 %v358, 0.0078125
    %v360 = vmax.f32 %v359, 0.0
    %v361 = vadd.f32 %v360, 1e-05
    %v362 = vrsqrt.pop %v361
    %v363 = vmul.f32 %v362, %v361
    %v364 = vmul.f32 %v363, %v362
    %v365 = vmul.f32 0.5, %v364
    %v366 = vsub.f32 1.5, %v365
    %v367 = vmul.f32 %v362, %v366
    %vm368 = vweird.f32 %v361
    %vm369 = vweird.f32 %v362
    %vm370 = vmor %vm368, %vm369
    %v371 = vsel %vm370, %v362, %v367
    %v372 = vld [vmem:[%s2] sm:$0x1]
    %v373 = vmul.f32 %v372, %v371
    %v374 = vld [vmem:[%s3] sm:$0x1]
    %v375 = vmul.f32 %v302, %v373
    %v376 = vsub.f32 %v374, %v375
    %v378 = vperm.slane %v373, 0
    %v380 = vmul.f32 %v265, %v378
    %v381 = vmul.f32 %v266, %v378
    %v382 = vmul.f32 %v267, %v378
    %v383 = vmul.f32 %v268, %v378
    %v384 = vmul.f32 %v269, %v378
    %v385 = vmul.f32 %v270, %v378
    %v386 = vmul.f32 %v271, %v378
    %v387 = vmul.f32 %v272, %v378
    %v388 = vmul.f32 %v273, %v378
    %v389 = vmul.f32 %v274, %v378
    %v390 = vmul.f32 %v275, %v378
    %v391 = vmul.f32 %v276, %v378
    %v392 = vmul.f32 %v277, %v378
    %v393 = vmul.f32 %v278, %v378
    %v394 = vmul.f32 %v279, %v378
    %v395 = vmul.f32 %v280, %v378
    %v397 = vperm.slane %v376, 0
    %v399 = vadd.f32 %v380, %v397
    %v400 = vadd.f32 %v381, %v397
    %v401 = vadd.f32 %v382, %v397
    %v402 = vadd.f32 %v383, %v397
    %v403 = vadd.f32 %v384, %v397
    %v404 = vadd.f32 %v385, %v397
    %v405 = vadd.f32 %v386, %v397
    %v406 = vadd.f32 %v387, %v397
    %v407 = vadd.f32 %v388, %v397
    %v408 = vadd.f32 %v389, %v397
    %v409 = vadd.f32 %v390, %v397
    %v410 = vadd.f32 %v391, %v397
    %v411 = vadd.f32 %v392, %v397
    %v412 = vadd.f32 %v393, %v397
    %v413 = vadd.f32 %v394, %v397
    %v414 = vadd.f32 %v395, %v397
    %v415 = vmax.f32 %v399, 0.0
    %v416 = vmax.f32 %v400, 0.0
    %v417 = vmax.f32 %v401, 0.0
    %v418 = vmax.f32 %v402, 0.0
    %v419 = vmax.f32 %v403, 0.0
    %v420 = vmax.f32 %v404, 0.0
    %v421 = vmax.f32 %v405, 0.0
    %v422 = vmax.f32 %v406, 0.0
    %v423 = vmax.f32 %v407, 0.0
    %v424 = vmax.f32 %v408, 0.0
    %v425 = vmax.f32 %v409, 0.0
    %v426 = vmax.f32 %v410, 0.0
    %v427 = vmax.f32 %v411, 0.0
    %v428 = vmax.f32 %v412, 0.0
    %v429 = vmax.f32 %v413, 0.0
    %v430 = vmax.f32 %v414, 0.0
    %v431 = vpack.c.bf16 %v415, %v415
    %v432 = vpack.c.bf16 %v416, %v416
    %v433 = vpack.c.bf16 %v417, %v417
    %v434 = vpack.c.bf16 %v418, %v418
    %v435 = vpack.c.bf16 %v419, %v419
    %v436 = vpack.c.bf16 %v420, %v420
    %v437 = vpack.c.bf16 %v421, %v421
    %v438 = vpack.c.bf16 %v422, %v422
    %v439 = vpack.c.bf16 %v423, %v423
    %v440 = vpack.c.bf16 %v424, %v424
    %v441 = vpack.c.bf16 %v425, %v425
    %v442 = vpack.c.bf16 %v426, %v426
    %v443 = vpack.c.bf16 %v427, %v427
    %v444 = vpack.c.bf16 %v428, %v428
    %v445 = vpack.c.bf16 %v429, %v429
    %v446 = vpack.c.bf16 %v430, %v430
    %447 = vst [vmem:[%s4] sm:$0xf] %v431
    %448 = vst [vmem:[%s4 + $0x4] sm:$0xf] %v432
    %449 = vst [vmem:[%s4 + $0x8] sm:$0xf] %v433
    %450 = vst [vmem:[%s4 + $0xc] sm:$0xf] %v434
    %451 = vst [vmem:[%s4 + $0x10] sm:$0xf] %v435
    %452 = vst [vmem:[%s4 + $0x14] sm:$0xf] %v436
    %453 = vst [vmem:[%s4 + $0x18] sm:$0xf] %v437
    %454 = vst [vmem:[%s4 + $0x1c] sm:$0xf] %v438
    %455 = vst [vmem:[%s4 + $0x20] sm:$0xf] %v439
    %456 = vst [vmem:[%s4 + $0x24] sm:$0xf] %v440
    %457 = vst [vmem:[%s4 + $0x28] sm:$0xf] %v441
    %458 = vst [vmem:[%s4 + $0x2c] sm:$0xf] %v442
    %459 = vst [vmem:[%s4 + $0x30] sm:$0xf] %v443
    %460 = vst [vmem:[%s4 + $0x34] sm:$0xf] %v444
    %461 = vst [vmem:[%s4 + $0x38] sm:$0xf] %v445
    %462 = vst [vmem:[%s4 + $0x3c] sm:$0xf] %v446
  $region25: #{_lambda_.19} parent=0 // pred_fallthru
    _
  // Predicated region
  $region26: #{_lambda_.19} parent=0 // pred_check
    _
  $region27: #{_lambda_.19} parent=0 // pred_check_branch
    %464 = sbr.rel (0) target = $region29
  $region28: #{_lambda_.19} parent=0 // pred_region
    _
  $region29: #{_lambda_.19} parent=0 // pred_fallthru
    _
  // Predicated region
  $region30: #{_lambda_.19} parent=0 // pred_check
    _
  $region31: #{_lambda_.19} parent=0 // pred_check_branch
    %466 = sbr.rel (0) target = $region33
  $region32: #{_lambda_.19} parent=0 // pred_region
    _
  $region33: #{_lambda_.19} parent=0 // pred_fallthru
    _

// kernel: _lambda_.20
$region0: #{_lambda_.20}
  #allocation0 [shape = 'u32[]', space=smem, size = 0x4, offset = 0x4, fixed_abs, tag = 'smem constant byte address 0x4 - core index']
  #allocation1 [shape = 'u32[72,128]{1,0:T(1,128)}', space=vmem, size = 0x9000, scoped, tag = 'internal scratch']
  #allocation2 [shape = 'f32[32,128]{1,0:T(8,128)}', space=vmem, size = 0x4000, scoped, tag = 'scratch operand']
  %s0 = inlined_call_operand.vmem [shape: bf16[32,128], index: 0, kind: input, shape index: {}]
  %s1 = inlined_call_operand.vmem [shape: bf16[128,128], index: 1, kind: input, shape index: {}]
  %s2 = inlined_call_operand.vmem [shape: f32[1,128], index: 2, kind: input, shape index: {}]
  %s3 = inlined_call_operand.vmem [shape: f32[1,128], index: 3, kind: input, shape index: {}]
  %s4 = inlined_call_operand.vmem [shape: bf16[32,128], index: 4, kind: output, shape index: {}]
  %s5 = sld [smem:[#allocation0]]
  $region34: #{_lambda_.20} parent=0
    _
  %s7 = ssub.s32 1, %s5
  %s8 = scalar_select 0, %s7, %s5
  // Predicated region
  $region2: #{_lambda_.20} parent=0 // pred_check
    _
  $region3: #{_lambda_.20} parent=0 // pred_check_branch
    %10 = sbr.rel (0) target = $region5
  $region4: #{_lambda_.20} parent=0 // pred_region
    _
  $region5: #{_lambda_.20} parent=0 // pred_fallthru
    _
  // Predicated region
  $region6: #{_lambda_.20} parent=0 // pred_check
    _
  $region7: #{_lambda_.20} parent=0 // pred_check_branch
    %12 = sbr.rel (0) target = $region9
  $region8: #{_lambda_.20} parent=0 // pred_region
    _
  $region9: #{_lambda_.20} parent=0 // pred_fallthru
    _
  // Predicated region
  $region10: #{_lambda_.20} parent=0 // pred_check
    _
  $region11: #{_lambda_.20} parent=0 // pred_check_branch
    %14 = sbr.rel (0) target = $region13
  $region12: #{_lambda_.20} parent=0 // pred_region
    _
  $region13: #{_lambda_.20} parent=0 // pred_fallthru
    _
  // Predicated region
  $region14: #{_lambda_.20} parent=0 // pred_check
    _
  $region15: #{_lambda_.20} parent=0 // pred_check_branch
    %16 = sbr.rel (0) target = $region17
  $region16: #{_lambda_.20} parent=0 // pred_region
    _
  $region17: #{_lambda_.20} parent=0 // pred_fallthru
    _
  %p17 = scmp.eq.s32.totalorder 0, 0
  // Predicated region
  $region18: #{_lambda_.20} parent=0 // pred_check
    %p18 = pneg %p17
  $region19: #{_lambda_.20} parent=0 // pred_check_branch
    %20 = sbr.rel (%p18) target = $region21
  $region20: #{_lambda_.20} parent=0 // pred_region
    %21 = vst [vmem:[#allocation2] sm:$0xff] 0.0
    %22 = vst [vmem:[#allocation2 + $0x8] sm:$0xff] 0.0
    %23 = vst [vmem:[#allocation2 + $0x10] sm:$0xff] 0.0
    %24 = vst [vmem:[#allocation2 + $0x18] sm:$0xff] 0.0
  $region21: #{_lambda_.20} parent=0 // pred_fallthru
    _
  %v25 = vld [vmem:[#allocation2] sm:$0xff]
  %v26 = vld [vmem:[#allocation2 + $0x8] sm:$0xff]
  %v27 = vld [vmem:[#allocation2 + $0x10] sm:$0xff]
  %v28 = vld [vmem:[#allocation2 + $0x18] sm:$0xff]
  %v29 = vld [vmem:[%s0] sm:$0xf]
  %v30 = vld [vmem:[%s0 + $0x4] sm:$0xf]
  %v31 = vld [vmem:[%s0 + $0x8] sm:$0xf]
  %v32 = vld [vmem:[%s0 + $0xc] sm:$0xf]
  %v33 = vld [vmem:[%s1] sm:$0xf]
  %v34 = vld [vmem:[%s1 + $0x4] sm:$0xf]
  %v35 = vld [vmem:[%s1 + $0x8] sm:$0xf]
  %v36 = vld [vmem:[%s1 + $0xc] sm:$0xf]
  %v37 = vld [vmem:[%s1 + $0x10] sm:$0xf]
  %v38 = vld [vmem:[%s1 + $0x14] sm:$0xf]
  %v39 = vld [vmem:[%s1 + $0x18] sm:$0xf]
  %v40 = vld [vmem:[%s1 + $0x1c] sm:$0xf]
  %v41 = vld [vmem:[%s1 + $0x20] sm:$0xf]
  %v42 = vld [vmem:[%s1 + $0x24] sm:$0xf]
  %v43 = vld [vmem:[%s1 + $0x28] sm:$0xf]
  %v44 = vld [vmem:[%s1 + $0x2c] sm:$0xf]
  %v45 = vld [vmem:[%s1 + $0x30] sm:$0xf]
  %v46 = vld [vmem:[%s1 + $0x34] sm:$0xf]
  %v47 = vld [vmem:[%s1 + $0x38] sm:$0xf]
  %v48 = vld [vmem:[%s1 + $0x3c] sm:$0xf]
  %v53 = vunpack.c.l.b16 %v29
  %v54 = vunpack.c.l.b16 %v30
  %v55 = vunpack.c.l.b16 %v31
  %v56 = vunpack.c.l.b16 %v32
  %v57 = vpack.c.b16 %v54, %v53
  %v58 = vpack.c.b16 %v56, %v55
  %v77 = vunpack.c.l.b16 %v33
  %v78 = vunpack.c.l.b16 %v34
  %v79 = vunpack.c.l.b16 %v35
  %v80 = vunpack.c.l.b16 %v36
  %v81 = vunpack.c.l.b16 %v37
  %v82 = vunpack.c.l.b16 %v38
  %v83 = vunpack.c.l.b16 %v39
  %v84 = vunpack.c.l.b16 %v40
  %v85 = vunpack.c.l.b16 %v41
  %v86 = vunpack.c.l.b16 %v42
  %v87 = vunpack.c.l.b16 %v43
  %v88 = vunpack.c.l.b16 %v44
  %v89 = vunpack.c.l.b16 %v45
  %v90 = vunpack.c.l.b16 %v46
  %v91 = vunpack.c.l.b16 %v47
  %v92 = vunpack.c.l.b16 %v48
  %v93 = vpack.c.b16 %v78, %v77
  %v94 = vpack.c.b16 %v80, %v79
  %v95 = vpack.c.b16 %v82, %v81
  %v96 = vpack.c.b16 %v84, %v83
  %v97 = vpack.c.b16 %v86, %v85
  %v98 = vpack.c.b16 %v88, %v87
  %v99 = vpack.c.b16 %v90, %v89
  %v100 = vpack.c.b16 %v92, %v91
  %109 = vmatpush.bf16.msra.mxu0 %v100
  %110 = vmatpush.bf16.msra.mxu0 %v99
  %111 = vmatpush.bf16.msra.mxu0 %v98
  %112 = vmatpush.bf16.msra.mxu0 %v97
  %113 = vmatpush.bf16.msra.mxu0 %v96
  %114 = vmatpush.bf16.msra.mxu0 %v95
  %115 = vmatpush.bf16.msra.mxu0 %v94
  %116 = vmatpush.bf16.msra.mxu0 %v93
  %117 = vmatmul.bf16.gmra.mxu0 %v57
  %v118 = vpop.f32.mrf.mxu0
  %v119 = vadd.f32 0.0, %v118
  %v120 = vpop.f32.mrf.mxu0
  %v121 = vadd.f32 0.0, %v120
  %122 = vmatmul.bf16.gmra.mxu0 %v58
  %v123 = vpop.f32.mrf.mxu0
  %v124 = vadd.f32 0.0, %v123
  %v125 = vpop.f32.mrf.mxu0
  %v126 = vadd.f32 0.0, %v125
  %127 = vdwg.mxu0
  %v128 = vadd.f32 %v25, %v119
  %v129 = vadd.f32 %v26, %v121
  %v130 = vadd.f32 %v27, %v124
  %v131 = vadd.f32 %v28, %v126
  %132 = vst [vmem:[#allocation2] sm:$0xff] %v128
  %133 = vst [vmem:[#allocation2 + $0x8] sm:$0xff] %v129
  %134 = vst [vmem:[#allocation2 + $0x10] sm:$0xff] %v130
  %135 = vst [vmem:[#allocation2 + $0x18] sm:$0xff] %v131
  // Predicated region
  $region22: #{_lambda_.20} parent=0 // pred_check
    %p136 = pneg %p17
  $region23: #{_lambda_.20} parent=0 // pred_check_branch
    %138 = sbr.rel (%p136) target = $region25
  $region24: #{_lambda_.20} parent=0 // pred_region
    %v139 = vld [vmem:[#allocation2] sm:$0xff]
    %v140 = vld [vmem:[#allocation2 + $0x8] sm:$0xff]
    %v141 = vld [vmem:[#allocation2 + $0x10] sm:$0xff]
    %v142 = vld [vmem:[#allocation2 + $0x18] sm:$0xff]
    %v143 = vadd.f32 %v139, %v140
    %v144 = vadd.f32 %v143, %v141
    %v145 = vadd.f32 %v144, %v142
    %v146 = vrot.slane %v145, 4
    %v147 = vadd.f32 %v145, %v146
    %v148 = vrot.slane %v147, 2
    %v149 = vadd.f32 %v147, %v148
    %v150 = vrot.slane %v149, 1
    %v151 = vadd.f32 %v149, %v150
    %v152 = vmul.f32 %v151, 0.03125
    %v153 = vsub.f32 %v139, %v152
    %v154 = vsub.f32 %v140, %v152
    %v155 = vsub.f32 %v141, %v152
    %v156 = vsub.f32 %v142, %v152
    %v157 = vmul.f32 %v153, %v153
    %v158 = vmul.f32 %v154, %v154
    %v159 = vmul.f32 %v155, %v155
    %v160 = vmul.f32 %v156, %v156
    %v161 = vadd.f32 %v157, %v158
    %v162 = vadd.f32 %v161, %v159
    %v163 = vadd.f32 %v162, %v160
    %v164 = vrot.slane %v163, 4
    %v165 = vadd.f32 %v163, %v164
    %v166 = vrot.slane %v165, 2
    %v167 = vadd.f32 %v165, %v166
    %v168 = vrot.slane %v167, 1
    %v169 = vadd.f32 %v167, %v168
    %v170 = vmul.f32 %v152, %v152
    %v171 = vmul.f32 %v170, 0.0
    %v172 = vsub.f32 %v169, %v171
    %v173 = vmul.f32 %v172, 0.03125
    %v174 = vmax.f32 %v173, 0.0
    %v175 = vadd.f32 %v174, 1e-05
    %v176 = vrsqrt.pop %v175
    %v177 = vmul.f32 %v176, %v175
    %v178 = vmul.f32 %v177, %v176
    %v179 = vmul.f32 0.5, %v178
    %v180 = vsub.f32 1.5, %v179
    %v181 = vmul.f32 %v176, %v180
    %vm182 = vweird.f32 %v175
    %vm183 = vweird.f32 %v176
    %vm184 = vmor %vm182, %vm183
    %v185 = vsel %vm184, %v176, %v181
    %v186 = vld [vmem:[%s2] sm:$0x1]
    %v187 = vmul.f32 %v186, %v185
    %v188 = vld [vmem:[%s3] sm:$0x1]
    %v189 = vmul.f32 %v152, %v187
    %v190 = vsub.f32 %v188, %v189
    %v192 = vperm.slane %v187, 0
    %v194 = vmul.f32 %v139, %v192
    %v195 = vmul.f32 %v140, %v192
    %v196 = vmul.f32 %v141, %v192
    %v197 = vmul.f32 %v142, %v192
    %v199 = vperm.slane %v190, 0
    %v201 = vadd.f32 %v194, %v199
    %v202 = vadd.f32 %v195, %v199
    %v203 = vadd.f32 %v196, %v199
    %v204 = vadd.f32 %v197, %v199
    %v205 = vmax.f32 %v201, 0.0
    %v206 = vmax.f32 %v202, 0.0
    %v207 = vmax.f32 %v203, 0.0
    %v208 = vmax.f32 %v204, 0.0
    %v209 = vpack.c.bf16 %v205, %v205
    %v210 = vpack.c.bf16 %v206, %v206
    %v211 = vpack.c.bf16 %v207, %v207
    %v212 = vpack.c.bf16 %v208, %v208
    %213 = vst [vmem:[%s4] sm:$0xf] %v209
    %214 = vst [vmem:[%s4 + $0x4] sm:$0xf] %v210
    %215 = vst [vmem:[%s4 + $0x8] sm:$0xf] %v211
    %216 = vst [vmem:[%s4 + $0xc] sm:$0xf] %v212
  $region25: #{_lambda_.20} parent=0 // pred_fallthru
    _
  // Predicated region
  $region26: #{_lambda_.20} parent=0 // pred_check
    _
  $region27: #{_lambda_.20} parent=0 // pred_check_branch
    %218 = sbr.rel (0) target = $region29
  $region28: #{_lambda_.20} parent=0 // pred_region
    _
  $region29: #{_lambda_.20} parent=0 // pred_fallthru
    _
  // Predicated region
  $region30: #{_lambda_.20} parent=0 // pred_check
    _
  $region31: #{_lambda_.20} parent=0 // pred_check_branch
    %220 = sbr.rel (0) target = $region33
  $region32: #{_lambda_.20} parent=0 // pred_region
    _
  $region33: #{_lambda_.20} parent=0 // pred_fallthru
    _

// kernel: _lambda_.21
$region0: #{_lambda_.21}
  #allocation0 [shape = 'u32[]', space=smem, size = 0x4, offset = 0x4, fixed_abs, tag = 'smem constant byte address 0x4 - core index']
  #allocation1 [shape = 'u32[72,128]{1,0:T(1,128)}', space=vmem, size = 0x9000, scoped, tag = 'internal scratch']
  #allocation2 [shape = 'f32[32,128]{1,0:T(8,128)}', space=vmem, size = 0x4000, scoped, tag = 'scratch operand']
  %s0 = inlined_call_operand.vmem [shape: bf16[32,128], index: 0, kind: input, shape index: {}]
  %s1 = inlined_call_operand.vmem [shape: bf16[128,128], index: 1, kind: input, shape index: {}]
  %s2 = inlined_call_operand.vmem [shape: f32[1,128], index: 2, kind: input, shape index: {}]
  %s3 = inlined_call_operand.vmem [shape: f32[1,128], index: 3, kind: input, shape index: {}]
  %s4 = inlined_call_operand.vmem [shape: bf16[32,128], index: 4, kind: output, shape index: {}]
  %s5 = sld [smem:[#allocation0]]
  $region34: #{_lambda_.21} parent=0
    _
  %s7 = ssub.s32 1, %s5
  %s8 = scalar_select 0, %s7, %s5
  // Predicated region
  $region2: #{_lambda_.21} parent=0 // pred_check
    _
  $region3: #{_lambda_.21} parent=0 // pred_check_branch
    %10 = sbr.rel (0) target = $region5
  $region4: #{_lambda_.21} parent=0 // pred_region
    _
  $region5: #{_lambda_.21} parent=0 // pred_fallthru
    _
  // Predicated region
  $region6: #{_lambda_.21} parent=0 // pred_check
    _
  $region7: #{_lambda_.21} parent=0 // pred_check_branch
    %12 = sbr.rel (0) target = $region9
  $region8: #{_lambda_.21} parent=0 // pred_region
    _
  $region9: #{_lambda_.21} parent=0 // pred_fallthru
    _
  // Predicated region
  $region10: #{_lambda_.21} parent=0 // pred_check
    _
  $region11: #{_lambda_.21} parent=0 // pred_check_branch
    %14 = sbr.rel (0) target = $region13
  $region12: #{_lambda_.21} parent=0 // pred_region
    _
  $region13: #{_lambda_.21} parent=0 // pred_fallthru
    _
  // Predicated region
  $region14: #{_lambda_.21} parent=0 // pred_check
    _
  $region15: #{_lambda_.21} parent=0 // pred_check_branch
    %16 = sbr.rel (0) target = $region17
  $region16: #{_lambda_.21} parent=0 // pred_region
    _
  $region17: #{_lambda_.21} parent=0 // pred_fallthru
    _
  %p17 = scmp.eq.s32.totalorder 0, 0
  // Predicated region
  $region18: #{_lambda_.21} parent=0 // pred_check
    %p18 = pneg %p17
  $region19: #{_lambda_.21} parent=0 // pred_check_branch
    %20 = sbr.rel (%p18) target = $region21
  $region20: #{_lambda_.21} parent=0 // pred_region
    %21 = vst [vmem:[#allocation2] sm:$0xff] 0.0
    %22 = vst [vmem:[#allocation2 + $0x8] sm:$0xff] 0.0
    %23 = vst [vmem:[#allocation2 + $0x10] sm:$0xff] 0.0
    %24 = vst [vmem:[#allocation2 + $0x18] sm:$0xff] 0.0
  $region21: #{_lambda_.21} parent=0 // pred_fallthru
    _
  %v25 = vld [vmem:[#allocation2] sm:$0xff]
  %v26 = vld [vmem:[#allocation2 + $0x8] sm:$0xff]
  %v27 = vld [vmem:[#allocation2 + $0x10] sm:$0xff]
  %v28 = vld [vmem:[#allocation2 + $0x18] sm:$0xff]
  %v29 = vld [vmem:[%s0] sm:$0xf]
  %v30 = vld [vmem:[%s0 + $0x4] sm:$0xf]
  %v31 = vld [vmem:[%s0 + $0x8] sm:$0xf]
  %v32 = vld [vmem:[%s0 + $0xc] sm:$0xf]
  %v33 = vld [vmem:[%s1] sm:$0xf]
  %v34 = vld [vmem:[%s1 + $0x4] sm:$0xf]
  %v35 = vld [vmem:[%s1 + $0x8] sm:$0xf]
  %v36 = vld [vmem:[%s1 + $0xc] sm:$0xf]
  %v37 = vld [vmem:[%s1 + $0x10] sm:$0xf]
  %v38 = vld [vmem:[%s1 + $0x14] sm:$0xf]
  %v39 = vld [vmem:[%s1 + $0x18] sm:$0xf]
  %v40 = vld [vmem:[%s1 + $0x1c] sm:$0xf]
  %v41 = vld [vmem:[%s1 + $0x20] sm:$0xf]
  %v42 = vld [vmem:[%s1 + $0x24] sm:$0xf]
  %v43 = vld [vmem:[%s1 + $0x28] sm:$0xf]
  %v44 = vld [vmem:[%s1 + $0x2c] sm:$0xf]
  %v45 = vld [vmem:[%s1 + $0x30] sm:$0xf]
  %v46 = vld [vmem:[%s1 + $0x34] sm:$0xf]
  %v47 = vld [vmem:[%s1 + $0x38] sm:$0xf]
  %v48 = vld [vmem:[%s1 + $0x3c] sm:$0xf]
  %v53 = vunpack.c.l.b16 %v29
  %v54 = vunpack.c.l.b16 %v30
  %v55 = vunpack.c.l.b16 %v31
  %v56 = vunpack.c.l.b16 %v32
  %v57 = vpack.c.b16 %v54, %v53
  %v58 = vpack.c.b16 %v56, %v55
  %v77 = vunpack.c.l.b16 %v33
  %v78 = vunpack.c.l.b16 %v34
  %v79 = vunpack.c.l.b16 %v35
  %v80 = vunpack.c.l.b16 %v36
  %v81 = vunpack.c.l.b16 %v37
  %v82 = vunpack.c.l.b16 %v38
  %v83 = vunpack.c.l.b16 %v39
  %v84 = vunpack.c.l.b16 %v40
  %v85 = vunpack.c.l.b16 %v41
  %v86 = vunpack.c.l.b16 %v42
  %v87 = vunpack.c.l.b16 %v43
  %v88 = vunpack.c.l.b16 %v44
  %v89 = vunpack.c.l.b16 %v45
  %v90 = vunpack.c.l.b16 %v46
  %v91 = vunpack.c.l.b16 %v47
  %v92 = vunpack.c.l.b16 %v48
  %v93 = vpack.c.b16 %v78, %v77
  %v94 = vpack.c.b16 %v80, %v79
  %v95 = vpack.c.b16 %v82, %v81
  %v96 = vpack.c.b16 %v84, %v83
  %v97 = vpack.c.b16 %v86, %v85
  %v98 = vpack.c.b16 %v88, %v87
  %v99 = vpack.c.b16 %v90, %v89
  %v100 = vpack.c.b16 %v92, %v91
  %109 = vmatpush.bf16.msra.mxu0 %v100
  %110 = vmatpush.bf16.msra.mxu0 %v99
  %111 = vmatpush.bf16.msra.mxu0 %v98
  %112 = vmatpush.bf16.msra.mxu0 %v97
  %113 = vmatpush.bf16.msra.mxu0 %v96
  %114 = vmatpush.bf16.msra.mxu0 %v95
  %115 = vmatpush.bf16.msra.mxu0 %v94
  %116 = vmatpush.bf16.msra.mxu0 %v93
  %117 = vmatmul.bf16.gmra.mxu0 %v57
  %v118 = vpop.f32.mrf.mxu0
  %v119 = vadd.f32 0.0, %v118
  %v120 = vpop.f32.mrf.mxu0
  %v121 = vadd.f32 0.0, %v120
  %122 = vmatmul.bf16.gmra.mxu0 %v58
  %v123 = vpop.f32.mrf.mxu0
  %v124 = vadd.f32 0.0, %v123
  %v125 = vpop.f32.mrf.mxu0
  %v126 = vadd.f32 0.0, %v125
  %127 = vdwg.mxu0
  %v128 = vadd.f32 %v25, %v119
  %v129 = vadd.f32 %v26, %v121
  %v130 = vadd.f32 %v27, %v124
  %v131 = vadd.f32 %v28, %v126
  %132 = vst [vmem:[#allocation2] sm:$0xff] %v128
  %133 = vst [vmem:[#allocation2 + $0x8] sm:$0xff] %v129
  %134 = vst [vmem:[#allocation2 + $0x10] sm:$0xff] %v130
  %135 = vst [vmem:[#allocation2 + $0x18] sm:$0xff] %v131
  // Predicated region
  $region22: #{_lambda_.21} parent=0 // pred_check
    %p136 = pneg %p17
  $region23: #{_lambda_.21} parent=0 // pred_check_branch
    %138 = sbr.rel (%p136) target = $region25
  $region24: #{_lambda_.21} parent=0 // pred_region
    %v139 = vld [vmem:[#allocation2] sm:$0xff]
    %v140 = vld [vmem:[#allocation2 + $0x8] sm:$0xff]
    %v141 = vld [vmem:[#allocation2 + $0x10] sm:$0xff]
    %v142 = vld [vmem:[#allocation2 + $0x18] sm:$0xff]
    %v143 = vadd.f32 %v139, %v140
    %v144 = vadd.f32 %v143, %v141
    %v145 = vadd.f32 %v144, %v142
    %v146 = vrot.slane %v145, 4
    %v147 = vadd.f32 %v145, %v146
    %v148 = vrot.slane %v147, 2
    %v149 = vadd.f32 %v147, %v148
    %v150 = vrot.slane %v149, 1
    %v151 = vadd.f32 %v149, %v150
    %v152 = vmul.f32 %v151, 0.03125
    %v153 = vsub.f32 %v139, %v152
    %v154 = vsub.f32 %v140, %v152
    %v155 = vsub.f32 %v141, %v152
    %v156 = vsub.f32 %v142, %v152
    %v157 = vmul.f32 %v153, %v153
    %v158 = vmul.f32 %v154, %v154
    %v159 = vmul.f32 %v155, %v155
    %v160 = vmul.f32 %v156, %v156
    %v161 = vadd.f32 %v157, %v158
    %v162 = vadd.f32 %v161, %v159
    %v163 = vadd.f32 %v162, %v160
    %v164 = vrot.slane %v163, 4
    %v165 = vadd.f32 %v163, %v164
    %v166 = vrot.slane %v165, 2
    %v167 = vadd.f32 %v165, %v166
    %v168 = vrot.slane %v167, 1
    %v169 = vadd.f32 %v167, %v168
    %v170 = vmul.f32 %v152, %v152
    %v171 = vmul.f32 %v170, 0.0
    %v172 = vsub.f32 %v169, %v171
    %v173 = vmul.f32 %v172, 0.03125
    %v174 = vmax.f32 %v173, 0.0
    %v175 = vadd.f32 %v174, 1e-05
    %v176 = vrsqrt.pop %v175
    %v177 = vmul.f32 %v176, %v175
    %v178 = vmul.f32 %v177, %v176
    %v179 = vmul.f32 0.5, %v178
    %v180 = vsub.f32 1.5, %v179
    %v181 = vmul.f32 %v176, %v180
    %vm182 = vweird.f32 %v175
    %vm183 = vweird.f32 %v176
    %vm184 = vmor %vm182, %vm183
    %v185 = vsel %vm184, %v176, %v181
    %v186 = vld [vmem:[%s2] sm:$0x1]
    %v187 = vmul.f32 %v186, %v185
    %v188 = vld [vmem:[%s3] sm:$0x1]
    %v189 = vmul.f32 %v152, %v187
    %v190 = vsub.f32 %v188, %v189
    %v192 = vperm.slane %v187, 0
    %v194 = vmul.f32 %v139, %v192
    %v195 = vmul.f32 %v140, %v192
    %v196 = vmul.f32 %v141, %v192
    %v197 = vmul.f32 %v142, %v192
    %v199 = vperm.slane %v190, 0
    %v201 = vadd.f32 %v194, %v199
    %v202 = vadd.f32 %v195, %v199
    %v203 = vadd.f32 %v196, %v199
    %v204 = vadd.f32 %v197, %v199
    %v205 = vpack.c.bf16 %v201, %v201
    %v206 = vpack.c.bf16 %v202, %v202
    %v207 = vpack.c.bf16 %v203, %v203
    %v208 = vpack.c.bf16 %v204, %v204
    %209 = vst [vmem:[%s4] sm:$0xf] %v205
    %210 = vst [vmem:[%s4 + $0x4] sm:$0xf] %v206
    %211 = vst [vmem:[%s4 + $0x8] sm:$0xf] %v207
    %212 = vst [vmem:[%s4 + $0xc] sm:$0xf] %v208
  $region25: #{_lambda_.21} parent=0 // pred_fallthru
    _
  // Predicated region
  $region26: #{_lambda_.21} parent=0 // pred_check
    _
  $region27: #{_lambda_.21} parent=0 // pred_check_branch
    %214 = sbr.rel (0) target = $region29
  $region28: #{_lambda_.21} parent=0 // pred_region
    _
  $region29: #{_lambda_.21} parent=0 // pred_fallthru
    _
  // Predicated region
  $region30: #{_lambda_.21} parent=0 // pred_check
    _
  $region31: #{_lambda_.21} parent=0 // pred_check_branch
    %216 = sbr.rel (0) target = $region33
  $region32: #{_lambda_.21} parent=0 // pred_region
    _
  $region33: #{_lambda_.21} parent=0 // pred_fallthru
    _

// kernel: _lambda_.22
$region0: #{_lambda_.22}
  #allocation0 [shape = 'u32[]', space=smem, size = 0x4, offset = 0x4, fixed_abs, tag = 'smem constant byte address 0x4 - core index']
  #allocation1 [shape = 'u32[72,128]{1,0:T(1,128)}', space=vmem, size = 0x9000, scoped, tag = 'internal scratch']
  #allocation2 [shape = 'f32[32,128]{1,0:T(8,128)}', space=vmem, size = 0x4000, scoped, tag = 'scratch operand']
  %s0 = inlined_call_operand.vmem [shape: bf16[32,256], index: 0, kind: input, shape index: {}]
  %s1 = inlined_call_operand.vmem [shape: bf16[256,128], index: 1, kind: input, shape index: {}]
  %s2 = inlined_call_operand.vmem [shape: f32[1,128], index: 2, kind: input, shape index: {}]
  %s3 = inlined_call_operand.vmem [shape: f32[1,128], index: 3, kind: input, shape index: {}]
  %s4 = inlined_call_operand.vmem [shape: bf16[32,128], index: 4, kind: input, shape index: {}]
  %s5 = inlined_call_operand.vmem [shape: bf16[32,128], index: 5, kind: output, shape index: {}]
  %s6 = sld [smem:[#allocation0]]
  $region38: #{_lambda_.22} parent=0
    _
  %s8 = ssub.s32 1, %s6
  %s9 = scalar_select 0, %s8, %s6
  // Predicated region
  $region2: #{_lambda_.22} parent=0 // pred_check
    _
  $region3: #{_lambda_.22} parent=0 // pred_check_branch
    %11 = sbr.rel (0) target = $region5
  $region4: #{_lambda_.22} parent=0 // pred_region
    _
  $region5: #{_lambda_.22} parent=0 // pred_fallthru
    _
  // Predicated region
  $region6: #{_lambda_.22} parent=0 // pred_check
    _
  $region7: #{_lambda_.22} parent=0 // pred_check_branch
    %13 = sbr.rel (0) target = $region9
  $region8: #{_lambda_.22} parent=0 // pred_region
    _
  $region9: #{_lambda_.22} parent=0 // pred_fallthru
    _
  // Predicated region
  $region10: #{_lambda_.22} parent=0 // pred_check
    _
  $region11: #{_lambda_.22} parent=0 // pred_check_branch
    %15 = sbr.rel (0) target = $region13
  $region12: #{_lambda_.22} parent=0 // pred_region
    _
  $region13: #{_lambda_.22} parent=0 // pred_fallthru
    _
  // Predicated region
  $region14: #{_lambda_.22} parent=0 // pred_check
    _
  $region15: #{_lambda_.22} parent=0 // pred_check_branch
    %17 = sbr.rel (0) target = $region17
  $region16: #{_lambda_.22} parent=0 // pred_region
    _
  $region17: #{_lambda_.22} parent=0 // pred_fallthru
    _
  // Predicated region
  $region18: #{_lambda_.22} parent=0 // pred_check
    _
  $region19: #{_lambda_.22} parent=0 // pred_check_branch
    %19 = sbr.rel (0) target = $region21
  $region20: #{_lambda_.22} parent=0 // pred_region
    _
  $region21: #{_lambda_.22} parent=0 // pred_fallthru
    _
  %p20 = scmp.eq.s32.totalorder 0, 0
  // Predicated region
  $region22: #{_lambda_.22} parent=0 // pred_check
    %p21 = pneg %p20
  $region23: #{_lambda_.22} parent=0 // pred_check_branch
    %23 = sbr.rel (%p21) target = $region25
  $region24: #{_lambda_.22} parent=0 // pred_region
    %24 = vst [vmem:[#allocation2] sm:$0xff] 0.0
    %25 = vst [vmem:[#allocation2 + $0x8] sm:$0xff] 0.0
    %26 = vst [vmem:[#allocation2 + $0x10] sm:$0xff] 0.0
    %27 = vst [vmem:[#allocation2 + $0x18] sm:$0xff] 0.0
  $region25: #{_lambda_.22} parent=0 // pred_fallthru
    _
  %v28 = vld [vmem:[#allocation2] sm:$0xff]
  %v29 = vld [vmem:[#allocation2 + $0x8] sm:$0xff]
  %v30 = vld [vmem:[#allocation2 + $0x10] sm:$0xff]
  %v31 = vld [vmem:[#allocation2 + $0x18] sm:$0xff]
  %v32 = vld [vmem:[%s0] sm:$0xff]
  %v33 = vld [vmem:[%s0 + $0x8] sm:$0xff]
  %v34 = vld [vmem:[%s0 + $0x10] sm:$0xff]
  %v35 = vld [vmem:[%s0 + $0x18] sm:$0xff]
  %v36 = vld [vmem:[%s1] sm:$0xf]
  %v37 = vld [vmem:[%s1 + $0x4] sm:$0xf]
  %v38 = vld [vmem:[%s1 + $0x8] sm:$0xf]
  %v39 = vld [vmem:[%s1 + $0xc] sm:$0xf]
  %v40 = vld [vmem:[%s1 + $0x10] sm:$0xf]
  %v41 = vld [vmem:[%s1 + $0x14] sm:$0xf]
  %v42 = vld [vmem:[%s1 + $0x18] sm:$0xf]
  %v43 = vld [vmem:[%s1 + $0x1c] sm:$0xf]
  %v44 = vld [vmem:[%s1 + $0x20] sm:$0xf]
  %v45 = vld [vmem:[%s1 + $0x24] sm:$0xf]
  %v46 = vld [vmem:[%s1 + $0x28] sm:$0xf]
  %v47 = vld [vmem:[%s1 + $0x2c] sm:$0xf]
  %v48 = vld [vmem:[%s1 + $0x30] sm:$0xf]
  %v49 = vld [vmem:[%s1 + $0x34] sm:$0xf]
  %v50 = vld [vmem:[%s1 + $0x38] sm:$0xf]
  %v51 = vld [vmem:[%s1 + $0x3c] sm:$0xf]
  %v52 = vld [vmem:[%s1 + $0x40] sm:$0xf]
  %v53 = vld [vmem:[%s1 + $0x44] sm:$0xf]
  %v54 = vld [vmem:[%s1 + $0x48] sm:$0xf]
  %v55 = vld [vmem:[%s1 + $0x4c] sm:$0xf]
  %v56 = vld [vmem:[%s1 + $0x50] sm:$0xf]
  %v57 = vld [vmem:[%s1 + $0x54] sm:$0xf]
  %v58 = vld [vmem:[%s1 + $0x58] sm:$0xf]
  %v59 = vld [vmem:[%s1 + $0x5c] sm:$0xf]
  %v60 = vld [vmem:[%s1 + $0x60] sm:$0xf]
  %v61 = vld [vmem:[%s1 + $0x64] sm:$0xf]
  %v62 = vld [vmem:[%s1 + $0x68] sm:$0xf]
  %v63 = vld [vmem:[%s1 + $0x6c] sm:$0xf]
  %v64 = vld [vmem:[%s1 + $0x70] sm:$0xf]
  %v65 = vld [vmem:[%s1 + $0x74] sm:$0xf]
  %v66 = vld [vmem:[%s1 + $0x78] sm:$0xf]
  %v67 = vld [vmem:[%s1 + $0x7c] sm:$0xf]
  %v72 = vunpack.c.l.b16 %v32
  %v73 = vunpack.c.h.b16 %v32
  %v74 = vunpack.c.l.b16 %v33
  %v75 = vunpack.c.h.b16 %v33
  %v76 = vunpack.c.l.b16 %v34
  %v77 = vunpack.c.h.b16 %v34
  %v78 = vunpack.c.l.b16 %v35
  %v79 = vunpack.c.h.b16 %v35
  %v80 = vpack.c.b16 %v74, %v72
  %v81 = vpack.c.b16 %v75, %v73
  %v82 = vpack.c.b16 %v78, %v76
  %v83 = vpack.c.b16 %v79, %v77
  %v120 = vunpack.c.l.b16 %v36
  %v121 = vunpack.c.l.b16 %v37
  %v122 = vunpack.c.l.b16 %v38
  %v123 = vunpack.c.l.b16 %v39
  %v124 = vunpack.c.l.b16 %v40
  %v125 = vunpack.c.l.b16 %v41
  %v126 = vunpack.c.l.b16 %v42
  %v127 = vunpack.c.l.b16 %v43
  %v128 = vunpack.c.l.b16 %v44
  %v129 = vunpack.c.l.b16 %v45
  %v130 = vunpack.c.l.b16 %v46
  %v131 = vunpack.c.l.b16 %v47
  %v132 = vunpack.c.l.b16 %v48
  %v133 = vunpack.c.l.b16 %v49
  %v134 = vunpack.c.l.b16 %v50
  %v135 = vunpack.c.l.b16 %v51
  %v136 = vunpack.c.l.b16 %v52
  %v137 = vunpack.c.l.b16 %v53
  %v138 = vunpack.c.l.b16 %v54
  %v139 = vunpack.c.l.b16 %v55
  %v140 = vunpack.c.l.b16 %v56
  %v141 = vunpack.c.l.b16 %v57
  %v142 = vunpack.c.l.b16 %v58
  %v143 = vunpack.c.l.b16 %v59
  %v144 = vunpack.c.l.b16 %v60
  %v145 = vunpack.c.l.b16 %v61
  %v146 = vunpack.c.l.b16 %v62
  %v147 = vunpack.c.l.b16 %v63
  %v148 = vunpack.c.l.b16 %v64
  %v149 = vunpack.c.l.b16 %v65
  %v150 = vunpack.c.l.b16 %v66
  %v151 = vunpack.c.l.b16 %v67
  %v152 = vpack.c.b16 %v121, %v120
  %v153 = vpack.c.b16 %v123, %v122
  %v154 = vpack.c.b16 %v125, %v124
  %v155 = vpack.c.b16 %v127, %v126
  %v156 = vpack.c.b16 %v129, %v128
  %v157 = vpack.c.b16 %v131, %v130
  %v158 = vpack.c.b16 %v133, %v132
  %v159 = vpack.c.b16 %v135, %v134
  %v160 = vpack.c.b16 %v137, %v136
  %v161 = vpack.c.b16 %v139, %v138
  %v162 = vpack.c.b16 %v141, %v140
  %v163 = vpack.c.b16 %v143, %v142
  %v164 = vpack.c.b16 %v145, %v144
  %v165 = vpack.c.b16 %v147, %v146
  %v166 = vpack.c.b16 %v149, %v148
  %v167 = vpack.c.b16 %v151, %v150
  %184 = vmatpush.bf16.msra.mxu0 %v159
  %185 = vmatpush.bf16.msra.mxu0 %v158
  %186 = vmatpush.bf16.msra.mxu0 %v157
  %187 = vmatpush.bf16.msra.mxu0 %v156
  %188 = vmatpush.bf16.msra.mxu0 %v155
  %189 = vmatpush.bf16.msra.mxu0 %v154
  %190 = vmatpush.bf16.msra.mxu0 %v153
  %191 = vmatpush.bf16.msra.mxu0 %v152
  %192 = vmatmul.bf16.gmra.mxu0 %v80
  %v193 = vpop.f32.mrf.mxu0
  %v194 = vadd.f32 0.0, %v193
  %v195 = vpop.f32.mrf.mxu0
  %v196 = vadd.f32 0.0, %v195
  %197 = vmatmul.bf16.gmra.mxu0 %v82
  %v198 = vpop.f32.mrf.mxu0
  %v199 = vadd.f32 0.0, %v198
  %v200 = vpop.f32.mrf.mxu0
  %v201 = vadd.f32 0.0, %v200
  %202 = vdwg.mxu0
  %203 = vmatpush.bf16.msra.mxu0 %v167
  %204 = vmatpush.bf16.msra.mxu0 %v166
  %205 = vmatpush.bf16.msra.mxu0 %v165
  %206 = vmatpush.bf16.msra.mxu0 %v164
  %207 = vmatpush.bf16.msra.mxu0 %v163
  %208 = vmatpush.bf16.msra.mxu0 %v162
  %209 = vmatpush.bf16.msra.mxu0 %v161
  %210 = vmatpush.bf16.msra.mxu0 %v160
  %211 = vmatmul.bf16.gmra.mxu0 %v81
  %v212 = vpop.f32.mrf.mxu0
  %v213 = vadd.f32 %v194, %v212
  %v214 = vpop.f32.mrf.mxu0
  %v215 = vadd.f32 %v196, %v214
  %216 = vmatmul.bf16.gmra.mxu0 %v83
  %v217 = vpop.f32.mrf.mxu0
  %v218 = vadd.f32 %v199, %v217
  %v219 = vpop.f32.mrf.mxu0
  %v220 = vadd.f32 %v201, %v219
  %221 = vdwg.mxu0
  %v222 = vadd.f32 %v28, %v213
  %v223 = vadd.f32 %v29, %v215
  %v224 = vadd.f32 %v30, %v218
  %v225 = vadd.f32 %v31, %v220
  %226 = vst [vmem:[#allocation2] sm:$0xff] %v222
  %227 = vst [vmem:[#allocation2 + $0x8] sm:$0xff] %v223
  %228 = vst [vmem:[#allocation2 + $0x10] sm:$0xff] %v224
  %229 = vst [vmem:[#allocation2 + $0x18] sm:$0xff] %v225
  // Predicated region
  $region26: #{_lambda_.22} parent=0 // pred_check
    %p230 = pneg %p20
  $region27: #{_lambda_.22} parent=0 // pred_check_branch
    %232 = sbr.rel (%p230) target = $region29
  $region28: #{_lambda_.22} parent=0 // pred_region
    %v233 = vld [vmem:[#allocation2] sm:$0xff]
    %v234 = vld [vmem:[#allocation2 + $0x8] sm:$0xff]
    %v235 = vld [vmem:[#allocation2 + $0x10] sm:$0xff]
    %v236 = vld [vmem:[#allocation2 + $0x18] sm:$0xff]
    %v237 = vadd.f32 %v233, %v234
    %v238 = vadd.f32 %v237, %v235
    %v239 = vadd.f32 %v238, %v236
    %v240 = vrot.slane %v239, 4
    %v241 = vadd.f32 %v239, %v240
    %v242 = vrot.slane %v241, 2
    %v243 = vadd.f32 %v241, %v242
    %v244 = vrot.slane %v243, 1
    %v245 = vadd.f32 %v243, %v244
    %v246 = vmul.f32 %v245, 0.03125
    %v247 = vsub.f32 %v233, %v246
    %v248 = vsub.f32 %v234, %v246
    %v249 = vsub.f32 %v235, %v246
    %v250 = vsub.f32 %v236, %v246
    %v251 = vmul.f32 %v247, %v247
    %v252 = vmul.f32 %v248, %v248
    %v253 = vmul.f32 %v249, %v249
    %v254 = vmul.f32 %v250, %v250
    %v255 = vadd.f32 %v251, %v252
    %v256 = vadd.f32 %v255, %v253
    %v257 = vadd.f32 %v256, %v254
    %v258 = vrot.slane %v257, 4
    %v259 = vadd.f32 %v257, %v258
    %v260 = vrot.slane %v259, 2
    %v261 = vadd.f32 %v259, %v260
    %v262 = vrot.slane %v261, 1
    %v263 = vadd.f32 %v261, %v262
    %v264 = vmul.f32 %v246, %v246
    %v265 = vmul.f32 %v264, 0.0
    %v266 = vsub.f32 %v263, %v265
    %v267 = vmul.f32 %v266, 0.03125
    %v268 = vmax.f32 %v267, 0.0
    %v269 = vadd.f32 %v268, 1e-05
    %v270 = vrsqrt.pop %v269
    %v271 = vmul.f32 %v270, %v269
    %v272 = vmul.f32 %v271, %v270
    %v273 = vmul.f32 0.5, %v272
    %v274 = vsub.f32 1.5, %v273
    %v275 = vmul.f32 %v270, %v274
    %vm276 = vweird.f32 %v269
    %vm277 = vweird.f32 %v270
    %vm278 = vmor %vm276, %vm277
    %v279 = vsel %vm278, %v270, %v275
    %v280 = vld [vmem:[%s2] sm:$0x1]
    %v281 = vmul.f32 %v280, %v279
    %v282 = vld [vmem:[%s3] sm:$0x1]
    %v283 = vmul.f32 %v246, %v281
    %v284 = vsub.f32 %v282, %v283
    %v286 = vperm.slane %v281, 0
    %v288 = vmul.f32 %v233, %v286
    %v289 = vmul.f32 %v234, %v286
    %v290 = vmul.f32 %v235, %v286
    %v291 = vmul.f32 %v236, %v286
    %v293 = vperm.slane %v284, 0
    %v295 = vadd.f32 %v288, %v293
    %v296 = vadd.f32 %v289, %v293
    %v297 = vadd.f32 %v290, %v293
    %v298 = vadd.f32 %v291, %v293
    %v299 = vld [vmem:[%s4] sm:$0xf]
    %v300 = vld [vmem:[%s4 + $0x4] sm:$0xf]
    %v301 = vld [vmem:[%s4 + $0x8] sm:$0xf]
    %v302 = vld [vmem:[%s4 + $0xc] sm:$0xf]
    %v303 = vunpack.c.l.bf16 %v299
    %v304 = vunpack.c.l.bf16 %v300
    %v305 = vunpack.c.l.bf16 %v301
    %v306 = vunpack.c.l.bf16 %v302
    %v307 = vadd.f32 %v295, %v303
    %v308 = vadd.f32 %v296, %v304
    %v309 = vadd.f32 %v297, %v305
    %v310 = vadd.f32 %v298, %v306
    %v311 = vmax.f32 %v307, 0.0
    %v312 = vmax.f32 %v308, 0.0
    %v313 = vmax.f32 %v309, 0.0
    %v314 = vmax.f32 %v310, 0.0
    %v315 = vpack.c.bf16 %v311, %v311
    %v316 = vpack.c.bf16 %v312, %v312
    %v317 = vpack.c.bf16 %v313, %v313
    %v318 = vpack.c.bf16 %v314, %v314
    %319 = vst [vmem:[%s5] sm:$0xf] %v315
    %320 = vst [vmem:[%s5 + $0x4] sm:$0xf] %v316
    %321 = vst [vmem:[%s5 + $0x8] sm:$0xf] %v317
    %322 = vst [vmem:[%s5 + $0xc] sm:$0xf] %v318
  $region29: #{_lambda_.22} parent=0 // pred_fallthru
    _
  // Predicated region
  $region30: #{_lambda_.22} parent=0 // pred_check
    _
  $region31: #{_lambda_.22} parent=0 // pred_check_branch
    %324 = sbr.rel (0) target = $region33
  $region32: #{_lambda_.22} parent=0 // pred_region
    _
  $region33: #{_lambda_.22} parent=0 // pred_fallthru
    _
  // Predicated region
  $region34: #{_lambda_.22} parent=0 // pred_check
    _
  $region35: #{_lambda_.22} parent=0 // pred_check_branch
    %326 = sbr.rel (0) target = $region37
  $region36: #{_lambda_.22} parent=0 // pred_region
    _
  $region37: #{_lambda_.22} parent=0 // pred_fallthru
    _

// kernel: _lambda_.23
$region0: #{_lambda_.23}
  #allocation0 [shape = 'u32[]', space=smem, size = 0x4, offset = 0x4, fixed_abs, tag = 'smem constant byte address 0x4 - core index']
  #allocation1 [shape = 'u32[72,128]{1,0:T(1,128)}', space=vmem, size = 0x9000, scoped, tag = 'internal scratch']
  #allocation2 [shape = 'f32[8,128]{1,0:T(8,128)}', space=vmem, size = 0x1000, scoped, tag = 'scratch operand']
  %s0 = inlined_call_operand.vmem [shape: bf16[8,256], index: 0, kind: input, shape index: {}]
  %s1 = inlined_call_operand.vmem [shape: bf16[256,128], index: 1, kind: input, shape index: {}]
  %s2 = inlined_call_operand.vmem [shape: f32[1,128], index: 2, kind: input, shape index: {}]
  %s3 = inlined_call_operand.vmem [shape: f32[1,128], index: 3, kind: input, shape index: {}]
  %s4 = inlined_call_operand.vmem [shape: bf16[8,128], index: 4, kind: output, shape index: {}]
  %s5 = sld [smem:[#allocation0]]
  $region34: #{_lambda_.23} parent=0
    _
  %s7 = ssub.s32 1, %s5
  %s8 = scalar_select 0, %s7, %s5
  // Predicated region
  $region2: #{_lambda_.23} parent=0 // pred_check
    _
  $region3: #{_lambda_.23} parent=0 // pred_check_branch
    %10 = sbr.rel (0) target = $region5
  $region4: #{_lambda_.23} parent=0 // pred_region
    _
  $region5: #{_lambda_.23} parent=0 // pred_fallthru
    _
  // Predicated region
  $region6: #{_lambda_.23} parent=0 // pred_check
    _
  $region7: #{_lambda_.23} parent=0 // pred_check_branch
    %12 = sbr.rel (0) target = $region9
  $region8: #{_lambda_.23} parent=0 // pred_region
    _
  $region9: #{_lambda_.23} parent=0 // pred_fallthru
    _
  // Predicated region
  $region10: #{_lambda_.23} parent=0 // pred_check
    _
  $region11: #{_lambda_.23} parent=0 // pred_check_branch
    %14 = sbr.rel (0) target = $region13
  $region12: #{_lambda_.23} parent=0 // pred_region
    _
  $region13: #{_lambda_.23} parent=0 // pred_fallthru
    _
  // Predicated region
  $region14: #{_lambda_.23} parent=0 // pred_check
    _
  $region15: #{_lambda_.23} parent=0 // pred_check_branch
    %16 = sbr.rel (0) target = $region17
  $region16: #{_lambda_.23} parent=0 // pred_region
    _
  $region17: #{_lambda_.23} parent=0 // pred_fallthru
    _
  %p17 = scmp.eq.s32.totalorder 0, 0
  // Predicated region
  $region18: #{_lambda_.23} parent=0 // pred_check
    %p18 = pneg %p17
  $region19: #{_lambda_.23} parent=0 // pred_check_branch
    %20 = sbr.rel (%p18) target = $region21
  $region20: #{_lambda_.23} parent=0 // pred_region
    %21 = vst [vmem:[#allocation2] sm:$0xff] 0.0
  $region21: #{_lambda_.23} parent=0 // pred_fallthru
    _
  %v22 = vld [vmem:[#allocation2] sm:$0xff]
  %v23 = vld [vmem:[%s0] sm:$0xff]
  %v24 = vld [vmem:[%s1] sm:$0xf]
  %v25 = vld [vmem:[%s1 + $0x4] sm:$0xf]
  %v26 = vld [vmem:[%s1 + $0x8] sm:$0xf]
  %v27 = vld [vmem:[%s1 + $0xc] sm:$0xf]
  %v28 = vld [vmem:[%s1 + $0x10] sm:$0xf]
  %v29 = vld [vmem:[%s1 + $0x14] sm:$0xf]
  %v30 = vld [vmem:[%s1 + $0x18] sm:$0xf]
  %v31 = vld [vmem:[%s1 + $0x1c] sm:$0xf]
  %v32 = vld [vmem:[%s1 + $0x20] sm:$0xf]
  %v33 = vld [vmem:[%s1 + $0x24] sm:$0xf]
  %v34 = vld [vmem:[%s1 + $0x28] sm:$0xf]
  %v35 = vld [vmem:[%s1 + $0x2c] sm:$0xf]
  %v36 = vld [vmem:[%s1 + $0x30] sm:$0xf]
  %v37 = vld [vmem:[%s1 + $0x34] sm:$0xf]
  %v38 = vld [vmem:[%s1 + $0x38] sm:$0xf]
  %v39 = vld [vmem:[%s1 + $0x3c] sm:$0xf]
  %v40 = vld [vmem:[%s1 + $0x40] sm:$0xf]
  %v41 = vld [vmem:[%s1 + $0x44] sm:$0xf]
  %v42 = vld [vmem:[%s1 + $0x48] sm:$0xf]
  %v43 = vld [vmem:[%s1 + $0x4c] sm:$0xf]
  %v44 = vld [vmem:[%s1 + $0x50] sm:$0xf]
  %v45 = vld [vmem:[%s1 + $0x54] sm:$0xf]
  %v46 = vld [vmem:[%s1 + $0x58] sm:$0xf]
  %v47 = vld [vmem:[%s1 + $0x5c] sm:$0xf]
  %v48 = vld [vmem:[%s1 + $0x60] sm:$0xf]
  %v49 = vld [vmem:[%s1 + $0x64] sm:$0xf]
  %v50 = vld [vmem:[%s1 + $0x68] sm:$0xf]
  %v51 = vld [vmem:[%s1 + $0x6c] sm:$0xf]
  %v52 = vld [vmem:[%s1 + $0x70] sm:$0xf]
  %v53 = vld [vmem:[%s1 + $0x74] sm:$0xf]
  %v54 = vld [vmem:[%s1 + $0x78] sm:$0xf]
  %v55 = vld [vmem:[%s1 + $0x7c] sm:$0xf]
  %v57 = vunpack.c.l.b16 %v23
  %v58 = vunpack.c.h.b16 %v23
  %v59 = vpack.c.b16 %v57, %v57
  %v60 = vpack.c.b16 %v58, %v58
  %v95 = vunpack.c.l.b16 %v24
  %v96 = vunpack.c.l.b16 %v25
  %v97 = vunpack.c.l.b16 %v26
  %v98 = vunpack.c.l.b16 %v27
  %v99 = vunpack.c.l.b16 %v28
  %v100 = vunpack.c.l.b16 %v29
  %v101 = vunpack.c.l.b16 %v30
  %v102 = vunpack.c.l.b16 %v31
  %v103 = vunpack.c.l.b16 %v32
  %v104 = vunpack.c.l.b16 %v33
  %v105 = vunpack.c.l.b16 %v34
  %v106 = vunpack.c.l.b16 %v35
  %v107 = vunpack.c.l.b16 %v36
  %v108 = vunpack.c.l.b16 %v37
  %v109 = vunpack.c.l.b16 %v38
  %v110 = vunpack.c.l.b16 %v39
  %v111 = vunpack.c.l.b16 %v40
  %v112 = vunpack.c.l.b16 %v41
  %v113 = vunpack.c.l.b16 %v42
  %v114 = vunpack.c.l.b16 %v43
  %v115 = vunpack.c.l.b16 %v44
  %v116 = vunpack.c.l.b16 %v45
  %v117 = vunpack.c.l.b16 %v46
  %v118 = vunpack.c.l.b16 %v47
  %v119 = vunpack.c.l.b16 %v48
  %v120 = vunpack.c.l.b16 %v49
  %v121 = vunpack.c.l.b16 %v50
  %v122 = vunpack.c.l.b16 %v51
  %v123 = vunpack.c.l.b16 %v52
  %v124 = vunpack.c.l.b16 %v53
  %v125 = vunpack.c.l.b16 %v54
  %v126 = vunpack.c.l.b16 %v55
  %v127 = vpack.c.b16 %v96, %v95
  %v128 = vpack.c.b16 %v98, %v97
  %v129 = vpack.c.b16 %v100, %v99
  %v130 = vpack.c.b16 %v102, %v101
  %v131 = vpack.c.b16 %v104, %v103
  %v132 = vpack.c.b16 %v106, %v105
  %v133 = vpack.c.b16 %v108, %v107
  %v134 = vpack.c.b16 %v110, %v109
  %v135 = vpack.c.b16 %v112, %v111
  %v136 = vpack.c.b16 %v114, %v113
  %v137 = vpack.c.b16 %v116, %v115
  %v138 = vpack.c.b16 %v118, %v117
  %v139 = vpack.c.b16 %v120, %v119
  %v140 = vpack.c.b16 %v122, %v121
  %v141 = vpack.c.b16 %v124, %v123
  %v142 = vpack.c.b16 %v126, %v125
  %159 = vmatpush.bf16.msra.mxu0 %v134
  %160 = vmatpush.bf16.msra.mxu0 %v133
  %161 = vmatpush.bf16.msra.mxu0 %v132
  %162 = vmatpush.bf16.msra.mxu0 %v131
  %163 = vmatpush.bf16.msra.mxu0 %v130
  %164 = vmatpush.bf16.msra.mxu0 %v129
  %165 = vmatpush.bf16.msra.mxu0 %v128
  %166 = vmatpush.bf16.msra.mxu0 %v127
  %167 = vmatmul.bf16.gmra.mxu0 %v59
  %v168 = vpop.f32.mrf.mxu0
  %v169 = vadd.f32 0.0, %v168
  %v170 = vpop.f32.mrf.mxu0
  %171 = vdwg.mxu0
  %172 = vmatpush.bf16.msra.mxu0 %v142
  %173 = vmatpush.bf16.msra.mxu0 %v141
  %174 = vmatpush.bf16.msra.mxu0 %v140
  %175 = vmatpush.bf16.msra.mxu0 %v139
  %176 = vmatpush.bf16.msra.mxu0 %v138
  %177 = vmatpush.bf16.msra.mxu0 %v137
  %178 = vmatpush.bf16.msra.mxu0 %v136
  %179 = vmatpush.bf16.msra.mxu0 %v135
  %180 = vmatmul.bf16.gmra.mxu0 %v60
  %v181 = vpop.f32.mrf.mxu0
  %v182 = vadd.f32 %v169, %v181
  %v183 = vpop.f32.mrf.mxu0
  %184 = vdwg.mxu0
  %v185 = vadd.f32 %v22, %v182
  %186 = vst [vmem:[#allocation2] sm:$0xff] %v185
  // Predicated region
  $region22: #{_lambda_.23} parent=0 // pred_check
    %p187 = pneg %p17
  $region23: #{_lambda_.23} parent=0 // pred_check_branch
    %189 = sbr.rel (%p187) target = $region25
  $region24: #{_lambda_.23} parent=0 // pred_region
    %v190 = vld [vmem:[#allocation2] sm:$0xff]
    %v191 = vrot.slane %v190, 4
    %v192 = vadd.f32 %v190, %v191
    %v193 = vrot.slane %v192, 2
    %v194 = vadd.f32 %v192, %v193
    %v195 = vrot.slane %v194, 1
    %v196 = vadd.f32 %v194, %v195
    %v197 = vmul.f32 %v196, 0.125
    %v198 = vsub.f32 %v190, %v197
    %v199 = vmul.f32 %v198, %v198
    %v200 = vrot.slane %v199, 4
    %v201 = vadd.f32 %v199, %v200
    %v202 = vrot.slane %v201, 2
    %v203 = vadd.f32 %v201, %v202
    %v204 = vrot.slane %v203, 1
    %v205 = vadd.f32 %v203, %v204
    %v206 = vmul.f32 %v197, %v197
    %v207 = vmul.f32 %v206, 0.0
    %v208 = vsub.f32 %v205, %v207
    %v209 = vmul.f32 %v208, 0.125
    %v210 = vmax.f32 %v209, 0.0
    %v211 = vadd.f32 %v210, 1e-05
    %v212 = vrsqrt.pop %v211
    %v213 = vmul.f32 %v212, %v211
    %v214 = vmul.f32 %v213, %v212
    %v215 = vmul.f32 0.5, %v214
    %v216 = vsub.f32 1.5, %v215
    %v217 = vmul.f32 %v212, %v216
    %vm218 = vweird.f32 %v211
    %vm219 = vweird.f32 %v212
    %vm220 = vmor %vm218, %vm219
    %v221 = vsel %vm220, %v212, %v217
    %v222 = vld [vmem:[%s2] sm:$0x1]
    %v223 = vmul.f32 %v222, %v221
    %v224 = vld [vmem:[%s3] sm:$0x1]
    %v225 = vmul.f32 %v197, %v223
    %v226 = vsub.f32 %v224, %v225
    %v228 = vperm.slane %v223, 0
    %v230 = vmul.f32 %v190, %v228
    %v232 = vperm.slane %v226, 0
    %v234 = vadd.f32 %v230, %v232
    %v235 = vmax.f32 %v234, 0.0
    %v236 = vpack.c.bf16 %v235, %v235
    %237 = vst [vmem:[%s4] sm:$0xf] %v236
  $region25: #{_lambda_.23} parent=0 // pred_fallthru
    _
  // Predicated region
  $region26: #{_lambda_.23} parent=0 // pred_check
    _
  $region27: #{_lambda_.23} parent=0 // pred_check_branch
    %239 = sbr.rel (0) target = $region29
  $region28: #{_lambda_.23} parent=0 // pred_region
    _
  $region29: #{_lambda_.23} parent=0 // pred_fallthru
    _
  // Predicated region
  $region30: #{_lambda_.23} parent=0 // pred_check
    _
  $region31: #{_lambda_.23} parent=0 // pred_check_branch
    %241 = sbr.rel (0) target = $region33
  $region32: #{_lambda_.23} parent=0 // pred_region
    _
  $region33: #{_lambda_.23} parent=0 // pred_fallthru
    _

// kernel: _lambda_.24
$region0: #{_lambda_.24}
  #allocation0 [shape = 'u32[]', space=smem, size = 0x4, offset = 0x4, fixed_abs, tag = 'smem constant byte address 0x4 - core index']
  #allocation1 [shape = 'u32[72,128]{1,0:T(1,128)}', space=vmem, size = 0x9000, scoped, tag = 'internal scratch']
  #allocation2 [shape = 'f32[8,128]{1,0:T(8,128)}', space=vmem, size = 0x1000, scoped, tag = 'scratch operand']
  %s0 = inlined_call_operand.vmem [shape: bf16[8,128], index: 0, kind: input, shape index: {}]
  %s1 = inlined_call_operand.vmem [shape: bf16[128,128], index: 1, kind: input, shape index: {}]
  %s2 = inlined_call_operand.vmem [shape: f32[1,128], index: 2, kind: input, shape index: {}]
  %s3 = inlined_call_operand.vmem [shape: f32[1,128], index: 3, kind: input, shape index: {}]
  %s4 = inlined_call_operand.vmem [shape: bf16[8,128], index: 4, kind: output, shape index: {}]
  %s5 = sld [smem:[#allocation0]]
  $region34: #{_lambda_.24} parent=0
    _
  %s7 = ssub.s32 1, %s5
  %s8 = scalar_select 0, %s7, %s5
  // Predicated region
  $region2: #{_lambda_.24} parent=0 // pred_check
    _
  $region3: #{_lambda_.24} parent=0 // pred_check_branch
    %10 = sbr.rel (0) target = $region5
  $region4: #{_lambda_.24} parent=0 // pred_region
    _
  $region5: #{_lambda_.24} parent=0 // pred_fallthru
    _
  // Predicated region
  $region6: #{_lambda_.24} parent=0 // pred_check
    _
  $region7: #{_lambda_.24} parent=0 // pred_check_branch
    %12 = sbr.rel (0) target = $region9
  $region8: #{_lambda_.24} parent=0 // pred_region
    _
  $region9: #{_lambda_.24} parent=0 // pred_fallthru
    _
  // Predicated region
  $region10: #{_lambda_.24} parent=0 // pred_check
    _
  $region11: #{_lambda_.24} parent=0 // pred_check_branch
    %14 = sbr.rel (0) target = $region13
  $region12: #{_lambda_.24} parent=0 // pred_region
    _
  $region13: #{_lambda_.24} parent=0 // pred_fallthru
    _
  // Predicated region
  $region14: #{_lambda_.24} parent=0 // pred_check
    _
  $region15: #{_lambda_.24} parent=0 // pred_check_branch
    %16 = sbr.rel (0) target = $region17
  $region16: #{_lambda_.24} parent=0 // pred_region
    _
  $region17: #{_lambda_.24} parent=0 // pred_fallthru
    _
  %p17 = scmp.eq.s32.totalorder 0, 0
  // Predicated region
  $region18: #{_lambda_.24} parent=0 // pred_check
    %p18 = pneg %p17
  $region19: #{_lambda_.24} parent=0 // pred_check_branch
    %20 = sbr.rel (%p18) target = $region21
  $region20: #{_lambda_.24} parent=0 // pred_region
    %21 = vst [vmem:[#allocation2] sm:$0xff] 0.0
  $region21: #{_lambda_.24} parent=0 // pred_fallthru
    _
  %v22 = vld [vmem:[#allocation2] sm:$0xff]
  %v23 = vld [vmem:[%s0] sm:$0xf]
  %v24 = vld [vmem:[%s1] sm:$0xf]
  %v25 = vld [vmem:[%s1 + $0x4] sm:$0xf]
  %v26 = vld [vmem:[%s1 + $0x8] sm:$0xf]
  %v27 = vld [vmem:[%s1 + $0xc] sm:$0xf]
  %v28 = vld [vmem:[%s1 + $0x10] sm:$0xf]
  %v29 = vld [vmem:[%s1 + $0x14] sm:$0xf]
  %v30 = vld [vmem:[%s1 + $0x18] sm:$0xf]
  %v31 = vld [vmem:[%s1 + $0x1c] sm:$0xf]
  %v32 = vld [vmem:[%s1 + $0x20] sm:$0xf]
  %v33 = vld [vmem:[%s1 + $0x24] sm:$0xf]
  %v34 = vld [vmem:[%s1 + $0x28] sm:$0xf]
  %v35 = vld [vmem:[%s1 + $0x2c] sm:$0xf]
  %v36 = vld [vmem:[%s1 + $0x30] sm:$0xf]
  %v37 = vld [vmem:[%s1 + $0x34] sm:$0xf]
  %v38 = vld [vmem:[%s1 + $0x38] sm:$0xf]
  %v39 = vld [vmem:[%s1 + $0x3c] sm:$0xf]
  %v56 = vunpack.c.l.b16 %v24
  %v57 = vunpack.c.l.b16 %v25
  %v58 = vunpack.c.l.b16 %v26
  %v59 = vunpack.c.l.b16 %v27
  %v60 = vunpack.c.l.b16 %v28
  %v61 = vunpack.c.l.b16 %v29
  %v62 = vunpack.c.l.b16 %v30
  %v63 = vunpack.c.l.b16 %v31
  %v64 = vunpack.c.l.b16 %v32
  %v65 = vunpack.c.l.b16 %v33
  %v66 = vunpack.c.l.b16 %v34
  %v67 = vunpack.c.l.b16 %v35
  %v68 = vunpack.c.l.b16 %v36
  %v69 = vunpack.c.l.b16 %v37
  %v70 = vunpack.c.l.b16 %v38
  %v71 = vunpack.c.l.b16 %v39
  %v72 = vpack.c.b16 %v57, %v56
  %v73 = vpack.c.b16 %v59, %v58
  %v74 = vpack.c.b16 %v61, %v60
  %v75 = vpack.c.b16 %v63, %v62
  %v76 = vpack.c.b16 %v65, %v64
  %v77 = vpack.c.b16 %v67, %v66
  %v78 = vpack.c.b16 %v69, %v68
  %v79 = vpack.c.b16 %v71, %v70
  %88 = vmatpush.bf16.msra.mxu0 %v79
  %89 = vmatpush.bf16.msra.mxu0 %v78
  %90 = vmatpush.bf16.msra.mxu0 %v77
  %91 = vmatpush.bf16.msra.mxu0 %v76
  %92 = vmatpush.bf16.msra.mxu0 %v75
  %93 = vmatpush.bf16.msra.mxu0 %v74
  %94 = vmatpush.bf16.msra.mxu0 %v73
  %95 = vmatpush.bf16.msra.mxu0 %v72
  %96 = vmatmul.bf16.gmra.mxu0 %v23
  %v97 = vpop.f32.mrf.mxu0
  %v98 = vadd.f32 0.0, %v97
  %v99 = vpop.f32.mrf.mxu0
  %100 = vdwg.mxu0
  %v101 = vadd.f32 %v22, %v98
  %102 = vst [vmem:[#allocation2] sm:$0xff] %v101
  // Predicated region
  $region22: #{_lambda_.24} parent=0 // pred_check
    %p103 = pneg %p17
  $region23: #{_lambda_.24} parent=0 // pred_check_branch
    %105 = sbr.rel (%p103) target = $region25
  $region24: #{_lambda_.24} parent=0 // pred_region
    %v106 = vld [vmem:[#allocation2] sm:$0xff]
    %v107 = vrot.slane %v106, 4
    %v108 = vadd.f32 %v106, %v107
    %v109 = vrot.slane %v108, 2
    %v110 = vadd.f32 %v108, %v109
    %v111 = vrot.slane %v110, 1
    %v112 = vadd.f32 %v110, %v111
    %v113 = vmul.f32 %v112, 0.125
    %v114 = vsub.f32 %v106, %v113
    %v115 = vmul.f32 %v114, %v114
    %v116 = vrot.slane %v115, 4
    %v117 = vadd.f32 %v115, %v116
    %v118 = vrot.slane %v117, 2
    %v119 = vadd.f32 %v117, %v118
    %v120 = vrot.slane %v119, 1
    %v121 = vadd.f32 %v119, %v120
    %v122 = vmul.f32 %v113, %v113
    %v123 = vmul.f32 %v122, 0.0
    %v124 = vsub.f32 %v121, %v123
    %v125 = vmul.f32 %v124, 0.125
    %v126 = vmax.f32 %v125, 0.0
    %v127 = vadd.f32 %v126, 1e-05
    %v128 = vrsqrt.pop %v127
    %v129 = vmul.f32 %v128, %v127
    %v130 = vmul.f32 %v129, %v128
    %v131 = vmul.f32 0.5, %v130
    %v132 = vsub.f32 1.5, %v131
    %v133 = vmul.f32 %v128, %v132
    %vm134 = vweird.f32 %v127
    %vm135 = vweird.f32 %v128
    %vm136 = vmor %vm134, %vm135
    %v137 = vsel %vm136, %v128, %v133
    %v138 = vld [vmem:[%s2] sm:$0x1]
    %v139 = vmul.f32 %v138, %v137
    %v140 = vld [vmem:[%s3] sm:$0x1]
    %v141 = vmul.f32 %v113, %v139
    %v142 = vsub.f32 %v140, %v141
    %v144 = vperm.slane %v139, 0
    %v146 = vmul.f32 %v106, %v144
    %v148 = vperm.slane %v142, 0
    %v150 = vadd.f32 %v146, %v148
    %v151 = vpack.c.bf16 %v150, %v150
    %152 = vst [vmem:[%s4] sm:$0xf] %v151
  $region25: #{_lambda_.24} parent=0 // pred_fallthru
    _
  // Predicated region
  $region26: #{_lambda_.24} parent=0 // pred_check
    _
  $region27: #{_lambda_.24} parent=0 // pred_check_branch
    %154 = sbr.rel (0) target = $region29
  $region28: #{_lambda_.24} parent=0 // pred_region
    _
  $region29: #{_lambda_.24} parent=0 // pred_fallthru
    _
  // Predicated region
  $region30: #{_lambda_.24} parent=0 // pred_check
    _
  $region31: #{_lambda_.24} parent=0 // pred_check_branch
    %156 = sbr.rel (0) target = $region33
  $region32: #{_lambda_.24} parent=0 // pred_region
    _
  $region33: #{_lambda_.24} parent=0 // pred_fallthru
    _

// kernel: _lambda_.25
$region0: #{_lambda_.25}
  #allocation0 [shape = 'u32[]', space=smem, size = 0x4, offset = 0x4, fixed_abs, tag = 'smem constant byte address 0x4 - core index']
  #allocation1 [shape = 'u32[72,128]{1,0:T(1,128)}', space=vmem, size = 0x9000, scoped, tag = 'internal scratch']
  #allocation2 [shape = 'f32[8,128]{1,0:T(8,128)}', space=vmem, size = 0x1000, scoped, tag = 'scratch operand']
  %s0 = inlined_call_operand.vmem [shape: bf16[8,256], index: 0, kind: input, shape index: {}]
  %s1 = inlined_call_operand.vmem [shape: bf16[256,128], index: 1, kind: input, shape index: {}]
  %s2 = inlined_call_operand.vmem [shape: f32[1,128], index: 2, kind: input, shape index: {}]
  %s3 = inlined_call_operand.vmem [shape: f32[1,128], index: 3, kind: input, shape index: {}]
  %s4 = inlined_call_operand.vmem [shape: bf16[8,128], index: 4, kind: input, shape index: {}]
  %s5 = inlined_call_operand.vmem [shape: bf16[8,128], index: 5, kind: output, shape index: {}]
  %s6 = sld [smem:[#allocation0]]
  $region38: #{_lambda_.25} parent=0
    _
  %s8 = ssub.s32 1, %s6
  %s9 = scalar_select 0, %s8, %s6
  // Predicated region
  $region2: #{_lambda_.25} parent=0 // pred_check
    _
  $region3: #{_lambda_.25} parent=0 // pred_check_branch
    %11 = sbr.rel (0) target = $region5
  $region4: #{_lambda_.25} parent=0 // pred_region
    _
  $region5: #{_lambda_.25} parent=0 // pred_fallthru
    _
  // Predicated region
  $region6: #{_lambda_.25} parent=0 // pred_check
    _
  $region7: #{_lambda_.25} parent=0 // pred_check_branch
    %13 = sbr.rel (0) target = $region9
  $region8: #{_lambda_.25} parent=0 // pred_region
    _
  $region9: #{_lambda_.25} parent=0 // pred_fallthru
    _
  // Predicated region
  $region10: #{_lambda_.25} parent=0 // pred_check
    _
  $region11: #{_lambda_.25} parent=0 // pred_check_branch
    %15 = sbr.rel (0) target = $region13
  $region12: #{_lambda_.25} parent=0 // pred_region
    _
  $region13: #{_lambda_.25} parent=0 // pred_fallthru
    _
  // Predicated region
  $region14: #{_lambda_.25} parent=0 // pred_check
    _
  $region15: #{_lambda_.25} parent=0 // pred_check_branch
    %17 = sbr.rel (0) target = $region17
  $region16: #{_lambda_.25} parent=0 // pred_region
    _
  $region17: #{_lambda_.25} parent=0 // pred_fallthru
    _
  // Predicated region
  $region18: #{_lambda_.25} parent=0 // pred_check
    _
  $region19: #{_lambda_.25} parent=0 // pred_check_branch
    %19 = sbr.rel (0) target = $region21
  $region20: #{_lambda_.25} parent=0 // pred_region
    _
  $region21: #{_lambda_.25} parent=0 // pred_fallthru
    _
  %p20 = scmp.eq.s32.totalorder 0, 0
  // Predicated region
  $region22: #{_lambda_.25} parent=0 // pred_check
    %p21 = pneg %p20
  $region23: #{_lambda_.25} parent=0 // pred_check_branch
    %23 = sbr.rel (%p21) target = $region25
  $region24: #{_lambda_.25} parent=0 // pred_region
    %24 = vst [vmem:[#allocation2] sm:$0xff] 0.0
  $region25: #{_lambda_.25} parent=0 // pred_fallthru
    _
  %v25 = vld [vmem:[#allocation2] sm:$0xff]
  %v26 = vld [vmem:[%s0] sm:$0xff]
  %v27 = vld [vmem:[%s1] sm:$0xf]
  %v28 = vld [vmem:[%s1 + $0x4] sm:$0xf]
  %v29 = vld [vmem:[%s1 + $0x8] sm:$0xf]
  %v30 = vld [vmem:[%s1 + $0xc] sm:$0xf]
  %v31 = vld [vmem:[%s1 + $0x10] sm:$0xf]
  %v32 = vld [vmem:[%s1 + $0x14] sm:$0xf]
  %v33 = vld [vmem:[%s1 + $0x18] sm:$0xf]
  %v34 = vld [vmem:[%s1 + $0x1c] sm:$0xf]
  %v35 = vld [vmem:[%s1 + $0x20] sm:$0xf]
  %v36 = vld [vmem:[%s1 + $0x24] sm:$0xf]
  %v37 = vld [vmem:[%s1 + $0x28] sm:$0xf]
  %v38 = vld [vmem:[%s1 + $0x2c] sm:$0xf]
  %v39 = vld [vmem:[%s1 + $0x30] sm:$0xf]
  %v40 = vld [vmem:[%s1 + $0x34] sm:$0xf]
  %v41 = vld [vmem:[%s1 + $0x38] sm:$0xf]
  %v42 = vld [vmem:[%s1 + $0x3c] sm:$0xf]
  %v43 = vld [vmem:[%s1 + $0x40] sm:$0xf]
  %v44 = vld [vmem:[%s1 + $0x44] sm:$0xf]
  %v45 = vld [vmem:[%s1 + $0x48] sm:$0xf]
  %v46 = vld [vmem:[%s1 + $0x4c] sm:$0xf]
  %v47 = vld [vmem:[%s1 + $0x50] sm:$0xf]
  %v48 = vld [vmem:[%s1 + $0x54] sm:$0xf]
  %v49 = vld [vmem:[%s1 + $0x58] sm:$0xf]
  %v50 = vld [vmem:[%s1 + $0x5c] sm:$0xf]
  %v51 = vld [vmem:[%s1 + $0x60] sm:$0xf]
  %v52 = vld [vmem:[%s1 + $0x64] sm:$0xf]
  %v53 = vld [vmem:[%s1 + $0x68] sm:$0xf]
  %v54 = vld [vmem:[%s1 + $0x6c] sm:$0xf]
  %v55 = vld [vmem:[%s1 + $0x70] sm:$0xf]
  %v56 = vld [vmem:[%s1 + $0x74] sm:$0xf]
  %v57 = vld [vmem:[%s1 + $0x78] sm:$0xf]
  %v58 = vld [vmem:[%s1 + $0x7c] sm:$0xf]
  %v60 = vunpack.c.l.b16 %v26
  %v61 = vunpack.c.h.b16 %v26
  %v62 = vpack.c.b16 %v60, %v60
  %v63 = vpack.c.b16 %v61, %v61
  %v98 = vunpack.c.l.b16 %v27
  %v99 = vunpack.c.l.b16 %v28
  %v100 = vunpack.c.l.b16 %v29
  %v101 = vunpack.c.l.b16 %v30
  %v102 = vunpack.c.l.b16 %v31
  %v103 = vunpack.c.l.b16 %v32
  %v104 = vunpack.c.l.b16 %v33
  %v105 = vunpack.c.l.b16 %v34
  %v106 = vunpack.c.l.b16 %v35
  %v107 = vunpack.c.l.b16 %v36
  %v108 = vunpack.c.l.b16 %v37
  %v109 = vunpack.c.l.b16 %v38
  %v110 = vunpack.c.l.b16 %v39
  %v111 = vunpack.c.l.b16 %v40
  %v112 = vunpack.c.l.b16 %v41
  %v113 = vunpack.c.l.b16 %v42
  %v114 = vunpack.c.l.b16 %v43
  %v115 = vunpack.c.l.b16 %v44
  %v116 = vunpack.c.l.b16 %v45
  %v117 = vunpack.c.l.b16 %v46
  %v118 = vunpack.c.l.b16 %v47
  %v119 = vunpack.c.l.b16 %v48
  %v120 = vunpack.c.l.b16 %v49
  %v121 = vunpack.c.l.b16 %v50
  %v122 = vunpack.c.l.b16 %v51
  %v123 = vunpack.c.l.b16 %v52
  %v124 = vunpack.c.l.b16 %v53
  %v125 = vunpack.c.l.b16 %v54
  %v126 = vunpack.c.l.b16 %v55
  %v127 = vunpack.c.l.b16 %v56
  %v128 = vunpack.c.l.b16 %v57
  %v129 = vunpack.c.l.b16 %v58
  %v130 = vpack.c.b16 %v99, %v98
  %v131 = vpack.c.b16 %v101, %v100
  %v132 = vpack.c.b16 %v103, %v102
  %v133 = vpack.c.b16 %v105, %v104
  %v134 = vpack.c.b16 %v107, %v106
  %v135 = vpack.c.b16 %v109, %v108
  %v136 = vpack.c.b16 %v111, %v110
  %v137 = vpack.c.b16 %v113, %v112
  %v138 = vpack.c.b16 %v115, %v114
  %v139 = vpack.c.b16 %v117, %v116
  %v140 = vpack.c.b16 %v119, %v118
  %v141 = vpack.c.b16 %v121, %v120
  %v142 = vpack.c.b16 %v123, %v122
  %v143 = vpack.c.b16 %v125, %v124
  %v144 = vpack.c.b16 %v127, %v126
  %v145 = vpack.c.b16 %v129, %v128
  %162 = vmatpush.bf16.msra.mxu0 %v137
  %163 = vmatpush.bf16.msra.mxu0 %v136
  %164 = vmatpush.bf16.msra.mxu0 %v135
  %165 = vmatpush.bf16.msra.mxu0 %v134
  %166 = vmatpush.bf16.msra.mxu0 %v133
  %167 = vmatpush.bf16.msra.mxu0 %v132
  %168 = vmatpush.bf16.msra.mxu0 %v131
  %169 = vmatpush.bf16.msra.mxu0 %v130
  %170 = vmatmul.bf16.gmra.mxu0 %v62
  %v171 = vpop.f32.mrf.mxu0
  %v172 = vadd.f32 0.0, %v171
  %v173 = vpop.f32.mrf.mxu0
  %174 = vdwg.mxu0
  %175 = vmatpush.bf16.msra.mxu0 %v145
  %176 = vmatpush.bf16.msra.mxu0 %v144
  %177 = vmatpush.bf16.msra.mxu0 %v143
  %178 = vmatpush.bf16.msra.mxu0 %v142
  %179 = vmatpush.bf16.msra.mxu0 %v141
  %180 = vmatpush.bf16.msra.mxu0 %v140
  %181 = vmatpush.bf16.msra.mxu0 %v139
  %182 = vmatpush.bf16.msra.mxu0 %v138
  %183 = vmatmul.bf16.gmra.mxu0 %v63
  %v184 = vpop.f32.mrf.mxu0
  %v185 = vadd.f32 %v172, %v184
  %v186 = vpop.f32.mrf.mxu0
  %187 = vdwg.mxu0
  %v188 = vadd.f32 %v25, %v185
  %189 = vst [vmem:[#allocation2] sm:$0xff] %v188
  // Predicated region
  $region26: #{_lambda_.25} parent=0 // pred_check
    %p190 = pneg %p20
  $region27: #{_lambda_.25} parent=0 // pred_check_branch
    %192 = sbr.rel (%p190) target = $region29
  $region28: #{_lambda_.25} parent=0 // pred_region
    %v193 = vld [vmem:[#allocation2] sm:$0xff]
    %v194 = vrot.slane %v193, 4
    %v195 = vadd.f32 %v193, %v194
    %v196 = vrot.slane %v195, 2
    %v197 = vadd.f32 %v195, %v196
    %v198 = vrot.slane %v197, 1
    %v199 = vadd.f32 %v197, %v198
    %v200 = vmul.f32 %v199, 0.125
    %v201 = vsub.f32 %v193, %v200
    %v202 = vmul.f32 %v201, %v201
    %v203 = vrot.slane %v202, 4
    %v204 = vadd.f32 %v202, %v203
    %v205 = vrot.slane %v204, 2
    %v206 = vadd.f32 %v204, %v205
    %v207 = vrot.slane %v206, 1
    %v208 = vadd.f32 %v206, %v207
    %v209 = vmul.f32 %v200, %v200
    %v210 = vmul.f32 %v209, 0.0
    %v211 = vsub.f32 %v208, %v210
    %v212 = vmul.f32 %v211, 0.125
    %v213 = vmax.f32 %v212, 0.0
    %v214 = vadd.f32 %v213, 1e-05
    %v215 = vrsqrt.pop %v214
    %v216 = vmul.f32 %v215, %v214
    %v217 = vmul.f32 %v216, %v215
    %v218 = vmul.f32 0.5, %v217
    %v219 = vsub.f32 1.5, %v218
    %v220 = vmul.f32 %v215, %v219
    %vm221 = vweird.f32 %v214
    %vm222 = vweird.f32 %v215
    %vm223 = vmor %vm221, %vm222
    %v224 = vsel %vm223, %v215, %v220
    %v225 = vld [vmem:[%s2] sm:$0x1]
    %v226 = vmul.f32 %v225, %v224
    %v227 = vld [vmem:[%s3] sm:$0x1]
    %v228 = vmul.f32 %v200, %v226
    %v229 = vsub.f32 %v227, %v228
    %v231 = vperm.slane %v226, 0
    %v233 = vmul.f32 %v193, %v231
    %v235 = vperm.slane %v229, 0
    %v237 = vadd.f32 %v233, %v235
    %v238 = vld [vmem:[%s4] sm:$0xf]
    %v239 = vunpack.c.l.bf16 %v238
    %v240 = vadd.f32 %v237, %v239
    %v241 = vmax.f32 %v240, 0.0
    %v242 = vpack.c.bf16 %v241, %v241
    %243 = vst [vmem:[%s5] sm:$0xf] %v242
  $region29: #{_lambda_.25} parent=0 // pred_fallthru
    _
  // Predicated region
  $region30: #{_lambda_.25} parent=0 // pred_check
    _
  $region31: #{_lambda_.25} parent=0 // pred_check_branch
    %245 = sbr.rel (0) target = $region33
  $region32: #{_lambda_.25} parent=0 // pred_region
    _
  $region33: #{_lambda_.25} parent=0 // pred_fallthru
    _
  // Predicated region
  $region34: #{_lambda_.25} parent=0 // pred_check
    _
  $region35: #{_lambda_.25} parent=0 // pred_check_branch
    %247 = sbr.rel (0) target = $region37
  $region36: #{_lambda_.25} parent=0 // pred_region
    _
  $region37: #{_lambda_.25} parent=0 // pred_fallthru
    _

// kernel: _lambda_.28
$region0: #{_lambda_.28}
  #allocation0 [shape = 'u32[]', space=smem, size = 0x4, offset = 0x4, fixed_abs, tag = 'smem constant byte address 0x4 - core index']
  #allocation1 [shape = 'u32[72,128]{1,0:T(1,128)}', space=vmem, size = 0x9000, scoped, tag = 'internal scratch']
  #allocation2 [shape = 'f32[8,128]{1,0:T(8,128)}', space=vmem, size = 0x1000, scoped, tag = 'scratch operand']
  %s0 = inlined_call_operand.vmem [shape: bf16[8,384], index: 0, kind: input, shape index: {}]
  %s1 = inlined_call_operand.vmem [shape: bf16[384,128], index: 1, kind: input, shape index: {}]
  %s2 = inlined_call_operand.vmem [shape: f32[1,128], index: 2, kind: input, shape index: {}]
  %s3 = inlined_call_operand.vmem [shape: f32[1,128], index: 3, kind: input, shape index: {}]
  %s4 = inlined_call_operand.vmem [shape: bf16[8,128], index: 4, kind: input, shape index: {}]
  %s5 = inlined_call_operand.vmem [shape: bf16[8,128], index: 5, kind: output, shape index: {}]
  %s6 = sld [smem:[#allocation0]]
  $region38: #{_lambda_.28} parent=0
    _
  %s8 = ssub.s32 1, %s6
  %s9 = scalar_select 0, %s8, %s6
  // Predicated region
  $region2: #{_lambda_.28} parent=0 // pred_check
    _
  $region3: #{_lambda_.28} parent=0 // pred_check_branch
    %11 = sbr.rel (0) target = $region5
  $region4: #{_lambda_.28} parent=0 // pred_region
    _
  $region5: #{_lambda_.28} parent=0 // pred_fallthru
    _
  // Predicated region
  $region6: #{_lambda_.28} parent=0 // pred_check
    _
  $region7: #{_lambda_.28} parent=0 // pred_check_branch
    %13 = sbr.rel (0) target = $region9
  $region8: #{_lambda_.28} parent=0 // pred_region
    _
  $region9: #{_lambda_.28} parent=0 // pred_fallthru
    _
  // Predicated region
  $region10: #{_lambda_.28} parent=0 // pred_check
    _
  $region11: #{_lambda_.28} parent=0 // pred_check_branch
    %15 = sbr.rel (0) target = $region13
  $region12: #{_lambda_.28} parent=0 // pred_region
    _
  $region13: #{_lambda_.28} parent=0 // pred_fallthru
    _
  // Predicated region
  $region14: #{_lambda_.28} parent=0 // pred_check
    _
  $region15: #{_lambda_.28} parent=0 // pred_check_branch
    %17 = sbr.rel (0) target = $region17
  $region16: #{_lambda_.28} parent=0 // pred_region
    _
  $region17: #{_lambda_.28} parent=0 // pred_fallthru
    _
  // Predicated region
  $region18: #{_lambda_.28} parent=0 // pred_check
    _
  $region19: #{_lambda_.28} parent=0 // pred_check_branch
    %19 = sbr.rel (0) target = $region21
  $region20: #{_lambda_.28} parent=0 // pred_region
    _
  $region21: #{_lambda_.28} parent=0 // pred_fallthru
    _
  %p20 = scmp.eq.s32.totalorder 0, 0
  // Predicated region
  $region22: #{_lambda_.28} parent=0 // pred_check
    %p21 = pneg %p20
  $region23: #{_lambda_.28} parent=0 // pred_check_branch
    %23 = sbr.rel (%p21) target = $region25
  $region24: #{_lambda_.28} parent=0 // pred_region
    %24 = vst [vmem:[#allocation2] sm:$0xff] 0.0
  $region25: #{_lambda_.28} parent=0 // pred_fallthru
    _
  %v25 = vld [vmem:[#allocation2] sm:$0xff]
  %v26 = vld [vmem:[%s0] sm:$0xff]
  %v27 = vld [vmem:[%s0 + $0x8] sm:$0xf]
  %v28 = vld [vmem:[%s1] sm:$0xf]
  %v29 = vld [vmem:[%s1 + $0x4] sm:$0xf]
  %v30 = vld [vmem:[%s1 + $0x8] sm:$0xf]
  %v31 = vld [vmem:[%s1 + $0xc] sm:$0xf]
  %v32 = vld [vmem:[%s1 + $0x10] sm:$0xf]
  %v33 = vld [vmem:[%s1 + $0x14] sm:$0xf]
  %v34 = vld [vmem:[%s1 + $0x18] sm:$0xf]
  %v35 = vld [vmem:[%s1 + $0x1c] sm:$0xf]
  %v36 = vld [vmem:[%s1 + $0x20] sm:$0xf]
  %v37 = vld [vmem:[%s1 + $0x24] sm:$0xf]
  %v38 = vld [vmem:[%s1 + $0x28] sm:$0xf]
  %v39 = vld [vmem:[%s1 + $0x2c] sm:$0xf]
  %v40 = vld [vmem:[%s1 + $0x30] sm:$0xf]
  %v41 = vld [vmem:[%s1 + $0x34] sm:$0xf]
  %v42 = vld [vmem:[%s1 + $0x38] sm:$0xf]
  %v43 = vld [vmem:[%s1 + $0x3c] sm:$0xf]
  %v44 = vld [vmem:[%s1 + $0x40] sm:$0xf]
  %v45 = vld [vmem:[%s1 + $0x44] sm:$0xf]
  %v46 = vld [vmem:[%s1 + $0x48] sm:$0xf]
  %v47 = vld [vmem:[%s1 + $0x4c] sm:$0xf]
  %v48 = vld [vmem:[%s1 + $0x50] sm:$0xf]
  %v49 = vld [vmem:[%s1 + $0x54] sm:$0xf]
  %v50 = vld [vmem:[%s1 + $0x58] sm:$0xf]
  %v51 = vld [vmem:[%s1 + $0x5c] sm:$0xf]
  %v52 = vld [vmem:[%s1 + $0x60] sm:$0xf]
  %v53 = vld [vmem:[%s1 + $0x64] sm:$0xf]
  %v54 = vld [vmem:[%s1 + $0x68] sm:$0xf]
  %v55 = vld [vmem:[%s1 + $0x6c] sm:$0xf]
  %v56 = vld [vmem:[%s1 + $0x70] sm:$0xf]
  %v57 = vld [vmem:[%s1 + $0x74] sm:$0xf]
  %v58 = vld [vmem:[%s1 + $0x78] sm:$0xf]
  %v59 = vld [vmem:[%s1 + $0x7c] sm:$0xf]
  %v60 = vld [vmem:[%s1 + $0x80] sm:$0xf]
  %v61 = vld [vmem:[%s1 + $0x84] sm:$0xf]
  %v62 = vld [vmem:[%s1 + $0x88] sm:$0xf]
  %v63 = vld [vmem:[%s1 + $0x8c] sm:$0xf]
  %v64 = vld [vmem:[%s1 + $0x90] sm:$0xf]
  %v65 = vld [vmem:[%s1 + $0x94] sm:$0xf]
  %v66 = vld [vmem:[%s1 + $0x98] sm:$0xf]
  %v67 = vld [vmem:[%s1 + $0x9c] sm:$0xf]
  %v68 = vld [vmem:[%s1 + $0xa0] sm:$0xf]
  %v69 = vld [vmem:[%s1 + $0xa4] sm:$0xf]
  %v70 = vld [vmem:[%s1 + $0xa8] sm:$0xf]
  %v71 = vld [vmem:[%s1 + $0xac] sm:$0xf]
  %v72 = vld [vmem:[%s1 + $0xb0] sm:$0xf]
  %v73 = vld [vmem:[%s1 + $0xb4] sm:$0xf]
  %v74 = vld [vmem:[%s1 + $0xb8] sm:$0xf]
  %v75 = vld [vmem:[%s1 + $0xbc] sm:$0xf]
  %v78 = vunpack.c.l.b16 %v26
  %v79 = vunpack.c.h.b16 %v26
  %v80 = vunpack.c.l.b16 %v27
  %v81 = vpack.c.b16 %v78, %v78
  %v82 = vpack.c.b16 %v79, %v79
  %v83 = vpack.c.b16 %v80, %v80
  %v135 = vunpack.c.l.b16 %v28
  %v136 = vunpack.c.l.b16 %v29
  %v137 = vunpack.c.l.b16 %v30
  %v138 = vunpack.c.l.b16 %v31
  %v139 = vunpack.c.l.b16 %v32
  %v140 = vunpack.c.l.b16 %v33
  %v141 = vunpack.c.l.b16 %v34
  %v142 = vunpack.c.l.b16 %v35
  %v143 = vunpack.c.l.b16 %v36
  %v144 = vunpack.c.l.b16 %v37
  %v145 = vunpack.c.l.b16 %v38
  %v146 = vunpack.c.l.b16 %v39
  %v147 = vunpack.c.l.b16 %v40
  %v148 = vunpack.c.l.b16 %v41
  %v149 = vunpack.c.l.b16 %v42
  %v150 = vunpack.c.l.b16 %v43
  %v151 = vunpack.c.l.b16 %v44
  %v152 = vunpack.c.l.b16 %v45
  %v153 = vunpack.c.l.b16 %v46
  %v154 = vunpack.c.l.b16 %v47
  %v155 = vunpack.c.l.b16 %v48
  %v156 = vunpack.c.l.b16 %v49
  %v157 = vunpack.c.l.b16 %v50
  %v158 = vunpack.c.l.b16 %v51
  %v159 = vunpack.c.l.b16 %v52
  %v160 = vunpack.c.l.b16 %v53
  %v161 = vunpack.c.l.b16 %v54
  %v162 = vunpack.c.l.b16 %v55
  %v163 = vunpack.c.l.b16 %v56
  %v164 = vunpack.c.l.b16 %v57
  %v165 = vunpack.c.l.b16 %v58
  %v166 = vunpack.c.l.b16 %v59
  %v167 = vunpack.c.l.b16 %v60
  %v168 = vunpack.c.l.b16 %v61
  %v169 = vunpack.c.l.b16 %v62
  %v170 = vunpack.c.l.b16 %v63
  %v171 = vunpack.c.l.b16 %v64
  %v172 = vunpack.c.l.b16 %v65
  %v173 = vunpack.c.l.b16 %v66
  %v174 = vunpack.c.l.b16 %v67
  %v175 = vunpack.c.l.b16 %v68
  %v176 = vunpack.c.l.b16 %v69
  %v177 = vunpack.c.l.b16 %v70
  %v178 = vunpack.c.l.b16 %v71
  %v179 = vunpack.c.l.b16 %v72
  %v180 = vunpack.c.l.b16 %v73
  %v181 = vunpack.c.l.b16 %v74
  %v182 = vunpack.c.l.b16 %v75
  %v183 = vpack.c.b16 %v136, %v135
  %v184 = vpack.c.b16 %v138, %v137
  %v185 = vpack.c.b16 %v140, %v139
  %v186 = vpack.c.b16 %v142, %v141
  %v187 = vpack.c.b16 %v144, %v143
  %v188 = vpack.c.b16 %v146, %v145
  %v189 = vpack.c.b16 %v148, %v147
  %v190 = vpack.c.b16 %v150, %v149
  %v191 = vpack.c.b16 %v152, %v151
  %v192 = vpack.c.b16 %v154, %v153
  %v193 = vpack.c.b16 %v156, %v155
  %v194 = vpack.c.b16 %v158, %v157
  %v195 = vpack.c.b16 %v160, %v159
  %v196 = vpack.c.b16 %v162, %v161
  %v197 = vpack.c.b16 %v164, %v163
  %v198 = vpack.c.b16 %v166, %v165
  %v199 = vpack.c.b16 %v168, %v167
  %v200 = vpack.c.b16 %v170, %v169
  %v201 = vpack.c.b16 %v172, %v171
  %v202 = vpack.c.b16 %v174, %v173
  %v203 = vpack.c.b16 %v176, %v175
  %v204 = vpack.c.b16 %v178, %v177
  %v205 = vpack.c.b16 %v180, %v179
  %v206 = vpack.c.b16 %v182, %v181
  %231 = vmatpush.bf16.msra.mxu0 %v190
  %232 = vmatpush.bf16.msra.mxu0 %v189
  %233 = vmatpush.bf16.msra.mxu0 %v188
  %234 = vmatpush.bf16.msra.mxu0 %v187
  %235 = vmatpush.bf16.msra.mxu0 %v186
  %236 = vmatpush.bf16.msra.mxu0 %v185
  %237 = vmatpush.bf16.msra.mxu0 %v184
  %238 = vmatpush.bf16.msra.mxu0 %v183
  %239 = vmatmul.bf16.gmra.mxu0 %v81
  %v240 = vpop.f32.mrf.mxu0
  %v241 = vadd.f32 0.0, %v240
  %v242 = vpop.f32.mrf.mxu0
  %243 = vdwg.mxu0
  %244 = vmatpush.bf16.msra.mxu0 %v198
  %245 = vmatpush.bf16.msra.mxu0 %v197
  %246 = vmatpush.bf16.msra.mxu0 %v196
  %247 = vmatpush.bf16.msra.mxu0 %v195
  %248 = vmatpush.bf16.msra.mxu0 %v194
  %249 = vmatpush.bf16.msra.mxu0 %v193
  %250 = vmatpush.bf16.msra.mxu0 %v192
  %251 = vmatpush.bf16.msra.mxu0 %v191
  %252 = vmatmul.bf16.gmra.mxu0 %v82
  %v253 = vpop.f32.mrf.mxu0
  %v254 = vadd.f32 %v241, %v253
  %v255 = vpop.f32.mrf.mxu0
  %256 = vdwg.mxu0
  %257 = vmatpush.bf16.msra.mxu0 %v206
  %258 = vmatpush.bf16.msra.mxu0 %v205
  %259 = vmatpush.bf16.msra.mxu0 %v204
  %260 = vmatpush.bf16.msra.mxu0 %v203
  %261 = vmatpush.bf16.msra.mxu0 %v202
  %262 = vmatpush.bf16.msra.mxu0 %v201
  %263 = vmatpush.bf16.msra.mxu0 %v200
  %264 = vmatpush.bf16.msra.mxu0 %v199
  %265 = vmatmul.bf16.gmra.mxu0 %v83
  %v266 = vpop.f32.mrf.mxu0
  %v267 = vadd.f32 %v254, %v266
  %v268 = vpop.f32.mrf.mxu0
  %269 = vdwg.mxu0
  %v270 = vadd.f32 %v25, %v267
  %271 = vst [vmem:[#allocation2] sm:$0xff] %v270
  // Predicated region
  $region26: #{_lambda_.28} parent=0 // pred_check
    %p272 = pneg %p20
  $region27: #{_lambda_.28} parent=0 // pred_check_branch
    %274 = sbr.rel (%p272) target = $region29
  $region28: #{_lambda_.28} parent=0 // pred_region
    %v275 = vld [vmem:[#allocation2] sm:$0xff]
    %v276 = vrot.slane %v275, 4
    %v277 = vadd.f32 %v275, %v276
    %v278 = vrot.slane %v277, 2
    %v279 = vadd.f32 %v277, %v278
    %v280 = vrot.slane %v279, 1
    %v281 = vadd.f32 %v279, %v280
    %v282 = vmul.f32 %v281, 0.125
    %v283 = vsub.f32 %v275, %v282
    %v284 = vmul.f32 %v283, %v283
    %v285 = vrot.slane %v284, 4
    %v286 = vadd.f32 %v284, %v285
    %v287 = vrot.slane %v286, 2
    %v288 = vadd.f32 %v286, %v287
    %v289 = vrot.slane %v288, 1
    %v290 = vadd.f32 %v288, %v289
    %v291 = vmul.f32 %v282, %v282
    %v292 = vmul.f32 %v291, 0.0
    %v293 = vsub.f32 %v290, %v292
    %v294 = vmul.f32 %v293, 0.125
    %v295 = vmax.f32 %v294, 0.0
    %v296 = vadd.f32 %v295, 1e-05
    %v297 = vrsqrt.pop %v296
    %v298 = vmul.f32 %v297, %v296
    %v299 = vmul.f32 %v298, %v297
    %v300 = vmul.f32 0.5, %v299
    %v301 = vsub.f32 1.5, %v300
    %v302 = vmul.f32 %v297, %v301
    %vm303 = vweird.f32 %v296
    %vm304 = vweird.f32 %v297
    %vm305 = vmor %vm303, %vm304
    %v306 = vsel %vm305, %v297, %v302
    %v307 = vld [vmem:[%s2] sm:$0x1]
    %v308 = vmul.f32 %v307, %v306
    %v309 = vld [vmem:[%s3] sm:$0x1]
    %v310 = vmul.f32 %v282, %v308
    %v311 = vsub.f32 %v309, %v310
    %v313 = vperm.slane %v308, 0
    %v315 = vmul.f32 %v275, %v313
    %v317 = vperm.slane %v311, 0
    %v319 = vadd.f32 %v315, %v317
    %v320 = vld [vmem:[%s4] sm:$0xf]
    %v321 = vunpack.c.l.bf16 %v320
    %v322 = vadd.f32 %v319, %v321
    %v323 = vmax.f32 %v322, 0.0
    %v324 = vpack.c.bf16 %v323, %v323
    %325 = vst [vmem:[%s5] sm:$0xf] %v324
  $region29: #{_lambda_.28} parent=0 // pred_fallthru
    _
  // Predicated region
  $region30: #{_lambda_.28} parent=0 // pred_check
    _
  $region31: #{_lambda_.28} parent=0 // pred_check_branch
    %327 = sbr.rel (0) target = $region33
  $region32: #{_lambda_.28} parent=0 // pred_region
    _
  $region33: #{_lambda_.28} parent=0 // pred_fallthru
    _
  // Predicated region
  $region34: #{_lambda_.28} parent=0 // pred_check
    _
  $region35: #{_lambda_.28} parent=0 // pred_check_branch
    %329 = sbr.rel (0) target = $region37
  $region36: #{_lambda_.28} parent=0 // pred_region
    _
  $region37: #{_lambda_.28} parent=0 // pred_fallthru
    _

// kernel: _lambda_.33
$region0: #{_lambda_.33}
  #allocation0 [shape = 'u32[]', space=smem, size = 0x4, offset = 0x4, fixed_abs, tag = 'smem constant byte address 0x4 - core index']
  #allocation1 [shape = 'u32[72,128]{1,0:T(1,128)}', space=vmem, size = 0x9000, scoped, tag = 'internal scratch']
  %s0 = inlined_call_operand.vmem [shape: bf16[2,4,128], index: 0, kind: input, shape index: {}]
  %s1 = inlined_call_operand.vmem [shape: f32[128,128], index: 1, kind: input, shape index: {}]
  %s2 = inlined_call_operand.vmem [shape: f32[1,128], index: 2, kind: input, shape index: {}]
  %s3 = inlined_call_operand.hbm [shape: f32[2,128], index: 3, kind: output, shape index: {}]
  %s4 = sld [smem:[#allocation0]]
  $region22: #{_lambda_.33} parent=0
    _
  %s6 = ssub.s32 1, %s4
  %s7 = scalar_select 0, %s6, %s4
  $region1: #{_lambda_.33} parent=0
    #allocation2 [shape = 'u8[1024]{0}', space=vmem, size = 0x400, scoped, tag = 'output window, operand 0, single buffered']
    #allocation3 [shape = 's32[1]{0}', space=sflag, size = 0x4, scoped, tag = 'scoped memory for _lambda_.33']
    %8 = vsyncpa [#allocation3], 0
    // Predicated region
    $region2: #{_lambda_.33} parent=1 // pred_check
      _
    $region3: #{_lambda_.33} parent=1 // pred_check_branch
      %10 = sbr.rel (0) target = $region5
    $region4: #{_lambda_.33} parent=1 // pred_region
      _
    $region5: #{_lambda_.33} parent=1 // pred_fallthru
      _
    // Predicated region
    $region6: #{_lambda_.33} parent=1 // pred_check
      _
    $region7: #{_lambda_.33} parent=1 // pred_check_branch
      %12 = sbr.rel (0) target = $region9
    $region8: #{_lambda_.33} parent=1 // pred_region
      _
    $region9: #{_lambda_.33} parent=1 // pred_fallthru
      _
    // Predicated region
    $region10: #{_lambda_.33} parent=1 // pred_check
      _
    $region11: #{_lambda_.33} parent=1 // pred_check_branch
      %14 = sbr.rel (0) target = $region13
    $region12: #{_lambda_.33} parent=1 // pred_region
      _
    $region13: #{_lambda_.33} parent=1 // pred_fallthru
      _
    %v15 = vld [vmem:[%s0] sm:$0x3]
    %v16 = vld [vmem:[%s0 + $0x2] sm:$0x3]
    %v17 = vunpack.c.l.bf16 %v15
    %v18 = vunpack.c.l.bf16 %v16
    %vm19 = vcmask 1043456
    %v20 = vsel %vm19, %v17, 0.0
    %v21 = vrot.slane %v20, 4
    %v22 = vadd.f32 %v20, %v21
    %v23 = vrot.slane %v22, 2
    %v24 = vadd.f32 %v22, %v23
    %v25 = vrot.slane %v24, 1
    %v26 = vadd.f32 %v24, %v25
    %v27 = vsel %vm19, %v18, 0.0
    %v28 = vrot.slane %v27, 4
    %v29 = vadd.f32 %v27, %v28
    %v30 = vrot.slane %v29, 2
    %v31 = vadd.f32 %v29, %v30
    %v32 = vrot.slane %v31, 1
    %v33 = vadd.f32 %v31, %v32
    %v34 = vrcp.pop 4.0
    %v35 = vmul.f32 4.0, %v34
    %v36 = vsub.f32 1.0, %v35
    %v37 = vmul.f32 %v34, %v36
    %v38 = vadd.f32 %v34, %v37
    %vm39 = vweird.f32 %v34
    %v40 = vsel %vm39, %v34, %v38
    %v41 = vmul.f32 %v26, %v40
    %v42 = vmul.f32 %v33, %v40
    %v43 = vld [vmem:[%s1] sm:$0xff]
    %v44 = vld [vmem:[%s1 + $0x8] sm:$0xff]
    %v45 = vld [vmem:[%s1 + $0x10] sm:$0xff]
    %v46 = vld [vmem:[%s1 + $0x18] sm:$0xff]
    %v47 = vld [vmem:[%s1 + $0x20] sm:$0xff]
    %v48 = vld [vmem:[%s1 + $0x28] sm:$0xff]
    %v49 = vld [vmem:[%s1 + $0x30] sm:$0xff]
    %v50 = vld [vmem:[%s1 + $0x38] sm:$0xff]
    %v51 = vld [vmem:[%s1 + $0x40] sm:$0xff]
    %v52 = vld [vmem:[%s1 + $0x48] sm:$0xff]
    %v53 = vld [vmem:[%s1 + $0x50] sm:$0xff]
    %v54 = vld [vmem:[%s1 + $0x58] sm:$0xff]
    %v55 = vld [vmem:[%s1 + $0x60] sm:$0xff]
    %v56 = vld [vmem:[%s1 + $0x68] sm:$0xff]
    %v57 = vld [vmem:[%s1 + $0x70] sm:$0xff]
    %v58 = vld [vmem:[%s1 + $0x78] sm:$0xff]
    %v59 = vld [vmem:[%s2] sm:$0x1]
    %v61 = vperm.slane %v59, 0
    %vm65 = vcmask 1041409
    %v66 = vsel %vm65, %v42, %v41
    %68 = vmatpush.msra.mxu0 %v58
    %69 = vmatpush.msra.mxu0 %v57
    %70 = vmatpush.msra.mxu0 %v56
    %71 = vmatpush.msra.mxu0 %v55
    %72 = vmatpush.msra.mxu0 %v54
    %73 = vmatpush.msra.mxu0 %v53
    %74 = vmatpush.msra.mxu0 %v52
    %75 = vmatpush.msra.mxu0 %v51
    %76 = vmatpush.msra.mxu0 %v50
    %77 = vmatpush.msra.mxu0 %v49
    %78 = vmatpush.msra.mxu0 %v48
    %79 = vmatpush.msra.mxu0 %v47
    %80 = vmatpush.msra.mxu0 %v46
    %81 = vmatpush.msra.mxu0 %v45
    %82 = vmatpush.msra.mxu0 %v44
    %83 = vmatpush.msra.mxu0 %v43
    %84 = vmatmul.f32.gmra.mxu0 %v66
    %v85 = vpop.f32.mrf.mxu0
    %v86 = vadd.f32 %v61, %v85
    %87 = vdwg.mxu0
    %88 = vst [vmem:[#allocation2] sm:$0x3] %v86
    // Predicated region
    $region14: #{_lambda_.33} parent=1 // pred_check
      _
    $region15: #{_lambda_.33} parent=1 // pred_check_branch
      %90 = sbr.rel (0) target = $region17
    $region16: #{_lambda_.33} parent=1 // pred_region
      %92 = vsyncadd [#allocation3], 0
      %s94 = sshll.u32 [#allocation2], 4
      %s95 = int_to_ptr.vmem [resolvable:$true] %s94
      %s96 = sshll.u32 %s3, 4
      %s97 = int_to_ptr.hbm [resolvable:$true] %s96
      %99 = dma.vmem_to_hbm [thread:$0]  %s95, 32, %s97, [#allocation3]
    $region17: #{_lambda_.33} parent=1 // pred_fallthru
      _
    // Predicated region
    $region18: #{_lambda_.33} parent=1 // pred_check
      _
    $region19: #{_lambda_.33} parent=1 // pred_check_branch
      %101 = sbr.rel (0) target = $region21
    $region20: #{_lambda_.33} parent=1 // pred_region
      %103 = dma.done [#allocation3], 32
    $region21: #{_lambda_.33} parent=1 // pred_fallthru
      _
    %104 = vsyncpa [#allocation3], 1

// kernel: _lambda_.29
$region0: #{_lambda_.29}
  #allocation0 [shape = 'u32[]', space=smem, size = 0x4, offset = 0x4, fixed_abs, tag = 'smem constant byte address 0x4 - core index']
  #allocation1 [shape = 'u32[72,128]{1,0:T(1,128)}', space=vmem, size = 0x9000, scoped, tag = 'internal scratch']
  #allocation2 [shape = 'f32[8,128]{1,0:T(8,128)}', space=vmem, size = 0x1000, scoped, tag = 'scratch operand']
  %s0 = inlined_call_operand.vmem [shape: bf16[8,384], index: 0, kind: input, shape index: {}]
  %s1 = inlined_call_operand.vmem [shape: bf16[384,128], index: 1, kind: input, shape index: {}]
  %s2 = inlined_call_operand.vmem [shape: f32[1,128], index: 2, kind: input, shape index: {}]
  %s3 = inlined_call_operand.vmem [shape: f32[1,128], index: 3, kind: input, shape index: {}]
  %s4 = inlined_call_operand.vmem [shape: bf16[8,128], index: 4, kind: output, shape index: {}]
  %s5 = sld [smem:[#allocation0]]
  $region34: #{_lambda_.29} parent=0
    _
  %s7 = ssub.s32 1, %s5
  %s8 = scalar_select 0, %s7, %s5
  // Predicated region
  $region2: #{_lambda_.29} parent=0 // pred_check
    _
  $region3: #{_lambda_.29} parent=0 // pred_check_branch
    %10 = sbr.rel (0) target = $region5
  $region4: #{_lambda_.29} parent=0 // pred_region
    _
  $region5: #{_lambda_.29} parent=0 // pred_fallthru
    _
  // Predicated region
  $region6: #{_lambda_.29} parent=0 // pred_check
    _
  $region7: #{_lambda_.29} parent=0 // pred_check_branch
    %12 = sbr.rel (0) target = $region9
  $region8: #{_lambda_.29} parent=0 // pred_region
    _
  $region9: #{_lambda_.29} parent=0 // pred_fallthru
    _
  // Predicated region
  $region10: #{_lambda_.29} parent=0 // pred_check
    _
  $region11: #{_lambda_.29} parent=0 // pred_check_branch
    %14 = sbr.rel (0) target = $region13
  $region12: #{_lambda_.29} parent=0 // pred_region
    _
  $region13: #{_lambda_.29} parent=0 // pred_fallthru
    _
  // Predicated region
  $region14: #{_lambda_.29} parent=0 // pred_check
    _
  $region15: #{_lambda_.29} parent=0 // pred_check_branch
    %16 = sbr.rel (0) target = $region17
  $region16: #{_lambda_.29} parent=0 // pred_region
    _
  $region17: #{_lambda_.29} parent=0 // pred_fallthru
    _
  %p17 = scmp.eq.s32.totalorder 0, 0
  // Predicated region
  $region18: #{_lambda_.29} parent=0 // pred_check
    %p18 = pneg %p17
  $region19: #{_lambda_.29} parent=0 // pred_check_branch
    %20 = sbr.rel (%p18) target = $region21
  $region20: #{_lambda_.29} parent=0 // pred_region
    %21 = vst [vmem:[#allocation2] sm:$0xff] 0.0
  $region21: #{_lambda_.29} parent=0 // pred_fallthru
    _
  %v22 = vld [vmem:[#allocation2] sm:$0xff]
  %v23 = vld [vmem:[%s0] sm:$0xff]
  %v24 = vld [vmem:[%s0 + $0x8] sm:$0xf]
  %v25 = vld [vmem:[%s1] sm:$0xf]
  %v26 = vld [vmem:[%s1 + $0x4] sm:$0xf]
  %v27 = vld [vmem:[%s1 + $0x8] sm:$0xf]
  %v28 = vld [vmem:[%s1 + $0xc] sm:$0xf]
  %v29 = vld [vmem:[%s1 + $0x10] sm:$0xf]
  %v30 = vld [vmem:[%s1 + $0x14] sm:$0xf]
  %v31 = vld [vmem:[%s1 + $0x18] sm:$0xf]
  %v32 = vld [vmem:[%s1 + $0x1c] sm:$0xf]
  %v33 = vld [vmem:[%s1 + $0x20] sm:$0xf]
  %v34 = vld [vmem:[%s1 + $0x24] sm:$0xf]
  %v35 = vld [vmem:[%s1 + $0x28] sm:$0xf]
  %v36 = vld [vmem:[%s1 + $0x2c] sm:$0xf]
  %v37 = vld [vmem:[%s1 + $0x30] sm:$0xf]
  %v38 = vld [vmem:[%s1 + $0x34] sm:$0xf]
  %v39 = vld [vmem:[%s1 + $0x38] sm:$0xf]
  %v40 = vld [vmem:[%s1 + $0x3c] sm:$0xf]
  %v41 = vld [vmem:[%s1 + $0x40] sm:$0xf]
  %v42 = vld [vmem:[%s1 + $0x44] sm:$0xf]
  %v43 = vld [vmem:[%s1 + $0x48] sm:$0xf]
  %v44 = vld [vmem:[%s1 + $0x4c] sm:$0xf]
  %v45 = vld [vmem:[%s1 + $0x50] sm:$0xf]
  %v46 = vld [vmem:[%s1 + $0x54] sm:$0xf]
  %v47 = vld [vmem:[%s1 + $0x58] sm:$0xf]
  %v48 = vld [vmem:[%s1 + $0x5c] sm:$0xf]
  %v49 = vld [vmem:[%s1 + $0x60] sm:$0xf]
  %v50 = vld [vmem:[%s1 + $0x64] sm:$0xf]
  %v51 = vld [vmem:[%s1 + $0x68] sm:$0xf]
  %v52 = vld [vmem:[%s1 + $0x6c] sm:$0xf]
  %v53 = vld [vmem:[%s1 + $0x70] sm:$0xf]
  %v54 = vld [vmem:[%s1 + $0x74] sm:$0xf]
  %v55 = vld [vmem:[%s1 + $0x78] sm:$0xf]
  %v56 = vld [vmem:[%s1 + $0x7c] sm:$0xf]
  %v57 = vld [vmem:[%s1 + $0x80] sm:$0xf]
  %v58 = vld [vmem:[%s1 + $0x84] sm:$0xf]
  %v59 = vld [vmem:[%s1 + $0x88] sm:$0xf]
  %v60 = vld [vmem:[%s1 + $0x8c] sm:$0xf]
  %v61 = vld [vmem:[%s1 + $0x90] sm:$0xf]
  %v62 = vld [vmem:[%s1 + $0x94] sm:$0xf]
  %v63 = vld [vmem:[%s1 + $0x98] sm:$0xf]
  %v64 = vld [vmem:[%s1 + $0x9c] sm:$0xf]
  %v65 = vld [vmem:[%s1 + $0xa0] sm:$0xf]
  %v66 = vld [vmem:[%s1 + $0xa4] sm:$0xf]
  %v67 = vld [vmem:[%s1 + $0xa8] sm:$0xf]
  %v68 = vld [vmem:[%s1 + $0xac] sm:$0xf]
  %v69 = vld [vmem:[%s1 + $0xb0] sm:$0xf]
  %v70 = vld [vmem:[%s1 + $0xb4] sm:$0xf]
  %v71 = vld [vmem:[%s1 + $0xb8] sm:$0xf]
  %v72 = vld [vmem:[%s1 + $0xbc] sm:$0xf]
  %v75 = vunpack.c.l.b16 %v23
  %v76 = vunpack.c.h.b16 %v23
  %v77 = vunpack.c.l.b16 %v24
  %v78 = vpack.c.b16 %v75, %v75
  %v79 = vpack.c.b16 %v76, %v76
  %v80 = vpack.c.b16 %v77, %v77
  %v132 = vunpack.c.l.b16 %v25
  %v133 = vunpack.c.l.b16 %v26
  %v134 = vunpack.c.l.b16 %v27
  %v135 = vunpack.c.l.b16 %v28
  %v136 = vunpack.c.l.b16 %v29
  %v137 = vunpack.c.l.b16 %v30
  %v138 = vunpack.c.l.b16 %v31
  %v139 = vunpack.c.l.b16 %v32
  %v140 = vunpack.c.l.b16 %v33
  %v141 = vunpack.c.l.b16 %v34
  %v142 = vunpack.c.l.b16 %v35
  %v143 = vunpack.c.l.b16 %v36
  %v144 = vunpack.c.l.b16 %v37
  %v145 = vunpack.c.l.b16 %v38
  %v146 = vunpack.c.l.b16 %v39
  %v147 = vunpack.c.l.b16 %v40
  %v148 = vunpack.c.l.b16 %v41
  %v149 = vunpack.c.l.b16 %v42
  %v150 = vunpack.c.l.b16 %v43
  %v151 = vunpack.c.l.b16 %v44
  %v152 = vunpack.c.l.b16 %v45
  %v153 = vunpack.c.l.b16 %v46
  %v154 = vunpack.c.l.b16 %v47
  %v155 = vunpack.c.l.b16 %v48
  %v156 = vunpack.c.l.b16 %v49
  %v157 = vunpack.c.l.b16 %v50
  %v158 = vunpack.c.l.b16 %v51
  %v159 = vunpack.c.l.b16 %v52
  %v160 = vunpack.c.l.b16 %v53
  %v161 = vunpack.c.l.b16 %v54
  %v162 = vunpack.c.l.b16 %v55
  %v163 = vunpack.c.l.b16 %v56
  %v164 = vunpack.c.l.b16 %v57
  %v165 = vunpack.c.l.b16 %v58
  %v166 = vunpack.c.l.b16 %v59
  %v167 = vunpack.c.l.b16 %v60
  %v168 = vunpack.c.l.b16 %v61
  %v169 = vunpack.c.l.b16 %v62
  %v170 = vunpack.c.l.b16 %v63
  %v171 = vunpack.c.l.b16 %v64
  %v172 = vunpack.c.l.b16 %v65
  %v173 = vunpack.c.l.b16 %v66
  %v174 = vunpack.c.l.b16 %v67
  %v175 = vunpack.c.l.b16 %v68
  %v176 = vunpack.c.l.b16 %v69
  %v177 = vunpack.c.l.b16 %v70
  %v178 = vunpack.c.l.b16 %v71
  %v179 = vunpack.c.l.b16 %v72
  %v180 = vpack.c.b16 %v133, %v132
  %v181 = vpack.c.b16 %v135, %v134
  %v182 = vpack.c.b16 %v137, %v136
  %v183 = vpack.c.b16 %v139, %v138
  %v184 = vpack.c.b16 %v141, %v140
  %v185 = vpack.c.b16 %v143, %v142
  %v186 = vpack.c.b16 %v145, %v144
  %v187 = vpack.c.b16 %v147, %v146
  %v188 = vpack.c.b16 %v149, %v148
  %v189 = vpack.c.b16 %v151, %v150
  %v190 = vpack.c.b16 %v153, %v152
  %v191 = vpack.c.b16 %v155, %v154
  %v192 = vpack.c.b16 %v157, %v156
  %v193 = vpack.c.b16 %v159, %v158
  %v194 = vpack.c.b16 %v161, %v160
  %v195 = vpack.c.b16 %v163, %v162
  %v196 = vpack.c.b16 %v165, %v164
  %v197 = vpack.c.b16 %v167, %v166
  %v198 = vpack.c.b16 %v169, %v168
  %v199 = vpack.c.b16 %v171, %v170
  %v200 = vpack.c.b16 %v173, %v172
  %v201 = vpack.c.b16 %v175, %v174
  %v202 = vpack.c.b16 %v177, %v176
  %v203 = vpack.c.b16 %v179, %v178
  %228 = vmatpush.bf16.msra.mxu0 %v187
  %229 = vmatpush.bf16.msra.mxu0 %v186
  %230 = vmatpush.bf16.msra.mxu0 %v185
  %231 = vmatpush.bf16.msra.mxu0 %v184
  %232 = vmatpush.bf16.msra.mxu0 %v183
  %233 = vmatpush.bf16.msra.mxu0 %v182
  %234 = vmatpush.bf16.msra.mxu0 %v181
  %235 = vmatpush.bf16.msra.mxu0 %v180
  %236 = vmatmul.bf16.gmra.mxu0 %v78
  %v237 = vpop.f32.mrf.mxu0
  %v238 = vadd.f32 0.0, %v237
  %v239 = vpop.f32.mrf.mxu0
  %240 = vdwg.mxu0
  %241 = vmatpush.bf16.msra.mxu0 %v195
  %242 = vmatpush.bf16.msra.mxu0 %v194
  %243 = vmatpush.bf16.msra.mxu0 %v193
  %244 = vmatpush.bf16.msra.mxu0 %v192
  %245 = vmatpush.bf16.msra.mxu0 %v191
  %246 = vmatpush.bf16.msra.mxu0 %v190
  %247 = vmatpush.bf16.msra.mxu0 %v189
  %248 = vmatpush.bf16.msra.mxu0 %v188
  %249 = vmatmul.bf16.gmra.mxu0 %v79
  %v250 = vpop.f32.mrf.mxu0
  %v251 = vadd.f32 %v238, %v250
  %v252 = vpop.f32.mrf.mxu0
  %253 = vdwg.mxu0
  %254 = vmatpush.bf16.msra.mxu0 %v203
  %255 = vmatpush.bf16.msra.mxu0 %v202
  %256 = vmatpush.bf16.msra.mxu0 %v201
  %257 = vmatpush.bf16.msra.mxu0 %v200
  %258 = vmatpush.bf16.msra.mxu0 %v199
  %259 = vmatpush.bf16.msra.mxu0 %v198
  %260 = vmatpush.bf16.msra.mxu0 %v197
  %261 = vmatpush.bf16.msra.mxu0 %v196
  %262 = vmatmul.bf16.gmra.mxu0 %v80
  %v263 = vpop.f32.mrf.mxu0
  %v264 = vadd.f32 %v251, %v263
  %v265 = vpop.f32.mrf.mxu0
  %266 = vdwg.mxu0
  %v267 = vadd.f32 %v22, %v264
  %268 = vst [vmem:[#allocation2] sm:$0xff] %v267
  // Predicated region
  $region22: #{_lambda_.29} parent=0 // pred_check
    %p269 = pneg %p17
  $region23: #{_lambda_.29} parent=0 // pred_check_branch
    %271 = sbr.rel (%p269) target = $region25
  $region24: #{_lambda_.29} parent=0 // pred_region
    %v272 = vld [vmem:[#allocation2] sm:$0xff]
    %v273 = vrot.slane %v272, 4
    %v274 = vadd.f32 %v272, %v273
    %v275 = vrot.slane %v274, 2
    %v276 = vadd.f32 %v274, %v275
    %v277 = vrot.slane %v276, 1
    %v278 = vadd.f32 %v276, %v277
    %v279 = vmul.f32 %v278, 0.125
    %v280 = vsub.f32 %v272, %v279
    %v281 = vmul.f32 %v280, %v280
    %v282 = vrot.slane %v281, 4
    %v283 = vadd.f32 %v281, %v282
    %v284 = vrot.slane %v283, 2
    %v285 = vadd.f32 %v283, %v284
    %v286 = vrot.slane %v285, 1
    %v287 = vadd.f32 %v285, %v286
    %v288 = vmul.f32 %v279, %v279
    %v289 = vmul.f32 %v288, 0.0
    %v290 = vsub.f32 %v287, %v289
    %v291 = vmul.f32 %v290, 0.125
    %v292 = vmax.f32 %v291, 0.0
    %v293 = vadd.f32 %v292, 1e-05
    %v294 = vrsqrt.pop %v293
    %v295 = vmul.f32 %v294, %v293
    %v296 = vmul.f32 %v295, %v294
    %v297 = vmul.f32 0.5, %v296
    %v298 = vsub.f32 1.5, %v297
    %v299 = vmul.f32 %v294, %v298
    %vm300 = vweird.f32 %v293
    %vm301 = vweird.f32 %v294
    %vm302 = vmor %vm300, %vm301
    %v303 = vsel %vm302, %v294, %v299
    %v304 = vld [vmem:[%s2] sm:$0x1]
    %v305 = vmul.f32 %v304, %v303
    %v306 = vld [vmem:[%s3] sm:$0x1]
    %v307 = vmul.f32 %v279, %v305
    %v308 = vsub.f32 %v306, %v307
    %v310 = vperm.slane %v305, 0
    %v312 = vmul.f32 %v272, %v310
    %v314 = vperm.slane %v308, 0
    %v316 = vadd.f32 %v312, %v314
    %v317 = vmax.f32 %v316, 0.0
    %v318 = vpack.c.bf16 %v317, %v317
    %319 = vst [vmem:[%s4] sm:$0xf] %v318
  $region25: #{_lambda_.29} parent=0 // pred_fallthru
    _
  // Predicated region
  $region26: #{_lambda_.29} parent=0 // pred_check
    _
  $region27: #{_lambda_.29} parent=0 // pred_check_branch
    %321 = sbr.rel (0) target = $region29
  $region28: #{_lambda_.29} parent=0 // pred_region
    _
  $region29: #{_lambda_.29} parent=0 // pred_fallthru
    _
  // Predicated region
  $region30: #{_lambda_.29} parent=0 // pred_check
    _
  $region31: #{_lambda_.29} parent=0 // pred_check_branch
    %323 = sbr.rel (0) target = $region33
  $region32: #{_lambda_.29} parent=0 // pred_region
    _
  $region33: #{_lambda_.29} parent=0 // pred_fallthru
    _

</llo_original>
